<compile_context>
chip_gen: v6e
topology: v6e:2x2x1
jax: 0.10.0
libtpu: 0.0.40
codegen_flags: <defaults>
</compile_context>

<pallas_src>
import functools

import jax
import jax.numpy as jnp
from jax.experimental import pallas as pl
from jax.experimental.pallas import tpu as pltpu

N_OPS = 8   # pool-and-broadcast ops over subsets of {i, j, l}
LANE = 128


def _round_up(x, m):
    return ((x + m - 1) // m) * m


def _pad2d(a, rows, cols):
    r, c = a.shape
    return jnp.pad(a, ((0, rows - r), (0, cols - c)))


# ----------------------------------------------------------------------------
# Pallas GEMM kernels (conv layers via im2col), fused bias + ReLU (+ pool).
# ----------------------------------------------------------------------------
def _gemm_bias_relu_kernel(a_ref, b_ref, bias_ref, o_ref):
    acc = jnp.dot(a_ref[...], b_ref[...], preferred_element_type=jnp.float32)
    o_ref[...] = jnp.maximum(acc + bias_ref[...], 0.0).astype(o_ref.dtype)


def _gemm_bias_relu_pool_kernel(a_ref, b_ref, bias_ref, o_ref, *, rows_per_img):
    acc = jnp.dot(a_ref[...], b_ref[...], preferred_element_type=jnp.float32)
    acc = jnp.maximum(acc + bias_ref[...], 0.0)              # (tm, N)
    tm, n = acc.shape
    pooled = jnp.mean(acc.reshape(tm // rows_per_img, rows_per_img, n), axis=1)
    o_ref[...] = pooled.astype(o_ref.dtype)                  # (imgs_per_tile, N)


def _pick_tile_m(m, want):
    # Largest tile <= want that is a multiple of 8 and divides m; otherwise
    # fall back to the full extent (always legal).  Never < 8.
    tm = min(want, m)
    tm -= tm % 8
    while tm >= 8 and m % tm != 0:
        tm -= 8
    return tm if tm >= 8 else m


def gemm_bias_relu(a, b, bias, *, tile_m=2048):
    """relu(a @ b + bias); a, b bf16 (K, N multiples of 128), bias f32."""
    M, K = a.shape
    _, N = b.shape
    tm = _pick_tile_m(M, tile_m)
    return pl.pallas_call(
        _gemm_bias_relu_kernel,
        out_shape=jax.ShapeDtypeStruct((M, N), jnp.float32),
        grid_spec=pltpu.PrefetchScalarGridSpec(
            num_scalar_prefetch=0,
            grid=(M // tm,),
            in_specs=[
                pl.BlockSpec((tm, K), lambda i: (i, 0)),
                pl.BlockSpec((K, N), lambda i: (0, 0)),
                pl.BlockSpec((1, N), lambda i: (0, 0)),
            ],
            out_specs=pl.BlockSpec((tm, N), lambda i: (i, 0)),
        ),
        compiler_params=pltpu.CompilerParams(dimension_semantics=("parallel",)),
    )(a, b, bias)


def gemm_bias_relu_pool(a, b, bias, *, n_imgs, rows_per_img):
    """relu(a @ b + bias) followed by a per-image mean over rows_per_img rows."""
    M, K = a.shape
    _, N = b.shape
    assert M == n_imgs * rows_per_img
    # Prefer 2 grid steps (keeps both v7x TCs busy) when the split is legal.
    imgs_per_tile = n_imgs
    half = n_imgs // 2
    if n_imgs % 2 == 0 and half % 8 == 0:
        imgs_per_tile = half
    tm = imgs_per_tile * rows_per_img
    return pl.pallas_call(
        functools.partial(_gemm_bias_relu_pool_kernel, rows_per_img=rows_per_img),
        out_shape=jax.ShapeDtypeStruct((n_imgs, N), jnp.float32),
        grid_spec=pltpu.PrefetchScalarGridSpec(
            num_scalar_prefetch=0,
            grid=(n_imgs // imgs_per_tile,),
            in_specs=[
                pl.BlockSpec((tm, K), lambda i: (i, 0)),
                pl.BlockSpec((K, N), lambda i: (0, 0)),
                pl.BlockSpec((1, N), lambda i: (0, 0)),
            ],
            out_specs=pl.BlockSpec((imgs_per_tile, N), lambda i: (i, 0)),
        ),
        compiler_params=pltpu.CompilerParams(dimension_semantics=("parallel",)),
    )(a, b, bias)


# ----------------------------------------------------------------------------
# Equivariant head kernel: triple outer product + 8 eset 3->3 ops + channel
# mix + ReLU + mean + ReLU + Linear(out_dim, 1).  One grid step per batch.
# ----------------------------------------------------------------------------
def _eq3_head_kernel(x4_ref, w_ref, b_ref, wo_ref, bo_ref, out_ref):
    x = x4_ref[0]                                    # (k, D) f32
    k, d = x.shape
    xb = jnp.broadcast_to(jnp.mean(x, axis=0, keepdims=True), (k, d))

    # Each eset op = mean-pool over a subset of {i, j, l} of T[i,j,l,d] =
    # x_i*x_j*x_l, broadcast back.  That factorizes per axis as x vs mean(x).
    #        op:   T   mi   mj   ml  mij  mil  mjl   ma
    fac_i = (x, xb, x,  x,  xb, xb, x,  xb)
    fac_j = (x, x,  xb, x,  xb, x,  xb, xb)
    fac_l = (x, x,  x,  xb, x,  xb, xb, xb)
    a_i = jnp.concatenate(fac_i, axis=1)             # (k, 8*D)
    a_j = jnp.concatenate(fac_j, axis=1)
    a_l = jnp.concatenate(fac_l, axis=1)
    kd = N_OPS * d

    # ops[(i,j,l), :] = a_i[i] * a_j[j] * a_l[l]  -> all 8 basis tensors,
    # concatenated along d, without materializing 8 separate broadcasts.
    # TODO(synk): for large k/D, build this i-slab-wise to bound VMEM (v7x).
    pij = (a_i[:, None, :] * a_j[None, :, :]).reshape(k * k, kd)
    ops = (pij[:, None, :] * a_l[None, :, :]).reshape(k * k * k, kd)

    # SetEq3to3 channel mix: one K = 8*D matmul against the flat weight.
    x6 = jnp.dot(ops.astype(w_ref.dtype), w_ref[...],
                 preferred_element_type=jnp.float32) + b_ref[...]   # (k^3, C)
    x7 = jnp.maximum(x6, 0.0)                        # ReLU
    x8 = jnp.mean(x7, axis=0, keepdims=True)         # mean over (i, j, l)
    x9 = jnp.maximum(x8, 0.0)                        # ReLU
    # TODO(synk): dropout_prob=0 / eval mode -> identity, nothing to do.
    x11 = jnp.dot(x9, wo_ref[...], preferred_element_type=jnp.float32) + bo_ref[...]
    out_ref[0] = x11                                 # (1, 1)


def eq3_head(x4, w_eq_flat, b_eq, w_out, b_out):
    B, k, D = x4.shape
    C = w_eq_flat.shape[1]
    out = pl.pallas_call(
        _eq3_head_kernel,
        out_shape=jax.ShapeDtypeStruct((B, 1, 1), jnp.float32),
        grid_spec=pltpu.PrefetchScalarGridSpec(
            num_scalar_prefetch=0,
            grid=(B,),
            in_specs=[
                pl.BlockSpec((1, k, D), lambda b: (b, 0, 0)),
                pl.BlockSpec((N_OPS * D, C), lambda b: (0, 0)),
                pl.BlockSpec((1, C), lambda b: (0, 0)),
                pl.BlockSpec((C, 1), lambda b: (0, 0)),
                pl.BlockSpec((1, 1), lambda b: (0, 0)),
            ],
            out_specs=pl.BlockSpec((1, 1, 1), lambda b: (b, 0, 0)),
        ),
        compiler_params=pltpu.CompilerParams(dimension_semantics=("parallel",)),
    )(x4, w_eq_flat, b_eq, w_out, b_out)
    return out[:, 0, :]                              # (B, 1)


# ----------------------------------------------------------------------------
# Glue: im2col for 3x3 'same' convs (K zero-padded), BasicConvNet, forward.
# ----------------------------------------------------------------------------
def im2col_3x3(x_nhwc, *, k_pad=None, out_dtype=jnp.bfloat16):
    N, H, W, C = x_nhwc.shape
    xp = jnp.pad(x_nhwc, ((0, 0), (1, 1), (1, 1), (0, 0)))
    cols = [xp[:, dh:dh + H, dw:dw + W, :] for dh in range(3) for dw in range(3)]
    p = jnp.concatenate(cols, axis=-1).reshape(N * H * W, 9 * C)
    if k_pad is not None and k_pad > 9 * C:
        p = jnp.pad(p, ((0, 0), (0, k_pad - 9 * C)))
    return p.astype(out_dtype)


def basic_conv_net(x_nhwc, params):
    """conv3x3(1->hid)+ReLU, conv3x3(hid->hid)+ReLU, global average pool."""
    # TODO(synk): im2col for conv2 still round-trips HBM; a fully fused
    # conv1+conv2+pool kernel would remove it but was skipped for robustness.
    N, H, W, _ = x_nhwc.shape
    hid = params["b1"].shape[1]
    np_ = _round_up(hid, LANE)                 # lane-dense output columns
    k1p = _round_up(9, LANE)
    k2p = _round_up(9 * hid, LANE)

    w1p = _pad2d(params["w1"], k1p, np_).astype(jnp.bfloat16)
    b1p = _pad2d(params["b1"], 1, np_)
    w2p = _pad2d(params["w2"], k2p, np_).astype(jnp.bfloat16)
    b2p = _pad2d(params["b2"], 1, np_)

    a1 = im2col_3x3(x_nhwc, k_pad=k1p)                         # (N*H*W, 128) bf16
    h1 = gemm_bias_relu(a1, w1p, b1p)                          # (N*H*W, 128) f32
    h1 = h1.reshape(N, H, W, np_)[..., :hid]                   # drop zero cols
    a2 = im2col_3x3(h1, k_pad=k2p)                             # (N*H*W, 384) bf16
    pooled = gemm_bias_relu_pool(a2, w2p, b2p, n_imgs=N, rows_per_img=H * W)
    return pooled[:, :hid]                                     # (N, hid)


def unique_eq3_net_mini(x, params):
    # x: (B, k, h, w) float32 (same axis convention as the PyTorch module)
    B, k, h, w = x.shape
    x1 = x.reshape(B * k, h, w, 1)                             # NHWC
    x2 = basic_conv_net(x1, params)                            # (B*k, hid)
    x4 = x2.reshape(B, k, -1)                                  # (B, k, hid)
    hid = x4.shape[-1]
    w_eq_flat = params["w_eq"].reshape(N_OPS * hid, -1).astype(jnp.bfloat16)
    return eq3_head(x4, w_eq_flat, params["b_eq"],
                    params["w_out"], params["b_out"])          # (B, 1)


def init_params(key, hid_dim, out_dim):
    ks = jax.random.split(key, 4)

    def w(k_, shape, fan_in):
        return jax.random.normal(k_, shape, jnp.float32) / jnp.sqrt(float(fan_in))

    return dict(
        w1=w(ks[0], (9 * 1, hid_dim), 9),
        b1=jnp.zeros((1, hid_dim), jnp.float32),
        w2=w(ks[1], (9 * hid_dim, hid_dim), 9 * hid_dim),
        b2=jnp.zeros((1, hid_dim), jnp.float32),
        w_eq=w(ks[2], (N_OPS, hid_dim, out_dim), N_OPS * hid_dim),
        b_eq=jnp.zeros((1, out_dim), jnp.float32),
        w_out=w(ks[3], (out_dim, 1), out_dim),
        b_out=jnp.zeros((1, 1), jnp.float32),
    )


if __name__ == "__main__":
    B, k, h, w = 2, 8, 16, 16
    hid_dim, out_dim = 32, 32

    key = jax.random.PRNGKey(0)
    kx, kp = jax.random.split(key)
    x = jax.random.normal(kx, (B, k, h, w), jnp.float32)
    params = init_params(kp, hid_dim, out_dim)

    fwd = jax.jit(unique_eq3_net_mini)
    out = fwd(x, params)
    out = jax.block_until_ready(out)

    assert out.shape == (B, 1), out.shape
    assert bool(jnp.all(jnp.isfinite(out)))
    print("KERNEL_OK")
</pallas_src>

<mosaic_0001>
module attributes {stable_mosaic.version = 11 : i64} {
  func.func @_gemm_bias_relu_kernel(%arg0: i32, %arg1: memref<2048x128xbf16, #tpu.memory_space<vmem>>, %arg2: memref<128x128xbf16, #tpu.memory_space<vmem>>, %arg3: memref<1x128xf32, #tpu.memory_space<vmem>>, %arg4: memref<2048x128xf32, #tpu.memory_space<vmem>>) attributes {dimension_semantics = [#tpu.dimension_semantics<parallel>], iteration_bounds = array<i64: 2>, scalar_prefetch = 0 : i64, scratch_operands = 0 : i64, tpu.core_type = #tpu.core_type<tc>, window_params = [{transform_indices = @transform_0, window_bounds = array<i64: 2048, 128>}, {pipeline_mode = #tpu.pipeline_mode<synchronous>, transform_indices = @transform_1, window_bounds = array<i64: 128, 128>}, {pipeline_mode = #tpu.pipeline_mode<synchronous>, transform_indices = @transform_2, window_bounds = array<i64: 1, 128>}, {transform_indices = @transform_3, window_bounds = array<i64: 2048, 128>}]} {
    %c0 = arith.constant 0 : index
    %c0_0 = arith.constant 0 : index
    %0 = vector.load %arg1[%c0, %c0_0] : memref<2048x128xbf16, #tpu.memory_space<vmem>>, vector<2048x128xbf16>
    %c0_1 = arith.constant 0 : index
    %c0_2 = arith.constant 0 : index
    %1 = vector.load %arg2[%c0_1, %c0_2] : memref<128x128xbf16, #tpu.memory_space<vmem>>, vector<128x128xbf16>
    %cst = arith.constant dense<0.000000e+00> : vector<2048x128xf32>
    %2 = tpu.matmul %0, %1, %cst {dimension_numbers = #tpu.dot_dimension_numbers<[1], [0], [0], [1], [0, 0, 1, 1], [], []>} : vector<2048x128xbf16>, vector<128x128xbf16>, vector<2048x128xf32> -> vector<2048x128xf32>
    %c0_3 = arith.constant 0 : index
    %c0_4 = arith.constant 0 : index
    %3 = vector.load %arg3[%c0_3, %c0_4] : memref<1x128xf32, #tpu.memory_space<vmem>>, vector<1x128xf32>
    %4 = vector.broadcast %3 : vector<1x128xf32> to vector<2048x128xf32>
    %5 = arith.addf %2, %4 : vector<2048x128xf32>
    %cst_5 = arith.constant 0.000000e+00 : f32
    %6 = vector.broadcast %cst_5 : f32 to vector<2048x128xf32>
    %7 = arith.maximumf %5, %6 : vector<2048x128xf32>
    %c0_6 = arith.constant 0 : index
    %c0_7 = arith.constant 0 : index
    %8 = vector.load %arg4[%c0_6, %c0_7] : memref<2048x128xf32, #tpu.memory_space<vmem>>, vector<2048x128xf32>
    tpu.vector_store %arg4[%c0_6, %c0_7], %7 {strides = array<i32>} : memref<2048x128xf32, #tpu.memory_space<vmem>>, vector<2048x128xf32>,
    return
  }
  func.func @transform_0(%arg0: i32) -> (i32, i32) {
    %c0_i32 = arith.constant 0 : i32
    %c0_i32_0 = arith.constant 0 : i32
    return %arg0, %c0_i32 : i32, i32
  }
  func.func @transform_1(%arg0: i32) -> (i32, i32) {
    %c0_i32 = arith.constant 0 : i32
    %c0_i32_0 = arith.constant 0 : i32
    %c0_i32_1 = arith.constant 0 : i32
    return %c0_i32, %c0_i32_0 : i32, i32
  }
  func.func @transform_2(%arg0: i32) -> (i32, i32) {
    %c0_i32 = arith.constant 0 : i32
    %c0_i32_0 = arith.constant 0 : i32
    %c0_i32_1 = arith.constant 0 : i32
    return %c0_i32, %c0_i32_0 : i32, i32
  }
  func.func @transform_3(%arg0: i32) -> (i32, i32) {
    %c0_i32 = arith.constant 0 : i32
    %c0_i32_0 = arith.constant 0 : i32
    return %arg0, %c0_i32 : i32, i32
  }
}

module attributes {stable_mosaic.version = 11 : i64} {
  func.func @_gemm_bias_relu_pool_kernel(%arg0: i32, %arg1: memref<2048x384xbf16, #tpu.memory_space<vmem>>, %arg2: memref<384x128xbf16, #tpu.memory_space<vmem>>, %arg3: memref<1x128xf32, #tpu.memory_space<vmem>>, %arg4: memref<8x128xf32, #tpu.memory_space<vmem>>) attributes {dimension_semantics = [#tpu.dimension_semantics<parallel>], iteration_bounds = array<i64: 2>, scalar_prefetch = 0 : i64, scratch_operands = 0 : i64, tpu.core_type = #tpu.core_type<tc>, window_params = [{transform_indices = @transform_0, window_bounds = array<i64: 2048, 384>}, {pipeline_mode = #tpu.pipeline_mode<synchronous>, transform_indices = @transform_1, window_bounds = array<i64: 384, 128>}, {pipeline_mode = #tpu.pipeline_mode<synchronous>, transform_indices = @transform_2, window_bounds = array<i64: 1, 128>}, {transform_indices = @transform_3, window_bounds = array<i64: 8, 128>}]} {
    %c0 = arith.constant 0 : index
    %c0_0 = arith.constant 0 : index
    %0 = vector.load %arg1[%c0, %c0_0] : memref<2048x384xbf16, #tpu.memory_space<vmem>>, vector<2048x384xbf16>
    %c0_1 = arith.constant 0 : index
    %c0_2 = arith.constant 0 : index
    %1 = vector.load %arg2[%c0_1, %c0_2] : memref<384x128xbf16, #tpu.memory_space<vmem>>, vector<384x128xbf16>
    %cst = arith.constant dense<0.000000e+00> : vector<2048x128xf32>
    %2 = tpu.matmul %0, %1, %cst {dimension_numbers = #tpu.dot_dimension_numbers<[1], [0], [0], [1], [0, 0, 1, 1], [], []>} : vector<2048x384xbf16>, vector<384x128xbf16>, vector<2048x128xf32> -> vector<2048x128xf32>
    %c0_3 = arith.constant 0 : index
    %c0_4 = arith.constant 0 : index
    %3 = vector.load %arg3[%c0_3, %c0_4] : memref<1x128xf32, #tpu.memory_space<vmem>>, vector<1x128xf32>
    %4 = vector.broadcast %3 : vector<1x128xf32> to vector<2048x128xf32>
    %5 = arith.addf %2, %4 : vector<2048x128xf32>
    %cst_5 = arith.constant 0.000000e+00 : f32
    %6 = vector.broadcast %cst_5 : f32 to vector<2048x128xf32>
    %7 = arith.maximumf %5, %6 : vector<2048x128xf32>
    %8 = vector.shape_cast %7 : vector<2048x128xf32> to vector<8x256x128xf32>
    %cst_6 = arith.constant dense<0.000000e+00> : vector<8x128xf32>
    %9 = vector.multi_reduction <add>, %8, %cst_6 [1] : vector<8x256x128xf32> to vector<8x128xf32>
    %cst_7 = arith.constant 2.560000e+02 : f32
    %10 = vector.broadcast %cst_7 : f32 to vector<8x128xf32>
    %11 = arith.divf %9, %10 : vector<8x128xf32>
    %c0_8 = arith.constant 0 : index
    %c0_9 = arith.constant 0 : index
    %12 = vector.load %arg4[%c0_8, %c0_9] : memref<8x128xf32, #tpu.memory_space<vmem>>, vector<8x128xf32>
    tpu.vector_store %arg4[%c0_8, %c0_9], %11 {strides = array<i32>} : memref<8x128xf32, #tpu.memory_space<vmem>>, vector<8x128xf32>,
    return
  }
  func.func @transform_0(%arg0: i32) -> (i32, i32) {
    %c0_i32 = arith.constant 0 : i32
    %c0_i32_0 = arith.constant 0 : i32
    return %arg0, %c0_i32 : i32, i32
  }
  func.func @transform_1(%arg0: i32) -> (i32, i32) {
    %c0_i32 = arith.constant 0 : i32
    %c0_i32_0 = arith.constant 0 : i32
    %c0_i32_1 = arith.constant 0 : i32
    return %c0_i32, %c0_i32_0 : i32, i32
  }
  func.func @transform_2(%arg0: i32) -> (i32, i32) {
    %c0_i32 = arith.constant 0 : i32
    %c0_i32_0 = arith.constant 0 : i32
    %c0_i32_1 = arith.constant 0 : i32
    return %c0_i32, %c0_i32_0 : i32, i32
  }
  func.func @transform_3(%arg0: i32) -> (i32, i32) {
    %c0_i32 = arith.constant 0 : i32
    %c0_i32_0 = arith.constant 0 : i32
    return %arg0, %c0_i32 : i32, i32
  }
}

module attributes {stable_mosaic.version = 11 : i64} {
  func.func @_eq3_head_kernel(%arg0: i32, %arg1: memref<1x8x32xf32, #tpu.memory_space<vmem>>, %arg2: memref<256x32xbf16, #tpu.memory_space<vmem>>, %arg3: memref<1x32xf32, #tpu.memory_space<vmem>>, %arg4: memref<32x1xf32, #tpu.memory_space<vmem>>, %arg5: memref<1x1xf32, #tpu.memory_space<vmem>>, %arg6: memref<1x1x1xf32, #tpu.memory_space<vmem>>) attributes {dimension_semantics = [#tpu.dimension_semantics<parallel>], iteration_bounds = array<i64: 2>, scalar_prefetch = 0 : i64, scratch_operands = 0 : i64, tpu.core_type = #tpu.core_type<tc>, window_params = [{transform_indices = @transform_0, window_bounds = array<i64: 1, 8, 32>}, {pipeline_mode = #tpu.pipeline_mode<synchronous>, transform_indices = @transform_1, window_bounds = array<i64: 256, 32>}, {pipeline_mode = #tpu.pipeline_mode<synchronous>, transform_indices = @transform_2, window_bounds = array<i64: 1, 32>}, {pipeline_mode = #tpu.pipeline_mode<synchronous>, transform_indices = @transform_3, window_bounds = array<i64: 32, 1>}, {pipeline_mode = #tpu.pipeline_mode<synchronous>, transform_indices = @transform_4, window_bounds = array<i64: 1, 1>}, {transform_indices = @transform_5, window_bounds = array<i64: 1, 1, 1>}]} {
    %c0 = arith.constant 0 : index
    %c0_0 = arith.constant 0 : index
    %c0_1 = arith.constant 0 : index
    %0 = vector.load %arg1[%c0, %c0_0, %c0_1] : memref<1x8x32xf32, #tpu.memory_space<vmem>>, vector<1x8x32xf32>
    %1 = vector.shape_cast %0 : vector<1x8x32xf32> to vector<8x32xf32>
    %cst = arith.constant dense<0.000000e+00> : vector<32xf32>
    %2 = vector.multi_reduction <add>, %1, %cst [0] : vector<8x32xf32> to vector<32xf32>
    %3 = vector.shape_cast %2 : vector<32xf32> to vector<1x32xf32>
    %cst_2 = arith.constant 8.000000e+00 : f32
    %4 = vector.broadcast %cst_2 : f32 to vector<1x32xf32>
    %5 = arith.divf %3, %4 : vector<1x32xf32>
    %6 = vector.shape_cast %5 : vector<1x32xf32> to vector<1x32xf32>
    %7 = vector.broadcast %6 : vector<1x32xf32> to vector<8x32xf32>
    %8 = tpu.concatenate %1, %7, %1, %1, %7, %7, %1, %7 in 1 : vector<8x32xf32>, vector<8x32xf32>, vector<8x32xf32>, vector<8x32xf32>, vector<8x32xf32>, vector<8x32xf32>, vector<8x32xf32>, vector<8x32xf32> -> vector<8x256xf32>
    %9 = tpu.concatenate %1, %1, %7, %1, %7, %1, %7, %7 in 1 : vector<8x32xf32>, vector<8x32xf32>, vector<8x32xf32>, vector<8x32xf32>, vector<8x32xf32>, vector<8x32xf32>, vector<8x32xf32>, vector<8x32xf32> -> vector<8x256xf32>
    %10 = tpu.concatenate %1, %1, %1, %7, %1, %7, %7, %7 in 1 : vector<8x32xf32>, vector<8x32xf32>, vector<8x32xf32>, vector<8x32xf32>, vector<8x32xf32>, vector<8x32xf32>, vector<8x32xf32>, vector<8x32xf32> -> vector<8x256xf32>
    %11 = vector.shape_cast %8 : vector<8x256xf32> to vector<8x1x256xf32>
    %12 = vector.shape_cast %9 : vector<8x256xf32> to vector<1x8x256xf32>
    %13 = vector.broadcast %11 : vector<8x1x256xf32> to vector<8x8x256xf32>
    %14 = vector.broadcast %12 : vector<1x8x256xf32> to vector<8x8x256xf32>
    %15 = arith.mulf %13, %14 : vector<8x8x256xf32>
    %16 = vector.shape_cast %15 : vector<8x8x256xf32> to vector<64x256xf32>
    %17 = vector.shape_cast %16 : vector<64x256xf32> to vector<64x1x256xf32>
    %18 = vector.shape_cast %10 : vector<8x256xf32> to vector<1x8x256xf32>
    %19 = vector.broadcast %17 : vector<64x1x256xf32> to vector<64x8x256xf32>
    %20 = vector.broadcast %18 : vector<1x8x256xf32> to vector<64x8x256xf32>
    %21 = arith.mulf %19, %20 : vector<64x8x256xf32>
    %22 = vector.shape_cast %21 : vector<64x8x256xf32> to vector<512x256xf32>
    %23 = arith.truncf %22 : vector<512x256xf32> to vector<512x256xbf16>
    %c0_3 = arith.constant 0 : index
    %c0_4 = arith.constant 0 : index
    %24 = vector.load %arg2[%c0_3, %c0_4] : memref<256x32xbf16, #tpu.memory_space<vmem>>, vector<256x32xbf16>
    %cst_5 = arith.constant dense<0.000000e+00> : vector<512x32xf32>
    %25 = tpu.matmul %23, %24, %cst_5 {dimension_numbers = #tpu.dot_dimension_numbers<[1], [0], [0], [1], [0, 0, 1, 1], [], []>} : vector<512x256xbf16>, vector<256x32xbf16>, vector<512x32xf32> -> vector<512x32xf32>
    %c0_6 = arith.constant 0 : index
    %c0_7 = arith.constant 0 : index
    %26 = vector.load %arg3[%c0_6, %c0_7] : memref<1x32xf32, #tpu.memory_space<vmem>>, vector<1x32xf32>
    %27 = vector.broadcast %26 : vector<1x32xf32> to vector<512x32xf32>
    %28 = arith.addf %25, %27 : vector<512x32xf32>
    %cst_8 = arith.constant 0.000000e+00 : f32
    %29 = vector.broadcast %cst_8 : f32 to vector<512x32xf32>
    %30 = arith.maximumf %28, %29 : vector<512x32xf32>
    %cst_9 = arith.constant dense<0.000000e+00> : vector<32xf32>
    %31 = vector.multi_reduction <add>, %30, %cst_9 [0] : vector<512x32xf32> to vector<32xf32>
    %32 = vector.shape_cast %31 : vector<32xf32> to vector<1x32xf32>
    %cst_10 = arith.constant 5.120000e+02 : f32
    %33 = vector.broadcast %cst_10 : f32 to vector<1x32xf32>
    %34 = arith.divf %32, %33 : vector<1x32xf32>
    %cst_11 = arith.constant 0.000000e+00 : f32
    %35 = vector.broadcast %cst_11 : f32 to vector<1x32xf32>
    %36 = arith.maximumf %34, %35 : vector<1x32xf32>
    %c0_12 = arith.constant 0 : index
    %c0_13 = arith.constant 0 : index
    %37 = vector.load %arg4[%c0_12, %c0_13] : memref<32x1xf32, #tpu.memory_space<vmem>>, vector<32x1xf32>
    %cst_14 = arith.constant dense<0.000000e+00> : vector<1x1xf32>
    %38 = tpu.matmul %36, %37, %cst_14 {dimension_numbers = #tpu.dot_dimension_numbers<[1], [0], [0], [1], [0, 0, 1, 1], [], []>} : vector<1x32xf32>, vector<32x1xf32>, vector<1x1xf32> -> vector<1x1xf32>
    %c0_15 = arith.constant 0 : index
    %c0_16 = arith.constant 0 : index
    %39 = vector.load %arg5[%c0_15, %c0_16] : memref<1x1xf32, #tpu.memory_space<vmem>>, vector<1x1xf32>
    %40 = arith.addf %38, %39 : vector<1x1xf32>
    %c0_17 = arith.constant 0 : index
    %c0_18 = arith.constant 0 : index
    %c0_19 = arith.constant 0 : index
    %41 = vector.load %arg6[%c0_17, %c0_18, %c0_19] : memref<1x1x1xf32, #tpu.memory_space<vmem>>, vector<1x1x1xf32>
    %42 = vector.shape_cast %41 : vector<1x1x1xf32> to vector<1x1xf32>
    %43 = vector.shape_cast %40 : vector<1x1xf32> to vector<1x1x1xf32>
    tpu.vector_store %arg6[%c0_17, %c0_18, %c0_19], %43 {strides = array<i32>} : memref<1x1x1xf32, #tpu.memory_space<vmem>>, vector<1x1x1xf32>,
    return
  }
  func.func @transform_0(%arg0: i32) -> (i32, i32, i32) {
    %c0_i32 = arith.constant 0 : i32
    %c0_i32_0 = arith.constant 0 : i32
    %c0_i32_1 = arith.constant 0 : i32
    return %arg0, %c0_i32, %c0_i32_0 : i32, i32, i32
  }
  func.func @transform_1(%arg0: i32) -> (i32, i32) {
    %c0_i32 = arith.constant 0 : i32
    %c0_i32_0 = arith.constant 0 : i32
    %c0_i32_1 = arith.constant 0 : i32
    return %c0_i32, %c0_i32_0 : i32, i32
  }
  func.func @transform_2(%arg0: i32) -> (i32, i32) {
    %c0_i32 = arith.constant 0 : i32
    %c0_i32_0 = arith.constant 0 : i32
    %c0_i32_1 = arith.constant 0 : i32
    return %c0_i32, %c0_i32_0 : i32, i32
  }
  func.func @transform_3(%arg0: i32) -> (i32, i32) {
    %c0_i32 = arith.constant 0 : i32
    %c0_i32_0 = arith.constant 0 : i32
    %c0_i32_1 = arith.constant 0 : i32
    return %c0_i32, %c0_i32_0 : i32, i32
  }
  func.func @transform_4(%arg0: i32) -> (i32, i32) {
    %c0_i32 = arith.constant 0 : i32
    %c0_i32_0 = arith.constant 0 : i32
    %c0_i32_1 = arith.constant 0 : i32
    return %c0_i32, %c0_i32_0 : i32, i32
  }
  func.func @transform_5(%arg0: i32) -> (i32, i32, i32) {
    %c0_i32 = arith.constant 0 : i32
    %c0_i32_0 = arith.constant 0 : i32
    %c0_i32_1 = arith.constant 0 : i32
    return %arg0, %c0_i32, %c0_i32_0 : i32, i32, i32
  }
}

</mosaic_0001>

<llo_original>
// kernel: unique_eq3_net_mini.3
$region0: #{unique_eq3_net_mini.3}
  #allocation0 [shape = 'u32[]', space=smem, size = 0x4, offset = 0x4, fixed_abs, tag = 'smem constant byte address 0x4 - core index']
  #allocation1 [shape = 'u32[144,128]{1,0:T(1,128)}', space=vmem, size = 0x12000, scoped, tag = 'internal scratch']
  %s0 = inlined_call_operand.vmem [shape: bf16[4096,128], index: 0, kind: input, shape index: {}]
  %s1 = inlined_call_operand.vmem [shape: bf16[128,128], index: 1, kind: input, shape index: {}]
  %s2 = inlined_call_operand.vmem [shape: f32[1,128], index: 2, kind: input, shape index: {}]
  %s3 = inlined_call_operand.vmem [shape: f32[4096,128], index: 3, kind: output, shape index: {}]
  %s4 = sld [smem:[#allocation0]]
  $region45: #{unique_eq3_net_mini.3} parent=0
    _
  %s6 = ssub.s32 1, %s4
  %s7 = scalar_select 0, %s6, %s4
  loop: start=0, step=1, limit=4
  $region2: #{unique_eq3_net_mini.3} parent=0 // loop_pre_header
    _
  $region3: #{unique_eq3_net_mini.3} parent=0 // loop_header
    %s9 = sphi 0, %s13
    %p10 = scmp.ge.s32.totalorder %s9, 4
    %s19 = sphi 0, %s21
    %s22 = sphi 0, %s19
    %s23 = sphi 0, %s22
    %s39 = sphi 0, %s23
    %s43 = sphi 0, %s43
    %s45 = sphi 0, %s43
    %s46 = sphi 0, %s45
    %s60 = sphi 0, %s46
    %s64 = sphi 0, %s64
    %s66 = sphi 0, %s64
    %s67 = sphi 0, %s66
    %s81 = sphi 0, %s67
    %s87 = sphi 0, %s89
    %s90 = sphi 0, %s87
    %s91 = sphi 0, %s90
    %s107 = sphi 0, %s91
  $region4: #{unique_eq3_net_mini.3} parent=0 // loop_header_branch
    %12 = sbr.rel (%p10) target = $region8
  $region5: #{unique_eq3_net_mini.3} parent=0 // loop_body
    %s14 = ssub.s32 %s9, 1
    %s15 = ssub.s32 %s9, 2
    %s16 = sadd.s32 %s9, 1
    %s17 = ssub.s32 %s9, %s16
    %p18 = scmp.eq.s32.totalorder %s17, 0
    %s20 = sadd.s32 %s19, 1
    %s21 = scalar_select %p18, %s19, %s20
    %p24 = pneg %p18
    %p25 = scmp.eq.s32.totalorder %s9, 1
    %p26 = por %p24, %p25
    %p27 = scmp.ne.s32.totalorder %s19, %s22
    %p28 = scmp.eq.s32.totalorder %s9, 0
    %p29 = por %p27, %p28
    %p30 = scmp.ne.s32.totalorder %s19, %s22
    %p31 = scmp.eq.s32.totalorder %s14, 1
    %p32 = por %p30, %p31
    %p33 = scmp.ne.s32.totalorder %s22, %s23
    %p34 = scmp.eq.s32.totalorder %s14, 0
    %p35 = por %p33, %p34
    %p36 = scmp.ne.s32.totalorder %s22, %s23
    %p37 = scmp.eq.s32.totalorder %s15, 1
    %p38 = por %p36, %p37
    %p40 = scmp.ne.s32.totalorder %s23, %s39
    %p41 = scmp.eq.s32.totalorder %s15, 0
    %p42 = por %p40, %p41
    %s44 = sadd.s32 %s43, 1
    %p47 = scmp.eq.s32.totalorder %s9, 1
    %p48 = scmp.ne.s32.totalorder %s43, %s45
    %p49 = scmp.eq.s32.totalorder %s9, 0
    %p50 = por %p48, %p49
    %p51 = scmp.ne.s32.totalorder %s43, %s45
    %p52 = scmp.eq.s32.totalorder %s14, 1
    %p53 = por %p51, %p52
    %p54 = scmp.ne.s32.totalorder %s45, %s46
    %p55 = scmp.eq.s32.totalorder %s14, 0
    %p56 = por %p54, %p55
    %p57 = scmp.ne.s32.totalorder %s45, %s46
    %p58 = scmp.eq.s32.totalorder %s15, 1
    %p59 = por %p57, %p58
    %p61 = scmp.ne.s32.totalorder %s46, %s60
    %p62 = scmp.eq.s32.totalorder %s15, 0
    %p63 = por %p61, %p62
    %s65 = sadd.s32 %s64, 1
    %p68 = scmp.eq.s32.totalorder %s9, 1
    %p69 = scmp.ne.s32.totalorder %s64, %s66
    %p70 = scmp.eq.s32.totalorder %s9, 0
    %p71 = por %p69, %p70
    %p72 = scmp.ne.s32.totalorder %s64, %s66
    %p73 = scmp.eq.s32.totalorder %s14, 1
    %p74 = por %p72, %p73
    %p75 = scmp.ne.s32.totalorder %s66, %s67
    %p76 = scmp.eq.s32.totalorder %s14, 0
    %p77 = por %p75, %p76
    %p78 = scmp.ne.s32.totalorder %s66, %s67
    %p79 = scmp.eq.s32.totalorder %s15, 1
    %p80 = por %p78, %p79
    %p82 = scmp.ne.s32.totalorder %s67, %s81
    %p83 = scmp.eq.s32.totalorder %s15, 0
    %p84 = por %p82, %p83
    %s85 = ssub.s32 %s9, %s16
    %p86 = scmp.eq.s32.totalorder %s85, 0
    %s88 = sadd.s32 %s87, 1
    %s89 = scalar_select %p86, %s87, %s88
    %p92 = pneg %p86
    %p93 = scmp.eq.s32.totalorder %s9, 1
    %p94 = por %p92, %p93
    %p95 = scmp.ne.s32.totalorder %s87, %s90
    %p96 = scmp.eq.s32.totalorder %s9, 0
    %p97 = por %p95, %p96
    %p98 = scmp.ne.s32.totalorder %s87, %s90
    %p99 = scmp.eq.s32.totalorder %s14, 1
    %p100 = por %p98, %p99
    %p101 = scmp.ne.s32.totalorder %s90, %s91
    %p102 = scmp.eq.s32.totalorder %s14, 0
    %p103 = por %p101, %p102
    %p104 = scmp.ne.s32.totalorder %s90, %s91
    %p105 = scmp.eq.s32.totalorder %s15, 1
    %p106 = por %p104, %p105
    %p108 = scmp.ne.s32.totalorder %s91, %s107
    %p109 = scmp.eq.s32.totalorder %s15, 0
    %p110 = por %p108, %p109
    %p111 = scmp.le.s32.totalorder 1, %s9
    %p112 = scmp.lt.s32.totalorder %s9, 3
    %p113 = pnand %p111, %p112
    %p114 = pneg %p113
    // Predicated region
    $region9: #{unique_eq3_net_mini.3} parent=5 // pred_check
      _
    $region10: #{unique_eq3_net_mini.3} parent=5 // pred_check_branch
      %116 = sbr.rel (%p113) target = $region12
    $region11: #{unique_eq3_net_mini.3} parent=5 // pred_region
      %s117 = ssub.s32 %s9, 1
      // Predicated region
      $region13: #{unique_eq3_net_mini.3} parent=11 // pred_check
        %p118 = pneg %p56
      $region14: #{unique_eq3_net_mini.3} parent=11 // pred_check_branch
        %120 = sbr.rel (%p118) target = $region16
      $region15: #{unique_eq3_net_mini.3} parent=11 // pred_region
        _
      $region16: #{unique_eq3_net_mini.3} parent=11 // pred_fallthru
        _
      // Predicated region
      $region17: #{unique_eq3_net_mini.3} parent=11 // pred_check
        %p121 = pneg %p77
      $region18: #{unique_eq3_net_mini.3} parent=11 // pred_check_branch
        %123 = sbr.rel (%p121) target = $region20
      $region19: #{unique_eq3_net_mini.3} parent=11 // pred_region
        _
      $region20: #{unique_eq3_net_mini.3} parent=11 // pred_fallthru
        _
    $region12: #{unique_eq3_net_mini.3} parent=5 // pred_fallthru
      _
    %p124 = scmp.lt.s32.totalorder %s9, 2
    // Predicated region
    $region21: #{unique_eq3_net_mini.3} parent=5 // pred_check
      %p125 = pneg %p124
    $region22: #{unique_eq3_net_mini.3} parent=5 // pred_check_branch
      %127 = sbr.rel (%p125) target = $region24
    $region23: #{unique_eq3_net_mini.3} parent=5 // pred_region
      // Predicated region
      $region25: #{unique_eq3_net_mini.3} parent=23 // pred_check
        %p128 = pneg %p29
      $region26: #{unique_eq3_net_mini.3} parent=23 // pred_check_branch
        %130 = sbr.rel (%p128) target = $region28
      $region27: #{unique_eq3_net_mini.3} parent=23 // pred_region
        %s131 = smul.u32 256, %s9
        %p132 = scmp.lt.s32.totalorder %s131, 511
        %s133 = scalar_select %p132, %s131, 511
        %s134 = smul.addr %s133, 4
        %s135 = scalar_lea.vmem %s0, %s134
        %s136 = smul.u32 256, %s9
      $region28: #{unique_eq3_net_mini.3} parent=23 // pred_fallthru
        _
    $region24: #{unique_eq3_net_mini.3} parent=5 // pred_fallthru
      _
    %p137 = scmp.le.s32.totalorder 1, %s9
    %p138 = scmp.lt.s32.totalorder %s9, 3
    %p139 = pnand %p137, %p138
    %p140 = pneg %p139
    // Predicated region
    $region29: #{unique_eq3_net_mini.3} parent=5 // pred_check
      _
    $region30: #{unique_eq3_net_mini.3} parent=5 // pred_check_branch
      %142 = sbr.rel (%p139) target = $region32
    $region31: #{unique_eq3_net_mini.3} parent=5 // pred_region
      %s143 = ssub.s32 %s9, 1
      %s144 = smul.u32 256, %s14
      %p145 = scmp.lt.s32.totalorder %s144, 511
      %s146 = scalar_select %p145, %s144, 511
      %s147 = smul.addr %s146, 4
      %s148 = scalar_lea.vmem %s0, %s147
      %p149 = pneg %p35
      %p150 = pneg %p32
      %p151 = pneg %p56
      %p152 = pneg %p53
      %p153 = pneg %p77
      %p154 = pneg %p74
      %p155 = pneg %p103
      %p156 = pneg %p100
      %s157 = smul.u32 256, %s14
      %p158 = scmp.lt.s32.totalorder %s157, 511
      %s159 = scalar_select %p158, %s157, 511
      %s160 = smul.addr %s159, 8
      %s161 = scalar_lea.vmem %s3, %s160
      %s162 = smul.u32 256, %s14
      %p163 = scmp.lt.s32.totalorder %s162, 511
      %s164 = scalar_select %p163, %s162, 511
      %s165 = smul.addr %s164, 4
      %s166 = scalar_lea.vmem %s0, %s165
      %s167 = smul.u32 256, %s14
      %s168 = smul.u32 256, %s14
      %p169 = scmp.lt.s32.totalorder %s168, 511
      %s170 = scalar_select %p169, %s168, 511
      %s171 = smul.addr %s170, 8
      %s172 = scalar_lea.vmem %s3, %s171
      %s173 = smul.u32 256, %s14
      %v175 = vld [vmem:[%s166] sm:$0xf]
      %v176 = vld [vmem:[%s166 + $0x4] sm:$0xf]
      %v177 = vld [vmem:[%s166 + $0x8] sm:$0xf]
      %v178 = vld [vmem:[%s166 + $0xc] sm:$0xf]
      %v179 = vld [vmem:[%s166 + $0x10] sm:$0xf]
      %v180 = vld [vmem:[%s166 + $0x14] sm:$0xf]
      %v181 = vld [vmem:[%s166 + $0x18] sm:$0xf]
      %v182 = vld [vmem:[%s166 + $0x1c] sm:$0xf]
      %v183 = vld [vmem:[%s166 + $0x20] sm:$0xf]
      %v184 = vld [vmem:[%s166 + $0x24] sm:$0xf]
      %v185 = vld [vmem:[%s166 + $0x28] sm:$0xf]
      %v186 = vld [vmem:[%s166 + $0x2c] sm:$0xf]
      %v187 = vld [vmem:[%s166 + $0x30] sm:$0xf]
      %v188 = vld [vmem:[%s166 + $0x34] sm:$0xf]
      %v189 = vld [vmem:[%s166 + $0x38] sm:$0xf]
      %v190 = vld [vmem:[%s166 + $0x3c] sm:$0xf]
      %v191 = vld [vmem:[%s166 + $0x40] sm:$0xf]
      %v192 = vld [vmem:[%s166 + $0x44] sm:$0xf]
      %v193 = vld [vmem:[%s166 + $0x48] sm:$0xf]
      %v194 = vld [vmem:[%s166 + $0x4c] sm:$0xf]
      %v195 = vld [vmem:[%s166 + $0x50] sm:$0xf]
      %v196 = vld [vmem:[%s166 + $0x54] sm:$0xf]
      %v197 = vld [vmem:[%s166 + $0x58] sm:$0xf]
      %v198 = vld [vmem:[%s166 + $0x5c] sm:$0xf]
      %v199 = vld [vmem:[%s166 + $0x60] sm:$0xf]
      %v200 = vld [vmem:[%s166 + $0x64] sm:$0xf]
      %v201 = vld [vmem:[%s166 + $0x68] sm:$0xf]
      %v202 = vld [vmem:[%s166 + $0x6c] sm:$0xf]
      %v203 = vld [vmem:[%s166 + $0x70] sm:$0xf]
      %v204 = vld [vmem:[%s166 + $0x74] sm:$0xf]
      %v205 = vld [vmem:[%s166 + $0x78] sm:$0xf]
      %v206 = vld [vmem:[%s166 + $0x7c] sm:$0xf]
      %v207 = vld [vmem:[%s166 + $0x80] sm:$0xf]
      %v208 = vld [vmem:[%s166 + $0x84] sm:$0xf]
      %v209 = vld [vmem:[%s166 + $0x88] sm:$0xf]
      %v210 = vld [vmem:[%s166 + $0x8c] sm:$0xf]
      %v211 = vld [vmem:[%s166 + $0x90] sm:$0xf]
      %v212 = vld [vmem:[%s166 + $0x94] sm:$0xf]
      %v213 = vld [vmem:[%s166 + $0x98] sm:$0xf]
      %v214 = vld [vmem:[%s166 + $0x9c] sm:$0xf]
      %v215 = vld [vmem:[%s166 + $0xa0] sm:$0xf]
      %v216 = vld [vmem:[%s166 + $0xa4] sm:$0xf]
      %v217 = vld [vmem:[%s166 + $0xa8] sm:$0xf]
      %v218 = vld [vmem:[%s166 + $0xac] sm:$0xf]
      %v219 = vld [vmem:[%s166 + $0xb0] sm:$0xf]
      %v220 = vld [vmem:[%s166 + $0xb4] sm:$0xf]
      %v221 = vld [vmem:[%s166 + $0xb8] sm:$0xf]
      %v222 = vld [vmem:[%s166 + $0xbc] sm:$0xf]
      %v223 = vld [vmem:[%s166 + $0xc0] sm:$0xf]
      %v224 = vld [vmem:[%s166 + $0xc4] sm:$0xf]
      %v225 = vld [vmem:[%s166 + $0xc8] sm:$0xf]
      %v226 = vld [vmem:[%s166 + $0xcc] sm:$0xf]
      %v227 = vld [vmem:[%s166 + $0xd0] sm:$0xf]
      %v228 = vld [vmem:[%s166 + $0xd4] sm:$0xf]
      %v229 = vld [vmem:[%s166 + $0xd8] sm:$0xf]
      %v230 = vld [vmem:[%s166 + $0xdc] sm:$0xf]
      %v231 = vld [vmem:[%s166 + $0xe0] sm:$0xf]
      %v232 = vld [vmem:[%s166 + $0xe4] sm:$0xf]
      %v233 = vld [vmem:[%s166 + $0xe8] sm:$0xf]
      %v234 = vld [vmem:[%s166 + $0xec] sm:$0xf]
      %v235 = vld [vmem:[%s166 + $0xf0] sm:$0xf]
      %v236 = vld [vmem:[%s166 + $0xf4] sm:$0xf]
      %v237 = vld [vmem:[%s166 + $0xf8] sm:$0xf]
      %v238 = vld [vmem:[%s166 + $0xfc] sm:$0xf]
      %v239 = vld [vmem:[%s166 + $0x100] sm:$0xf]
      %v240 = vld [vmem:[%s166 + $0x104] sm:$0xf]
      %v241 = vld [vmem:[%s166 + $0x108] sm:$0xf]
      %v242 = vld [vmem:[%s166 + $0x10c] sm:$0xf]
      %v243 = vld [vmem:[%s166 + $0x110] sm:$0xf]
      %v244 = vld [vmem:[%s166 + $0x114] sm:$0xf]
      %v245 = vld [vmem:[%s166 + $0x118] sm:$0xf]
      %v246 = vld [vmem:[%s166 + $0x11c] sm:$0xf]
      %v247 = vld [vmem:[%s166 + $0x120] sm:$0xf]
      %v248 = vld [vmem:[%s166 + $0x124] sm:$0xf]
      %v249 = vld [vmem:[%s166 + $0x128] sm:$0xf]
      %v250 = vld [vmem:[%s166 + $0x12c] sm:$0xf]
      %v251 = vld [vmem:[%s166 + $0x130] sm:$0xf]
      %v252 = vld [vmem:[%s166 + $0x134] sm:$0xf]
      %v253 = vld [vmem:[%s166 + $0x138] sm:$0xf]
      %v254 = vld [vmem:[%s166 + $0x13c] sm:$0xf]
      %v255 = vld [vmem:[%s166 + $0x140] sm:$0xf]
      %v256 = vld [vmem:[%s166 + $0x144] sm:$0xf]
      %v257 = vld [vmem:[%s166 + $0x148] sm:$0xf]
      %v258 = vld [vmem:[%s166 + $0x14c] sm:$0xf]
      %v259 = vld [vmem:[%s166 + $0x150] sm:$0xf]
      %v260 = vld [vmem:[%s166 + $0x154] sm:$0xf]
      %v261 = vld [vmem:[%s166 + $0x158] sm:$0xf]
      %v262 = vld [vmem:[%s166 + $0x15c] sm:$0xf]
      %v263 = vld [vmem:[%s166 + $0x160] sm:$0xf]
      %v264 = vld [vmem:[%s166 + $0x164] sm:$0xf]
      %v265 = vld [vmem:[%s166 + $0x168] sm:$0xf]
      %v266 = vld [vmem:[%s166 + $0x16c] sm:$0xf]
      %v267 = vld [vmem:[%s166 + $0x170] sm:$0xf]
      %v268 = vld [vmem:[%s166 + $0x174] sm:$0xf]
      %v269 = vld [vmem:[%s166 + $0x178] sm:$0xf]
      %v270 = vld [vmem:[%s166 + $0x17c] sm:$0xf]
      %v271 = vld [vmem:[%s166 + $0x180] sm:$0xf]
      %v272 = vld [vmem:[%s166 + $0x184] sm:$0xf]
      %v273 = vld [vmem:[%s166 + $0x188] sm:$0xf]
      %v274 = vld [vmem:[%s166 + $0x18c] sm:$0xf]
      %v275 = vld [vmem:[%s166 + $0x190] sm:$0xf]
      %v276 = vld [vmem:[%s166 + $0x194] sm:$0xf]
      %v277 = vld [vmem:[%s166 + $0x198] sm:$0xf]
      %v278 = vld [vmem:[%s166 + $0x19c] sm:$0xf]
      %v279 = vld [vmem:[%s166 + $0x1a0] sm:$0xf]
      %v280 = vld [vmem:[%s166 + $0x1a4] sm:$0xf]
      %v281 = vld [vmem:[%s166 + $0x1a8] sm:$0xf]
      %v282 = vld [vmem:[%s166 + $0x1ac] sm:$0xf]
      %v283 = vld [vmem:[%s166 + $0x1b0] sm:$0xf]
      %v284 = vld [vmem:[%s166 + $0x1b4] sm:$0xf]
      %v285 = vld [vmem:[%s166 + $0x1b8] sm:$0xf]
      %v286 = vld [vmem:[%s166 + $0x1bc] sm:$0xf]
      %v287 = vld [vmem:[%s166 + $0x1c0] sm:$0xf]
      %v288 = vld [vmem:[%s166 + $0x1c4] sm:$0xf]
      %v289 = vld [vmem:[%s166 + $0x1c8] sm:$0xf]
      %v290 = vld [vmem:[%s166 + $0x1cc] sm:$0xf]
      %v291 = vld [vmem:[%s166 + $0x1d0] sm:$0xf]
      %v292 = vld [vmem:[%s166 + $0x1d4] sm:$0xf]
      %v293 = vld [vmem:[%s166 + $0x1d8] sm:$0xf]
      %v294 = vld [vmem:[%s166 + $0x1dc] sm:$0xf]
      %v295 = vld [vmem:[%s166 + $0x1e0] sm:$0xf]
      %v296 = vld [vmem:[%s166 + $0x1e4] sm:$0xf]
      %v297 = vld [vmem:[%s166 + $0x1e8] sm:$0xf]
      %v298 = vld [vmem:[%s166 + $0x1ec] sm:$0xf]
      %v299 = vld [vmem:[%s166 + $0x1f0] sm:$0xf]
      %v300 = vld [vmem:[%s166 + $0x1f4] sm:$0xf]
      %v301 = vld [vmem:[%s166 + $0x1f8] sm:$0xf]
      %v302 = vld [vmem:[%s166 + $0x1fc] sm:$0xf]
      %v303 = vld [vmem:[%s166 + $0x200] sm:$0xf]
      %v304 = vld [vmem:[%s166 + $0x204] sm:$0xf]
      %v305 = vld [vmem:[%s166 + $0x208] sm:$0xf]
      %v306 = vld [vmem:[%s166 + $0x20c] sm:$0xf]
      %v307 = vld [vmem:[%s166 + $0x210] sm:$0xf]
      %v308 = vld [vmem:[%s166 + $0x214] sm:$0xf]
      %v309 = vld [vmem:[%s166 + $0x218] sm:$0xf]
      %v310 = vld [vmem:[%s166 + $0x21c] sm:$0xf]
      %v311 = vld [vmem:[%s166 + $0x220] sm:$0xf]
      %v312 = vld [vmem:[%s166 + $0x224] sm:$0xf]
      %v313 = vld [vmem:[%s166 + $0x228] sm:$0xf]
      %v314 = vld [vmem:[%s166 + $0x22c] sm:$0xf]
      %v315 = vld [vmem:[%s166 + $0x230] sm:$0xf]
      %v316 = vld [vmem:[%s166 + $0x234] sm:$0xf]
      %v317 = vld [vmem:[%s166 + $0x238] sm:$0xf]
      %v318 = vld [vmem:[%s166 + $0x23c] sm:$0xf]
      %v319 = vld [vmem:[%s166 + $0x240] sm:$0xf]
      %v320 = vld [vmem:[%s166 + $0x244] sm:$0xf]
      %v321 = vld [vmem:[%s166 + $0x248] sm:$0xf]
      %v322 = vld [vmem:[%s166 + $0x24c] sm:$0xf]
      %v323 = vld [vmem:[%s166 + $0x250] sm:$0xf]
      %v324 = vld [vmem:[%s166 + $0x254] sm:$0xf]
      %v325 = vld [vmem:[%s166 + $0x258] sm:$0xf]
      %v326 = vld [vmem:[%s166 + $0x25c] sm:$0xf]
      %v327 = vld [vmem:[%s166 + $0x260] sm:$0xf]
      %v328 = vld [vmem:[%s166 + $0x264] sm:$0xf]
      %v329 = vld [vmem:[%s166 + $0x268] sm:$0xf]
      %v330 = vld [vmem:[%s166 + $0x26c] sm:$0xf]
      %v331 = vld [vmem:[%s166 + $0x270] sm:$0xf]
      %v332 = vld [vmem:[%s166 + $0x274] sm:$0xf]
      %v333 = vld [vmem:[%s166 + $0x278] sm:$0xf]
      %v334 = vld [vmem:[%s166 + $0x27c] sm:$0xf]
      %v335 = vld [vmem:[%s166 + $0x280] sm:$0xf]
      %v336 = vld [vmem:[%s166 + $0x284] sm:$0xf]
      %v337 = vld [vmem:[%s166 + $0x288] sm:$0xf]
      %v338 = vld [vmem:[%s166 + $0x28c] sm:$0xf]
      %v339 = vld [vmem:[%s166 + $0x290] sm:$0xf]
      %v340 = vld [vmem:[%s166 + $0x294] sm:$0xf]
      %v341 = vld [vmem:[%s166 + $0x298] sm:$0xf]
      %v342 = vld [vmem:[%s166 + $0x29c] sm:$0xf]
      %v343 = vld [vmem:[%s166 + $0x2a0] sm:$0xf]
      %v344 = vld [vmem:[%s166 + $0x2a4] sm:$0xf]
      %v345 = vld [vmem:[%s166 + $0x2a8] sm:$0xf]
      %v346 = vld [vmem:[%s166 + $0x2ac] sm:$0xf]
      %v347 = vld [vmem:[%s166 + $0x2b0] sm:$0xf]
      %v348 = vld [vmem:[%s166 + $0x2b4] sm:$0xf]
      %v349 = vld [vmem:[%s166 + $0x2b8] sm:$0xf]
      %v350 = vld [vmem:[%s166 + $0x2bc] sm:$0xf]
      %v351 = vld [vmem:[%s166 + $0x2c0] sm:$0xf]
      %v352 = vld [vmem:[%s166 + $0x2c4] sm:$0xf]
      %v353 = vld [vmem:[%s166 + $0x2c8] sm:$0xf]
      %v354 = vld [vmem:[%s166 + $0x2cc] sm:$0xf]
      %v355 = vld [vmem:[%s166 + $0x2d0] sm:$0xf]
      %v356 = vld [vmem:[%s166 + $0x2d4] sm:$0xf]
      %v357 = vld [vmem:[%s166 + $0x2d8] sm:$0xf]
      %v358 = vld [vmem:[%s166 + $0x2dc] sm:$0xf]
      %v359 = vld [vmem:[%s166 + $0x2e0] sm:$0xf]
      %v360 = vld [vmem:[%s166 + $0x2e4] sm:$0xf]
      %v361 = vld [vmem:[%s166 + $0x2e8] sm:$0xf]
      %v362 = vld [vmem:[%s166 + $0x2ec] sm:$0xf]
      %v363 = vld [vmem:[%s166 + $0x2f0] sm:$0xf]
      %v364 = vld [vmem:[%s166 + $0x2f4] sm:$0xf]
      %v365 = vld [vmem:[%s166 + $0x2f8] sm:$0xf]
      %v366 = vld [vmem:[%s166 + $0x2fc] sm:$0xf]
      %v367 = vld [vmem:[%s166 + $0x300] sm:$0xf]
      %v368 = vld [vmem:[%s166 + $0x304] sm:$0xf]
      %v369 = vld [vmem:[%s166 + $0x308] sm:$0xf]
      %v370 = vld [vmem:[%s166 + $0x30c] sm:$0xf]
      %v371 = vld [vmem:[%s166 + $0x310] sm:$0xf]
      %v372 = vld [vmem:[%s166 + $0x314] sm:$0xf]
      %v373 = vld [vmem:[%s166 + $0x318] sm:$0xf]
      %v374 = vld [vmem:[%s166 + $0x31c] sm:$0xf]
      %v375 = vld [vmem:[%s166 + $0x320] sm:$0xf]
      %v376 = vld [vmem:[%s166 + $0x324] sm:$0xf]
      %v377 = vld [vmem:[%s166 + $0x328] sm:$0xf]
      %v378 = vld [vmem:[%s166 + $0x32c] sm:$0xf]
      %v379 = vld [vmem:[%s166 + $0x330] sm:$0xf]
      %v380 = vld [vmem:[%s166 + $0x334] sm:$0xf]
      %v381 = vld [vmem:[%s166 + $0x338] sm:$0xf]
      %v382 = vld [vmem:[%s166 + $0x33c] sm:$0xf]
      %v383 = vld [vmem:[%s166 + $0x340] sm:$0xf]
      %v384 = vld [vmem:[%s166 + $0x344] sm:$0xf]
      %v385 = vld [vmem:[%s166 + $0x348] sm:$0xf]
      %v386 = vld [vmem:[%s166 + $0x34c] sm:$0xf]
      %v387 = vld [vmem:[%s166 + $0x350] sm:$0xf]
      %v388 = vld [vmem:[%s166 + $0x354] sm:$0xf]
      %v389 = vld [vmem:[%s166 + $0x358] sm:$0xf]
      %v390 = vld [vmem:[%s166 + $0x35c] sm:$0xf]
      %v391 = vld [vmem:[%s166 + $0x360] sm:$0xf]
      %v392 = vld [vmem:[%s166 + $0x364] sm:$0xf]
      %v393 = vld [vmem:[%s166 + $0x368] sm:$0xf]
      %v394 = vld [vmem:[%s166 + $0x36c] sm:$0xf]
      %v395 = vld [vmem:[%s166 + $0x370] sm:$0xf]
      %v396 = vld [vmem:[%s166 + $0x374] sm:$0xf]
      %v397 = vld [vmem:[%s166 + $0x378] sm:$0xf]
      %v398 = vld [vmem:[%s166 + $0x37c] sm:$0xf]
      %v399 = vld [vmem:[%s166 + $0x380] sm:$0xf]
      %v400 = vld [vmem:[%s166 + $0x384] sm:$0xf]
      %v401 = vld [vmem:[%s166 + $0x388] sm:$0xf]
      %v402 = vld [vmem:[%s166 + $0x38c] sm:$0xf]
      %v403 = vld [vmem:[%s166 + $0x390] sm:$0xf]
      %v404 = vld [vmem:[%s166 + $0x394] sm:$0xf]
      %v405 = vld [vmem:[%s166 + $0x398] sm:$0xf]
      %v406 = vld [vmem:[%s166 + $0x39c] sm:$0xf]
      %v407 = vld [vmem:[%s166 + $0x3a0] sm:$0xf]
      %v408 = vld [vmem:[%s166 + $0x3a4] sm:$0xf]
      %v409 = vld [vmem:[%s166 + $0x3a8] sm:$0xf]
      %v410 = vld [vmem:[%s166 + $0x3ac] sm:$0xf]
      %v411 = vld [vmem:[%s166 + $0x3b0] sm:$0xf]
      %v412 = vld [vmem:[%s166 + $0x3b4] sm:$0xf]
      %v413 = vld [vmem:[%s166 + $0x3b8] sm:$0xf]
      %v414 = vld [vmem:[%s166 + $0x3bc] sm:$0xf]
      %v415 = vld [vmem:[%s166 + $0x3c0] sm:$0xf]
      %v416 = vld [vmem:[%s166 + $0x3c4] sm:$0xf]
      %v417 = vld [vmem:[%s166 + $0x3c8] sm:$0xf]
      %v418 = vld [vmem:[%s166 + $0x3cc] sm:$0xf]
      %v419 = vld [vmem:[%s166 + $0x3d0] sm:$0xf]
      %v420 = vld [vmem:[%s166 + $0x3d4] sm:$0xf]
      %v421 = vld [vmem:[%s166 + $0x3d8] sm:$0xf]
      %v422 = vld [vmem:[%s166 + $0x3dc] sm:$0xf]
      %v423 = vld [vmem:[%s166 + $0x3e0] sm:$0xf]
      %v424 = vld [vmem:[%s166 + $0x3e4] sm:$0xf]
      %v425 = vld [vmem:[%s166 + $0x3e8] sm:$0xf]
      %v426 = vld [vmem:[%s166 + $0x3ec] sm:$0xf]
      %v427 = vld [vmem:[%s166 + $0x3f0] sm:$0xf]
      %v428 = vld [vmem:[%s166 + $0x3f4] sm:$0xf]
      %v429 = vld [vmem:[%s166 + $0x3f8] sm:$0xf]
      %v430 = vld [vmem:[%s166 + $0x3fc] sm:$0xf]
      %v431 = vld [vmem:[%s1] sm:$0xf]
      %v432 = vld [vmem:[%s1 + $0x4] sm:$0xf]
      %v433 = vld [vmem:[%s1 + $0x8] sm:$0xf]
      %v434 = vld [vmem:[%s1 + $0xc] sm:$0xf]
      %v435 = vld [vmem:[%s1 + $0x10] sm:$0xf]
      %v436 = vld [vmem:[%s1 + $0x14] sm:$0xf]
      %v437 = vld [vmem:[%s1 + $0x18] sm:$0xf]
      %v438 = vld [vmem:[%s1 + $0x1c] sm:$0xf]
      %v439 = vld [vmem:[%s1 + $0x20] sm:$0xf]
      %v440 = vld [vmem:[%s1 + $0x24] sm:$0xf]
      %v441 = vld [vmem:[%s1 + $0x28] sm:$0xf]
      %v442 = vld [vmem:[%s1 + $0x2c] sm:$0xf]
      %v443 = vld [vmem:[%s1 + $0x30] sm:$0xf]
      %v444 = vld [vmem:[%s1 + $0x34] sm:$0xf]
      %v445 = vld [vmem:[%s1 + $0x38] sm:$0xf]
      %v446 = vld [vmem:[%s1 + $0x3c] sm:$0xf]
      %v447 = vld [vmem:[%s2] sm:$0x1]
      %v449 = vlaneseq
      %v450 = vshrl.u32 %v449, 7
      %v451 = vsub.s32 0, %v450
      %v452 = vrot.slane %v447, %v451
      %v710 = vunpack.c.l.b16 %v175
      %v711 = vunpack.c.l.b16 %v176
      %v712 = vunpack.c.l.b16 %v177
      %v713 = vunpack.c.l.b16 %v178
      %v714 = vunpack.c.l.b16 %v179
      %v715 = vunpack.c.l.b16 %v180
      %v716 = vunpack.c.l.b16 %v181
      %v717 = vunpack.c.l.b16 %v182
      %v718 = vunpack.c.l.b16 %v183
      %v719 = vunpack.c.l.b16 %v184
      %v720 = vunpack.c.l.b16 %v185
      %v721 = vunpack.c.l.b16 %v186
      %v722 = vunpack.c.l.b16 %v187
      %v723 = vunpack.c.l.b16 %v188
      %v724 = vunpack.c.l.b16 %v189
      %v725 = vunpack.c.l.b16 %v190
      %v726 = vunpack.c.l.b16 %v191
      %v727 = vunpack.c.l.b16 %v192
      %v728 = vunpack.c.l.b16 %v193
      %v729 = vunpack.c.l.b16 %v194
      %v730 = vunpack.c.l.b16 %v195
      %v731 = vunpack.c.l.b16 %v196
      %v732 = vunpack.c.l.b16 %v197
      %v733 = vunpack.c.l.b16 %v198
      %v734 = vunpack.c.l.b16 %v199
      %v735 = vunpack.c.l.b16 %v200
      %v736 = vunpack.c.l.b16 %v201
      %v737 = vunpack.c.l.b16 %v202
      %v738 = vunpack.c.l.b16 %v203
      %v739 = vunpack.c.l.b16 %v204
      %v740 = vunpack.c.l.b16 %v205
      %v741 = vunpack.c.l.b16 %v206
      %v742 = vunpack.c.l.b16 %v207
      %v743 = vunpack.c.l.b16 %v208
      %v744 = vunpack.c.l.b16 %v209
      %v745 = vunpack.c.l.b16 %v210
      %v746 = vunpack.c.l.b16 %v211
      %v747 = vunpack.c.l.b16 %v212
      %v748 = vunpack.c.l.b16 %v213
      %v749 = vunpack.c.l.b16 %v214
      %v750 = vunpack.c.l.b16 %v215
      %v751 = vunpack.c.l.b16 %v216
      %v752 = vunpack.c.l.b16 %v217
      %v753 = vunpack.c.l.b16 %v218
      %v754 = vunpack.c.l.b16 %v219
      %v755 = vunpack.c.l.b16 %v220
      %v756 = vunpack.c.l.b16 %v221
      %v757 = vunpack.c.l.b16 %v222
      %v758 = vunpack.c.l.b16 %v223
      %v759 = vunpack.c.l.b16 %v224
      %v760 = vunpack.c.l.b16 %v225
      %v761 = vunpack.c.l.b16 %v226
      %v762 = vunpack.c.l.b16 %v227
      %v763 = vunpack.c.l.b16 %v228
      %v764 = vunpack.c.l.b16 %v229
      %v765 = vunpack.c.l.b16 %v230
      %v766 = vunpack.c.l.b16 %v231
      %v767 = vunpack.c.l.b16 %v232
      %v768 = vunpack.c.l.b16 %v233
      %v769 = vunpack.c.l.b16 %v234
      %v770 = vunpack.c.l.b16 %v235
      %v771 = vunpack.c.l.b16 %v236
      %v772 = vunpack.c.l.b16 %v237
      %v773 = vunpack.c.l.b16 %v238
      %v774 = vunpack.c.l.b16 %v239
      %v775 = vunpack.c.l.b16 %v240
      %v776 = vunpack.c.l.b16 %v241
      %v777 = vunpack.c.l.b16 %v242
      %v778 = vunpack.c.l.b16 %v243
      %v779 = vunpack.c.l.b16 %v244
      %v780 = vunpack.c.l.b16 %v245
      %v781 = vunpack.c.l.b16 %v246
      %v782 = vunpack.c.l.b16 %v247
      %v783 = vunpack.c.l.b16 %v248
      %v784 = vunpack.c.l.b16 %v249
      %v785 = vunpack.c.l.b16 %v250
      %v786 = vunpack.c.l.b16 %v251
      %v787 = vunpack.c.l.b16 %v252
      %v788 = vunpack.c.l.b16 %v253
      %v789 = vunpack.c.l.b16 %v254
      %v790 = vunpack.c.l.b16 %v255
      %v791 = vunpack.c.l.b16 %v256
      %v792 = vunpack.c.l.b16 %v257
      %v793 = vunpack.c.l.b16 %v258
      %v794 = vunpack.c.l.b16 %v259
      %v795 = vunpack.c.l.b16 %v260
      %v796 = vunpack.c.l.b16 %v261
      %v797 = vunpack.c.l.b16 %v262
      %v798 = vunpack.c.l.b16 %v263
      %v799 = vunpack.c.l.b16 %v264
      %v800 = vunpack.c.l.b16 %v265
      %v801 = vunpack.c.l.b16 %v266
      %v802 = vunpack.c.l.b16 %v267
      %v803 = vunpack.c.l.b16 %v268
      %v804 = vunpack.c.l.b16 %v269
      %v805 = vunpack.c.l.b16 %v270
      %v806 = vunpack.c.l.b16 %v271
      %v807 = vunpack.c.l.b16 %v272
      %v808 = vunpack.c.l.b16 %v273
      %v809 = vunpack.c.l.b16 %v274
      %v810 = vunpack.c.l.b16 %v275
      %v811 = vunpack.c.l.b16 %v276
      %v812 = vunpack.c.l.b16 %v277
      %v813 = vunpack.c.l.b16 %v278
      %v814 = vunpack.c.l.b16 %v279
      %v815 = vunpack.c.l.b16 %v280
      %v816 = vunpack.c.l.b16 %v281
      %v817 = vunpack.c.l.b16 %v282
      %v818 = vunpack.c.l.b16 %v283
      %v819 = vunpack.c.l.b16 %v284
      %v820 = vunpack.c.l.b16 %v285
      %v821 = vunpack.c.l.b16 %v286
      %v822 = vunpack.c.l.b16 %v287
      %v823 = vunpack.c.l.b16 %v288
      %v824 = vunpack.c.l.b16 %v289
      %v825 = vunpack.c.l.b16 %v290
      %v826 = vunpack.c.l.b16 %v291
      %v827 = vunpack.c.l.b16 %v292
      %v828 = vunpack.c.l.b16 %v293
      %v829 = vunpack.c.l.b16 %v294
      %v830 = vunpack.c.l.b16 %v295
      %v831 = vunpack.c.l.b16 %v296
      %v832 = vunpack.c.l.b16 %v297
      %v833 = vunpack.c.l.b16 %v298
      %v834 = vunpack.c.l.b16 %v299
      %v835 = vunpack.c.l.b16 %v300
      %v836 = vunpack.c.l.b16 %v301
      %v837 = vunpack.c.l.b16 %v302
      %v838 = vunpack.c.l.b16 %v303
      %v839 = vunpack.c.l.b16 %v304
      %v840 = vunpack.c.l.b16 %v305
      %v841 = vunpack.c.l.b16 %v306
      %v842 = vunpack.c.l.b16 %v307
      %v843 = vunpack.c.l.b16 %v308
      %v844 = vunpack.c.l.b16 %v309
      %v845 = vunpack.c.l.b16 %v310
      %v846 = vunpack.c.l.b16 %v311
      %v847 = vunpack.c.l.b16 %v312
      %v848 = vunpack.c.l.b16 %v313
      %v849 = vunpack.c.l.b16 %v314
      %v850 = vunpack.c.l.b16 %v315
      %v851 = vunpack.c.l.b16 %v316
      %v852 = vunpack.c.l.b16 %v317
      %v853 = vunpack.c.l.b16 %v318
      %v854 = vunpack.c.l.b16 %v319
      %v855 = vunpack.c.l.b16 %v320
      %v856 = vunpack.c.l.b16 %v321
      %v857 = vunpack.c.l.b16 %v322
      %v858 = vunpack.c.l.b16 %v323
      %v859 = vunpack.c.l.b16 %v324
      %v860 = vunpack.c.l.b16 %v325
      %v861 = vunpack.c.l.b16 %v326
      %v862 = vunpack.c.l.b16 %v327
      %v863 = vunpack.c.l.b16 %v328
      %v864 = vunpack.c.l.b16 %v329
      %v865 = vunpack.c.l.b16 %v330
      %v866 = vunpack.c.l.b16 %v331
      %v867 = vunpack.c.l.b16 %v332
      %v868 = vunpack.c.l.b16 %v333
      %v869 = vunpack.c.l.b16 %v334
      %v870 = vunpack.c.l.b16 %v335
      %v871 = vunpack.c.l.b16 %v336
      %v872 = vunpack.c.l.b16 %v337
      %v873 = vunpack.c.l.b16 %v338
      %v874 = vunpack.c.l.b16 %v339
      %v875 = vunpack.c.l.b16 %v340
      %v876 = vunpack.c.l.b16 %v341
      %v877 = vunpack.c.l.b16 %v342
      %v878 = vunpack.c.l.b16 %v343
      %v879 = vunpack.c.l.b16 %v344
      %v880 = vunpack.c.l.b16 %v345
      %v881 = vunpack.c.l.b16 %v346
      %v882 = vunpack.c.l.b16 %v347
      %v883 = vunpack.c.l.b16 %v348
      %v884 = vunpack.c.l.b16 %v349
      %v885 = vunpack.c.l.b16 %v350
      %v886 = vunpack.c.l.b16 %v351
      %v887 = vunpack.c.l.b16 %v352
      %v888 = vunpack.c.l.b16 %v353
      %v889 = vunpack.c.l.b16 %v354
      %v890 = vunpack.c.l.b16 %v355
      %v891 = vunpack.c.l.b16 %v356
      %v892 = vunpack.c.l.b16 %v357
      %v893 = vunpack.c.l.b16 %v358
      %v894 = vunpack.c.l.b16 %v359
      %v895 = vunpack.c.l.b16 %v360
      %v896 = vunpack.c.l.b16 %v361
      %v897 = vunpack.c.l.b16 %v362
      %v898 = vunpack.c.l.b16 %v363
      %v899 = vunpack.c.l.b16 %v364
      %v900 = vunpack.c.l.b16 %v365
      %v901 = vunpack.c.l.b16 %v366
      %v902 = vunpack.c.l.b16 %v367
      %v903 = vunpack.c.l.b16 %v368
      %v904 = vunpack.c.l.b16 %v369
      %v905 = vunpack.c.l.b16 %v370
      %v906 = vunpack.c.l.b16 %v371
      %v907 = vunpack.c.l.b16 %v372
      %v908 = vunpack.c.l.b16 %v373
      %v909 = vunpack.c.l.b16 %v374
      %v910 = vunpack.c.l.b16 %v375
      %v911 = vunpack.c.l.b16 %v376
      %v912 = vunpack.c.l.b16 %v377
      %v913 = vunpack.c.l.b16 %v378
      %v914 = vunpack.c.l.b16 %v379
      %v915 = vunpack.c.l.b16 %v380
      %v916 = vunpack.c.l.b16 %v381
      %v917 = vunpack.c.l.b16 %v382
      %v918 = vunpack.c.l.b16 %v383
      %v919 = vunpack.c.l.b16 %v384
      %v920 = vunpack.c.l.b16 %v385
      %v921 = vunpack.c.l.b16 %v386
      %v922 = vunpack.c.l.b16 %v387
      %v923 = vunpack.c.l.b16 %v388
      %v924 = vunpack.c.l.b16 %v389
      %v925 = vunpack.c.l.b16 %v390
      %v926 = vunpack.c.l.b16 %v391
      %v927 = vunpack.c.l.b16 %v392
      %v928 = vunpack.c.l.b16 %v393
      %v929 = vunpack.c.l.b16 %v394
      %v930 = vunpack.c.l.b16 %v395
      %v931 = vunpack.c.l.b16 %v396
      %v932 = vunpack.c.l.b16 %v397
      %v933 = vunpack.c.l.b16 %v398
      %v934 = vunpack.c.l.b16 %v399
      %v935 = vunpack.c.l.b16 %v400
      %v936 = vunpack.c.l.b16 %v401
      %v937 = vunpack.c.l.b16 %v402
      %v938 = vunpack.c.l.b16 %v403
      %v939 = vunpack.c.l.b16 %v404
      %v940 = vunpack.c.l.b16 %v405
      %v941 = vunpack.c.l.b16 %v406
      %v942 = vunpack.c.l.b16 %v407
      %v943 = vunpack.c.l.b16 %v408
      %v944 = vunpack.c.l.b16 %v409
      %v945 = vunpack.c.l.b16 %v410
      %v946 = vunpack.c.l.b16 %v411
      %v947 = vunpack.c.l.b16 %v412
      %v948 = vunpack.c.l.b16 %v413
      %v949 = vunpack.c.l.b16 %v414
      %v950 = vunpack.c.l.b16 %v415
      %v951 = vunpack.c.l.b16 %v416
      %v952 = vunpack.c.l.b16 %v417
      %v953 = vunpack.c.l.b16 %v418
      %v954 = vunpack.c.l.b16 %v419
      %v955 = vunpack.c.l.b16 %v420
      %v956 = vunpack.c.l.b16 %v421
      %v957 = vunpack.c.l.b16 %v422
      %v958 = vunpack.c.l.b16 %v423
      %v959 = vunpack.c.l.b16 %v424
      %v960 = vunpack.c.l.b16 %v425
      %v961 = vunpack.c.l.b16 %v426
      %v962 = vunpack.c.l.b16 %v427
      %v963 = vunpack.c.l.b16 %v428
      %v964 = vunpack.c.l.b16 %v429
      %v965 = vunpack.c.l.b16 %v430
      %v966 = vpack.c.b16 %v711, %v710
      %v967 = vpack.c.b16 %v713, %v712
      %v968 = vpack.c.b16 %v715, %v714
      %v969 = vpack.c.b16 %v717, %v716
      %v970 = vpack.c.b16 %v719, %v718
      %v971 = vpack.c.b16 %v721, %v720
      %v972 = vpack.c.b16 %v723, %v722
      %v973 = vpack.c.b16 %v725, %v724
      %v974 = vpack.c.b16 %v727, %v726
      %v975 = vpack.c.b16 %v729, %v728
      %v976 = vpack.c.b16 %v731, %v730
      %v977 = vpack.c.b16 %v733, %v732
      %v978 = vpack.c.b16 %v735, %v734
      %v979 = vpack.c.b16 %v737, %v736
      %v980 = vpack.c.b16 %v739, %v738
      %v981 = vpack.c.b16 %v741, %v740
      %v982 = vpack.c.b16 %v743, %v742
      %v983 = vpack.c.b16 %v745, %v744
      %v984 = vpack.c.b16 %v747, %v746
      %v985 = vpack.c.b16 %v749, %v748
      %v986 = vpack.c.b16 %v751, %v750
      %v987 = vpack.c.b16 %v753, %v752
      %v988 = vpack.c.b16 %v755, %v754
      %v989 = vpack.c.b16 %v757, %v756
      %v990 = vpack.c.b16 %v759, %v758
      %v991 = vpack.c.b16 %v761, %v760
      %v992 = vpack.c.b16 %v763, %v762
      %v993 = vpack.c.b16 %v765, %v764
      %v994 = vpack.c.b16 %v767, %v766
      %v995 = vpack.c.b16 %v769, %v768
      %v996 = vpack.c.b16 %v771, %v770
      %v997 = vpack.c.b16 %v773, %v772
      %v998 = vpack.c.b16 %v775, %v774
      %v999 = vpack.c.b16 %v777, %v776
      %v1000 = vpack.c.b16 %v779, %v778
      %v1001 = vpack.c.b16 %v781, %v780
      %v1002 = vpack.c.b16 %v783, %v782
      %v1003 = vpack.c.b16 %v785, %v784
      %v1004 = vpack.c.b16 %v787, %v786
      %v1005 = vpack.c.b16 %v789, %v788
      %v1006 = vpack.c.b16 %v791, %v790
      %v1007 = vpack.c.b16 %v793, %v792
      %v1008 = vpack.c.b16 %v795, %v794
      %v1009 = vpack.c.b16 %v797, %v796
      %v1010 = vpack.c.b16 %v799, %v798
      %v1011 = vpack.c.b16 %v801, %v800
      %v1012 = vpack.c.b16 %v803, %v802
      %v1013 = vpack.c.b16 %v805, %v804
      %v1014 = vpack.c.b16 %v807, %v806
      %v1015 = vpack.c.b16 %v809, %v808
      %v1016 = vpack.c.b16 %v811, %v810
      %v1017 = vpack.c.b16 %v813, %v812
      %v1018 = vpack.c.b16 %v815, %v814
      %v1019 = vpack.c.b16 %v817, %v816
      %v1020 = vpack.c.b16 %v819, %v818
      %v1021 = vpack.c.b16 %v821, %v820
      %v1022 = vpack.c.b16 %v823, %v822
      %v1023 = vpack.c.b16 %v825, %v824
      %v1024 = vpack.c.b16 %v827, %v826
      %v1025 = vpack.c.b16 %v829, %v828
      %v1026 = vpack.c.b16 %v831, %v830
      %v1027 = vpack.c.b16 %v833, %v832
      %v1028 = vpack.c.b16 %v835, %v834
      %v1029 = vpack.c.b16 %v837, %v836
      %v1030 = vpack.c.b16 %v839, %v838
      %v1031 = vpack.c.b16 %v841, %v840
      %v1032 = vpack.c.b16 %v843, %v842
      %v1033 = vpack.c.b16 %v845, %v844
      %v1034 = vpack.c.b16 %v847, %v846
      %v1035 = vpack.c.b16 %v849, %v848
      %v1036 = vpack.c.b16 %v851, %v850
      %v1037 = vpack.c.b16 %v853, %v852
      %v1038 = vpack.c.b16 %v855, %v854
      %v1039 = vpack.c.b16 %v857, %v856
      %v1040 = vpack.c.b16 %v859, %v858
      %v1041 = vpack.c.b16 %v861, %v860
      %v1042 = vpack.c.b16 %v863, %v862
      %v1043 = vpack.c.b16 %v865, %v864
      %v1044 = vpack.c.b16 %v867, %v866
      %v1045 = vpack.c.b16 %v869, %v868
      %v1046 = vpack.c.b16 %v871, %v870
      %v1047 = vpack.c.b16 %v873, %v872
      %v1048 = vpack.c.b16 %v875, %v874
      %v1049 = vpack.c.b16 %v877, %v876
      %v1050 = vpack.c.b16 %v879, %v878
      %v1051 = vpack.c.b16 %v881, %v880
      %v1052 = vpack.c.b16 %v883, %v882
      %v1053 = vpack.c.b16 %v885, %v884
      %v1054 = vpack.c.b16 %v887, %v886
      %v1055 = vpack.c.b16 %v889, %v888
      %v1056 = vpack.c.b16 %v891, %v890
      %v1057 = vpack.c.b16 %v893, %v892
      %v1058 = vpack.c.b16 %v895, %v894
      %v1059 = vpack.c.b16 %v897, %v896
      %v1060 = vpack.c.b16 %v899, %v898
      %v1061 = vpack.c.b16 %v901, %v900
      %v1062 = vpack.c.b16 %v903, %v902
      %v1063 = vpack.c.b16 %v905, %v904
      %v1064 = vpack.c.b16 %v907, %v906
      %v1065 = vpack.c.b16 %v909, %v908
      %v1066 = vpack.c.b16 %v911, %v910
      %v1067 = vpack.c.b16 %v913, %v912
      %v1068 = vpack.c.b16 %v915, %v914
      %v1069 = vpack.c.b16 %v917, %v916
      %v1070 = vpack.c.b16 %v919, %v918
      %v1071 = vpack.c.b16 %v921, %v920
      %v1072 = vpack.c.b16 %v923, %v922
      %v1073 = vpack.c.b16 %v925, %v924
      %v1074 = vpack.c.b16 %v927, %v926
      %v1075 = vpack.c.b16 %v929, %v928
      %v1076 = vpack.c.b16 %v931, %v930
      %v1077 = vpack.c.b16 %v933, %v932
      %v1078 = vpack.c.b16 %v935, %v934
      %v1079 = vpack.c.b16 %v937, %v936
      %v1080 = vpack.c.b16 %v939, %v938
      %v1081 = vpack.c.b16 %v941, %v940
      %v1082 = vpack.c.b16 %v943, %v942
      %v1083 = vpack.c.b16 %v945, %v944
      %v1084 = vpack.c.b16 %v947, %v946
      %v1085 = vpack.c.b16 %v949, %v948
      %v1086 = vpack.c.b16 %v951, %v950
      %v1087 = vpack.c.b16 %v953, %v952
      %v1088 = vpack.c.b16 %v955, %v954
      %v1089 = vpack.c.b16 %v957, %v956
      %v1090 = vpack.c.b16 %v959, %v958
      %v1091 = vpack.c.b16 %v961, %v960
      %v1092 = vpack.c.b16 %v963, %v962
      %v1093 = vpack.c.b16 %v965, %v964
      %v1238 = vunpack.c.l.b16 %v431
      %v1239 = vunpack.c.l.b16 %v432
      %v1240 = vunpack.c.l.b16 %v433
      %v1241 = vunpack.c.l.b16 %v434
      %v1242 = vunpack.c.l.b16 %v435
      %v1243 = vunpack.c.l.b16 %v436
      %v1244 = vunpack.c.l.b16 %v437
      %v1245 = vunpack.c.l.b16 %v438
      %v1246 = vunpack.c.l.b16 %v439
      %v1247 = vunpack.c.l.b16 %v440
      %v1248 = vunpack.c.l.b16 %v441
      %v1249 = vunpack.c.l.b16 %v442
      %v1250 = vunpack.c.l.b16 %v443
      %v1251 = vunpack.c.l.b16 %v444
      %v1252 = vunpack.c.l.b16 %v445
      %v1253 = vunpack.c.l.b16 %v446
      %v1254 = vpack.c.b16 %v1239, %v1238
      %v1255 = vpack.c.b16 %v1241, %v1240
      %v1256 = vpack.c.b16 %v1243, %v1242
      %v1257 = vpack.c.b16 %v1245, %v1244
      %v1258 = vpack.c.b16 %v1247, %v1246
      %v1259 = vpack.c.b16 %v1249, %v1248
      %v1260 = vpack.c.b16 %v1251, %v1250
      %v1261 = vpack.c.b16 %v1253, %v1252
      %1270 = vmatprep.subr.bf16.mxu0 0
      %1271 = vmatpush1.bf16.msra.mxu0 %v1261
      %1272 = vmatprep.subr.bf16.mxu0 0
      %1273 = vmatpush1.bf16.msra.mxu0 %v1260
      %1274 = vmatprep.subr.bf16.mxu0 0
      %1275 = vmatpush1.bf16.msra.mxu0 %v1259
      %1276 = vmatprep.subr.bf16.mxu0 0
      %1277 = vmatpush1.bf16.msra.mxu0 %v1258
      %1278 = vmatprep.subr.bf16.mxu0 0
      %1279 = vmatpush1.bf16.msra.mxu0 %v1257
      %1280 = vmatprep.subr.bf16.mxu0 0
      %1281 = vmatpush1.bf16.msra.mxu0 %v1256
      %1282 = vmatprep.subr.bf16.mxu0 0
      %1283 = vmatpush1.bf16.msra.mxu0 %v1255
      %1284 = vmatprep.subr.bf16.mxu0 0
      %1285 = vmatpush1.bf16.msra.mxu0 %v1254
      %1286 = vmatprep.subr.bf16.mxu0 0
      %1287 = vmatpush2.bf16.msra.mxu0 0
      %1288 = vmatprep.subr.bf16.mxu0 0
      %1289 = vmatpush2.bf16.msra.mxu0 0
      %1290 = vmatprep.subr.bf16.mxu0 0
      %1291 = vmatpush2.bf16.msra.mxu0 0
      %1292 = vmatprep.subr.bf16.mxu0 0
      %1293 = vmatpush2.bf16.msra.mxu0 0
      %1294 = vmatprep.subr.bf16.mxu0 0
      %1295 = vmatpush2.bf16.msra.mxu0 0
      %1296 = vmatprep.subr.bf16.mxu0 0
      %1297 = vmatpush2.bf16.msra.mxu0 0
      %1298 = vmatprep.subr.bf16.mxu0 0
      %1299 = vmatpush2.bf16.msra.mxu0 0
      %1300 = vmatprep.subr.bf16.mxu0 0
      %1301 = vmatpush2.bf16.msra.mxu0 0
      %1302 = vmatprep.mubr.bf16.mxu0 0
      %1303 = vmatmul.mubr.bf16.gmra.mxu0 %v966
      %v1304 = vpop.f32.mrf.mxu0
      %v1305 = vadd.f32 %v452, %v1304
      %v1306 = vpop.f32.mrf.mxu0
      %v1307 = vpop.f32.mrf.mxu0
      %v1308 = vadd.f32 %v452, %v1307
      %v1309 = vpop.f32.mrf.mxu0
      %1310 = vmatprep.mubr.bf16.mxu0 0
      %1311 = vmatmul.mubr.bf16.gmra.mxu0 %v967
      %v1312 = vpop.f32.mrf.mxu0
      %v1313 = vadd.f32 %v452, %v1312
      %v1314 = vpop.f32.mrf.mxu0
      %v1315 = vpop.f32.mrf.mxu0
      %v1316 = vadd.f32 %v452, %v1315
      %v1317 = vpop.f32.mrf.mxu0
      %1318 = vmatprep.mubr.bf16.mxu0 0
      %1319 = vmatmul.mubr.bf16.gmra.mxu0 %v968
      %v1320 = vpop.f32.mrf.mxu0
      %v1321 = vadd.f32 %v452, %v1320
      %v1322 = vpop.f32.mrf.mxu0
      %v1323 = vpop.f32.mrf.mxu0
      %v1324 = vadd.f32 %v452, %v1323
      %v1325 = vpop.f32.mrf.mxu0
      %1326 = vmatprep.mubr.bf16.mxu0 0
      %1327 = vmatmul.mubr.bf16.gmra.mxu0 %v969
      %v1328 = vpop.f32.mrf.mxu0
      %v1329 = vadd.f32 %v452, %v1328
      %v1330 = vpop.f32.mrf.mxu0
      %v1331 = vpop.f32.mrf.mxu0
      %v1332 = vadd.f32 %v452, %v1331
      %v1333 = vpop.f32.mrf.mxu0
      %1334 = vmatprep.mubr.bf16.mxu0 0
      %1335 = vmatmul.mubr.bf16.gmra.mxu0 %v970
      %v1336 = vpop.f32.mrf.mxu0
      %v1337 = vadd.f32 %v452, %v1336
      %v1338 = vpop.f32.mrf.mxu0
      %v1339 = vpop.f32.mrf.mxu0
      %v1340 = vadd.f32 %v452, %v1339
      %v1341 = vpop.f32.mrf.mxu0
      %1342 = vmatprep.mubr.bf16.mxu0 0
      %1343 = vmatmul.mubr.bf16.gmra.mxu0 %v971
      %v1344 = vpop.f32.mrf.mxu0
      %v1345 = vadd.f32 %v452, %v1344
      %v1346 = vpop.f32.mrf.mxu0
      %v1347 = vpop.f32.mrf.mxu0
      %v1348 = vadd.f32 %v452, %v1347
      %v1349 = vpop.f32.mrf.mxu0
      %1350 = vmatprep.mubr.bf16.mxu0 0
      %1351 = vmatmul.mubr.bf16.gmra.mxu0 %v972
      %v1352 = vpop.f32.mrf.mxu0
      %v1353 = vadd.f32 %v452, %v1352
      %v1354 = vpop.f32.mrf.mxu0
      %v1355 = vpop.f32.mrf.mxu0
      %v1356 = vadd.f32 %v452, %v1355
      %v1357 = vpop.f32.mrf.mxu0
      %1358 = vmatprep.mubr.bf16.mxu0 0
      %1359 = vmatmul.mubr.bf16.gmra.mxu0 %v973
      %v1360 = vpop.f32.mrf.mxu0
      %v1361 = vadd.f32 %v452, %v1360
      %v1362 = vpop.f32.mrf.mxu0
      %v1363 = vpop.f32.mrf.mxu0
      %v1364 = vadd.f32 %v452, %v1363
      %v1365 = vpop.f32.mrf.mxu0
      %1366 = vmatprep.mubr.bf16.mxu0 0
      %1367 = vmatmul.mubr.bf16.gmra.mxu0 %v974
      %v1368 = vpop.f32.mrf.mxu0
      %v1369 = vadd.f32 %v452, %v1368
      %v1370 = vpop.f32.mrf.mxu0
      %v1371 = vpop.f32.mrf.mxu0
      %v1372 = vadd.f32 %v452, %v1371
      %v1373 = vpop.f32.mrf.mxu0
      %1374 = vmatprep.mubr.bf16.mxu0 0
      %1375 = vmatmul.mubr.bf16.gmra.mxu0 %v975
      %v1376 = vpop.f32.mrf.mxu0
      %v1377 = vadd.f32 %v452, %v1376
      %v1378 = vpop.f32.mrf.mxu0
      %v1379 = vpop.f32.mrf.mxu0
      %v1380 = vadd.f32 %v452, %v1379
      %v1381 = vpop.f32.mrf.mxu0
      %1382 = vmatprep.mubr.bf16.mxu0 0
      %1383 = vmatmul.mubr.bf16.gmra.mxu0 %v976
      %v1384 = vpop.f32.mrf.mxu0
      %v1385 = vadd.f32 %v452, %v1384
      %v1386 = vpop.f32.mrf.mxu0
      %v1387 = vpop.f32.mrf.mxu0
      %v1388 = vadd.f32 %v452, %v1387
      %v1389 = vpop.f32.mrf.mxu0
      %1390 = vmatprep.mubr.bf16.mxu0 0
      %1391 = vmatmul.mubr.bf16.gmra.mxu0 %v977
      %v1392 = vpop.f32.mrf.mxu0
      %v1393 = vadd.f32 %v452, %v1392
      %v1394 = vpop.f32.mrf.mxu0
      %v1395 = vpop.f32.mrf.mxu0
      %v1396 = vadd.f32 %v452, %v1395
      %v1397 = vpop.f32.mrf.mxu0
      %1398 = vmatprep.mubr.bf16.mxu0 0
      %1399 = vmatmul.mubr.bf16.gmra.mxu0 %v978
      %v1400 = vpop.f32.mrf.mxu0
      %v1401 = vadd.f32 %v452, %v1400
      %v1402 = vpop.f32.mrf.mxu0
      %v1403 = vpop.f32.mrf.mxu0
      %v1404 = vadd.f32 %v452, %v1403
      %v1405 = vpop.f32.mrf.mxu0
      %1406 = vmatprep.mubr.bf16.mxu0 0
      %1407 = vmatmul.mubr.bf16.gmra.mxu0 %v979
      %v1408 = vpop.f32.mrf.mxu0
      %v1409 = vadd.f32 %v452, %v1408
      %v1410 = vpop.f32.mrf.mxu0
      %v1411 = vpop.f32.mrf.mxu0
      %v1412 = vadd.f32 %v452, %v1411
      %v1413 = vpop.f32.mrf.mxu0
      %1414 = vmatprep.mubr.bf16.mxu0 0
      %1415 = vmatmul.mubr.bf16.gmra.mxu0 %v980
      %v1416 = vpop.f32.mrf.mxu0
      %v1417 = vadd.f32 %v452, %v1416
      %v1418 = vpop.f32.mrf.mxu0
      %v1419 = vpop.f32.mrf.mxu0
      %v1420 = vadd.f32 %v452, %v1419
      %v1421 = vpop.f32.mrf.mxu0
      %1422 = vmatprep.mubr.bf16.mxu0 0
      %1423 = vmatmul.mubr.bf16.gmra.mxu0 %v981
      %v1424 = vpop.f32.mrf.mxu0
      %v1425 = vadd.f32 %v452, %v1424
      %v1426 = vpop.f32.mrf.mxu0
      %v1427 = vpop.f32.mrf.mxu0
      %v1428 = vadd.f32 %v452, %v1427
      %v1429 = vpop.f32.mrf.mxu0
      %1430 = vmatprep.mubr.bf16.mxu0 0
      %1431 = vmatmul.mubr.bf16.gmra.mxu0 %v982
      %v1432 = vpop.f32.mrf.mxu0
      %v1433 = vadd.f32 %v452, %v1432
      %v1434 = vpop.f32.mrf.mxu0
      %v1435 = vpop.f32.mrf.mxu0
      %v1436 = vadd.f32 %v452, %v1435
      %v1437 = vpop.f32.mrf.mxu0
      %1438 = vmatprep.mubr.bf16.mxu0 0
      %1439 = vmatmul.mubr.bf16.gmra.mxu0 %v983
      %v1440 = vpop.f32.mrf.mxu0
      %v1441 = vadd.f32 %v452, %v1440
      %v1442 = vpop.f32.mrf.mxu0
      %v1443 = vpop.f32.mrf.mxu0
      %v1444 = vadd.f32 %v452, %v1443
      %v1445 = vpop.f32.mrf.mxu0
      %1446 = vmatprep.mubr.bf16.mxu0 0
      %1447 = vmatmul.mubr.bf16.gmra.mxu0 %v984
      %v1448 = vpop.f32.mrf.mxu0
      %v1449 = vadd.f32 %v452, %v1448
      %v1450 = vpop.f32.mrf.mxu0
      %v1451 = vpop.f32.mrf.mxu0
      %v1452 = vadd.f32 %v452, %v1451
      %v1453 = vpop.f32.mrf.mxu0
      %1454 = vmatprep.mubr.bf16.mxu0 0
      %1455 = vmatmul.mubr.bf16.gmra.mxu0 %v985
      %v1456 = vpop.f32.mrf.mxu0
      %v1457 = vadd.f32 %v452, %v1456
      %v1458 = vpop.f32.mrf.mxu0
      %v1459 = vpop.f32.mrf.mxu0
      %v1460 = vadd.f32 %v452, %v1459
      %v1461 = vpop.f32.mrf.mxu0
      %1462 = vmatprep.mubr.bf16.mxu0 0
      %1463 = vmatmul.mubr.bf16.gmra.mxu0 %v986
      %v1464 = vpop.f32.mrf.mxu0
      %v1465 = vadd.f32 %v452, %v1464
      %v1466 = vpop.f32.mrf.mxu0
      %v1467 = vpop.f32.mrf.mxu0
      %v1468 = vadd.f32 %v452, %v1467
      %v1469 = vpop.f32.mrf.mxu0
      %1470 = vmatprep.mubr.bf16.mxu0 0
      %1471 = vmatmul.mubr.bf16.gmra.mxu0 %v987
      %v1472 = vpop.f32.mrf.mxu0
      %v1473 = vadd.f32 %v452, %v1472
      %v1474 = vpop.f32.mrf.mxu0
      %v1475 = vpop.f32.mrf.mxu0
      %v1476 = vadd.f32 %v452, %v1475
      %v1477 = vpop.f32.mrf.mxu0
      %1478 = vmatprep.mubr.bf16.mxu0 0
      %1479 = vmatmul.mubr.bf16.gmra.mxu0 %v988
      %v1480 = vpop.f32.mrf.mxu0
      %v1481 = vadd.f32 %v452, %v1480
      %v1482 = vpop.f32.mrf.mxu0
      %v1483 = vpop.f32.mrf.mxu0
      %v1484 = vadd.f32 %v452, %v1483
      %v1485 = vpop.f32.mrf.mxu0
      %1486 = vmatprep.mubr.bf16.mxu0 0
      %1487 = vmatmul.mubr.bf16.gmra.mxu0 %v989
      %v1488 = vpop.f32.mrf.mxu0
      %v1489 = vadd.f32 %v452, %v1488
      %v1490 = vpop.f32.mrf.mxu0
      %v1491 = vpop.f32.mrf.mxu0
      %v1492 = vadd.f32 %v452, %v1491
      %v1493 = vpop.f32.mrf.mxu0
      %1494 = vmatprep.mubr.bf16.mxu0 0
      %1495 = vmatmul.mubr.bf16.gmra.mxu0 %v990
      %v1496 = vpop.f32.mrf.mxu0
      %v1497 = vadd.f32 %v452, %v1496
      %v1498 = vpop.f32.mrf.mxu0
      %v1499 = vpop.f32.mrf.mxu0
      %v1500 = vadd.f32 %v452, %v1499
      %v1501 = vpop.f32.mrf.mxu0
      %1502 = vmatprep.mubr.bf16.mxu0 0
      %1503 = vmatmul.mubr.bf16.gmra.mxu0 %v991
      %v1504 = vpop.f32.mrf.mxu0
      %v1505 = vadd.f32 %v452, %v1504
      %v1506 = vpop.f32.mrf.mxu0
      %v1507 = vpop.f32.mrf.mxu0
      %v1508 = vadd.f32 %v452, %v1507
      %v1509 = vpop.f32.mrf.mxu0
      %1510 = vmatprep.mubr.bf16.mxu0 0
      %1511 = vmatmul.mubr.bf16.gmra.mxu0 %v992
      %v1512 = vpop.f32.mrf.mxu0
      %v1513 = vadd.f32 %v452, %v1512
      %v1514 = vpop.f32.mrf.mxu0
      %v1515 = vpop.f32.mrf.mxu0
      %v1516 = vadd.f32 %v452, %v1515
      %v1517 = vpop.f32.mrf.mxu0
      %1518 = vmatprep.mubr.bf16.mxu0 0
      %1519 = vmatmul.mubr.bf16.gmra.mxu0 %v993
      %v1520 = vpop.f32.mrf.mxu0
      %v1521 = vadd.f32 %v452, %v1520
      %v1522 = vpop.f32.mrf.mxu0
      %v1523 = vpop.f32.mrf.mxu0
      %v1524 = vadd.f32 %v452, %v1523
      %v1525 = vpop.f32.mrf.mxu0
      %1526 = vmatprep.mubr.bf16.mxu0 0
      %1527 = vmatmul.mubr.bf16.gmra.mxu0 %v994
      %v1528 = vpop.f32.mrf.mxu0
      %v1529 = vadd.f32 %v452, %v1528
      %v1530 = vpop.f32.mrf.mxu0
      %v1531 = vpop.f32.mrf.mxu0
      %v1532 = vadd.f32 %v452, %v1531
      %v1533 = vpop.f32.mrf.mxu0
      %1534 = vmatprep.mubr.bf16.mxu0 0
      %1535 = vmatmul.mubr.bf16.gmra.mxu0 %v995
      %v1536 = vpop.f32.mrf.mxu0
      %v1537 = vadd.f32 %v452, %v1536
      %v1538 = vpop.f32.mrf.mxu0
      %v1539 = vpop.f32.mrf.mxu0
      %v1540 = vadd.f32 %v452, %v1539
      %v1541 = vpop.f32.mrf.mxu0
      %1542 = vmatprep.mubr.bf16.mxu0 0
      %1543 = vmatmul.mubr.bf16.gmra.mxu0 %v996
      %v1544 = vpop.f32.mrf.mxu0
      %v1545 = vadd.f32 %v452, %v1544
      %v1546 = vpop.f32.mrf.mxu0
      %v1547 = vpop.f32.mrf.mxu0
      %v1548 = vadd.f32 %v452, %v1547
      %v1549 = vpop.f32.mrf.mxu0
      %1550 = vmatprep.mubr.bf16.mxu0 0
      %1551 = vmatmul.mubr.bf16.gmra.mxu0 %v997
      %v1552 = vpop.f32.mrf.mxu0
      %v1553 = vadd.f32 %v452, %v1552
      %v1554 = vpop.f32.mrf.mxu0
      %v1555 = vpop.f32.mrf.mxu0
      %v1556 = vadd.f32 %v452, %v1555
      %v1557 = vpop.f32.mrf.mxu0
      %1558 = vmatprep.mubr.bf16.mxu0 0
      %1559 = vmatmul.mubr.bf16.gmra.mxu0 %v998
      %v1560 = vpop.f32.mrf.mxu0
      %v1561 = vadd.f32 %v452, %v1560
      %v1562 = vpop.f32.mrf.mxu0
      %v1563 = vpop.f32.mrf.mxu0
      %v1564 = vadd.f32 %v452, %v1563
      %v1565 = vpop.f32.mrf.mxu0
      %1566 = vmatprep.mubr.bf16.mxu0 0
      %1567 = vmatmul.mubr.bf16.gmra.mxu0 %v999
      %v1568 = vpop.f32.mrf.mxu0
      %v1569 = vadd.f32 %v452, %v1568
      %v1570 = vpop.f32.mrf.mxu0
      %v1571 = vpop.f32.mrf.mxu0
      %v1572 = vadd.f32 %v452, %v1571
      %v1573 = vpop.f32.mrf.mxu0
      %1574 = vmatprep.mubr.bf16.mxu0 0
      %1575 = vmatmul.mubr.bf16.gmra.mxu0 %v1000
      %v1576 = vpop.f32.mrf.mxu0
      %v1577 = vadd.f32 %v452, %v1576
      %v1578 = vpop.f32.mrf.mxu0
      %v1579 = vpop.f32.mrf.mxu0
      %v1580 = vadd.f32 %v452, %v1579
      %v1581 = vpop.f32.mrf.mxu0
      %1582 = vmatprep.mubr.bf16.mxu0 0
      %1583 = vmatmul.mubr.bf16.gmra.mxu0 %v1001
      %v1584 = vpop.f32.mrf.mxu0
      %v1585 = vadd.f32 %v452, %v1584
      %v1586 = vpop.f32.mrf.mxu0
      %v1587 = vpop.f32.mrf.mxu0
      %v1588 = vadd.f32 %v452, %v1587
      %v1589 = vpop.f32.mrf.mxu0
      %1590 = vmatprep.mubr.bf16.mxu0 0
      %1591 = vmatmul.mubr.bf16.gmra.mxu0 %v1002
      %v1592 = vpop.f32.mrf.mxu0
      %v1593 = vadd.f32 %v452, %v1592
      %v1594 = vpop.f32.mrf.mxu0
      %v1595 = vpop.f32.mrf.mxu0
      %v1596 = vadd.f32 %v452, %v1595
      %v1597 = vpop.f32.mrf.mxu0
      %1598 = vmatprep.mubr.bf16.mxu0 0
      %1599 = vmatmul.mubr.bf16.gmra.mxu0 %v1003
      %v1600 = vpop.f32.mrf.mxu0
      %v1601 = vadd.f32 %v452, %v1600
      %v1602 = vpop.f32.mrf.mxu0
      %v1603 = vpop.f32.mrf.mxu0
      %v1604 = vadd.f32 %v452, %v1603
      %v1605 = vpop.f32.mrf.mxu0
      %1606 = vmatprep.mubr.bf16.mxu0 0
      %1607 = vmatmul.mubr.bf16.gmra.mxu0 %v1004
      %v1608 = vpop.f32.mrf.mxu0
      %v1609 = vadd.f32 %v452, %v1608
      %v1610 = vpop.f32.mrf.mxu0
      %v1611 = vpop.f32.mrf.mxu0
      %v1612 = vadd.f32 %v452, %v1611
      %v1613 = vpop.f32.mrf.mxu0
      %1614 = vmatprep.mubr.bf16.mxu0 0
      %1615 = vmatmul.mubr.bf16.gmra.mxu0 %v1005
      %v1616 = vpop.f32.mrf.mxu0
      %v1617 = vadd.f32 %v452, %v1616
      %v1618 = vpop.f32.mrf.mxu0
      %v1619 = vpop.f32.mrf.mxu0
      %v1620 = vadd.f32 %v452, %v1619
      %v1621 = vpop.f32.mrf.mxu0
      %1622 = vmatprep.mubr.bf16.mxu0 0
      %1623 = vmatmul.mubr.bf16.gmra.mxu0 %v1006
      %v1624 = vpop.f32.mrf.mxu0
      %v1625 = vadd.f32 %v452, %v1624
      %v1626 = vpop.f32.mrf.mxu0
      %v1627 = vpop.f32.mrf.mxu0
      %v1628 = vadd.f32 %v452, %v1627
      %v1629 = vpop.f32.mrf.mxu0
      %1630 = vmatprep.mubr.bf16.mxu0 0
      %1631 = vmatmul.mubr.bf16.gmra.mxu0 %v1007
      %v1632 = vpop.f32.mrf.mxu0
      %v1633 = vadd.f32 %v452, %v1632
      %v1634 = vpop.f32.mrf.mxu0
      %v1635 = vpop.f32.mrf.mxu0
      %v1636 = vadd.f32 %v452, %v1635
      %v1637 = vpop.f32.mrf.mxu0
      %1638 = vmatprep.mubr.bf16.mxu0 0
      %1639 = vmatmul.mubr.bf16.gmra.mxu0 %v1008
      %v1640 = vpop.f32.mrf.mxu0
      %v1641 = vadd.f32 %v452, %v1640
      %v1642 = vpop.f32.mrf.mxu0
      %v1643 = vpop.f32.mrf.mxu0
      %v1644 = vadd.f32 %v452, %v1643
      %v1645 = vpop.f32.mrf.mxu0
      %1646 = vmatprep.mubr.bf16.mxu0 0
      %1647 = vmatmul.mubr.bf16.gmra.mxu0 %v1009
      %v1648 = vpop.f32.mrf.mxu0
      %v1649 = vadd.f32 %v452, %v1648
      %v1650 = vpop.f32.mrf.mxu0
      %v1651 = vpop.f32.mrf.mxu0
      %v1652 = vadd.f32 %v452, %v1651
      %v1653 = vpop.f32.mrf.mxu0
      %1654 = vmatprep.mubr.bf16.mxu0 0
      %1655 = vmatmul.mubr.bf16.gmra.mxu0 %v1010
      %v1656 = vpop.f32.mrf.mxu0
      %v1657 = vadd.f32 %v452, %v1656
      %v1658 = vpop.f32.mrf.mxu0
      %v1659 = vpop.f32.mrf.mxu0
      %v1660 = vadd.f32 %v452, %v1659
      %v1661 = vpop.f32.mrf.mxu0
      %1662 = vmatprep.mubr.bf16.mxu0 0
      %1663 = vmatmul.mubr.bf16.gmra.mxu0 %v1011
      %v1664 = vpop.f32.mrf.mxu0
      %v1665 = vadd.f32 %v452, %v1664
      %v1666 = vpop.f32.mrf.mxu0
      %v1667 = vpop.f32.mrf.mxu0
      %v1668 = vadd.f32 %v452, %v1667
      %v1669 = vpop.f32.mrf.mxu0
      %1670 = vmatprep.mubr.bf16.mxu0 0
      %1671 = vmatmul.mubr.bf16.gmra.mxu0 %v1012
      %v1672 = vpop.f32.mrf.mxu0
      %v1673 = vadd.f32 %v452, %v1672
      %v1674 = vpop.f32.mrf.mxu0
      %v1675 = vpop.f32.mrf.mxu0
      %v1676 = vadd.f32 %v452, %v1675
      %v1677 = vpop.f32.mrf.mxu0
      %1678 = vmatprep.mubr.bf16.mxu0 0
      %1679 = vmatmul.mubr.bf16.gmra.mxu0 %v1013
      %v1680 = vpop.f32.mrf.mxu0
      %v1681 = vadd.f32 %v452, %v1680
      %v1682 = vpop.f32.mrf.mxu0
      %v1683 = vpop.f32.mrf.mxu0
      %v1684 = vadd.f32 %v452, %v1683
      %v1685 = vpop.f32.mrf.mxu0
      %1686 = vmatprep.mubr.bf16.mxu0 0
      %1687 = vmatmul.mubr.bf16.gmra.mxu0 %v1014
      %v1688 = vpop.f32.mrf.mxu0
      %v1689 = vadd.f32 %v452, %v1688
      %v1690 = vpop.f32.mrf.mxu0
      %v1691 = vpop.f32.mrf.mxu0
      %v1692 = vadd.f32 %v452, %v1691
      %v1693 = vpop.f32.mrf.mxu0
      %1694 = vmatprep.mubr.bf16.mxu0 0
      %1695 = vmatmul.mubr.bf16.gmra.mxu0 %v1015
      %v1696 = vpop.f32.mrf.mxu0
      %v1697 = vadd.f32 %v452, %v1696
      %v1698 = vpop.f32.mrf.mxu0
      %v1699 = vpop.f32.mrf.mxu0
      %v1700 = vadd.f32 %v452, %v1699
      %v1701 = vpop.f32.mrf.mxu0
      %1702 = vmatprep.mubr.bf16.mxu0 0
      %1703 = vmatmul.mubr.bf16.gmra.mxu0 %v1016
      %v1704 = vpop.f32.mrf.mxu0
      %v1705 = vadd.f32 %v452, %v1704
      %v1706 = vpop.f32.mrf.mxu0
      %v1707 = vpop.f32.mrf.mxu0
      %v1708 = vadd.f32 %v452, %v1707
      %v1709 = vpop.f32.mrf.mxu0
      %1710 = vmatprep.mubr.bf16.mxu0 0
      %1711 = vmatmul.mubr.bf16.gmra.mxu0 %v1017
      %v1712 = vpop.f32.mrf.mxu0
      %v1713 = vadd.f32 %v452, %v1712
      %v1714 = vpop.f32.mrf.mxu0
      %v1715 = vpop.f32.mrf.mxu0
      %v1716 = vadd.f32 %v452, %v1715
      %v1717 = vpop.f32.mrf.mxu0
      %1718 = vmatprep.mubr.bf16.mxu0 0
      %1719 = vmatmul.mubr.bf16.gmra.mxu0 %v1018
      %v1720 = vpop.f32.mrf.mxu0
      %v1721 = vadd.f32 %v452, %v1720
      %v1722 = vpop.f32.mrf.mxu0
      %v1723 = vpop.f32.mrf.mxu0
      %v1724 = vadd.f32 %v452, %v1723
      %v1725 = vpop.f32.mrf.mxu0
      %1726 = vmatprep.mubr.bf16.mxu0 0
      %1727 = vmatmul.mubr.bf16.gmra.mxu0 %v1019
      %v1728 = vpop.f32.mrf.mxu0
      %v1729 = vadd.f32 %v452, %v1728
      %v1730 = vpop.f32.mrf.mxu0
      %v1731 = vpop.f32.mrf.mxu0
      %v1732 = vadd.f32 %v452, %v1731
      %v1733 = vpop.f32.mrf.mxu0
      %1734 = vmatprep.mubr.bf16.mxu0 0
      %1735 = vmatmul.mubr.bf16.gmra.mxu0 %v1020
      %v1736 = vpop.f32.mrf.mxu0
      %v1737 = vadd.f32 %v452, %v1736
      %v1738 = vpop.f32.mrf.mxu0
      %v1739 = vpop.f32.mrf.mxu0
      %v1740 = vadd.f32 %v452, %v1739
      %v1741 = vpop.f32.mrf.mxu0
      %1742 = vmatprep.mubr.bf16.mxu0 0
      %1743 = vmatmul.mubr.bf16.gmra.mxu0 %v1021
      %v1744 = vpop.f32.mrf.mxu0
      %v1745 = vadd.f32 %v452, %v1744
      %v1746 = vpop.f32.mrf.mxu0
      %v1747 = vpop.f32.mrf.mxu0
      %v1748 = vadd.f32 %v452, %v1747
      %v1749 = vpop.f32.mrf.mxu0
      %1750 = vmatprep.mubr.bf16.mxu0 0
      %1751 = vmatmul.mubr.bf16.gmra.mxu0 %v1022
      %v1752 = vpop.f32.mrf.mxu0
      %v1753 = vadd.f32 %v452, %v1752
      %v1754 = vpop.f32.mrf.mxu0
      %v1755 = vpop.f32.mrf.mxu0
      %v1756 = vadd.f32 %v452, %v1755
      %v1757 = vpop.f32.mrf.mxu0
      %1758 = vmatprep.mubr.bf16.mxu0 0
      %1759 = vmatmul.mubr.bf16.gmra.mxu0 %v1023
      %v1760 = vpop.f32.mrf.mxu0
      %v1761 = vadd.f32 %v452, %v1760
      %v1762 = vpop.f32.mrf.mxu0
      %v1763 = vpop.f32.mrf.mxu0
      %v1764 = vadd.f32 %v452, %v1763
      %v1765 = vpop.f32.mrf.mxu0
      %1766 = vmatprep.mubr.bf16.mxu0 0
      %1767 = vmatmul.mubr.bf16.gmra.mxu0 %v1024
      %v1768 = vpop.f32.mrf.mxu0
      %v1769 = vadd.f32 %v452, %v1768
      %v1770 = vpop.f32.mrf.mxu0
      %v1771 = vpop.f32.mrf.mxu0
      %v1772 = vadd.f32 %v452, %v1771
      %v1773 = vpop.f32.mrf.mxu0
      %1774 = vmatprep.mubr.bf16.mxu0 0
      %1775 = vmatmul.mubr.bf16.gmra.mxu0 %v1025
      %v1776 = vpop.f32.mrf.mxu0
      %v1777 = vadd.f32 %v452, %v1776
      %v1778 = vpop.f32.mrf.mxu0
      %v1779 = vpop.f32.mrf.mxu0
      %v1780 = vadd.f32 %v452, %v1779
      %v1781 = vpop.f32.mrf.mxu0
      %1782 = vmatprep.mubr.bf16.mxu0 0
      %1783 = vmatmul.mubr.bf16.gmra.mxu0 %v1026
      %v1784 = vpop.f32.mrf.mxu0
      %v1785 = vadd.f32 %v452, %v1784
      %v1786 = vpop.f32.mrf.mxu0
      %v1787 = vpop.f32.mrf.mxu0
      %v1788 = vadd.f32 %v452, %v1787
      %v1789 = vpop.f32.mrf.mxu0
      %1790 = vmatprep.mubr.bf16.mxu0 0
      %1791 = vmatmul.mubr.bf16.gmra.mxu0 %v1027
      %v1792 = vpop.f32.mrf.mxu0
      %v1793 = vadd.f32 %v452, %v1792
      %v1794 = vpop.f32.mrf.mxu0
      %v1795 = vpop.f32.mrf.mxu0
      %v1796 = vadd.f32 %v452, %v1795
      %v1797 = vpop.f32.mrf.mxu0
      %1798 = vmatprep.mubr.bf16.mxu0 0
      %1799 = vmatmul.mubr.bf16.gmra.mxu0 %v1028
      %v1800 = vpop.f32.mrf.mxu0
      %v1801 = vadd.f32 %v452, %v1800
      %v1802 = vpop.f32.mrf.mxu0
      %v1803 = vpop.f32.mrf.mxu0
      %v1804 = vadd.f32 %v452, %v1803
      %v1805 = vpop.f32.mrf.mxu0
      %1806 = vmatprep.mubr.bf16.mxu0 0
      %1807 = vmatmul.mubr.bf16.gmra.mxu0 %v1029
      %v1808 = vpop.f32.mrf.mxu0
      %v1809 = vadd.f32 %v452, %v1808
      %v1810 = vpop.f32.mrf.mxu0
      %v1811 = vpop.f32.mrf.mxu0
      %v1812 = vadd.f32 %v452, %v1811
      %v1813 = vpop.f32.mrf.mxu0
      %1814 = vmatprep.mubr.bf16.mxu0 0
      %1815 = vmatmul.mubr.bf16.gmra.mxu0 %v1030
      %v1816 = vpop.f32.mrf.mxu0
      %v1817 = vadd.f32 %v452, %v1816
      %v1818 = vpop.f32.mrf.mxu0
      %v1819 = vpop.f32.mrf.mxu0
      %v1820 = vadd.f32 %v452, %v1819
      %v1821 = vpop.f32.mrf.mxu0
      %1822 = vmatprep.mubr.bf16.mxu0 0
      %1823 = vmatmul.mubr.bf16.gmra.mxu0 %v1031
      %v1824 = vpop.f32.mrf.mxu0
      %v1825 = vadd.f32 %v452, %v1824
      %v1826 = vpop.f32.mrf.mxu0
      %v1827 = vpop.f32.mrf.mxu0
      %v1828 = vadd.f32 %v452, %v1827
      %v1829 = vpop.f32.mrf.mxu0
      %1830 = vmatprep.mubr.bf16.mxu0 0
      %1831 = vmatmul.mubr.bf16.gmra.mxu0 %v1032
      %v1832 = vpop.f32.mrf.mxu0
      %v1833 = vadd.f32 %v452, %v1832
      %v1834 = vpop.f32.mrf.mxu0
      %v1835 = vpop.f32.mrf.mxu0
      %v1836 = vadd.f32 %v452, %v1835
      %v1837 = vpop.f32.mrf.mxu0
      %1838 = vmatprep.mubr.bf16.mxu0 0
      %1839 = vmatmul.mubr.bf16.gmra.mxu0 %v1033
      %v1840 = vpop.f32.mrf.mxu0
      %v1841 = vadd.f32 %v452, %v1840
      %v1842 = vpop.f32.mrf.mxu0
      %v1843 = vpop.f32.mrf.mxu0
      %v1844 = vadd.f32 %v452, %v1843
      %v1845 = vpop.f32.mrf.mxu0
      %1846 = vmatprep.mubr.bf16.mxu0 0
      %1847 = vmatmul.mubr.bf16.gmra.mxu0 %v1034
      %v1848 = vpop.f32.mrf.mxu0
      %v1849 = vadd.f32 %v452, %v1848
      %v1850 = vpop.f32.mrf.mxu0
      %v1851 = vpop.f32.mrf.mxu0
      %v1852 = vadd.f32 %v452, %v1851
      %v1853 = vpop.f32.mrf.mxu0
      %1854 = vmatprep.mubr.bf16.mxu0 0
      %1855 = vmatmul.mubr.bf16.gmra.mxu0 %v1035
      %v1856 = vpop.f32.mrf.mxu0
      %v1857 = vadd.f32 %v452, %v1856
      %v1858 = vpop.f32.mrf.mxu0
      %v1859 = vpop.f32.mrf.mxu0
      %v1860 = vadd.f32 %v452, %v1859
      %v1861 = vpop.f32.mrf.mxu0
      %1862 = vmatprep.mubr.bf16.mxu0 0
      %1863 = vmatmul.mubr.bf16.gmra.mxu0 %v1036
      %v1864 = vpop.f32.mrf.mxu0
      %v1865 = vadd.f32 %v452, %v1864
      %v1866 = vpop.f32.mrf.mxu0
      %v1867 = vpop.f32.mrf.mxu0
      %v1868 = vadd.f32 %v452, %v1867
      %v1869 = vpop.f32.mrf.mxu0
      %1870 = vmatprep.mubr.bf16.mxu0 0
      %1871 = vmatmul.mubr.bf16.gmra.mxu0 %v1037
      %v1872 = vpop.f32.mrf.mxu0
      %v1873 = vadd.f32 %v452, %v1872
      %v1874 = vpop.f32.mrf.mxu0
      %v1875 = vpop.f32.mrf.mxu0
      %v1876 = vadd.f32 %v452, %v1875
      %v1877 = vpop.f32.mrf.mxu0
      %1878 = vmatprep.mubr.bf16.mxu0 0
      %1879 = vmatmul.mubr.bf16.gmra.mxu0 %v1038
      %v1880 = vpop.f32.mrf.mxu0
      %v1881 = vadd.f32 %v452, %v1880
      %v1882 = vpop.f32.mrf.mxu0
      %v1883 = vpop.f32.mrf.mxu0
      %v1884 = vadd.f32 %v452, %v1883
      %v1885 = vpop.f32.mrf.mxu0
      %1886 = vmatprep.mubr.bf16.mxu0 0
      %1887 = vmatmul.mubr.bf16.gmra.mxu0 %v1039
      %v1888 = vpop.f32.mrf.mxu0
      %v1889 = vadd.f32 %v452, %v1888
      %v1890 = vpop.f32.mrf.mxu0
      %v1891 = vpop.f32.mrf.mxu0
      %v1892 = vadd.f32 %v452, %v1891
      %v1893 = vpop.f32.mrf.mxu0
      %1894 = vmatprep.mubr.bf16.mxu0 0
      %1895 = vmatmul.mubr.bf16.gmra.mxu0 %v1040
      %v1896 = vpop.f32.mrf.mxu0
      %v1897 = vadd.f32 %v452, %v1896
      %v1898 = vpop.f32.mrf.mxu0
      %v1899 = vpop.f32.mrf.mxu0
      %v1900 = vadd.f32 %v452, %v1899
      %v1901 = vpop.f32.mrf.mxu0
      %1902 = vmatprep.mubr.bf16.mxu0 0
      %1903 = vmatmul.mubr.bf16.gmra.mxu0 %v1041
      %v1904 = vpop.f32.mrf.mxu0
      %v1905 = vadd.f32 %v452, %v1904
      %v1906 = vpop.f32.mrf.mxu0
      %v1907 = vpop.f32.mrf.mxu0
      %v1908 = vadd.f32 %v452, %v1907
      %v1909 = vpop.f32.mrf.mxu0
      %1910 = vmatprep.mubr.bf16.mxu0 0
      %1911 = vmatmul.mubr.bf16.gmra.mxu0 %v1042
      %v1912 = vpop.f32.mrf.mxu0
      %v1913 = vadd.f32 %v452, %v1912
      %v1914 = vpop.f32.mrf.mxu0
      %v1915 = vpop.f32.mrf.mxu0
      %v1916 = vadd.f32 %v452, %v1915
      %v1917 = vpop.f32.mrf.mxu0
      %1918 = vmatprep.mubr.bf16.mxu0 0
      %1919 = vmatmul.mubr.bf16.gmra.mxu0 %v1043
      %v1920 = vpop.f32.mrf.mxu0
      %v1921 = vadd.f32 %v452, %v1920
      %v1922 = vpop.f32.mrf.mxu0
      %v1923 = vpop.f32.mrf.mxu0
      %v1924 = vadd.f32 %v452, %v1923
      %v1925 = vpop.f32.mrf.mxu0
      %1926 = vmatprep.mubr.bf16.mxu0 0
      %1927 = vmatmul.mubr.bf16.gmra.mxu0 %v1044
      %v1928 = vpop.f32.mrf.mxu0
      %v1929 = vadd.f32 %v452, %v1928
      %v1930 = vpop.f32.mrf.mxu0
      %v1931 = vpop.f32.mrf.mxu0
      %v1932 = vadd.f32 %v452, %v1931
      %v1933 = vpop.f32.mrf.mxu0
      %1934 = vmatprep.mubr.bf16.mxu0 0
      %1935 = vmatmul.mubr.bf16.gmra.mxu0 %v1045
      %v1936 = vpop.f32.mrf.mxu0
      %v1937 = vadd.f32 %v452, %v1936
      %v1938 = vpop.f32.mrf.mxu0
      %v1939 = vpop.f32.mrf.mxu0
      %v1940 = vadd.f32 %v452, %v1939
      %v1941 = vpop.f32.mrf.mxu0
      %1942 = vmatprep.mubr.bf16.mxu0 0
      %1943 = vmatmul.mubr.bf16.gmra.mxu0 %v1046
      %v1944 = vpop.f32.mrf.mxu0
      %v1945 = vadd.f32 %v452, %v1944
      %v1946 = vpop.f32.mrf.mxu0
      %v1947 = vpop.f32.mrf.mxu0
      %v1948 = vadd.f32 %v452, %v1947
      %v1949 = vpop.f32.mrf.mxu0
      %1950 = vmatprep.mubr.bf16.mxu0 0
      %1951 = vmatmul.mubr.bf16.gmra.mxu0 %v1047
      %v1952 = vpop.f32.mrf.mxu0
      %v1953 = vadd.f32 %v452, %v1952
      %v1954 = vpop.f32.mrf.mxu0
      %v1955 = vpop.f32.mrf.mxu0
      %v1956 = vadd.f32 %v452, %v1955
      %v1957 = vpop.f32.mrf.mxu0
      %1958 = vmatprep.mubr.bf16.mxu0 0
      %1959 = vmatmul.mubr.bf16.gmra.mxu0 %v1048
      %v1960 = vpop.f32.mrf.mxu0
      %v1961 = vadd.f32 %v452, %v1960
      %v1962 = vpop.f32.mrf.mxu0
      %v1963 = vpop.f32.mrf.mxu0
      %v1964 = vadd.f32 %v452, %v1963
      %v1965 = vpop.f32.mrf.mxu0
      %1966 = vmatprep.mubr.bf16.mxu0 0
      %1967 = vmatmul.mubr.bf16.gmra.mxu0 %v1049
      %v1968 = vpop.f32.mrf.mxu0
      %v1969 = vadd.f32 %v452, %v1968
      %v1970 = vpop.f32.mrf.mxu0
      %v1971 = vpop.f32.mrf.mxu0
      %v1972 = vadd.f32 %v452, %v1971
      %v1973 = vpop.f32.mrf.mxu0
      %1974 = vmatprep.mubr.bf16.mxu0 0
      %1975 = vmatmul.mubr.bf16.gmra.mxu0 %v1050
      %v1976 = vpop.f32.mrf.mxu0
      %v1977 = vadd.f32 %v452, %v1976
      %v1978 = vpop.f32.mrf.mxu0
      %v1979 = vpop.f32.mrf.mxu0
      %v1980 = vadd.f32 %v452, %v1979
      %v1981 = vpop.f32.mrf.mxu0
      %1982 = vmatprep.mubr.bf16.mxu0 0
      %1983 = vmatmul.mubr.bf16.gmra.mxu0 %v1051
      %v1984 = vpop.f32.mrf.mxu0
      %v1985 = vadd.f32 %v452, %v1984
      %v1986 = vpop.f32.mrf.mxu0
      %v1987 = vpop.f32.mrf.mxu0
      %v1988 = vadd.f32 %v452, %v1987
      %v1989 = vpop.f32.mrf.mxu0
      %1990 = vmatprep.mubr.bf16.mxu0 0
      %1991 = vmatmul.mubr.bf16.gmra.mxu0 %v1052
      %v1992 = vpop.f32.mrf.mxu0
      %v1993 = vadd.f32 %v452, %v1992
      %v1994 = vpop.f32.mrf.mxu0
      %v1995 = vpop.f32.mrf.mxu0
      %v1996 = vadd.f32 %v452, %v1995
      %v1997 = vpop.f32.mrf.mxu0
      %1998 = vmatprep.mubr.bf16.mxu0 0
      %1999 = vmatmul.mubr.bf16.gmra.mxu0 %v1053
      %v2000 = vpop.f32.mrf.mxu0
      %v2001 = vadd.f32 %v452, %v2000
      %v2002 = vpop.f32.mrf.mxu0
      %v2003 = vpop.f32.mrf.mxu0
      %v2004 = vadd.f32 %v452, %v2003
      %v2005 = vpop.f32.mrf.mxu0
      %2006 = vmatprep.mubr.bf16.mxu0 0
      %2007 = vmatmul.mubr.bf16.gmra.mxu0 %v1054
      %v2008 = vpop.f32.mrf.mxu0
      %v2009 = vadd.f32 %v452, %v2008
      %v2010 = vpop.f32.mrf.mxu0
      %v2011 = vpop.f32.mrf.mxu0
      %v2012 = vadd.f32 %v452, %v2011
      %v2013 = vpop.f32.mrf.mxu0
      %2014 = vmatprep.mubr.bf16.mxu0 0
      %2015 = vmatmul.mubr.bf16.gmra.mxu0 %v1055
      %v2016 = vpop.f32.mrf.mxu0
      %v2017 = vadd.f32 %v452, %v2016
      %v2018 = vpop.f32.mrf.mxu0
      %v2019 = vpop.f32.mrf.mxu0
      %v2020 = vadd.f32 %v452, %v2019
      %v2021 = vpop.f32.mrf.mxu0
      %2022 = vmatprep.mubr.bf16.mxu0 0
      %2023 = vmatmul.mubr.bf16.gmra.mxu0 %v1056
      %v2024 = vpop.f32.mrf.mxu0
      %v2025 = vadd.f32 %v452, %v2024
      %v2026 = vpop.f32.mrf.mxu0
      %v2027 = vpop.f32.mrf.mxu0
      %v2028 = vadd.f32 %v452, %v2027
      %v2029 = vpop.f32.mrf.mxu0
      %2030 = vmatprep.mubr.bf16.mxu0 0
      %2031 = vmatmul.mubr.bf16.gmra.mxu0 %v1057
      %v2032 = vpop.f32.mrf.mxu0
      %v2033 = vadd.f32 %v452, %v2032
      %v2034 = vpop.f32.mrf.mxu0
      %v2035 = vpop.f32.mrf.mxu0
      %v2036 = vadd.f32 %v452, %v2035
      %v2037 = vpop.f32.mrf.mxu0
      %2038 = vmatprep.mubr.bf16.mxu0 0
      %2039 = vmatmul.mubr.bf16.gmra.mxu0 %v1058
      %v2040 = vpop.f32.mrf.mxu0
      %v2041 = vadd.f32 %v452, %v2040
      %v2042 = vpop.f32.mrf.mxu0
      %v2043 = vpop.f32.mrf.mxu0
      %v2044 = vadd.f32 %v452, %v2043
      %v2045 = vpop.f32.mrf.mxu0
      %2046 = vmatprep.mubr.bf16.mxu0 0
      %2047 = vmatmul.mubr.bf16.gmra.mxu0 %v1059
      %v2048 = vpop.f32.mrf.mxu0
      %v2049 = vadd.f32 %v452, %v2048
      %v2050 = vpop.f32.mrf.mxu0
      %v2051 = vpop.f32.mrf.mxu0
      %v2052 = vadd.f32 %v452, %v2051
      %v2053 = vpop.f32.mrf.mxu0
      %2054 = vmatprep.mubr.bf16.mxu0 0
      %2055 = vmatmul.mubr.bf16.gmra.mxu0 %v1060
      %v2056 = vpop.f32.mrf.mxu0
      %v2057 = vadd.f32 %v452, %v2056
      %v2058 = vpop.f32.mrf.mxu0
      %v2059 = vpop.f32.mrf.mxu0
      %v2060 = vadd.f32 %v452, %v2059
      %v2061 = vpop.f32.mrf.mxu0
      %2062 = vmatprep.mubr.bf16.mxu0 0
      %2063 = vmatmul.mubr.bf16.gmra.mxu0 %v1061
      %v2064 = vpop.f32.mrf.mxu0
      %v2065 = vadd.f32 %v452, %v2064
      %v2066 = vpop.f32.mrf.mxu0
      %v2067 = vpop.f32.mrf.mxu0
      %v2068 = vadd.f32 %v452, %v2067
      %v2069 = vpop.f32.mrf.mxu0
      %2070 = vmatprep.mubr.bf16.mxu0 0
      %2071 = vmatmul.mubr.bf16.gmra.mxu0 %v1062
      %v2072 = vpop.f32.mrf.mxu0
      %v2073 = vadd.f32 %v452, %v2072
      %v2074 = vpop.f32.mrf.mxu0
      %v2075 = vpop.f32.mrf.mxu0
      %v2076 = vadd.f32 %v452, %v2075
      %v2077 = vpop.f32.mrf.mxu0
      %2078 = vmatprep.mubr.bf16.mxu0 0
      %2079 = vmatmul.mubr.bf16.gmra.mxu0 %v1063
      %v2080 = vpop.f32.mrf.mxu0
      %v2081 = vadd.f32 %v452, %v2080
      %v2082 = vpop.f32.mrf.mxu0
      %v2083 = vpop.f32.mrf.mxu0
      %v2084 = vadd.f32 %v452, %v2083
      %v2085 = vpop.f32.mrf.mxu0
      %2086 = vmatprep.mubr.bf16.mxu0 0
      %2087 = vmatmul.mubr.bf16.gmra.mxu0 %v1064
      %v2088 = vpop.f32.mrf.mxu0
      %v2089 = vadd.f32 %v452, %v2088
      %v2090 = vpop.f32.mrf.mxu0
      %v2091 = vpop.f32.mrf.mxu0
      %v2092 = vadd.f32 %v452, %v2091
      %v2093 = vpop.f32.mrf.mxu0
      %2094 = vmatprep.mubr.bf16.mxu0 0
      %2095 = vmatmul.mubr.bf16.gmra.mxu0 %v1065
      %v2096 = vpop.f32.mrf.mxu0
      %v2097 = vadd.f32 %v452, %v2096
      %v2098 = vpop.f32.mrf.mxu0
      %v2099 = vpop.f32.mrf.mxu0
      %v2100 = vadd.f32 %v452, %v2099
      %v2101 = vpop.f32.mrf.mxu0
      %2102 = vmatprep.mubr.bf16.mxu0 0
      %2103 = vmatmul.mubr.bf16.gmra.mxu0 %v1066
      %v2104 = vpop.f32.mrf.mxu0
      %v2105 = vadd.f32 %v452, %v2104
      %v2106 = vpop.f32.mrf.mxu0
      %v2107 = vpop.f32.mrf.mxu0
      %v2108 = vadd.f32 %v452, %v2107
      %v2109 = vpop.f32.mrf.mxu0
      %2110 = vmatprep.mubr.bf16.mxu0 0
      %2111 = vmatmul.mubr.bf16.gmra.mxu0 %v1067
      %v2112 = vpop.f32.mrf.mxu0
      %v2113 = vadd.f32 %v452, %v2112
      %v2114 = vpop.f32.mrf.mxu0
      %v2115 = vpop.f32.mrf.mxu0
      %v2116 = vadd.f32 %v452, %v2115
      %v2117 = vpop.f32.mrf.mxu0
      %2118 = vmatprep.mubr.bf16.mxu0 0
      %2119 = vmatmul.mubr.bf16.gmra.mxu0 %v1068
      %v2120 = vpop.f32.mrf.mxu0
      %v2121 = vadd.f32 %v452, %v2120
      %v2122 = vpop.f32.mrf.mxu0
      %v2123 = vpop.f32.mrf.mxu0
      %v2124 = vadd.f32 %v452, %v2123
      %v2125 = vpop.f32.mrf.mxu0
      %2126 = vmatprep.mubr.bf16.mxu0 0
      %2127 = vmatmul.mubr.bf16.gmra.mxu0 %v1069
      %v2128 = vpop.f32.mrf.mxu0
      %v2129 = vadd.f32 %v452, %v2128
      %v2130 = vpop.f32.mrf.mxu0
      %v2131 = vpop.f32.mrf.mxu0
      %v2132 = vadd.f32 %v452, %v2131
      %v2133 = vpop.f32.mrf.mxu0
      %2134 = vmatprep.mubr.bf16.mxu0 0
      %2135 = vmatmul.mubr.bf16.gmra.mxu0 %v1070
      %v2136 = vpop.f32.mrf.mxu0
      %v2137 = vadd.f32 %v452, %v2136
      %v2138 = vpop.f32.mrf.mxu0
      %v2139 = vpop.f32.mrf.mxu0
      %v2140 = vadd.f32 %v452, %v2139
      %v2141 = vpop.f32.mrf.mxu0
      %2142 = vmatprep.mubr.bf16.mxu0 0
      %2143 = vmatmul.mubr.bf16.gmra.mxu0 %v1071
      %v2144 = vpop.f32.mrf.mxu0
      %v2145 = vadd.f32 %v452, %v2144
      %v2146 = vpop.f32.mrf.mxu0
      %v2147 = vpop.f32.mrf.mxu0
      %v2148 = vadd.f32 %v452, %v2147
      %v2149 = vpop.f32.mrf.mxu0
      %2150 = vmatprep.mubr.bf16.mxu0 0
      %2151 = vmatmul.mubr.bf16.gmra.mxu0 %v1072
      %v2152 = vpop.f32.mrf.mxu0
      %v2153 = vadd.f32 %v452, %v2152
      %v2154 = vpop.f32.mrf.mxu0
      %v2155 = vpop.f32.mrf.mxu0
      %v2156 = vadd.f32 %v452, %v2155
      %v2157 = vpop.f32.mrf.mxu0
      %2158 = vmatprep.mubr.bf16.mxu0 0
      %2159 = vmatmul.mubr.bf16.gmra.mxu0 %v1073
      %v2160 = vpop.f32.mrf.mxu0
      %v2161 = vadd.f32 %v452, %v2160
      %v2162 = vpop.f32.mrf.mxu0
      %v2163 = vpop.f32.mrf.mxu0
      %v2164 = vadd.f32 %v452, %v2163
      %v2165 = vpop.f32.mrf.mxu0
      %2166 = vmatprep.mubr.bf16.mxu0 0
      %2167 = vmatmul.mubr.bf16.gmra.mxu0 %v1074
      %v2168 = vpop.f32.mrf.mxu0
      %v2169 = vadd.f32 %v452, %v2168
      %v2170 = vpop.f32.mrf.mxu0
      %v2171 = vpop.f32.mrf.mxu0
      %v2172 = vadd.f32 %v452, %v2171
      %v2173 = vpop.f32.mrf.mxu0
      %2174 = vmatprep.mubr.bf16.mxu0 0
      %2175 = vmatmul.mubr.bf16.gmra.mxu0 %v1075
      %v2176 = vpop.f32.mrf.mxu0
      %v2177 = vadd.f32 %v452, %v2176
      %v2178 = vpop.f32.mrf.mxu0
      %v2179 = vpop.f32.mrf.mxu0
      %v2180 = vadd.f32 %v452, %v2179
      %v2181 = vpop.f32.mrf.mxu0
      %2182 = vmatprep.mubr.bf16.mxu0 0
      %2183 = vmatmul.mubr.bf16.gmra.mxu0 %v1076
      %v2184 = vpop.f32.mrf.mxu0
      %v2185 = vadd.f32 %v452, %v2184
      %v2186 = vpop.f32.mrf.mxu0
      %v2187 = vpop.f32.mrf.mxu0
      %v2188 = vadd.f32 %v452, %v2187
      %v2189 = vpop.f32.mrf.mxu0
      %2190 = vmatprep.mubr.bf16.mxu0 0
      %2191 = vmatmul.mubr.bf16.gmra.mxu0 %v1077
      %v2192 = vpop.f32.mrf.mxu0
      %v2193 = vadd.f32 %v452, %v2192
      %v2194 = vpop.f32.mrf.mxu0
      %v2195 = vpop.f32.mrf.mxu0
      %v2196 = vadd.f32 %v452, %v2195
      %v2197 = vpop.f32.mrf.mxu0
      %2198 = vmatprep.mubr.bf16.mxu0 0
      %2199 = vmatmul.mubr.bf16.gmra.mxu0 %v1078
      %v2200 = vpop.f32.mrf.mxu0
      %v2201 = vadd.f32 %v452, %v2200
      %v2202 = vpop.f32.mrf.mxu0
      %v2203 = vpop.f32.mrf.mxu0
      %v2204 = vadd.f32 %v452, %v2203
      %v2205 = vpop.f32.mrf.mxu0
      %2206 = vmatprep.mubr.bf16.mxu0 0
      %2207 = vmatmul.mubr.bf16.gmra.mxu0 %v1079
      %v2208 = vpop.f32.mrf.mxu0
      %v2209 = vadd.f32 %v452, %v2208
      %v2210 = vpop.f32.mrf.mxu0
      %v2211 = vpop.f32.mrf.mxu0
      %v2212 = vadd.f32 %v452, %v2211
      %v2213 = vpop.f32.mrf.mxu0
      %2214 = vmatprep.mubr.bf16.mxu0 0
      %2215 = vmatmul.mubr.bf16.gmra.mxu0 %v1080
      %v2216 = vpop.f32.mrf.mxu0
      %v2217 = vadd.f32 %v452, %v2216
      %v2218 = vpop.f32.mrf.mxu0
      %v2219 = vpop.f32.mrf.mxu0
      %v2220 = vadd.f32 %v452, %v2219
      %v2221 = vpop.f32.mrf.mxu0
      %2222 = vmatprep.mubr.bf16.mxu0 0
      %2223 = vmatmul.mubr.bf16.gmra.mxu0 %v1081
      %v2224 = vpop.f32.mrf.mxu0
      %v2225 = vadd.f32 %v452, %v2224
      %v2226 = vpop.f32.mrf.mxu0
      %v2227 = vpop.f32.mrf.mxu0
      %v2228 = vadd.f32 %v452, %v2227
      %v2229 = vpop.f32.mrf.mxu0
      %2230 = vmatprep.mubr.bf16.mxu0 0
      %2231 = vmatmul.mubr.bf16.gmra.mxu0 %v1082
      %v2232 = vpop.f32.mrf.mxu0
      %v2233 = vadd.f32 %v452, %v2232
      %v2234 = vpop.f32.mrf.mxu0
      %v2235 = vpop.f32.mrf.mxu0
      %v2236 = vadd.f32 %v452, %v2235
      %v2237 = vpop.f32.mrf.mxu0
      %2238 = vmatprep.mubr.bf16.mxu0 0
      %2239 = vmatmul.mubr.bf16.gmra.mxu0 %v1083
      %v2240 = vpop.f32.mrf.mxu0
      %v2241 = vadd.f32 %v452, %v2240
      %v2242 = vpop.f32.mrf.mxu0
      %v2243 = vpop.f32.mrf.mxu0
      %v2244 = vadd.f32 %v452, %v2243
      %v2245 = vpop.f32.mrf.mxu0
      %2246 = vmatprep.mubr.bf16.mxu0 0
      %2247 = vmatmul.mubr.bf16.gmra.mxu0 %v1084
      %v2248 = vpop.f32.mrf.mxu0
      %v2249 = vadd.f32 %v452, %v2248
      %v2250 = vpop.f32.mrf.mxu0
      %v2251 = vpop.f32.mrf.mxu0
      %v2252 = vadd.f32 %v452, %v2251
      %v2253 = vpop.f32.mrf.mxu0
      %2254 = vmatprep.mubr.bf16.mxu0 0
      %2255 = vmatmul.mubr.bf16.gmra.mxu0 %v1085
      %v2256 = vpop.f32.mrf.mxu0
      %v2257 = vadd.f32 %v452, %v2256
      %v2258 = vpop.f32.mrf.mxu0
      %v2259 = vpop.f32.mrf.mxu0
      %v2260 = vadd.f32 %v452, %v2259
      %v2261 = vpop.f32.mrf.mxu0
      %2262 = vmatprep.mubr.bf16.mxu0 0
      %2263 = vmatmul.mubr.bf16.gmra.mxu0 %v1086
      %v2264 = vpop.f32.mrf.mxu0
      %v2265 = vadd.f32 %v452, %v2264
      %v2266 = vpop.f32.mrf.mxu0
      %v2267 = vpop.f32.mrf.mxu0
      %v2268 = vadd.f32 %v452, %v2267
      %v2269 = vpop.f32.mrf.mxu0
      %2270 = vmatprep.mubr.bf16.mxu0 0
      %2271 = vmatmul.mubr.bf16.gmra.mxu0 %v1087
      %v2272 = vpop.f32.mrf.mxu0
      %v2273 = vadd.f32 %v452, %v2272
      %v2274 = vpop.f32.mrf.mxu0
      %v2275 = vpop.f32.mrf.mxu0
      %v2276 = vadd.f32 %v452, %v2275
      %v2277 = vpop.f32.mrf.mxu0
      %2278 = vmatprep.mubr.bf16.mxu0 0
      %2279 = vmatmul.mubr.bf16.gmra.mxu0 %v1088
      %v2280 = vpop.f32.mrf.mxu0
      %v2281 = vadd.f32 %v452, %v2280
      %v2282 = vpop.f32.mrf.mxu0
      %v2283 = vpop.f32.mrf.mxu0
      %v2284 = vadd.f32 %v452, %v2283
      %v2285 = vpop.f32.mrf.mxu0
      %2286 = vmatprep.mubr.bf16.mxu0 0
      %2287 = vmatmul.mubr.bf16.gmra.mxu0 %v1089
      %v2288 = vpop.f32.mrf.mxu0
      %v2289 = vadd.f32 %v452, %v2288
      %v2290 = vpop.f32.mrf.mxu0
      %v2291 = vpop.f32.mrf.mxu0
      %v2292 = vadd.f32 %v452, %v2291
      %v2293 = vpop.f32.mrf.mxu0
      %2294 = vmatprep.mubr.bf16.mxu0 0
      %2295 = vmatmul.mubr.bf16.gmra.mxu0 %v1090
      %v2296 = vpop.f32.mrf.mxu0
      %v2297 = vadd.f32 %v452, %v2296
      %v2298 = vpop.f32.mrf.mxu0
      %v2299 = vpop.f32.mrf.mxu0
      %v2300 = vadd.f32 %v452, %v2299
      %v2301 = vpop.f32.mrf.mxu0
      %2302 = vmatprep.mubr.bf16.mxu0 0
      %2303 = vmatmul.mubr.bf16.gmra.mxu0 %v1091
      %v2304 = vpop.f32.mrf.mxu0
      %v2305 = vadd.f32 %v452, %v2304
      %v2306 = vpop.f32.mrf.mxu0
      %v2307 = vpop.f32.mrf.mxu0
      %v2308 = vadd.f32 %v452, %v2307
      %v2309 = vpop.f32.mrf.mxu0
      %2310 = vmatprep.mubr.bf16.mxu0 0
      %2311 = vmatmul.mubr.bf16.gmra.mxu0 %v1092
      %v2312 = vpop.f32.mrf.mxu0
      %v2313 = vadd.f32 %v452, %v2312
      %v2314 = vpop.f32.mrf.mxu0
      %v2315 = vpop.f32.mrf.mxu0
      %v2316 = vadd.f32 %v452, %v2315
      %v2317 = vpop.f32.mrf.mxu0
      %2318 = vmatprep.mubr.bf16.mxu0 0
      %2319 = vmatmul.mubr.bf16.gmra.mxu0 %v1093
      %v2320 = vpop.f32.mrf.mxu0
      %v2321 = vadd.f32 %v452, %v2320
      %v2322 = vpop.f32.mrf.mxu0
      %v2323 = vpop.f32.mrf.mxu0
      %v2324 = vadd.f32 %v452, %v2323
      %v2325 = vpop.f32.mrf.mxu0
      %2326 = vdwg.mxu0
      %v2327 = vmax.f32 %v1305, 0.0
      %v2328 = vmax.f32 %v1308, 0.0
      %v2329 = vmax.f32 %v1313, 0.0
      %v2330 = vmax.f32 %v1316, 0.0
      %v2331 = vmax.f32 %v1321, 0.0
      %v2332 = vmax.f32 %v1324, 0.0
      %v2333 = vmax.f32 %v1329, 0.0
      %v2334 = vmax.f32 %v1332, 0.0
      %v2335 = vmax.f32 %v1337, 0.0
      %v2336 = vmax.f32 %v1340, 0.0
      %v2337 = vmax.f32 %v1345, 0.0
      %v2338 = vmax.f32 %v1348, 0.0
      %v2339 = vmax.f32 %v1353, 0.0
      %v2340 = vmax.f32 %v1356, 0.0
      %v2341 = vmax.f32 %v1361, 0.0
      %v2342 = vmax.f32 %v1364, 0.0
      %v2343 = vmax.f32 %v1369, 0.0
      %v2344 = vmax.f32 %v1372, 0.0
      %v2345 = vmax.f32 %v1377, 0.0
      %v2346 = vmax.f32 %v1380, 0.0
      %v2347 = vmax.f32 %v1385, 0.0
      %v2348 = vmax.f32 %v1388, 0.0
      %v2349 = vmax.f32 %v1393, 0.0
      %v2350 = vmax.f32 %v1396, 0.0
      %v2351 = vmax.f32 %v1401, 0.0
      %v2352 = vmax.f32 %v1404, 0.0
      %v2353 = vmax.f32 %v1409, 0.0
      %v2354 = vmax.f32 %v1412, 0.0
      %v2355 = vmax.f32 %v1417, 0.0
      %v2356 = vmax.f32 %v1420, 0.0
      %v2357 = vmax.f32 %v1425, 0.0
      %v2358 = vmax.f32 %v1428, 0.0
      %v2359 = vmax.f32 %v1433, 0.0
      %v2360 = vmax.f32 %v1436, 0.0
      %v2361 = vmax.f32 %v1441, 0.0
      %v2362 = vmax.f32 %v1444, 0.0
      %v2363 = vmax.f32 %v1449, 0.0
      %v2364 = vmax.f32 %v1452, 0.0
      %v2365 = vmax.f32 %v1457, 0.0
      %v2366 = vmax.f32 %v1460, 0.0
      %v2367 = vmax.f32 %v1465, 0.0
      %v2368 = vmax.f32 %v1468, 0.0
      %v2369 = vmax.f32 %v1473, 0.0
      %v2370 = vmax.f32 %v1476, 0.0
      %v2371 = vmax.f32 %v1481, 0.0
      %v2372 = vmax.f32 %v1484, 0.0
      %v2373 = vmax.f32 %v1489, 0.0
      %v2374 = vmax.f32 %v1492, 0.0
      %v2375 = vmax.f32 %v1497, 0.0
      %v2376 = vmax.f32 %v1500, 0.0
      %v2377 = vmax.f32 %v1505, 0.0
      %v2378 = vmax.f32 %v1508, 0.0
      %v2379 = vmax.f32 %v1513, 0.0
      %v2380 = vmax.f32 %v1516, 0.0
      %v2381 = vmax.f32 %v1521, 0.0
      %v2382 = vmax.f32 %v1524, 0.0
      %v2383 = vmax.f32 %v1529, 0.0
      %v2384 = vmax.f32 %v1532, 0.0
      %v2385 = vmax.f32 %v1537, 0.0
      %v2386 = vmax.f32 %v1540, 0.0
      %v2387 = vmax.f32 %v1545, 0.0
      %v2388 = vmax.f32 %v1548, 0.0
      %v2389 = vmax.f32 %v1553, 0.0
      %v2390 = vmax.f32 %v1556, 0.0
      %v2391 = vmax.f32 %v1561, 0.0
      %v2392 = vmax.f32 %v1564, 0.0
      %v2393 = vmax.f32 %v1569, 0.0
      %v2394 = vmax.f32 %v1572, 0.0
      %v2395 = vmax.f32 %v1577, 0.0
      %v2396 = vmax.f32 %v1580, 0.0
      %v2397 = vmax.f32 %v1585, 0.0
      %v2398 = vmax.f32 %v1588, 0.0
      %v2399 = vmax.f32 %v1593, 0.0
      %v2400 = vmax.f32 %v1596, 0.0
      %v2401 = vmax.f32 %v1601, 0.0
      %v2402 = vmax.f32 %v1604, 0.0
      %v2403 = vmax.f32 %v1609, 0.0
      %v2404 = vmax.f32 %v1612, 0.0
      %v2405 = vmax.f32 %v1617, 0.0
      %v2406 = vmax.f32 %v1620, 0.0
      %v2407 = vmax.f32 %v1625, 0.0
      %v2408 = vmax.f32 %v1628, 0.0
      %v2409 = vmax.f32 %v1633, 0.0
      %v2410 = vmax.f32 %v1636, 0.0
      %v2411 = vmax.f32 %v1641, 0.0
      %v2412 = vmax.f32 %v1644, 0.0
      %v2413 = vmax.f32 %v1649, 0.0
      %v2414 = vmax.f32 %v1652, 0.0
      %v2415 = vmax.f32 %v1657, 0.0
      %v2416 = vmax.f32 %v1660, 0.0
      %v2417 = vmax.f32 %v1665, 0.0
      %v2418 = vmax.f32 %v1668, 0.0
      %v2419 = vmax.f32 %v1673, 0.0
      %v2420 = vmax.f32 %v1676, 0.0
      %v2421 = vmax.f32 %v1681, 0.0
      %v2422 = vmax.f32 %v1684, 0.0
      %v2423 = vmax.f32 %v1689, 0.0
      %v2424 = vmax.f32 %v1692, 0.0
      %v2425 = vmax.f32 %v1697, 0.0
      %v2426 = vmax.f32 %v1700, 0.0
      %v2427 = vmax.f32 %v1705, 0.0
      %v2428 = vmax.f32 %v1708, 0.0
      %v2429 = vmax.f32 %v1713, 0.0
      %v2430 = vmax.f32 %v1716, 0.0
      %v2431 = vmax.f32 %v1721, 0.0
      %v2432 = vmax.f32 %v1724, 0.0
      %v2433 = vmax.f32 %v1729, 0.0
      %v2434 = vmax.f32 %v1732, 0.0
      %v2435 = vmax.f32 %v1737, 0.0
      %v2436 = vmax.f32 %v1740, 0.0
      %v2437 = vmax.f32 %v1745, 0.0
      %v2438 = vmax.f32 %v1748, 0.0
      %v2439 = vmax.f32 %v1753, 0.0
      %v2440 = vmax.f32 %v1756, 0.0
      %v2441 = vmax.f32 %v1761, 0.0
      %v2442 = vmax.f32 %v1764, 0.0
      %v2443 = vmax.f32 %v1769, 0.0
      %v2444 = vmax.f32 %v1772, 0.0
      %v2445 = vmax.f32 %v1777, 0.0
      %v2446 = vmax.f32 %v1780, 0.0
      %v2447 = vmax.f32 %v1785, 0.0
      %v2448 = vmax.f32 %v1788, 0.0
      %v2449 = vmax.f32 %v1793, 0.0
      %v2450 = vmax.f32 %v1796, 0.0
      %v2451 = vmax.f32 %v1801, 0.0
      %v2452 = vmax.f32 %v1804, 0.0
      %v2453 = vmax.f32 %v1809, 0.0
      %v2454 = vmax.f32 %v1812, 0.0
      %v2455 = vmax.f32 %v1817, 0.0
      %v2456 = vmax.f32 %v1820, 0.0
      %v2457 = vmax.f32 %v1825, 0.0
      %v2458 = vmax.f32 %v1828, 0.0
      %v2459 = vmax.f32 %v1833, 0.0
      %v2460 = vmax.f32 %v1836, 0.0
      %v2461 = vmax.f32 %v1841, 0.0
      %v2462 = vmax.f32 %v1844, 0.0
      %v2463 = vmax.f32 %v1849, 0.0
      %v2464 = vmax.f32 %v1852, 0.0
      %v2465 = vmax.f32 %v1857, 0.0
      %v2466 = vmax.f32 %v1860, 0.0
      %v2467 = vmax.f32 %v1865, 0.0
      %v2468 = vmax.f32 %v1868, 0.0
      %v2469 = vmax.f32 %v1873, 0.0
      %v2470 = vmax.f32 %v1876, 0.0
      %v2471 = vmax.f32 %v1881, 0.0
      %v2472 = vmax.f32 %v1884, 0.0
      %v2473 = vmax.f32 %v1889, 0.0
      %v2474 = vmax.f32 %v1892, 0.0
      %v2475 = vmax.f32 %v1897, 0.0
      %v2476 = vmax.f32 %v1900, 0.0
      %v2477 = vmax.f32 %v1905, 0.0
      %v2478 = vmax.f32 %v1908, 0.0
      %v2479 = vmax.f32 %v1913, 0.0
      %v2480 = vmax.f32 %v1916, 0.0
      %v2481 = vmax.f32 %v1921, 0.0
      %v2482 = vmax.f32 %v1924, 0.0
      %v2483 = vmax.f32 %v1929, 0.0
      %v2484 = vmax.f32 %v1932, 0.0
      %v2485 = vmax.f32 %v1937, 0.0
      %v2486 = vmax.f32 %v1940, 0.0
      %v2487 = vmax.f32 %v1945, 0.0
      %v2488 = vmax.f32 %v1948, 0.0
      %v2489 = vmax.f32 %v1953, 0.0
      %v2490 = vmax.f32 %v1956, 0.0
      %v2491 = vmax.f32 %v1961, 0.0
      %v2492 = vmax.f32 %v1964, 0.0
      %v2493 = vmax.f32 %v1969, 0.0
      %v2494 = vmax.f32 %v1972, 0.0
      %v2495 = vmax.f32 %v1977, 0.0
      %v2496 = vmax.f32 %v1980, 0.0
      %v2497 = vmax.f32 %v1985, 0.0
      %v2498 = vmax.f32 %v1988, 0.0
      %v2499 = vmax.f32 %v1993, 0.0
      %v2500 = vmax.f32 %v1996, 0.0
      %v2501 = vmax.f32 %v2001, 0.0
      %v2502 = vmax.f32 %v2004, 0.0
      %v2503 = vmax.f32 %v2009, 0.0
      %v2504 = vmax.f32 %v2012, 0.0
      %v2505 = vmax.f32 %v2017, 0.0
      %v2506 = vmax.f32 %v2020, 0.0
      %v2507 = vmax.f32 %v2025, 0.0
      %v2508 = vmax.f32 %v2028, 0.0
      %v2509 = vmax.f32 %v2033, 0.0
      %v2510 = vmax.f32 %v2036, 0.0
      %v2511 = vmax.f32 %v2041, 0.0
      %v2512 = vmax.f32 %v2044, 0.0
      %v2513 = vmax.f32 %v2049, 0.0
      %v2514 = vmax.f32 %v2052, 0.0
      %v2515 = vmax.f32 %v2057, 0.0
      %v2516 = vmax.f32 %v2060, 0.0
      %v2517 = vmax.f32 %v2065, 0.0
      %v2518 = vmax.f32 %v2068, 0.0
      %v2519 = vmax.f32 %v2073, 0.0
      %v2520 = vmax.f32 %v2076, 0.0
      %v2521 = vmax.f32 %v2081, 0.0
      %v2522 = vmax.f32 %v2084, 0.0
      %v2523 = vmax.f32 %v2089, 0.0
      %v2524 = vmax.f32 %v2092, 0.0
      %v2525 = vmax.f32 %v2097, 0.0
      %v2526 = vmax.f32 %v2100, 0.0
      %v2527 = vmax.f32 %v2105, 0.0
      %v2528 = vmax.f32 %v2108, 0.0
      %v2529 = vmax.f32 %v2113, 0.0
      %v2530 = vmax.f32 %v2116, 0.0
      %v2531 = vmax.f32 %v2121, 0.0
      %v2532 = vmax.f32 %v2124, 0.0
      %v2533 = vmax.f32 %v2129, 0.0
      %v2534 = vmax.f32 %v2132, 0.0
      %v2535 = vmax.f32 %v2137, 0.0
      %v2536 = vmax.f32 %v2140, 0.0
      %v2537 = vmax.f32 %v2145, 0.0
      %v2538 = vmax.f32 %v2148, 0.0
      %v2539 = vmax.f32 %v2153, 0.0
      %v2540 = vmax.f32 %v2156, 0.0
      %v2541 = vmax.f32 %v2161, 0.0
      %v2542 = vmax.f32 %v2164, 0.0
      %v2543 = vmax.f32 %v2169, 0.0
      %v2544 = vmax.f32 %v2172, 0.0
      %v2545 = vmax.f32 %v2177, 0.0
      %v2546 = vmax.f32 %v2180, 0.0
      %v2547 = vmax.f32 %v2185, 0.0
      %v2548 = vmax.f32 %v2188, 0.0
      %v2549 = vmax.f32 %v2193, 0.0
      %v2550 = vmax.f32 %v2196, 0.0
      %v2551 = vmax.f32 %v2201, 0.0
      %v2552 = vmax.f32 %v2204, 0.0
      %v2553 = vmax.f32 %v2209, 0.0
      %v2554 = vmax.f32 %v2212, 0.0
      %v2555 = vmax.f32 %v2217, 0.0
      %v2556 = vmax.f32 %v2220, 0.0
      %v2557 = vmax.f32 %v2225, 0.0
      %v2558 = vmax.f32 %v2228, 0.0
      %v2559 = vmax.f32 %v2233, 0.0
      %v2560 = vmax.f32 %v2236, 0.0
      %v2561 = vmax.f32 %v2241, 0.0
      %v2562 = vmax.f32 %v2244, 0.0
      %v2563 = vmax.f32 %v2249, 0.0
      %v2564 = vmax.f32 %v2252, 0.0
      %v2565 = vmax.f32 %v2257, 0.0
      %v2566 = vmax.f32 %v2260, 0.0
      %v2567 = vmax.f32 %v2265, 0.0
      %v2568 = vmax.f32 %v2268, 0.0
      %v2569 = vmax.f32 %v2273, 0.0
      %v2570 = vmax.f32 %v2276, 0.0
      %v2571 = vmax.f32 %v2281, 0.0
      %v2572 = vmax.f32 %v2284, 0.0
      %v2573 = vmax.f32 %v2289, 0.0
      %v2574 = vmax.f32 %v2292, 0.0
      %v2575 = vmax.f32 %v2297, 0.0
      %v2576 = vmax.f32 %v2300, 0.0
      %v2577 = vmax.f32 %v2305, 0.0
      %v2578 = vmax.f32 %v2308, 0.0
      %v2579 = vmax.f32 %v2313, 0.0
      %v2580 = vmax.f32 %v2316, 0.0
      %v2581 = vmax.f32 %v2321, 0.0
      %v2582 = vmax.f32 %v2324, 0.0
      %2583 = vst [vmem:[%s172] sm:$0xff] %v2327
      %2584 = vst [vmem:[%s172 + $0x8] sm:$0xff] %v2328
      %2585 = vst [vmem:[%s172 + $0x10] sm:$0xff] %v2329
      %2586 = vst [vmem:[%s172 + $0x18] sm:$0xff] %v2330
      %2587 = vst [vmem:[%s172 + $0x20] sm:$0xff] %v2331
      %2588 = vst [vmem:[%s172 + $0x28] sm:$0xff] %v2332
      %2589 = vst [vmem:[%s172 + $0x30] sm:$0xff] %v2333
      %2590 = vst [vmem:[%s172 + $0x38] sm:$0xff] %v2334
      %2591 = vst [vmem:[%s172 + $0x40] sm:$0xff] %v2335
      %2592 = vst [vmem:[%s172 + $0x48] sm:$0xff] %v2336
      %2593 = vst [vmem:[%s172 + $0x50] sm:$0xff] %v2337
      %2594 = vst [vmem:[%s172 + $0x58] sm:$0xff] %v2338
      %2595 = vst [vmem:[%s172 + $0x60] sm:$0xff] %v2339
      %2596 = vst [vmem:[%s172 + $0x68] sm:$0xff] %v2340
      %2597 = vst [vmem:[%s172 + $0x70] sm:$0xff] %v2341
      %2598 = vst [vmem:[%s172 + $0x78] sm:$0xff] %v2342
      %2599 = vst [vmem:[%s172 + $0x80] sm:$0xff] %v2343
      %2600 = vst [vmem:[%s172 + $0x88] sm:$0xff] %v2344
      %2601 = vst [vmem:[%s172 + $0x90] sm:$0xff] %v2345
      %2602 = vst [vmem:[%s172 + $0x98] sm:$0xff] %v2346
      %2603 = vst [vmem:[%s172 + $0xa0] sm:$0xff] %v2347
      %2604 = vst [vmem:[%s172 + $0xa8] sm:$0xff] %v2348
      %2605 = vst [vmem:[%s172 + $0xb0] sm:$0xff] %v2349
      %2606 = vst [vmem:[%s172 + $0xb8] sm:$0xff] %v2350
      %2607 = vst [vmem:[%s172 + $0xc0] sm:$0xff] %v2351
      %2608 = vst [vmem:[%s172 + $0xc8] sm:$0xff] %v2352
      %2609 = vst [vmem:[%s172 + $0xd0] sm:$0xff] %v2353
      %2610 = vst [vmem:[%s172 + $0xd8] sm:$0xff] %v2354
      %2611 = vst [vmem:[%s172 + $0xe0] sm:$0xff] %v2355
      %2612 = vst [vmem:[%s172 + $0xe8] sm:$0xff] %v2356
      %2613 = vst [vmem:[%s172 + $0xf0] sm:$0xff] %v2357
      %2614 = vst [vmem:[%s172 + $0xf8] sm:$0xff] %v2358
      %2615 = vst [vmem:[%s172 + $0x100] sm:$0xff] %v2359
      %2616 = vst [vmem:[%s172 + $0x108] sm:$0xff] %v2360
      %2617 = vst [vmem:[%s172 + $0x110] sm:$0xff] %v2361
      %2618 = vst [vmem:[%s172 + $0x118] sm:$0xff] %v2362
      %2619 = vst [vmem:[%s172 + $0x120] sm:$0xff] %v2363
      %2620 = vst [vmem:[%s172 + $0x128] sm:$0xff] %v2364
      %2621 = vst [vmem:[%s172 + $0x130] sm:$0xff] %v2365
      %2622 = vst [vmem:[%s172 + $0x138] sm:$0xff] %v2366
      %2623 = vst [vmem:[%s172 + $0x140] sm:$0xff] %v2367
      %2624 = vst [vmem:[%s172 + $0x148] sm:$0xff] %v2368
      %2625 = vst [vmem:[%s172 + $0x150] sm:$0xff] %v2369
      %2626 = vst [vmem:[%s172 + $0x158] sm:$0xff] %v2370
      %2627 = vst [vmem:[%s172 + $0x160] sm:$0xff] %v2371
      %2628 = vst [vmem:[%s172 + $0x168] sm:$0xff] %v2372
      %2629 = vst [vmem:[%s172 + $0x170] sm:$0xff] %v2373
      %2630 = vst [vmem:[%s172 + $0x178] sm:$0xff] %v2374
      %2631 = vst [vmem:[%s172 + $0x180] sm:$0xff] %v2375
      %2632 = vst [vmem:[%s172 + $0x188] sm:$0xff] %v2376
      %2633 = vst [vmem:[%s172 + $0x190] sm:$0xff] %v2377
      %2634 = vst [vmem:[%s172 + $0x198] sm:$0xff] %v2378
      %2635 = vst [vmem:[%s172 + $0x1a0] sm:$0xff] %v2379
      %2636 = vst [vmem:[%s172 + $0x1a8] sm:$0xff] %v2380
      %2637 = vst [vmem:[%s172 + $0x1b0] sm:$0xff] %v2381
      %2638 = vst [vmem:[%s172 + $0x1b8] sm:$0xff] %v2382
      %2639 = vst [vmem:[%s172 + $0x1c0] sm:$0xff] %v2383
      %2640 = vst [vmem:[%s172 + $0x1c8] sm:$0xff] %v2384
      %2641 = vst [vmem:[%s172 + $0x1d0] sm:$0xff] %v2385
      %2642 = vst [vmem:[%s172 + $0x1d8] sm:$0xff] %v2386
      %2643 = vst [vmem:[%s172 + $0x1e0] sm:$0xff] %v2387
      %2644 = vst [vmem:[%s172 + $0x1e8] sm:$0xff] %v2388
      %2645 = vst [vmem:[%s172 + $0x1f0] sm:$0xff] %v2389
      %2646 = vst [vmem:[%s172 + $0x1f8] sm:$0xff] %v2390
      %2647 = vst [vmem:[%s172 + $0x200] sm:$0xff] %v2391
      %2648 = vst [vmem:[%s172 + $0x208] sm:$0xff] %v2392
      %2649 = vst [vmem:[%s172 + $0x210] sm:$0xff] %v2393
      %2650 = vst [vmem:[%s172 + $0x218] sm:$0xff] %v2394
      %2651 = vst [vmem:[%s172 + $0x220] sm:$0xff] %v2395
      %2652 = vst [vmem:[%s172 + $0x228] sm:$0xff] %v2396
      %2653 = vst [vmem:[%s172 + $0x230] sm:$0xff] %v2397
      %2654 = vst [vmem:[%s172 + $0x238] sm:$0xff] %v2398
      %2655 = vst [vmem:[%s172 + $0x240] sm:$0xff] %v2399
      %2656 = vst [vmem:[%s172 + $0x248] sm:$0xff] %v2400
      %2657 = vst [vmem:[%s172 + $0x250] sm:$0xff] %v2401
      %2658 = vst [vmem:[%s172 + $0x258] sm:$0xff] %v2402
      %2659 = vst [vmem:[%s172 + $0x260] sm:$0xff] %v2403
      %2660 = vst [vmem:[%s172 + $0x268] sm:$0xff] %v2404
      %2661 = vst [vmem:[%s172 + $0x270] sm:$0xff] %v2405
      %2662 = vst [vmem:[%s172 + $0x278] sm:$0xff] %v2406
      %2663 = vst [vmem:[%s172 + $0x280] sm:$0xff] %v2407
      %2664 = vst [vmem:[%s172 + $0x288] sm:$0xff] %v2408
      %2665 = vst [vmem:[%s172 + $0x290] sm:$0xff] %v2409
      %2666 = vst [vmem:[%s172 + $0x298] sm:$0xff] %v2410
      %2667 = vst [vmem:[%s172 + $0x2a0] sm:$0xff] %v2411
      %2668 = vst [vmem:[%s172 + $0x2a8] sm:$0xff] %v2412
      %2669 = vst [vmem:[%s172 + $0x2b0] sm:$0xff] %v2413
      %2670 = vst [vmem:[%s172 + $0x2b8] sm:$0xff] %v2414
      %2671 = vst [vmem:[%s172 + $0x2c0] sm:$0xff] %v2415
      %2672 = vst [vmem:[%s172 + $0x2c8] sm:$0xff] %v2416
      %2673 = vst [vmem:[%s172 + $0x2d0] sm:$0xff] %v2417
      %2674 = vst [vmem:[%s172 + $0x2d8] sm:$0xff] %v2418
      %2675 = vst [vmem:[%s172 + $0x2e0] sm:$0xff] %v2419
      %2676 = vst [vmem:[%s172 + $0x2e8] sm:$0xff] %v2420
      %2677 = vst [vmem:[%s172 + $0x2f0] sm:$0xff] %v2421
      %2678 = vst [vmem:[%s172 + $0x2f8] sm:$0xff] %v2422
      %2679 = vst [vmem:[%s172 + $0x300] sm:$0xff] %v2423
      %2680 = vst [vmem:[%s172 + $0x308] sm:$0xff] %v2424
      %2681 = vst [vmem:[%s172 + $0x310] sm:$0xff] %v2425
      %2682 = vst [vmem:[%s172 + $0x318] sm:$0xff] %v2426
      %2683 = vst [vmem:[%s172 + $0x320] sm:$0xff] %v2427
      %2684 = vst [vmem:[%s172 + $0x328] sm:$0xff] %v2428
      %2685 = vst [vmem:[%s172 + $0x330] sm:$0xff] %v2429
      %2686 = vst [vmem:[%s172 + $0x338] sm:$0xff] %v2430
      %2687 = vst [vmem:[%s172 + $0x340] sm:$0xff] %v2431
      %2688 = vst [vmem:[%s172 + $0x348] sm:$0xff] %v2432
      %2689 = vst [vmem:[%s172 + $0x350] sm:$0xff] %v2433
      %2690 = vst [vmem:[%s172 + $0x358] sm:$0xff] %v2434
      %2691 = vst [vmem:[%s172 + $0x360] sm:$0xff] %v2435
      %2692 = vst [vmem:[%s172 + $0x368] sm:$0xff] %v2436
      %2693 = vst [vmem:[%s172 + $0x370] sm:$0xff] %v2437
      %2694 = vst [vmem:[%s172 + $0x378] sm:$0xff] %v2438
      %2695 = vst [vmem:[%s172 + $0x380] sm:$0xff] %v2439
      %2696 = vst [vmem:[%s172 + $0x388] sm:$0xff] %v2440
      %2697 = vst [vmem:[%s172 + $0x390] sm:$0xff] %v2441
      %2698 = vst [vmem:[%s172 + $0x398] sm:$0xff] %v2442
      %2699 = vst [vmem:[%s172 + $0x3a0] sm:$0xff] %v2443
      %2700 = vst [vmem:[%s172 + $0x3a8] sm:$0xff] %v2444
      %2701 = vst [vmem:[%s172 + $0x3b0] sm:$0xff] %v2445
      %2702 = vst [vmem:[%s172 + $0x3b8] sm:$0xff] %v2446
      %2703 = vst [vmem:[%s172 + $0x3c0] sm:$0xff] %v2447
      %2704 = vst [vmem:[%s172 + $0x3c8] sm:$0xff] %v2448
      %2705 = vst [vmem:[%s172 + $0x3d0] sm:$0xff] %v2449
      %2706 = vst [vmem:[%s172 + $0x3d8] sm:$0xff] %v2450
      %2707 = vst [vmem:[%s172 + $0x3e0] sm:$0xff] %v2451
      %2708 = vst [vmem:[%s172 + $0x3e8] sm:$0xff] %v2452
      %2709 = vst [vmem:[%s172 + $0x3f0] sm:$0xff] %v2453
      %2710 = vst [vmem:[%s172 + $0x3f8] sm:$0xff] %v2454
      %2711 = vst [vmem:[%s172 + $0x400] sm:$0xff] %v2455
      %2712 = vst [vmem:[%s172 + $0x408] sm:$0xff] %v2456
      %2713 = vst [vmem:[%s172 + $0x410] sm:$0xff] %v2457
      %2714 = vst [vmem:[%s172 + $0x418] sm:$0xff] %v2458
      %2715 = vst [vmem:[%s172 + $0x420] sm:$0xff] %v2459
      %2716 = vst [vmem:[%s172 + $0x428] sm:$0xff] %v2460
      %2717 = vst [vmem:[%s172 + $0x430] sm:$0xff] %v2461
      %2718 = vst [vmem:[%s172 + $0x438] sm:$0xff] %v2462
      %2719 = vst [vmem:[%s172 + $0x440] sm:$0xff] %v2463
      %2720 = vst [vmem:[%s172 + $0x448] sm:$0xff] %v2464
      %2721 = vst [vmem:[%s172 + $0x450] sm:$0xff] %v2465
      %2722 = vst [vmem:[%s172 + $0x458] sm:$0xff] %v2466
      %2723 = vst [vmem:[%s172 + $0x460] sm:$0xff] %v2467
      %2724 = vst [vmem:[%s172 + $0x468] sm:$0xff] %v2468
      %2725 = vst [vmem:[%s172 + $0x470] sm:$0xff] %v2469
      %2726 = vst [vmem:[%s172 + $0x478] sm:$0xff] %v2470
      %2727 = vst [vmem:[%s172 + $0x480] sm:$0xff] %v2471
      %2728 = vst [vmem:[%s172 + $0x488] sm:$0xff] %v2472
      %2729 = vst [vmem:[%s172 + $0x490] sm:$0xff] %v2473
      %2730 = vst [vmem:[%s172 + $0x498] sm:$0xff] %v2474
      %2731 = vst [vmem:[%s172 + $0x4a0] sm:$0xff] %v2475
      %2732 = vst [vmem:[%s172 + $0x4a8] sm:$0xff] %v2476
      %2733 = vst [vmem:[%s172 + $0x4b0] sm:$0xff] %v2477
      %2734 = vst [vmem:[%s172 + $0x4b8] sm:$0xff] %v2478
      %2735 = vst [vmem:[%s172 + $0x4c0] sm:$0xff] %v2479
      %2736 = vst [vmem:[%s172 + $0x4c8] sm:$0xff] %v2480
      %2737 = vst [vmem:[%s172 + $0x4d0] sm:$0xff] %v2481
      %2738 = vst [vmem:[%s172 + $0x4d8] sm:$0xff] %v2482
      %2739 = vst [vmem:[%s172 + $0x4e0] sm:$0xff] %v2483
      %2740 = vst [vmem:[%s172 + $0x4e8] sm:$0xff] %v2484
      %2741 = vst [vmem:[%s172 + $0x4f0] sm:$0xff] %v2485
      %2742 = vst [vmem:[%s172 + $0x4f8] sm:$0xff] %v2486
      %2743 = vst [vmem:[%s172 + $0x500] sm:$0xff] %v2487
      %2744 = vst [vmem:[%s172 + $0x508] sm:$0xff] %v2488
      %2745 = vst [vmem:[%s172 + $0x510] sm:$0xff] %v2489
      %2746 = vst [vmem:[%s172 + $0x518] sm:$0xff] %v2490
      %2747 = vst [vmem:[%s172 + $0x520] sm:$0xff] %v2491
      %2748 = vst [vmem:[%s172 + $0x528] sm:$0xff] %v2492
      %2749 = vst [vmem:[%s172 + $0x530] sm:$0xff] %v2493
      %2750 = vst [vmem:[%s172 + $0x538] sm:$0xff] %v2494
      %2751 = vst [vmem:[%s172 + $0x540] sm:$0xff] %v2495
      %2752 = vst [vmem:[%s172 + $0x548] sm:$0xff] %v2496
      %2753 = vst [vmem:[%s172 + $0x550] sm:$0xff] %v2497
      %2754 = vst [vmem:[%s172 + $0x558] sm:$0xff] %v2498
      %2755 = vst [vmem:[%s172 + $0x560] sm:$0xff] %v2499
      %2756 = vst [vmem:[%s172 + $0x568] sm:$0xff] %v2500
      %2757 = vst [vmem:[%s172 + $0x570] sm:$0xff] %v2501
      %2758 = vst [vmem:[%s172 + $0x578] sm:$0xff] %v2502
      %2759 = vst [vmem:[%s172 + $0x580] sm:$0xff] %v2503
      %2760 = vst [vmem:[%s172 + $0x588] sm:$0xff] %v2504
      %2761 = vst [vmem:[%s172 + $0x590] sm:$0xff] %v2505
      %2762 = vst [vmem:[%s172 + $0x598] sm:$0xff] %v2506
      %2763 = vst [vmem:[%s172 + $0x5a0] sm:$0xff] %v2507
      %2764 = vst [vmem:[%s172 + $0x5a8] sm:$0xff] %v2508
      %2765 = vst [vmem:[%s172 + $0x5b0] sm:$0xff] %v2509
      %2766 = vst [vmem:[%s172 + $0x5b8] sm:$0xff] %v2510
      %2767 = vst [vmem:[%s172 + $0x5c0] sm:$0xff] %v2511
      %2768 = vst [vmem:[%s172 + $0x5c8] sm:$0xff] %v2512
      %2769 = vst [vmem:[%s172 + $0x5d0] sm:$0xff] %v2513
      %2770 = vst [vmem:[%s172 + $0x5d8] sm:$0xff] %v2514
      %2771 = vst [vmem:[%s172 + $0x5e0] sm:$0xff] %v2515
      %2772 = vst [vmem:[%s172 + $0x5e8] sm:$0xff] %v2516
      %2773 = vst [vmem:[%s172 + $0x5f0] sm:$0xff] %v2517
      %2774 = vst [vmem:[%s172 + $0x5f8] sm:$0xff] %v2518
      %2775 = vst [vmem:[%s172 + $0x600] sm:$0xff] %v2519
      %2776 = vst [vmem:[%s172 + $0x608] sm:$0xff] %v2520
      %2777 = vst [vmem:[%s172 + $0x610] sm:$0xff] %v2521
      %2778 = vst [vmem:[%s172 + $0x618] sm:$0xff] %v2522
      %2779 = vst [vmem:[%s172 + $0x620] sm:$0xff] %v2523
      %2780 = vst [vmem:[%s172 + $0x628] sm:$0xff] %v2524
      %2781 = vst [vmem:[%s172 + $0x630] sm:$0xff] %v2525
      %2782 = vst [vmem:[%s172 + $0x638] sm:$0xff] %v2526
      %2783 = vst [vmem:[%s172 + $0x640] sm:$0xff] %v2527
      %2784 = vst [vmem:[%s172 + $0x648] sm:$0xff] %v2528
      %2785 = vst [vmem:[%s172 + $0x650] sm:$0xff] %v2529
      %2786 = vst [vmem:[%s172 + $0x658] sm:$0xff] %v2530
      %2787 = vst [vmem:[%s172 + $0x660] sm:$0xff] %v2531
      %2788 = vst [vmem:[%s172 + $0x668] sm:$0xff] %v2532
      %2789 = vst [vmem:[%s172 + $0x670] sm:$0xff] %v2533
      %2790 = vst [vmem:[%s172 + $0x678] sm:$0xff] %v2534
      %2791 = vst [vmem:[%s172 + $0x680] sm:$0xff] %v2535
      %2792 = vst [vmem:[%s172 + $0x688] sm:$0xff] %v2536
      %2793 = vst [vmem:[%s172 + $0x690] sm:$0xff] %v2537
      %2794 = vst [vmem:[%s172 + $0x698] sm:$0xff] %v2538
      %2795 = vst [vmem:[%s172 + $0x6a0] sm:$0xff] %v2539
      %2796 = vst [vmem:[%s172 + $0x6a8] sm:$0xff] %v2540
      %2797 = vst [vmem:[%s172 + $0x6b0] sm:$0xff] %v2541
      %2798 = vst [vmem:[%s172 + $0x6b8] sm:$0xff] %v2542
      %2799 = vst [vmem:[%s172 + $0x6c0] sm:$0xff] %v2543
      %2800 = vst [vmem:[%s172 + $0x6c8] sm:$0xff] %v2544
      %2801 = vst [vmem:[%s172 + $0x6d0] sm:$0xff] %v2545
      %2802 = vst [vmem:[%s172 + $0x6d8] sm:$0xff] %v2546
      %2803 = vst [vmem:[%s172 + $0x6e0] sm:$0xff] %v2547
      %2804 = vst [vmem:[%s172 + $0x6e8] sm:$0xff] %v2548
      %2805 = vst [vmem:[%s172 + $0x6f0] sm:$0xff] %v2549
      %2806 = vst [vmem:[%s172 + $0x6f8] sm:$0xff] %v2550
      %2807 = vst [vmem:[%s172 + $0x700] sm:$0xff] %v2551
      %2808 = vst [vmem:[%s172 + $0x708] sm:$0xff] %v2552
      %2809 = vst [vmem:[%s172 + $0x710] sm:$0xff] %v2553
      %2810 = vst [vmem:[%s172 + $0x718] sm:$0xff] %v2554
      %2811 = vst [vmem:[%s172 + $0x720] sm:$0xff] %v2555
      %2812 = vst [vmem:[%s172 + $0x728] sm:$0xff] %v2556
      %2813 = vst [vmem:[%s172 + $0x730] sm:$0xff] %v2557
      %2814 = vst [vmem:[%s172 + $0x738] sm:$0xff] %v2558
      %2815 = vst [vmem:[%s172 + $0x740] sm:$0xff] %v2559
      %2816 = vst [vmem:[%s172 + $0x748] sm:$0xff] %v2560
      %2817 = vst [vmem:[%s172 + $0x750] sm:$0xff] %v2561
      %2818 = vst [vmem:[%s172 + $0x758] sm:$0xff] %v2562
      %2819 = vst [vmem:[%s172 + $0x760] sm:$0xff] %v2563
      %2820 = vst [vmem:[%s172 + $0x768] sm:$0xff] %v2564
      %2821 = vst [vmem:[%s172 + $0x770] sm:$0xff] %v2565
      %2822 = vst [vmem:[%s172 + $0x778] sm:$0xff] %v2566
      %2823 = vst [vmem:[%s172 + $0x780] sm:$0xff] %v2567
      %2824 = vst [vmem:[%s172 + $0x788] sm:$0xff] %v2568
      %2825 = vst [vmem:[%s172 + $0x790] sm:$0xff] %v2569
      %2826 = vst [vmem:[%s172 + $0x798] sm:$0xff] %v2570
      %2827 = vst [vmem:[%s172 + $0x7a0] sm:$0xff] %v2571
      %2828 = vst [vmem:[%s172 + $0x7a8] sm:$0xff] %v2572
      %2829 = vst [vmem:[%s172 + $0x7b0] sm:$0xff] %v2573
      %2830 = vst [vmem:[%s172 + $0x7b8] sm:$0xff] %v2574
      %2831 = vst [vmem:[%s172 + $0x7c0] sm:$0xff] %v2575
      %2832 = vst [vmem:[%s172 + $0x7c8] sm:$0xff] %v2576
      %2833 = vst [vmem:[%s172 + $0x7d0] sm:$0xff] %v2577
      %2834 = vst [vmem:[%s172 + $0x7d8] sm:$0xff] %v2578
      %2835 = vst [vmem:[%s172 + $0x7e0] sm:$0xff] %v2579
      %2836 = vst [vmem:[%s172 + $0x7e8] sm:$0xff] %v2580
      %2837 = vst [vmem:[%s172 + $0x7f0] sm:$0xff] %v2581
      %2838 = vst [vmem:[%s172 + $0x7f8] sm:$0xff] %v2582
      %s2839 = smul.u32 256, %s14
      %p2840 = scmp.lt.s32.totalorder %s2839, 511
      %s2841 = scalar_select %p2840, %s2839, 511
      %s2842 = smul.addr %s2841, 8
      %s2843 = scalar_lea.vmem %s3, %s2842
      // Predicated region
      $region33: #{unique_eq3_net_mini.3} parent=31 // pred_check
        %p2844 = pneg %p100
      $region34: #{unique_eq3_net_mini.3} parent=31 // pred_check_branch
        %2846 = sbr.rel (%p2844) target = $region36
      $region35: #{unique_eq3_net_mini.3} parent=31 // pred_region
        %s2847 = smul.u32 256, %s14
      $region36: #{unique_eq3_net_mini.3} parent=31 // pred_fallthru
        _
    $region32: #{unique_eq3_net_mini.3} parent=5 // pred_fallthru
      _
    %p2848 = scmp.le.s32.totalorder 2, %s9
    // Predicated region
    $region37: #{unique_eq3_net_mini.3} parent=5 // pred_check
      %p2849 = pneg %p2848
    $region38: #{unique_eq3_net_mini.3} parent=5 // pred_check_branch
      %2851 = sbr.rel (%p2849) target = $region40
    $region39: #{unique_eq3_net_mini.3} parent=5 // pred_region
      %s2852 = ssub.s32 %s9, 2
      // Predicated region
      $region41: #{unique_eq3_net_mini.3} parent=39 // pred_check
        %p2853 = pneg %p106
      $region42: #{unique_eq3_net_mini.3} parent=39 // pred_check_branch
        %2855 = sbr.rel (%p2853) target = $region44
      $region43: #{unique_eq3_net_mini.3} parent=39 // pred_region
        %s2856 = smul.u32 256, %s15
        %p2857 = scmp.lt.s32.totalorder %s2856, 511
        %s2858 = scalar_select %p2857, %s2856, 511
        %s2859 = smul.addr %s2858, 8
        %s2860 = scalar_lea.vmem %s3, %s2859
      $region44: #{unique_eq3_net_mini.3} parent=39 // pred_fallthru
        _
    $region40: #{unique_eq3_net_mini.3} parent=5 // pred_fallthru
      _
  $region6: #{unique_eq3_net_mini.3} parent=0 // loop_footer
    %s13 = sadd.s32 1, %s9
  $region7: #{unique_eq3_net_mini.3} parent=0 // loop_footer_branch
    %8 = sbr.rel target = $region3
  $region8: #{unique_eq3_net_mini.3} parent=0 // loop_exit
    _

// kernel: unique_eq3_net_mini.5
$region0: #{unique_eq3_net_mini.5}
  #allocation0 [shape = 'u32[]', space=smem, size = 0x4, offset = 0x4, fixed_abs, tag = 'smem constant byte address 0x4 - core index']
  #allocation1 [shape = 'u32[144,128]{1,0:T(1,128)}', space=vmem, size = 0x12000, scoped, tag = 'internal scratch']
  #allocation2 [shape = 'f32[1,1]{1,0:T(1,128)S(1)}', space=vmem, size = 0x200, scoped, tag = 'scoped memory for unique_eq3_net_mini.5']
  %s0 = inlined_call_operand.vmem [shape: f32[2,8,32], index: 0, kind: input, shape index: {}]
  %s1 = inlined_call_operand.vmem [shape: bf16[256,32], index: 1, kind: input, shape index: {}]
  %s2 = inlined_call_operand.vmem [shape: f32[1,32], index: 2, kind: input, shape index: {}]
  %s3 = inlined_call_operand.vmem [shape: f32[32,1], index: 3, kind: input, shape index: {}]
  %s4 = inlined_call_operand.<no memory space> [shape: f32[1,1], index: 4, kind: input, shape index: {}]
  %s5 = inlined_call_operand.vmem [shape: f32[2,1,1], index: 5, kind: output, shape index: {}]
  %s6 = sld [smem:[#allocation0]]
  $region53: #{unique_eq3_net_mini.5} parent=0
    _
  %s8 = ssub.s32 1, %s6
  %s9 = scalar_select 0, %s8, %s6
  %v10 = vstv %s4
  %11 = vst [vmem:[#allocation2] sm:$0x1] %v10
  loop: start=0, step=1, limit=4
  $region2: #{unique_eq3_net_mini.5} parent=0 // loop_pre_header
    _
  $region3: #{unique_eq3_net_mini.5} parent=0 // loop_header
    %s13 = sphi 0, %s17
    %p14 = scmp.ge.s32.totalorder %s13, 4
    %s23 = sphi 0, %s25
    %s26 = sphi 0, %s23
    %s27 = sphi 0, %s26
    %s43 = sphi 0, %s27
    %s47 = sphi 0, %s47
    %s49 = sphi 0, %s47
    %s50 = sphi 0, %s49
    %s64 = sphi 0, %s50
    %s68 = sphi 0, %s68
    %s70 = sphi 0, %s68
    %s71 = sphi 0, %s70
    %s85 = sphi 0, %s71
    %s89 = sphi 0, %s89
    %s91 = sphi 0, %s89
    %s92 = sphi 0, %s91
    %s106 = sphi 0, %s92
    %s110 = sphi 0, %s110
    %s112 = sphi 0, %s110
    %s113 = sphi 0, %s112
    %s127 = sphi 0, %s113
    %s133 = sphi 0, %s135
    %s136 = sphi 0, %s133
    %s137 = sphi 0, %s136
    %s153 = sphi 0, %s137
  $region4: #{unique_eq3_net_mini.5} parent=0 // loop_header_branch
    %16 = sbr.rel (%p14) target = $region8
  $region5: #{unique_eq3_net_mini.5} parent=0 // loop_body
    %s18 = ssub.s32 %s13, 1
    %s19 = ssub.s32 %s13, 2
    %s20 = sadd.s32 %s13, 1
    %s21 = ssub.s32 %s13, %s20
    %p22 = scmp.eq.s32.totalorder %s21, 0
    %s24 = sadd.s32 %s23, 1
    %s25 = scalar_select %p22, %s23, %s24
    %p28 = pneg %p22
    %p29 = scmp.eq.s32.totalorder %s13, 1
    %p30 = por %p28, %p29
    %p31 = scmp.ne.s32.totalorder %s23, %s26
    %p32 = scmp.eq.s32.totalorder %s13, 0
    %p33 = por %p31, %p32
    %p34 = scmp.ne.s32.totalorder %s23, %s26
    %p35 = scmp.eq.s32.totalorder %s18, 1
    %p36 = por %p34, %p35
    %p37 = scmp.ne.s32.totalorder %s26, %s27
    %p38 = scmp.eq.s32.totalorder %s18, 0
    %p39 = por %p37, %p38
    %p40 = scmp.ne.s32.totalorder %s26, %s27
    %p41 = scmp.eq.s32.totalorder %s19, 1
    %p42 = por %p40, %p41
    %p44 = scmp.ne.s32.totalorder %s27, %s43
    %p45 = scmp.eq.s32.totalorder %s19, 0
    %p46 = por %p44, %p45
    %s48 = sadd.s32 %s47, 1
    %p51 = scmp.eq.s32.totalorder %s13, 1
    %p52 = scmp.ne.s32.totalorder %s47, %s49
    %p53 = scmp.eq.s32.totalorder %s13, 0
    %p54 = por %p52, %p53
    %p55 = scmp.ne.s32.totalorder %s47, %s49
    %p56 = scmp.eq.s32.totalorder %s18, 1
    %p57 = por %p55, %p56
    %p58 = scmp.ne.s32.totalorder %s49, %s50
    %p59 = scmp.eq.s32.totalorder %s18, 0
    %p60 = por %p58, %p59
    %p61 = scmp.ne.s32.totalorder %s49, %s50
    %p62 = scmp.eq.s32.totalorder %s19, 1
    %p63 = por %p61, %p62
    %p65 = scmp.ne.s32.totalorder %s50, %s64
    %p66 = scmp.eq.s32.totalorder %s19, 0
    %p67 = por %p65, %p66
    %s69 = sadd.s32 %s68, 1
    %p72 = scmp.eq.s32.totalorder %s13, 1
    %p73 = scmp.ne.s32.totalorder %s68, %s70
    %p74 = scmp.eq.s32.totalorder %s13, 0
    %p75 = por %p73, %p74
    %p76 = scmp.ne.s32.totalorder %s68, %s70
    %p77 = scmp.eq.s32.totalorder %s18, 1
    %p78 = por %p76, %p77
    %p79 = scmp.ne.s32.totalorder %s70, %s71
    %p80 = scmp.eq.s32.totalorder %s18, 0
    %p81 = por %p79, %p80
    %p82 = scmp.ne.s32.totalorder %s70, %s71
    %p83 = scmp.eq.s32.totalorder %s19, 1
    %p84 = por %p82, %p83
    %p86 = scmp.ne.s32.totalorder %s71, %s85
    %p87 = scmp.eq.s32.totalorder %s19, 0
    %p88 = por %p86, %p87
    %s90 = sadd.s32 %s89, 1
    %p93 = scmp.eq.s32.totalorder %s13, 1
    %p94 = scmp.ne.s32.totalorder %s89, %s91
    %p95 = scmp.eq.s32.totalorder %s13, 0
    %p96 = por %p94, %p95
    %p97 = scmp.ne.s32.totalorder %s89, %s91
    %p98 = scmp.eq.s32.totalorder %s18, 1
    %p99 = por %p97, %p98
    %p100 = scmp.ne.s32.totalorder %s91, %s92
    %p101 = scmp.eq.s32.totalorder %s18, 0
    %p102 = por %p100, %p101
    %p103 = scmp.ne.s32.totalorder %s91, %s92
    %p104 = scmp.eq.s32.totalorder %s19, 1
    %p105 = por %p103, %p104
    %p107 = scmp.ne.s32.totalorder %s92, %s106
    %p108 = scmp.eq.s32.totalorder %s19, 0
    %p109 = por %p107, %p108
    %s111 = sadd.s32 %s110, 1
    %p114 = scmp.eq.s32.totalorder %s13, 1
    %p115 = scmp.ne.s32.totalorder %s110, %s112
    %p116 = scmp.eq.s32.totalorder %s13, 0
    %p117 = por %p115, %p116
    %p118 = scmp.ne.s32.totalorder %s110, %s112
    %p119 = scmp.eq.s32.totalorder %s18, 1
    %p120 = por %p118, %p119
    %p121 = scmp.ne.s32.totalorder %s112, %s113
    %p122 = scmp.eq.s32.totalorder %s18, 0
    %p123 = por %p121, %p122
    %p124 = scmp.ne.s32.totalorder %s112, %s113
    %p125 = scmp.eq.s32.totalorder %s19, 1
    %p126 = por %p124, %p125
    %p128 = scmp.ne.s32.totalorder %s113, %s127
    %p129 = scmp.eq.s32.totalorder %s19, 0
    %p130 = por %p128, %p129
    %s131 = ssub.s32 %s13, %s20
    %p132 = scmp.eq.s32.totalorder %s131, 0
    %s134 = sadd.s32 %s133, 1
    %s135 = scalar_select %p132, %s133, %s134
    %p138 = pneg %p132
    %p139 = scmp.eq.s32.totalorder %s13, 1
    %p140 = por %p138, %p139
    %p141 = scmp.ne.s32.totalorder %s133, %s136
    %p142 = scmp.eq.s32.totalorder %s13, 0
    %p143 = por %p141, %p142
    %p144 = scmp.ne.s32.totalorder %s133, %s136
    %p145 = scmp.eq.s32.totalorder %s18, 1
    %p146 = por %p144, %p145
    %p147 = scmp.ne.s32.totalorder %s136, %s137
    %p148 = scmp.eq.s32.totalorder %s18, 0
    %p149 = por %p147, %p148
    %p150 = scmp.ne.s32.totalorder %s136, %s137
    %p151 = scmp.eq.s32.totalorder %s19, 1
    %p152 = por %p150, %p151
    %p154 = scmp.ne.s32.totalorder %s137, %s153
    %p155 = scmp.eq.s32.totalorder %s19, 0
    %p156 = por %p154, %p155
    %p157 = scmp.le.s32.totalorder 1, %s13
    %p158 = scmp.lt.s32.totalorder %s13, 3
    %p159 = pnand %p157, %p158
    %p160 = pneg %p159
    // Predicated region
    $region9: #{unique_eq3_net_mini.5} parent=5 // pred_check
      _
    $region10: #{unique_eq3_net_mini.5} parent=5 // pred_check_branch
      %162 = sbr.rel (%p159) target = $region12
    $region11: #{unique_eq3_net_mini.5} parent=5 // pred_region
      %s163 = ssub.s32 %s13, 1
      // Predicated region
      $region13: #{unique_eq3_net_mini.5} parent=11 // pred_check
        %p164 = pneg %p60
      $region14: #{unique_eq3_net_mini.5} parent=11 // pred_check_branch
        %166 = sbr.rel (%p164) target = $region16
      $region15: #{unique_eq3_net_mini.5} parent=11 // pred_region
        _
      $region16: #{unique_eq3_net_mini.5} parent=11 // pred_fallthru
        _
      // Predicated region
      $region17: #{unique_eq3_net_mini.5} parent=11 // pred_check
        %p167 = pneg %p81
      $region18: #{unique_eq3_net_mini.5} parent=11 // pred_check_branch
        %169 = sbr.rel (%p167) target = $region20
      $region19: #{unique_eq3_net_mini.5} parent=11 // pred_region
        _
      $region20: #{unique_eq3_net_mini.5} parent=11 // pred_fallthru
        _
      // Predicated region
      $region21: #{unique_eq3_net_mini.5} parent=11 // pred_check
        %p170 = pneg %p102
      $region22: #{unique_eq3_net_mini.5} parent=11 // pred_check_branch
        %172 = sbr.rel (%p170) target = $region24
      $region23: #{unique_eq3_net_mini.5} parent=11 // pred_region
        _
      $region24: #{unique_eq3_net_mini.5} parent=11 // pred_fallthru
        _
      // Predicated region
      $region25: #{unique_eq3_net_mini.5} parent=11 // pred_check
        %p173 = pneg %p123
      $region26: #{unique_eq3_net_mini.5} parent=11 // pred_check_branch
        %175 = sbr.rel (%p173) target = $region28
      $region27: #{unique_eq3_net_mini.5} parent=11 // pred_region
        _
      $region28: #{unique_eq3_net_mini.5} parent=11 // pred_fallthru
        _
    $region12: #{unique_eq3_net_mini.5} parent=5 // pred_fallthru
      _
    %p176 = scmp.lt.s32.totalorder %s13, 2
    // Predicated region
    $region29: #{unique_eq3_net_mini.5} parent=5 // pred_check
      %p177 = pneg %p176
    $region30: #{unique_eq3_net_mini.5} parent=5 // pred_check_branch
      %179 = sbr.rel (%p177) target = $region32
    $region31: #{unique_eq3_net_mini.5} parent=5 // pred_region
      // Predicated region
      $region33: #{unique_eq3_net_mini.5} parent=31 // pred_check
        %p180 = pneg %p33
      $region34: #{unique_eq3_net_mini.5} parent=31 // pred_check_branch
        %182 = sbr.rel (%p180) target = $region36
      $region35: #{unique_eq3_net_mini.5} parent=31 // pred_region
        %p183 = scmp.lt.s32.totalorder %s13, 1
        %s184 = scalar_select %p183, %s13, 1
        %s185 = smul.addr %s184, 8
        %s186 = scalar_lea.vmem %s0, %s185
      $region36: #{unique_eq3_net_mini.5} parent=31 // pred_fallthru
        _
    $region32: #{unique_eq3_net_mini.5} parent=5 // pred_fallthru
      _
    %p187 = scmp.le.s32.totalorder 1, %s13
    %p188 = scmp.lt.s32.totalorder %s13, 3
    %p189 = pnand %p187, %p188
    %p190 = pneg %p189
    // Predicated region
    $region37: #{unique_eq3_net_mini.5} parent=5 // pred_check
      _
    $region38: #{unique_eq3_net_mini.5} parent=5 // pred_check_branch
      %192 = sbr.rel (%p189) target = $region40
    $region39: #{unique_eq3_net_mini.5} parent=5 // pred_region
      %s193 = ssub.s32 %s13, 1
      %p194 = scmp.lt.s32.totalorder %s18, 1
      %s195 = scalar_select %p194, %s18, 1
      %s196 = smul.addr %s195, 8
      %s197 = scalar_lea.vmem %s0, %s196
      %p198 = pneg %p39
      %p199 = pneg %p36
      %p200 = pneg %p60
      %p201 = pneg %p57
      %p202 = pneg %p81
      %p203 = pneg %p78
      %p204 = pneg %p102
      %p205 = pneg %p99
      %p206 = pneg %p123
      %p207 = pneg %p120
      %p208 = pneg %p149
      %p209 = pneg %p146
      %p210 = scmp.lt.s32.totalorder %s18, 1
      %s211 = scalar_select %p210, %s18, 1
      %s212 = scalar_lea.vmem %s5, %s211
      %p213 = scmp.lt.s32.totalorder %s18, 1
      %s214 = scalar_select %p213, %s18, 1
      %s215 = smul.addr %s214, 8
      %s216 = scalar_lea.vmem %s0, %s215
      %p217 = scmp.lt.s32.totalorder %s18, 1
      %s218 = scalar_select %p217, %s18, 1
      %s219 = scalar_lea.vmem %s5, %s218
      %v221 = vld [vmem:[%s216] sm:$0xff]
      %vm222 = vcmask 261120
      %v223 = vsel %vm222, %v221, 0.0
      %v224 = vrot.slane %v223, 4
      %v225 = vadd.f32 %v223, %v224
      %v226 = vrot.slane %v225, 2
      %v227 = vadd.f32 %v225, %v226
      %v228 = vrot.slane %v227, 1
      %v229 = vadd.f32 %v227, %v228
      %v230 = vrcp.pop 8.0
      %v231 = vmul.f32 %v229, %v230
      %233 = vrot.lane.b32.xlu0 %v231, 32
      %v234 = vpop.permute.xlu0 %233
      %237 = vrot.lane.b32.xlu0 %v221, 64
      %v238 = vpop.permute.xlu0 %237
      %240 = vrot.lane.b32.xlu0 %v221, 96
      %v241 = vpop.permute.xlu0 %240
      %243 = vrot.lane.b32.xlu0 %v231, 96
      %v244 = vpop.permute.xlu0 %243
      %v246 = vsel %vm222, %v221, %v234
      %vm247 = vcmask 523264
      %v248 = vsel %vm247, %v246, %v238
      %vm249 = vcmask 785408
      %v250 = vsel %vm249, %v248, %v241
      %v251 = vsel %vm222, %v231, %v234
      %v252 = vsel %vm247, %v251, %v238
      %v253 = vsel %vm249, %v252, %v244
      %254 = vrot.lane.b32.xlu0 %v221, 32
      %v255 = vpop.permute.xlu0 %254
      %257 = vrot.lane.b32.xlu0 %v231, 64
      %v258 = vpop.permute.xlu0 %257
      %v260 = vsel %vm222, %v221, %v255
      %v261 = vsel %vm247, %v260, %v258
      %v262 = vsel %vm249, %v261, %v241
      %v263 = vsel %vm222, %v231, %v255
      %v264 = vsel %vm247, %v263, %v258
      %v265 = vsel %vm249, %v264, %v244
      %v266 = vsel %vm247, %v260, %v238
      %v267 = vsel %vm249, %v266, %v244
      %v268 = vsel %vm247, %v246, %v258
      %v269 = vsel %vm249, %v268, %v244
      %v272 = vcombine.low %v250, %v253
      %v273 = vcombine.high %v250, %v253
      %v275 = vunpack.c.l.s4 1966171168
      %v276 = vunpack.c.0.s8 %v275
      %v277 = vlaneseq
      %v278 = vshrl.u32 %v277, 7
      %v279 = vsub.s32 %v276, %v278
      %v280 = vrot.slane %v272, %v279
      %v282 = vunpack.c.l.s4 1966171168
      %v283 = vunpack.c.0.s8 %v282
      %v284 = vlaneseq
      %v285 = vshrl.u32 %v284, 7
      %v286 = vsub.s32 %v283, %v285
      %v287 = vrot.slane %v273, %v286
      %v288 = vcombine.high %v280, %v280
      %v289 = vcombine.high %v287, %v287
      %v291 = vunpack.c.l.s4 1966171168
      %v292 = vunpack.c.0.s8 %v291
      %v293 = vlaneseq
      %v294 = vshrl.u32 %v293, 7
      %v295 = vsub.s32 %v292, %v294
      %v296 = vrot.slane %v280, %v295
      %v298 = vunpack.c.l.s4 1966171168
      %v299 = vunpack.c.0.s8 %v298
      %v300 = vlaneseq
      %v301 = vshrl.u32 %v300, 7
      %v302 = vsub.s32 %v299, %v301
      %v303 = vrot.slane %v287, %v302
      %v305 = vunpack.c.l.s4 1966171168
      %v306 = vunpack.c.0.s8 %v305
      %v307 = vlaneseq
      %v308 = vshrl.u32 %v307, 7
      %v309 = vsub.s32 %v306, %v308
      %v310 = vrot.slane %v288, %v309
      %v312 = vunpack.c.l.s4 1966171168
      %v313 = vunpack.c.0.s8 %v312
      %v314 = vlaneseq
      %v315 = vshrl.u32 %v314, 7
      %v316 = vsub.s32 %v313, %v315
      %v317 = vrot.slane %v289, %v316
      %v318 = vcombine.high %v296, %v296
      %v319 = vcombine.high %v303, %v303
      %v320 = vcombine.high %v310, %v310
      %v321 = vcombine.high %v317, %v317
      %v322 = vlaneseq
      %v323 = vshrl.u32 %v322, 7
      %v324 = vsub.s32 0, %v323
      %v325 = vrot.slane %v296, %v324
      %v326 = vlaneseq
      %v327 = vshrl.u32 %v326, 7
      %v328 = vsub.s32 1, %v327
      %v329 = vrot.slane %v296, %v328
      %v330 = vlaneseq
      %v331 = vshrl.u32 %v330, 7
      %v332 = vsub.s32 0, %v331
      %v333 = vrot.slane %v310, %v332
      %v334 = vlaneseq
      %v335 = vshrl.u32 %v334, 7
      %v336 = vsub.s32 1, %v335
      %v337 = vrot.slane %v310, %v336
      %v338 = vlaneseq
      %v339 = vshrl.u32 %v338, 7
      %v340 = vsub.s32 0, %v339
      %v341 = vrot.slane %v318, %v340
      %v342 = vlaneseq
      %v343 = vshrl.u32 %v342, 7
      %v344 = vsub.s32 1, %v343
      %v345 = vrot.slane %v318, %v344
      %v346 = vlaneseq
      %v347 = vshrl.u32 %v346, 7
      %v348 = vsub.s32 0, %v347
      %v349 = vrot.slane %v320, %v348
      %v350 = vlaneseq
      %v351 = vshrl.u32 %v350, 7
      %v352 = vsub.s32 1, %v351
      %v353 = vrot.slane %v320, %v352
      %v354 = vlaneseq
      %v355 = vshrl.u32 %v354, 7
      %v356 = vsub.s32 0, %v355
      %v357 = vrot.slane %v303, %v356
      %v358 = vlaneseq
      %v359 = vshrl.u32 %v358, 7
      %v360 = vsub.s32 1, %v359
      %v361 = vrot.slane %v303, %v360
      %v362 = vlaneseq
      %v363 = vshrl.u32 %v362, 7
      %v364 = vsub.s32 0, %v363
      %v365 = vrot.slane %v317, %v364
      %v366 = vlaneseq
      %v367 = vshrl.u32 %v366, 7
      %v368 = vsub.s32 1, %v367
      %v369 = vrot.slane %v317, %v368
      %v370 = vlaneseq
      %v371 = vshrl.u32 %v370, 7
      %v372 = vsub.s32 0, %v371
      %v373 = vrot.slane %v319, %v372
      %v374 = vlaneseq
      %v375 = vshrl.u32 %v374, 7
      %v376 = vsub.s32 1, %v375
      %v377 = vrot.slane %v319, %v376
      %v378 = vlaneseq
      %v379 = vshrl.u32 %v378, 7
      %v380 = vsub.s32 0, %v379
      %v381 = vrot.slane %v321, %v380
      %v382 = vlaneseq
      %v383 = vshrl.u32 %v382, 7
      %v384 = vsub.s32 1, %v383
      %v385 = vrot.slane %v321, %v384
      %v402 = vmul.f32 %v325, %v262
      %v403 = vmul.f32 %v329, %v265
      %v404 = vmul.f32 %v333, %v262
      %v405 = vmul.f32 %v337, %v265
      %v406 = vmul.f32 %v341, %v262
      %v407 = vmul.f32 %v345, %v265
      %v408 = vmul.f32 %v349, %v262
      %v409 = vmul.f32 %v353, %v265
      %v410 = vmul.f32 %v357, %v262
      %v411 = vmul.f32 %v361, %v265
      %v412 = vmul.f32 %v365, %v262
      %v413 = vmul.f32 %v369, %v265
      %v414 = vmul.f32 %v373, %v262
      %v415 = vmul.f32 %v377, %v265
      %v416 = vmul.f32 %v381, %v262
      %v417 = vmul.f32 %v385, %v265
      %v434 = vcombine.low %v402, %v403
      %v435 = vcombine.high %v402, %v403
      %v437 = vunpack.c.l.s4 1966171168
      %v438 = vunpack.c.0.s8 %v437
      %v439 = vlaneseq
      %v440 = vshrl.u32 %v439, 7
      %v441 = vsub.s32 %v438, %v440
      %v442 = vrot.slane %v434, %v441
      %v444 = vunpack.c.l.s4 1966171168
      %v445 = vunpack.c.0.s8 %v444
      %v446 = vlaneseq
      %v447 = vshrl.u32 %v446, 7
      %v448 = vsub.s32 %v445, %v447
      %v449 = vrot.slane %v435, %v448
      %v450 = vcombine.high %v442, %v442
      %v451 = vcombine.high %v449, %v449
      %v453 = vunpack.c.l.s4 1966171168
      %v454 = vunpack.c.0.s8 %v453
      %v455 = vlaneseq
      %v456 = vshrl.u32 %v455, 7
      %v457 = vsub.s32 %v454, %v456
      %v458 = vrot.slane %v442, %v457
      %v460 = vunpack.c.l.s4 1966171168
      %v461 = vunpack.c.0.s8 %v460
      %v462 = vlaneseq
      %v463 = vshrl.u32 %v462, 7
      %v464 = vsub.s32 %v461, %v463
      %v465 = vrot.slane %v449, %v464
      %v467 = vunpack.c.l.s4 1966171168
      %v468 = vunpack.c.0.s8 %v467
      %v469 = vlaneseq
      %v470 = vshrl.u32 %v469, 7
      %v471 = vsub.s32 %v468, %v470
      %v472 = vrot.slane %v450, %v471
      %v474 = vunpack.c.l.s4 1966171168
      %v475 = vunpack.c.0.s8 %v474
      %v476 = vlaneseq
      %v477 = vshrl.u32 %v476, 7
      %v478 = vsub.s32 %v475, %v477
      %v479 = vrot.slane %v451, %v478
      %v480 = vcombine.high %v458, %v458
      %v481 = vcombine.high %v465, %v465
      %v482 = vcombine.high %v472, %v472
      %v483 = vcombine.high %v479, %v479
      %v484 = vcombine.low %v404, %v405
      %v485 = vcombine.high %v404, %v405
      %v487 = vunpack.c.l.s4 1966171168
      %v488 = vunpack.c.0.s8 %v487
      %v489 = vlaneseq
      %v490 = vshrl.u32 %v489, 7
      %v491 = vsub.s32 %v488, %v490
      %v492 = vrot.slane %v484, %v491
      %v494 = vunpack.c.l.s4 1966171168
      %v495 = vunpack.c.0.s8 %v494
      %v496 = vlaneseq
      %v497 = vshrl.u32 %v496, 7
      %v498 = vsub.s32 %v495, %v497
      %v499 = vrot.slane %v485, %v498
      %v500 = vcombine.high %v492, %v492
      %v501 = vcombine.high %v499, %v499
      %v503 = vunpack.c.l.s4 1966171168
      %v504 = vunpack.c.0.s8 %v503
      %v505 = vlaneseq
      %v506 = vshrl.u32 %v505, 7
      %v507 = vsub.s32 %v504, %v506
      %v508 = vrot.slane %v492, %v507
      %v510 = vunpack.c.l.s4 1966171168
      %v511 = vunpack.c.0.s8 %v510
      %v512 = vlaneseq
      %v513 = vshrl.u32 %v512, 7
      %v514 = vsub.s32 %v511, %v513
      %v515 = vrot.slane %v499, %v514
      %v517 = vunpack.c.l.s4 1966171168
      %v518 = vunpack.c.0.s8 %v517
      %v519 = vlaneseq
      %v520 = vshrl.u32 %v519, 7
      %v521 = vsub.s32 %v518, %v520
      %v522 = vrot.slane %v500, %v521
      %v524 = vunpack.c.l.s4 1966171168
      %v525 = vunpack.c.0.s8 %v524
      %v526 = vlaneseq
      %v527 = vshrl.u32 %v526, 7
      %v528 = vsub.s32 %v525, %v527
      %v529 = vrot.slane %v501, %v528
      %v530 = vcombine.high %v508, %v508
      %v531 = vcombine.high %v515, %v515
      %v532 = vcombine.high %v522, %v522
      %v533 = vcombine.high %v529, %v529
      %v534 = vcombine.low %v406, %v407
      %v535 = vcombine.high %v406, %v407
      %v537 = vunpack.c.l.s4 1966171168
      %v538 = vunpack.c.0.s8 %v537
      %v539 = vlaneseq
      %v540 = vshrl.u32 %v539, 7
      %v541 = vsub.s32 %v538, %v540
      %v542 = vrot.slane %v534, %v541
      %v544 = vunpack.c.l.s4 1966171168
      %v545 = vunpack.c.0.s8 %v544
      %v546 = vlaneseq
      %v547 = vshrl.u32 %v546, 7
      %v548 = vsub.s32 %v545, %v547
      %v549 = vrot.slane %v535, %v548
      %v550 = vcombine.high %v542, %v542
      %v551 = vcombine.high %v549, %v549
      %v553 = vunpack.c.l.s4 1966171168
      %v554 = vunpack.c.0.s8 %v553
      %v555 = vlaneseq
      %v556 = vshrl.u32 %v555, 7
      %v557 = vsub.s32 %v554, %v556
      %v558 = vrot.slane %v542, %v557
      %v560 = vunpack.c.l.s4 1966171168
      %v561 = vunpack.c.0.s8 %v560
      %v562 = vlaneseq
      %v563 = vshrl.u32 %v562, 7
      %v564 = vsub.s32 %v561, %v563
      %v565 = vrot.slane %v549, %v564
      %v567 = vunpack.c.l.s4 1966171168
      %v568 = vunpack.c.0.s8 %v567
      %v569 = vlaneseq
      %v570 = vshrl.u32 %v569, 7
      %v571 = vsub.s32 %v568, %v570
      %v572 = vrot.slane %v550, %v571
      %v574 = vunpack.c.l.s4 1966171168
      %v575 = vunpack.c.0.s8 %v574
      %v576 = vlaneseq
      %v577 = vshrl.u32 %v576, 7
      %v578 = vsub.s32 %v575, %v577
      %v579 = vrot.slane %v551, %v578
      %v580 = vcombine.high %v558, %v558
      %v581 = vcombine.high %v565, %v565
      %v582 = vcombine.high %v572, %v572
      %v583 = vcombine.high %v579, %v579
      %v584 = vcombine.low %v408, %v409
      %v585 = vcombine.high %v408, %v409
      %v587 = vunpack.c.l.s4 1966171168
      %v588 = vunpack.c.0.s8 %v587
      %v589 = vlaneseq
      %v590 = vshrl.u32 %v589, 7
      %v591 = vsub.s32 %v588, %v590
      %v592 = vrot.slane %v584, %v591
      %v594 = vunpack.c.l.s4 1966171168
      %v595 = vunpack.c.0.s8 %v594
      %v596 = vlaneseq
      %v597 = vshrl.u32 %v596, 7
      %v598 = vsub.s32 %v595, %v597
      %v599 = vrot.slane %v585, %v598
      %v600 = vcombine.high %v592, %v592
      %v601 = vcombine.high %v599, %v599
      %v603 = vunpack.c.l.s4 1966171168
      %v604 = vunpack.c.0.s8 %v603
      %v605 = vlaneseq
      %v606 = vshrl.u32 %v605, 7
      %v607 = vsub.s32 %v604, %v606
      %v608 = vrot.slane %v592, %v607
      %v610 = vunpack.c.l.s4 1966171168
      %v611 = vunpack.c.0.s8 %v610
      %v612 = vlaneseq
      %v613 = vshrl.u32 %v612, 7
      %v614 = vsub.s32 %v611, %v613
      %v615 = vrot.slane %v599, %v614
      %v617 = vunpack.c.l.s4 1966171168
      %v618 = vunpack.c.0.s8 %v617
      %v619 = vlaneseq
      %v620 = vshrl.u32 %v619, 7
      %v621 = vsub.s32 %v618, %v620
      %v622 = vrot.slane %v600, %v621
      %v624 = vunpack.c.l.s4 1966171168
      %v625 = vunpack.c.0.s8 %v624
      %v626 = vlaneseq
      %v627 = vshrl.u32 %v626, 7
      %v628 = vsub.s32 %v625, %v627
      %v629 = vrot.slane %v601, %v628
      %v630 = vcombine.high %v608, %v608
      %v631 = vcombine.high %v615, %v615
      %v632 = vcombine.high %v622, %v622
      %v633 = vcombine.high %v629, %v629
      %v634 = vcombine.low %v410, %v411
      %v635 = vcombine.high %v410, %v411
      %v637 = vunpack.c.l.s4 1966171168
      %v638 = vunpack.c.0.s8 %v637
      %v639 = vlaneseq
      %v640 = vshrl.u32 %v639, 7
      %v641 = vsub.s32 %v638, %v640
      %v642 = vrot.slane %v634, %v641
      %v644 = vunpack.c.l.s4 1966171168
      %v645 = vunpack.c.0.s8 %v644
      %v646 = vlaneseq
      %v647 = vshrl.u32 %v646, 7
      %v648 = vsub.s32 %v645, %v647
      %v649 = vrot.slane %v635, %v648
      %v650 = vcombine.high %v642, %v642
      %v651 = vcombine.high %v649, %v649
      %v653 = vunpack.c.l.s4 1966171168
      %v654 = vunpack.c.0.s8 %v653
      %v655 = vlaneseq
      %v656 = vshrl.u32 %v655, 7
      %v657 = vsub.s32 %v654, %v656
      %v658 = vrot.slane %v642, %v657
      %v660 = vunpack.c.l.s4 1966171168
      %v661 = vunpack.c.0.s8 %v660
      %v662 = vlaneseq
      %v663 = vshrl.u32 %v662, 7
      %v664 = vsub.s32 %v661, %v663
      %v665 = vrot.slane %v649, %v664
      %v667 = vunpack.c.l.s4 1966171168
      %v668 = vunpack.c.0.s8 %v667
      %v669 = vlaneseq
      %v670 = vshrl.u32 %v669, 7
      %v671 = vsub.s32 %v668, %v670
      %v672 = vrot.slane %v650, %v671
      %v674 = vunpack.c.l.s4 1966171168
      %v675 = vunpack.c.0.s8 %v674
      %v676 = vlaneseq
      %v677 = vshrl.u32 %v676, 7
      %v678 = vsub.s32 %v675, %v677
      %v679 = vrot.slane %v651, %v678
      %v680 = vcombine.high %v658, %v658
      %v681 = vcombine.high %v665, %v665
      %v682 = vcombine.high %v672, %v672
      %v683 = vcombine.high %v679, %v679
      %v684 = vcombine.low %v412, %v413
      %v685 = vcombine.high %v412, %v413
      %v687 = vunpack.c.l.s4 1966171168
      %v688 = vunpack.c.0.s8 %v687
      %v689 = vlaneseq
      %v690 = vshrl.u32 %v689, 7
      %v691 = vsub.s32 %v688, %v690
      %v692 = vrot.slane %v684, %v691
      %v694 = vunpack.c.l.s4 1966171168
      %v695 = vunpack.c.0.s8 %v694
      %v696 = vlaneseq
      %v697 = vshrl.u32 %v696, 7
      %v698 = vsub.s32 %v695, %v697
      %v699 = vrot.slane %v685, %v698
      %v700 = vcombine.high %v692, %v692
      %v701 = vcombine.high %v699, %v699
      %v703 = vunpack.c.l.s4 1966171168
      %v704 = vunpack.c.0.s8 %v703
      %v705 = vlaneseq
      %v706 = vshrl.u32 %v705, 7
      %v707 = vsub.s32 %v704, %v706
      %v708 = vrot.slane %v692, %v707
      %v710 = vunpack.c.l.s4 1966171168
      %v711 = vunpack.c.0.s8 %v710
      %v712 = vlaneseq
      %v713 = vshrl.u32 %v712, 7
      %v714 = vsub.s32 %v711, %v713
      %v715 = vrot.slane %v699, %v714
      %v717 = vunpack.c.l.s4 1966171168
      %v718 = vunpack.c.0.s8 %v717
      %v719 = vlaneseq
      %v720 = vshrl.u32 %v719, 7
      %v721 = vsub.s32 %v718, %v720
      %v722 = vrot.slane %v700, %v721
      %v724 = vunpack.c.l.s4 1966171168
      %v725 = vunpack.c.0.s8 %v724
      %v726 = vlaneseq
      %v727 = vshrl.u32 %v726, 7
      %v728 = vsub.s32 %v725, %v727
      %v729 = vrot.slane %v701, %v728
      %v730 = vcombine.high %v708, %v708
      %v731 = vcombine.high %v715, %v715
      %v732 = vcombine.high %v722, %v722
      %v733 = vcombine.high %v729, %v729
      %v734 = vcombine.low %v414, %v415
      %v735 = vcombine.high %v414, %v415
      %v737 = vunpack.c.l.s4 1966171168
      %v738 = vunpack.c.0.s8 %v737
      %v739 = vlaneseq
      %v740 = vshrl.u32 %v739, 7
      %v741 = vsub.s32 %v738, %v740
      %v742 = vrot.slane %v734, %v741
      %v744 = vunpack.c.l.s4 1966171168
      %v745 = vunpack.c.0.s8 %v744
      %v746 = vlaneseq
      %v747 = vshrl.u32 %v746, 7
      %v748 = vsub.s32 %v745, %v747
      %v749 = vrot.slane %v735, %v748
      %v750 = vcombine.high %v742, %v742
      %v751 = vcombine.high %v749, %v749
      %v753 = vunpack.c.l.s4 1966171168
      %v754 = vunpack.c.0.s8 %v753
      %v755 = vlaneseq
      %v756 = vshrl.u32 %v755, 7
      %v757 = vsub.s32 %v754, %v756
      %v758 = vrot.slane %v742, %v757
      %v760 = vunpack.c.l.s4 1966171168
      %v761 = vunpack.c.0.s8 %v760
      %v762 = vlaneseq
      %v763 = vshrl.u32 %v762, 7
      %v764 = vsub.s32 %v761, %v763
      %v765 = vrot.slane %v749, %v764
      %v767 = vunpack.c.l.s4 1966171168
      %v768 = vunpack.c.0.s8 %v767
      %v769 = vlaneseq
      %v770 = vshrl.u32 %v769, 7
      %v771 = vsub.s32 %v768, %v770
      %v772 = vrot.slane %v750, %v771
      %v774 = vunpack.c.l.s4 1966171168
      %v775 = vunpack.c.0.s8 %v774
      %v776 = vlaneseq
      %v777 = vshrl.u32 %v776, 7
      %v778 = vsub.s32 %v775, %v777
      %v779 = vrot.slane %v751, %v778
      %v780 = vcombine.high %v758, %v758
      %v781 = vcombine.high %v765, %v765
      %v782 = vcombine.high %v772, %v772
      %v783 = vcombine.high %v779, %v779
      %v784 = vcombine.low %v416, %v417
      %v785 = vcombine.high %v416, %v417
      %v787 = vunpack.c.l.s4 1966171168
      %v788 = vunpack.c.0.s8 %v787
      %v789 = vlaneseq
      %v790 = vshrl.u32 %v789, 7
      %v791 = vsub.s32 %v788, %v790
      %v792 = vrot.slane %v784, %v791
      %v794 = vunpack.c.l.s4 1966171168
      %v795 = vunpack.c.0.s8 %v794
      %v796 = vlaneseq
      %v797 = vshrl.u32 %v796, 7
      %v798 = vsub.s32 %v795, %v797
      %v799 = vrot.slane %v785, %v798
      %v800 = vcombine.high %v792, %v792
      %v801 = vcombine.high %v799, %v799
      %v803 = vunpack.c.l.s4 1966171168
      %v804 = vunpack.c.0.s8 %v803
      %v805 = vlaneseq
      %v806 = vshrl.u32 %v805, 7
      %v807 = vsub.s32 %v804, %v806
      %v808 = vrot.slane %v792, %v807
      %v810 = vunpack.c.l.s4 1966171168
      %v811 = vunpack.c.0.s8 %v810
      %v812 = vlaneseq
      %v813 = vshrl.u32 %v812, 7
      %v814 = vsub.s32 %v811, %v813
      %v815 = vrot.slane %v799, %v814
      %v817 = vunpack.c.l.s4 1966171168
      %v818 = vunpack.c.0.s8 %v817
      %v819 = vlaneseq
      %v820 = vshrl.u32 %v819, 7
      %v821 = vsub.s32 %v818, %v820
      %v822 = vrot.slane %v800, %v821
      %v824 = vunpack.c.l.s4 1966171168
      %v825 = vunpack.c.0.s8 %v824
      %v826 = vlaneseq
      %v827 = vshrl.u32 %v826, 7
      %v828 = vsub.s32 %v825, %v827
      %v829 = vrot.slane %v801, %v828
      %v830 = vcombine.high %v808, %v808
      %v831 = vcombine.high %v815, %v815
      %v832 = vcombine.high %v822, %v822
      %v833 = vcombine.high %v829, %v829
      %v834 = vlaneseq
      %v835 = vshrl.u32 %v834, 7
      %v836 = vsub.s32 0, %v835
      %v837 = vrot.slane %v458, %v836
      %v838 = vlaneseq
      %v839 = vshrl.u32 %v838, 7
      %v840 = vsub.s32 1, %v839
      %v841 = vrot.slane %v458, %v840
      %v842 = vlaneseq
      %v843 = vshrl.u32 %v842, 7
      %v844 = vsub.s32 0, %v843
      %v845 = vrot.slane %v472, %v844
      %v846 = vlaneseq
      %v847 = vshrl.u32 %v846, 7
      %v848 = vsub.s32 1, %v847
      %v849 = vrot.slane %v472, %v848
      %v850 = vlaneseq
      %v851 = vshrl.u32 %v850, 7
      %v852 = vsub.s32 0, %v851
      %v853 = vrot.slane %v480, %v852
      %v854 = vlaneseq
      %v855 = vshrl.u32 %v854, 7
      %v856 = vsub.s32 1, %v855
      %v857 = vrot.slane %v480, %v856
      %v858 = vlaneseq
      %v859 = vshrl.u32 %v858, 7
      %v860 = vsub.s32 0, %v859
      %v861 = vrot.slane %v482, %v860
      %v862 = vlaneseq
      %v863 = vshrl.u32 %v862, 7
      %v864 = vsub.s32 1, %v863
      %v865 = vrot.slane %v482, %v864
      %v866 = vlaneseq
      %v867 = vshrl.u32 %v866, 7
      %v868 = vsub.s32 0, %v867
      %v869 = vrot.slane %v465, %v868
      %v870 = vlaneseq
      %v871 = vshrl.u32 %v870, 7
      %v872 = vsub.s32 1, %v871
      %v873 = vrot.slane %v465, %v872
      %v874 = vlaneseq
      %v875 = vshrl.u32 %v874, 7
      %v876 = vsub.s32 0, %v875
      %v877 = vrot.slane %v479, %v876
      %v878 = vlaneseq
      %v879 = vshrl.u32 %v878, 7
      %v880 = vsub.s32 1, %v879
      %v881 = vrot.slane %v479, %v880
      %v882 = vlaneseq
      %v883 = vshrl.u32 %v882, 7
      %v884 = vsub.s32 0, %v883
      %v885 = vrot.slane %v481, %v884
      %v886 = vlaneseq
      %v887 = vshrl.u32 %v886, 7
      %v888 = vsub.s32 1, %v887
      %v889 = vrot.slane %v481, %v888
      %v890 = vlaneseq
      %v891 = vshrl.u32 %v890, 7
      %v892 = vsub.s32 0, %v891
      %v893 = vrot.slane %v483, %v892
      %v894 = vlaneseq
      %v895 = vshrl.u32 %v894, 7
      %v896 = vsub.s32 1, %v895
      %v897 = vrot.slane %v483, %v896
      %v898 = vlaneseq
      %v899 = vshrl.u32 %v898, 7
      %v900 = vsub.s32 0, %v899
      %v901 = vrot.slane %v508, %v900
      %v902 = vlaneseq
      %v903 = vshrl.u32 %v902, 7
      %v904 = vsub.s32 1, %v903
      %v905 = vrot.slane %v508, %v904
      %v906 = vlaneseq
      %v907 = vshrl.u32 %v906, 7
      %v908 = vsub.s32 0, %v907
      %v909 = vrot.slane %v522, %v908
      %v910 = vlaneseq
      %v911 = vshrl.u32 %v910, 7
      %v912 = vsub.s32 1, %v911
      %v913 = vrot.slane %v522, %v912
      %v914 = vlaneseq
      %v915 = vshrl.u32 %v914, 7
      %v916 = vsub.s32 0, %v915
      %v917 = vrot.slane %v530, %v916
      %v918 = vlaneseq
      %v919 = vshrl.u32 %v918, 7
      %v920 = vsub.s32 1, %v919
      %v921 = vrot.slane %v530, %v920
      %v922 = vlaneseq
      %v923 = vshrl.u32 %v922, 7
      %v924 = vsub.s32 0, %v923
      %v925 = vrot.slane %v532, %v924
      %v926 = vlaneseq
      %v927 = vshrl.u32 %v926, 7
      %v928 = vsub.s32 1, %v927
      %v929 = vrot.slane %v532, %v928
      %v930 = vlaneseq
      %v931 = vshrl.u32 %v930, 7
      %v932 = vsub.s32 0, %v931
      %v933 = vrot.slane %v515, %v932
      %v934 = vlaneseq
      %v935 = vshrl.u32 %v934, 7
      %v936 = vsub.s32 1, %v935
      %v937 = vrot.slane %v515, %v936
      %v938 = vlaneseq
      %v939 = vshrl.u32 %v938, 7
      %v940 = vsub.s32 0, %v939
      %v941 = vrot.slane %v529, %v940
      %v942 = vlaneseq
      %v943 = vshrl.u32 %v942, 7
      %v944 = vsub.s32 1, %v943
      %v945 = vrot.slane %v529, %v944
      %v946 = vlaneseq
      %v947 = vshrl.u32 %v946, 7
      %v948 = vsub.s32 0, %v947
      %v949 = vrot.slane %v531, %v948
      %v950 = vlaneseq
      %v951 = vshrl.u32 %v950, 7
      %v952 = vsub.s32 1, %v951
      %v953 = vrot.slane %v531, %v952
      %v954 = vlaneseq
      %v955 = vshrl.u32 %v954, 7
      %v956 = vsub.s32 0, %v955
      %v957 = vrot.slane %v533, %v956
      %v958 = vlaneseq
      %v959 = vshrl.u32 %v958, 7
      %v960 = vsub.s32 1, %v959
      %v961 = vrot.slane %v533, %v960
      %v962 = vlaneseq
      %v963 = vshrl.u32 %v962, 7
      %v964 = vsub.s32 0, %v963
      %v965 = vrot.slane %v558, %v964
      %v966 = vlaneseq
      %v967 = vshrl.u32 %v966, 7
      %v968 = vsub.s32 1, %v967
      %v969 = vrot.slane %v558, %v968
      %v970 = vlaneseq
      %v971 = vshrl.u32 %v970, 7
      %v972 = vsub.s32 0, %v971
      %v973 = vrot.slane %v572, %v972
      %v974 = vlaneseq
      %v975 = vshrl.u32 %v974, 7
      %v976 = vsub.s32 1, %v975
      %v977 = vrot.slane %v572, %v976
      %v978 = vlaneseq
      %v979 = vshrl.u32 %v978, 7
      %v980 = vsub.s32 0, %v979
      %v981 = vrot.slane %v580, %v980
      %v982 = vlaneseq
      %v983 = vshrl.u32 %v982, 7
      %v984 = vsub.s32 1, %v983
      %v985 = vrot.slane %v580, %v984
      %v986 = vlaneseq
      %v987 = vshrl.u32 %v986, 7
      %v988 = vsub.s32 0, %v987
      %v989 = vrot.slane %v582, %v988
      %v990 = vlaneseq
      %v991 = vshrl.u32 %v990, 7
      %v992 = vsub.s32 1, %v991
      %v993 = vrot.slane %v582, %v992
      %v994 = vlaneseq
      %v995 = vshrl.u32 %v994, 7
      %v996 = vsub.s32 0, %v995
      %v997 = vrot.slane %v565, %v996
      %v998 = vlaneseq
      %v999 = vshrl.u32 %v998, 7
      %v1000 = vsub.s32 1, %v999
      %v1001 = vrot.slane %v565, %v1000
      %v1002 = vlaneseq
      %v1003 = vshrl.u32 %v1002, 7
      %v1004 = vsub.s32 0, %v1003
      %v1005 = vrot.slane %v579, %v1004
      %v1006 = vlaneseq
      %v1007 = vshrl.u32 %v1006, 7
      %v1008 = vsub.s32 1, %v1007
      %v1009 = vrot.slane %v579, %v1008
      %v1010 = vlaneseq
      %v1011 = vshrl.u32 %v1010, 7
      %v1012 = vsub.s32 0, %v1011
      %v1013 = vrot.slane %v581, %v1012
      %v1014 = vlaneseq
      %v1015 = vshrl.u32 %v1014, 7
      %v1016 = vsub.s32 1, %v1015
      %v1017 = vrot.slane %v581, %v1016
      %v1018 = vlaneseq
      %v1019 = vshrl.u32 %v1018, 7
      %v1020 = vsub.s32 0, %v1019
      %v1021 = vrot.slane %v583, %v1020
      %v1022 = vlaneseq
      %v1023 = vshrl.u32 %v1022, 7
      %v1024 = vsub.s32 1, %v1023
      %v1025 = vrot.slane %v583, %v1024
      %v1026 = vlaneseq
      %v1027 = vshrl.u32 %v1026, 7
      %v1028 = vsub.s32 0, %v1027
      %v1029 = vrot.slane %v608, %v1028
      %v1030 = vlaneseq
      %v1031 = vshrl.u32 %v1030, 7
      %v1032 = vsub.s32 1, %v1031
      %v1033 = vrot.slane %v608, %v1032
      %v1034 = vlaneseq
      %v1035 = vshrl.u32 %v1034, 7
      %v1036 = vsub.s32 0, %v1035
      %v1037 = vrot.slane %v622, %v1036
      %v1038 = vlaneseq
      %v1039 = vshrl.u32 %v1038, 7
      %v1040 = vsub.s32 1, %v1039
      %v1041 = vrot.slane %v622, %v1040
      %v1042 = vlaneseq
      %v1043 = vshrl.u32 %v1042, 7
      %v1044 = vsub.s32 0, %v1043
      %v1045 = vrot.slane %v630, %v1044
      %v1046 = vlaneseq
      %v1047 = vshrl.u32 %v1046, 7
      %v1048 = vsub.s32 1, %v1047
      %v1049 = vrot.slane %v630, %v1048
      %v1050 = vlaneseq
      %v1051 = vshrl.u32 %v1050, 7
      %v1052 = vsub.s32 0, %v1051
      %v1053 = vrot.slane %v632, %v1052
      %v1054 = vlaneseq
      %v1055 = vshrl.u32 %v1054, 7
      %v1056 = vsub.s32 1, %v1055
      %v1057 = vrot.slane %v632, %v1056
      %v1058 = vlaneseq
      %v1059 = vshrl.u32 %v1058, 7
      %v1060 = vsub.s32 0, %v1059
      %v1061 = vrot.slane %v615, %v1060
      %v1062 = vlaneseq
      %v1063 = vshrl.u32 %v1062, 7
      %v1064 = vsub.s32 1, %v1063
      %v1065 = vrot.slane %v615, %v1064
      %v1066 = vlaneseq
      %v1067 = vshrl.u32 %v1066, 7
      %v1068 = vsub.s32 0, %v1067
      %v1069 = vrot.slane %v629, %v1068
      %v1070 = vlaneseq
      %v1071 = vshrl.u32 %v1070, 7
      %v1072 = vsub.s32 1, %v1071
      %v1073 = vrot.slane %v629, %v1072
      %v1074 = vlaneseq
      %v1075 = vshrl.u32 %v1074, 7
      %v1076 = vsub.s32 0, %v1075
      %v1077 = vrot.slane %v631, %v1076
      %v1078 = vlaneseq
      %v1079 = vshrl.u32 %v1078, 7
      %v1080 = vsub.s32 1, %v1079
      %v1081 = vrot.slane %v631, %v1080
      %v1082 = vlaneseq
      %v1083 = vshrl.u32 %v1082, 7
      %v1084 = vsub.s32 0, %v1083
      %v1085 = vrot.slane %v633, %v1084
      %v1086 = vlaneseq
      %v1087 = vshrl.u32 %v1086, 7
      %v1088 = vsub.s32 1, %v1087
      %v1089 = vrot.slane %v633, %v1088
      %v1090 = vlaneseq
      %v1091 = vshrl.u32 %v1090, 7
      %v1092 = vsub.s32 0, %v1091
      %v1093 = vrot.slane %v658, %v1092
      %v1094 = vlaneseq
      %v1095 = vshrl.u32 %v1094, 7
      %v1096 = vsub.s32 1, %v1095
      %v1097 = vrot.slane %v658, %v1096
      %v1098 = vlaneseq
      %v1099 = vshrl.u32 %v1098, 7
      %v1100 = vsub.s32 0, %v1099
      %v1101 = vrot.slane %v672, %v1100
      %v1102 = vlaneseq
      %v1103 = vshrl.u32 %v1102, 7
      %v1104 = vsub.s32 1, %v1103
      %v1105 = vrot.slane %v672, %v1104
      %v1106 = vlaneseq
      %v1107 = vshrl.u32 %v1106, 7
      %v1108 = vsub.s32 0, %v1107
      %v1109 = vrot.slane %v680, %v1108
      %v1110 = vlaneseq
      %v1111 = vshrl.u32 %v1110, 7
      %v1112 = vsub.s32 1, %v1111
      %v1113 = vrot.slane %v680, %v1112
      %v1114 = vlaneseq
      %v1115 = vshrl.u32 %v1114, 7
      %v1116 = vsub.s32 0, %v1115
      %v1117 = vrot.slane %v682, %v1116
      %v1118 = vlaneseq
      %v1119 = vshrl.u32 %v1118, 7
      %v1120 = vsub.s32 1, %v1119
      %v1121 = vrot.slane %v682, %v1120
      %v1122 = vlaneseq
      %v1123 = vshrl.u32 %v1122, 7
      %v1124 = vsub.s32 0, %v1123
      %v1125 = vrot.slane %v665, %v1124
      %v1126 = vlaneseq
      %v1127 = vshrl.u32 %v1126, 7
      %v1128 = vsub.s32 1, %v1127
      %v1129 = vrot.slane %v665, %v1128
      %v1130 = vlaneseq
      %v1131 = vshrl.u32 %v1130, 7
      %v1132 = vsub.s32 0, %v1131
      %v1133 = vrot.slane %v679, %v1132
      %v1134 = vlaneseq
      %v1135 = vshrl.u32 %v1134, 7
      %v1136 = vsub.s32 1, %v1135
      %v1137 = vrot.slane %v679, %v1136
      %v1138 = vlaneseq
      %v1139 = vshrl.u32 %v1138, 7
      %v1140 = vsub.s32 0, %v1139
      %v1141 = vrot.slane %v681, %v1140
      %v1142 = vlaneseq
      %v1143 = vshrl.u32 %v1142, 7
      %v1144 = vsub.s32 1, %v1143
      %v1145 = vrot.slane %v681, %v1144
      %v1146 = vlaneseq
      %v1147 = vshrl.u32 %v1146, 7
      %v1148 = vsub.s32 0, %v1147
      %v1149 = vrot.slane %v683, %v1148
      %v1150 = vlaneseq
      %v1151 = vshrl.u32 %v1150, 7
      %v1152 = vsub.s32 1, %v1151
      %v1153 = vrot.slane %v683, %v1152
      %v1154 = vlaneseq
      %v1155 = vshrl.u32 %v1154, 7
      %v1156 = vsub.s32 0, %v1155
      %v1157 = vrot.slane %v708, %v1156
      %v1158 = vlaneseq
      %v1159 = vshrl.u32 %v1158, 7
      %v1160 = vsub.s32 1, %v1159
      %v1161 = vrot.slane %v708, %v1160
      %v1162 = vlaneseq
      %v1163 = vshrl.u32 %v1162, 7
      %v1164 = vsub.s32 0, %v1163
      %v1165 = vrot.slane %v722, %v1164
      %v1166 = vlaneseq
      %v1167 = vshrl.u32 %v1166, 7
      %v1168 = vsub.s32 1, %v1167
      %v1169 = vrot.slane %v722, %v1168
      %v1170 = vlaneseq
      %v1171 = vshrl.u32 %v1170, 7
      %v1172 = vsub.s32 0, %v1171
      %v1173 = vrot.slane %v730, %v1172
      %v1174 = vlaneseq
      %v1175 = vshrl.u32 %v1174, 7
      %v1176 = vsub.s32 1, %v1175
      %v1177 = vrot.slane %v730, %v1176
      %v1178 = vlaneseq
      %v1179 = vshrl.u32 %v1178, 7
      %v1180 = vsub.s32 0, %v1179
      %v1181 = vrot.slane %v732, %v1180
      %v1182 = vlaneseq
      %v1183 = vshrl.u32 %v1182, 7
      %v1184 = vsub.s32 1, %v1183
      %v1185 = vrot.slane %v732, %v1184
      %v1186 = vlaneseq
      %v1187 = vshrl.u32 %v1186, 7
      %v1188 = vsub.s32 0, %v1187
      %v1189 = vrot.slane %v715, %v1188
      %v1190 = vlaneseq
      %v1191 = vshrl.u32 %v1190, 7
      %v1192 = vsub.s32 1, %v1191
      %v1193 = vrot.slane %v715, %v1192
      %v1194 = vlaneseq
      %v1195 = vshrl.u32 %v1194, 7
      %v1196 = vsub.s32 0, %v1195
      %v1197 = vrot.slane %v729, %v1196
      %v1198 = vlaneseq
      %v1199 = vshrl.u32 %v1198, 7
      %v1200 = vsub.s32 1, %v1199
      %v1201 = vrot.slane %v729, %v1200
      %v1202 = vlaneseq
      %v1203 = vshrl.u32 %v1202, 7
      %v1204 = vsub.s32 0, %v1203
      %v1205 = vrot.slane %v731, %v1204
      %v1206 = vlaneseq
      %v1207 = vshrl.u32 %v1206, 7
      %v1208 = vsub.s32 1, %v1207
      %v1209 = vrot.slane %v731, %v1208
      %v1210 = vlaneseq
      %v1211 = vshrl.u32 %v1210, 7
      %v1212 = vsub.s32 0, %v1211
      %v1213 = vrot.slane %v733, %v1212
      %v1214 = vlaneseq
      %v1215 = vshrl.u32 %v1214, 7
      %v1216 = vsub.s32 1, %v1215
      %v1217 = vrot.slane %v733, %v1216
      %v1218 = vlaneseq
      %v1219 = vshrl.u32 %v1218, 7
      %v1220 = vsub.s32 0, %v1219
      %v1221 = vrot.slane %v758, %v1220
      %v1222 = vlaneseq
      %v1223 = vshrl.u32 %v1222, 7
      %v1224 = vsub.s32 1, %v1223
      %v1225 = vrot.slane %v758, %v1224
      %v1226 = vlaneseq
      %v1227 = vshrl.u32 %v1226, 7
      %v1228 = vsub.s32 0, %v1227
      %v1229 = vrot.slane %v772, %v1228
      %v1230 = vlaneseq
      %v1231 = vshrl.u32 %v1230, 7
      %v1232 = vsub.s32 1, %v1231
      %v1233 = vrot.slane %v772, %v1232
      %v1234 = vlaneseq
      %v1235 = vshrl.u32 %v1234, 7
      %v1236 = vsub.s32 0, %v1235
      %v1237 = vrot.slane %v780, %v1236
      %v1238 = vlaneseq
      %v1239 = vshrl.u32 %v1238, 7
      %v1240 = vsub.s32 1, %v1239
      %v1241 = vrot.slane %v780, %v1240
      %v1242 = vlaneseq
      %v1243 = vshrl.u32 %v1242, 7
      %v1244 = vsub.s32 0, %v1243
      %v1245 = vrot.slane %v782, %v1244
      %v1246 = vlaneseq
      %v1247 = vshrl.u32 %v1246, 7
      %v1248 = vsub.s32 1, %v1247
      %v1249 = vrot.slane %v782, %v1248
      %v1250 = vlaneseq
      %v1251 = vshrl.u32 %v1250, 7
      %v1252 = vsub.s32 0, %v1251
      %v1253 = vrot.slane %v765, %v1252
      %v1254 = vlaneseq
      %v1255 = vshrl.u32 %v1254, 7
      %v1256 = vsub.s32 1, %v1255
      %v1257 = vrot.slane %v765, %v1256
      %v1258 = vlaneseq
      %v1259 = vshrl.u32 %v1258, 7
      %v1260 = vsub.s32 0, %v1259
      %v1261 = vrot.slane %v779, %v1260
      %v1262 = vlaneseq
      %v1263 = vshrl.u32 %v1262, 7
      %v1264 = vsub.s32 1, %v1263
      %v1265 = vrot.slane %v779, %v1264
      %v1266 = vlaneseq
      %v1267 = vshrl.u32 %v1266, 7
      %v1268 = vsub.s32 0, %v1267
      %v1269 = vrot.slane %v781, %v1268
      %v1270 = vlaneseq
      %v1271 = vshrl.u32 %v1270, 7
      %v1272 = vsub.s32 1, %v1271
      %v1273 = vrot.slane %v781, %v1272
      %v1274 = vlaneseq
      %v1275 = vshrl.u32 %v1274, 7
      %v1276 = vsub.s32 0, %v1275
      %v1277 = vrot.slane %v783, %v1276
      %v1278 = vlaneseq
      %v1279 = vshrl.u32 %v1278, 7
      %v1280 = vsub.s32 1, %v1279
      %v1281 = vrot.slane %v783, %v1280
      %v1282 = vlaneseq
      %v1283 = vshrl.u32 %v1282, 7
      %v1284 = vsub.s32 0, %v1283
      %v1285 = vrot.slane %v808, %v1284
      %v1286 = vlaneseq
      %v1287 = vshrl.u32 %v1286, 7
      %v1288 = vsub.s32 1, %v1287
      %v1289 = vrot.slane %v808, %v1288
      %v1290 = vlaneseq
      %v1291 = vshrl.u32 %v1290, 7
      %v1292 = vsub.s32 0, %v1291
      %v1293 = vrot.slane %v822, %v1292
      %v1294 = vlaneseq
      %v1295 = vshrl.u32 %v1294, 7
      %v1296 = vsub.s32 1, %v1295
      %v1297 = vrot.slane %v822, %v1296
      %v1298 = vlaneseq
      %v1299 = vshrl.u32 %v1298, 7
      %v1300 = vsub.s32 0, %v1299
      %v1301 = vrot.slane %v830, %v1300
      %v1302 = vlaneseq
      %v1303 = vshrl.u32 %v1302, 7
      %v1304 = vsub.s32 1, %v1303
      %v1305 = vrot.slane %v830, %v1304
      %v1306 = vlaneseq
      %v1307 = vshrl.u32 %v1306, 7
      %v1308 = vsub.s32 0, %v1307
      %v1309 = vrot.slane %v832, %v1308
      %v1310 = vlaneseq
      %v1311 = vshrl.u32 %v1310, 7
      %v1312 = vsub.s32 1, %v1311
      %v1313 = vrot.slane %v832, %v1312
      %v1314 = vlaneseq
      %v1315 = vshrl.u32 %v1314, 7
      %v1316 = vsub.s32 0, %v1315
      %v1317 = vrot.slane %v815, %v1316
      %v1318 = vlaneseq
      %v1319 = vshrl.u32 %v1318, 7
      %v1320 = vsub.s32 1, %v1319
      %v1321 = vrot.slane %v815, %v1320
      %v1322 = vlaneseq
      %v1323 = vshrl.u32 %v1322, 7
      %v1324 = vsub.s32 0, %v1323
      %v1325 = vrot.slane %v829, %v1324
      %v1326 = vlaneseq
      %v1327 = vshrl.u32 %v1326, 7
      %v1328 = vsub.s32 1, %v1327
      %v1329 = vrot.slane %v829, %v1328
      %v1330 = vlaneseq
      %v1331 = vshrl.u32 %v1330, 7
      %v1332 = vsub.s32 0, %v1331
      %v1333 = vrot.slane %v831, %v1332
      %v1334 = vlaneseq
      %v1335 = vshrl.u32 %v1334, 7
      %v1336 = vsub.s32 1, %v1335
      %v1337 = vrot.slane %v831, %v1336
      %v1338 = vlaneseq
      %v1339 = vshrl.u32 %v1338, 7
      %v1340 = vsub.s32 0, %v1339
      %v1341 = vrot.slane %v833, %v1340
      %v1342 = vlaneseq
      %v1343 = vshrl.u32 %v1342, 7
      %v1344 = vsub.s32 1, %v1343
      %v1345 = vrot.slane %v833, %v1344
      %v1474 = vmul.f32 %v837, %v267
      %v1475 = vmul.f32 %v841, %v269
      %v1476 = vmul.f32 %v845, %v267
      %v1477 = vmul.f32 %v849, %v269
      %v1478 = vmul.f32 %v853, %v267
      %v1479 = vmul.f32 %v857, %v269
      %v1480 = vmul.f32 %v861, %v267
      %v1481 = vmul.f32 %v865, %v269
      %v1482 = vmul.f32 %v869, %v267
      %v1483 = vmul.f32 %v873, %v269
      %v1484 = vmul.f32 %v877, %v267
      %v1485 = vmul.f32 %v881, %v269
      %v1486 = vmul.f32 %v885, %v267
      %v1487 = vmul.f32 %v889, %v269
      %v1488 = vmul.f32 %v893, %v267
      %v1489 = vmul.f32 %v897, %v269
      %v1490 = vmul.f32 %v901, %v267
      %v1491 = vmul.f32 %v905, %v269
      %v1492 = vmul.f32 %v909, %v267
      %v1493 = vmul.f32 %v913, %v269
      %v1494 = vmul.f32 %v917, %v267
      %v1495 = vmul.f32 %v921, %v269
      %v1496 = vmul.f32 %v925, %v267
      %v1497 = vmul.f32 %v929, %v269
      %v1498 = vmul.f32 %v933, %v267
      %v1499 = vmul.f32 %v937, %v269
      %v1500 = vmul.f32 %v941, %v267
      %v1501 = vmul.f32 %v945, %v269
      %v1502 = vmul.f32 %v949, %v267
      %v1503 = vmul.f32 %v953, %v269
      %v1504 = vmul.f32 %v957, %v267
      %v1505 = vmul.f32 %v961, %v269
      %v1506 = vmul.f32 %v965, %v267
      %v1507 = vmul.f32 %v969, %v269
      %v1508 = vmul.f32 %v973, %v267
      %v1509 = vmul.f32 %v977, %v269
      %v1510 = vmul.f32 %v981, %v267
      %v1511 = vmul.f32 %v985, %v269
      %v1512 = vmul.f32 %v989, %v267
      %v1513 = vmul.f32 %v993, %v269
      %v1514 = vmul.f32 %v997, %v267
      %v1515 = vmul.f32 %v1001, %v269
      %v1516 = vmul.f32 %v1005, %v267
      %v1517 = vmul.f32 %v1009, %v269
      %v1518 = vmul.f32 %v1013, %v267
      %v1519 = vmul.f32 %v1017, %v269
      %v1520 = vmul.f32 %v1021, %v267
      %v1521 = vmul.f32 %v1025, %v269
      %v1522 = vmul.f32 %v1029, %v267
      %v1523 = vmul.f32 %v1033, %v269
      %v1524 = vmul.f32 %v1037, %v267
      %v1525 = vmul.f32 %v1041, %v269
      %v1526 = vmul.f32 %v1045, %v267
      %v1527 = vmul.f32 %v1049, %v269
      %v1528 = vmul.f32 %v1053, %v267
      %v1529 = vmul.f32 %v1057, %v269
      %v1530 = vmul.f32 %v1061, %v267
      %v1531 = vmul.f32 %v1065, %v269
      %v1532 = vmul.f32 %v1069, %v267
      %v1533 = vmul.f32 %v1073, %v269
      %v1534 = vmul.f32 %v1077, %v267
      %v1535 = vmul.f32 %v1081, %v269
      %v1536 = vmul.f32 %v1085, %v267
      %v1537 = vmul.f32 %v1089, %v269
      %v1538 = vmul.f32 %v1093, %v267
      %v1539 = vmul.f32 %v1097, %v269
      %v1540 = vmul.f32 %v1101, %v267
      %v1541 = vmul.f32 %v1105, %v269
      %v1542 = vmul.f32 %v1109, %v267
      %v1543 = vmul.f32 %v1113, %v269
      %v1544 = vmul.f32 %v1117, %v267
      %v1545 = vmul.f32 %v1121, %v269
      %v1546 = vmul.f32 %v1125, %v267
      %v1547 = vmul.f32 %v1129, %v269
      %v1548 = vmul.f32 %v1133, %v267
      %v1549 = vmul.f32 %v1137, %v269
      %v1550 = vmul.f32 %v1141, %v267
      %v1551 = vmul.f32 %v1145, %v269
      %v1552 = vmul.f32 %v1149, %v267
      %v1553 = vmul.f32 %v1153, %v269
      %v1554 = vmul.f32 %v1157, %v267
      %v1555 = vmul.f32 %v1161, %v269
      %v1556 = vmul.f32 %v1165, %v267
      %v1557 = vmul.f32 %v1169, %v269
      %v1558 = vmul.f32 %v1173, %v267
      %v1559 = vmul.f32 %v1177, %v269
      %v1560 = vmul.f32 %v1181, %v267
      %v1561 = vmul.f32 %v1185, %v269
      %v1562 = vmul.f32 %v1189, %v267
      %v1563 = vmul.f32 %v1193, %v269
      %v1564 = vmul.f32 %v1197, %v267
      %v1565 = vmul.f32 %v1201, %v269
      %v1566 = vmul.f32 %v1205, %v267
      %v1567 = vmul.f32 %v1209, %v269
      %v1568 = vmul.f32 %v1213, %v267
      %v1569 = vmul.f32 %v1217, %v269
      %v1570 = vmul.f32 %v1221, %v267
      %v1571 = vmul.f32 %v1225, %v269
      %v1572 = vmul.f32 %v1229, %v267
      %v1573 = vmul.f32 %v1233, %v269
      %v1574 = vmul.f32 %v1237, %v267
      %v1575 = vmul.f32 %v1241, %v269
      %v1576 = vmul.f32 %v1245, %v267
      %v1577 = vmul.f32 %v1249, %v269
      %v1578 = vmul.f32 %v1253, %v267
      %v1579 = vmul.f32 %v1257, %v269
      %v1580 = vmul.f32 %v1261, %v267
      %v1581 = vmul.f32 %v1265, %v269
      %v1582 = vmul.f32 %v1269, %v267
      %v1583 = vmul.f32 %v1273, %v269
      %v1584 = vmul.f32 %v1277, %v267
      %v1585 = vmul.f32 %v1281, %v269
      %v1586 = vmul.f32 %v1285, %v267
      %v1587 = vmul.f32 %v1289, %v269
      %v1588 = vmul.f32 %v1293, %v267
      %v1589 = vmul.f32 %v1297, %v269
      %v1590 = vmul.f32 %v1301, %v267
      %v1591 = vmul.f32 %v1305, %v269
      %v1592 = vmul.f32 %v1309, %v267
      %v1593 = vmul.f32 %v1313, %v269
      %v1594 = vmul.f32 %v1317, %v267
      %v1595 = vmul.f32 %v1321, %v269
      %v1596 = vmul.f32 %v1325, %v267
      %v1597 = vmul.f32 %v1329, %v269
      %v1598 = vmul.f32 %v1333, %v267
      %v1599 = vmul.f32 %v1337, %v269
      %v1600 = vmul.f32 %v1341, %v267
      %v1601 = vmul.f32 %v1345, %v269
      %v1602 = vpack.c.bf16 %v1476, %v1474
      %v1603 = vpack.c.bf16 %v1477, %v1475
      %v1604 = vpack.c.bf16 %v1480, %v1478
      %v1605 = vpack.c.bf16 %v1481, %v1479
      %v1606 = vpack.c.bf16 %v1484, %v1482
      %v1607 = vpack.c.bf16 %v1485, %v1483
      %v1608 = vpack.c.bf16 %v1488, %v1486
      %v1609 = vpack.c.bf16 %v1489, %v1487
      %v1610 = vpack.c.bf16 %v1492, %v1490
      %v1611 = vpack.c.bf16 %v1493, %v1491
      %v1612 = vpack.c.bf16 %v1496, %v1494
      %v1613 = vpack.c.bf16 %v1497, %v1495
      %v1614 = vpack.c.bf16 %v1500, %v1498
      %v1615 = vpack.c.bf16 %v1501, %v1499
      %v1616 = vpack.c.bf16 %v1504, %v1502
      %v1617 = vpack.c.bf16 %v1505, %v1503
      %v1618 = vpack.c.bf16 %v1508, %v1506
      %v1619 = vpack.c.bf16 %v1509, %v1507
      %v1620 = vpack.c.bf16 %v1512, %v1510
      %v1621 = vpack.c.bf16 %v1513, %v1511
      %v1622 = vpack.c.bf16 %v1516, %v1514
      %v1623 = vpack.c.bf16 %v1517, %v1515
      %v1624 = vpack.c.bf16 %v1520, %v1518
      %v1625 = vpack.c.bf16 %v1521, %v1519
      %v1626 = vpack.c.bf16 %v1524, %v1522
      %v1627 = vpack.c.bf16 %v1525, %v1523
      %v1628 = vpack.c.bf16 %v1528, %v1526
      %v1629 = vpack.c.bf16 %v1529, %v1527
      %v1630 = vpack.c.bf16 %v1532, %v1530
      %v1631 = vpack.c.bf16 %v1533, %v1531
      %v1632 = vpack.c.bf16 %v1536, %v1534
      %v1633 = vpack.c.bf16 %v1537, %v1535
      %v1634 = vpack.c.bf16 %v1540, %v1538
      %v1635 = vpack.c.bf16 %v1541, %v1539
      %v1636 = vpack.c.bf16 %v1544, %v1542
      %v1637 = vpack.c.bf16 %v1545, %v1543
      %v1638 = vpack.c.bf16 %v1548, %v1546
      %v1639 = vpack.c.bf16 %v1549, %v1547
      %v1640 = vpack.c.bf16 %v1552, %v1550
      %v1641 = vpack.c.bf16 %v1553, %v1551
      %v1642 = vpack.c.bf16 %v1556, %v1554
      %v1643 = vpack.c.bf16 %v1557, %v1555
      %v1644 = vpack.c.bf16 %v1560, %v1558
      %v1645 = vpack.c.bf16 %v1561, %v1559
      %v1646 = vpack.c.bf16 %v1564, %v1562
      %v1647 = vpack.c.bf16 %v1565, %v1563
      %v1648 = vpack.c.bf16 %v1568, %v1566
      %v1649 = vpack.c.bf16 %v1569, %v1567
      %v1650 = vpack.c.bf16 %v1572, %v1570
      %v1651 = vpack.c.bf16 %v1573, %v1571
      %v1652 = vpack.c.bf16 %v1576, %v1574
      %v1653 = vpack.c.bf16 %v1577, %v1575
      %v1654 = vpack.c.bf16 %v1580, %v1578
      %v1655 = vpack.c.bf16 %v1581, %v1579
      %v1656 = vpack.c.bf16 %v1584, %v1582
      %v1657 = vpack.c.bf16 %v1585, %v1583
      %v1658 = vpack.c.bf16 %v1588, %v1586
      %v1659 = vpack.c.bf16 %v1589, %v1587
      %v1660 = vpack.c.bf16 %v1592, %v1590
      %v1661 = vpack.c.bf16 %v1593, %v1591
      %v1662 = vpack.c.bf16 %v1596, %v1594
      %v1663 = vpack.c.bf16 %v1597, %v1595
      %v1664 = vpack.c.bf16 %v1600, %v1598
      %v1665 = vpack.c.bf16 %v1601, %v1599
      %v1666 = vld [vmem:[%s1] sm:$0xf]
      %v1667 = vld [vmem:[%s1 + $0x4] sm:$0xf]
      %v1668 = vld [vmem:[%s1 + $0x8] sm:$0xf]
      %v1669 = vld [vmem:[%s1 + $0xc] sm:$0xf]
      %v1670 = vld [vmem:[%s1 + $0x10] sm:$0xf]
      %v1671 = vld [vmem:[%s1 + $0x14] sm:$0xf]
      %v1672 = vld [vmem:[%s1 + $0x18] sm:$0xf]
      %v1673 = vld [vmem:[%s1 + $0x1c] sm:$0xf]
      %v1674 = vld [vmem:[%s1 + $0x20] sm:$0xf]
      %v1675 = vld [vmem:[%s1 + $0x24] sm:$0xf]
      %v1676 = vld [vmem:[%s1 + $0x28] sm:$0xf]
      %v1677 = vld [vmem:[%s1 + $0x2c] sm:$0xf]
      %v1678 = vld [vmem:[%s1 + $0x30] sm:$0xf]
      %v1679 = vld [vmem:[%s1 + $0x34] sm:$0xf]
      %v1680 = vld [vmem:[%s1 + $0x38] sm:$0xf]
      %v1681 = vld [vmem:[%s1 + $0x3c] sm:$0xf]
      %v1682 = vld [vmem:[%s1 + $0x40] sm:$0xf]
      %v1683 = vld [vmem:[%s1 + $0x44] sm:$0xf]
      %v1684 = vld [vmem:[%s1 + $0x48] sm:$0xf]
      %v1685 = vld [vmem:[%s1 + $0x4c] sm:$0xf]
      %v1686 = vld [vmem:[%s1 + $0x50] sm:$0xf]
      %v1687 = vld [vmem:[%s1 + $0x54] sm:$0xf]
      %v1688 = vld [vmem:[%s1 + $0x58] sm:$0xf]
      %v1689 = vld [vmem:[%s1 + $0x5c] sm:$0xf]
      %v1690 = vld [vmem:[%s1 + $0x60] sm:$0xf]
      %v1691 = vld [vmem:[%s1 + $0x64] sm:$0xf]
      %v1692 = vld [vmem:[%s1 + $0x68] sm:$0xf]
      %v1693 = vld [vmem:[%s1 + $0x6c] sm:$0xf]
      %v1694 = vld [vmem:[%s1 + $0x70] sm:$0xf]
      %v1695 = vld [vmem:[%s1 + $0x74] sm:$0xf]
      %v1696 = vld [vmem:[%s1 + $0x78] sm:$0xf]
      %v1697 = vld [vmem:[%s1 + $0x7c] sm:$0xf]
      %v1698 = vld [vmem:[%s2] sm:$0x1]
      %v1700 = vlaneseq
      %v1701 = vshrl.u32 %v1700, 7
      %v1702 = vsub.s32 0, %v1701
      %v1703 = vrot.slane %v1698, %v1702
      %v1737 = vunpack.c.l.b16 %v1666
      %v1738 = vunpack.c.l.b16 %v1667
      %v1739 = vunpack.c.l.b16 %v1668
      %v1740 = vunpack.c.l.b16 %v1669
      %v1741 = vunpack.c.l.b16 %v1670
      %v1742 = vunpack.c.l.b16 %v1671
      %v1743 = vunpack.c.l.b16 %v1672
      %v1744 = vunpack.c.l.b16 %v1673
      %v1745 = vunpack.c.l.b16 %v1674
      %v1746 = vunpack.c.l.b16 %v1675
      %v1747 = vunpack.c.l.b16 %v1676
      %v1748 = vunpack.c.l.b16 %v1677
      %v1749 = vunpack.c.l.b16 %v1678
      %v1750 = vunpack.c.l.b16 %v1679
      %v1751 = vunpack.c.l.b16 %v1680
      %v1752 = vunpack.c.l.b16 %v1681
      %v1753 = vunpack.c.l.b16 %v1682
      %v1754 = vunpack.c.l.b16 %v1683
      %v1755 = vunpack.c.l.b16 %v1684
      %v1756 = vunpack.c.l.b16 %v1685
      %v1757 = vunpack.c.l.b16 %v1686
      %v1758 = vunpack.c.l.b16 %v1687
      %v1759 = vunpack.c.l.b16 %v1688
      %v1760 = vunpack.c.l.b16 %v1689
      %v1761 = vunpack.c.l.b16 %v1690
      %v1762 = vunpack.c.l.b16 %v1691
      %v1763 = vunpack.c.l.b16 %v1692
      %v1764 = vunpack.c.l.b16 %v1693
      %v1765 = vunpack.c.l.b16 %v1694
      %v1766 = vunpack.c.l.b16 %v1695
      %v1767 = vunpack.c.l.b16 %v1696
      %v1768 = vunpack.c.l.b16 %v1697
      %v1769 = vpack.c.b16 %v1738, %v1737
      %v1770 = vpack.c.b16 %v1740, %v1739
      %v1771 = vpack.c.b16 %v1742, %v1741
      %v1772 = vpack.c.b16 %v1744, %v1743
      %v1773 = vpack.c.b16 %v1746, %v1745
      %v1774 = vpack.c.b16 %v1748, %v1747
      %v1775 = vpack.c.b16 %v1750, %v1749
      %v1776 = vpack.c.b16 %v1752, %v1751
      %v1777 = vpack.c.b16 %v1754, %v1753
      %v1778 = vpack.c.b16 %v1756, %v1755
      %v1779 = vpack.c.b16 %v1758, %v1757
      %v1780 = vpack.c.b16 %v1760, %v1759
      %v1781 = vpack.c.b16 %v1762, %v1761
      %v1782 = vpack.c.b16 %v1764, %v1763
      %v1783 = vpack.c.b16 %v1766, %v1765
      %v1784 = vpack.c.b16 %v1768, %v1767
      %1801 = vmatprep.subr.bf16.mxu0 0
      %1802 = vmatpush1.bf16.msra.mxu0 %v1776
      %1803 = vmatprep.subr.bf16.mxu0 0
      %1804 = vmatpush1.bf16.msra.mxu0 %v1775
      %1805 = vmatprep.subr.bf16.mxu0 0
      %1806 = vmatpush1.bf16.msra.mxu0 %v1774
      %1807 = vmatprep.subr.bf16.mxu0 0
      %1808 = vmatpush1.bf16.msra.mxu0 %v1773
      %1809 = vmatprep.subr.bf16.mxu0 0
      %1810 = vmatpush1.bf16.msra.mxu0 %v1772
      %1811 = vmatprep.subr.bf16.mxu0 0
      %1812 = vmatpush1.bf16.msra.mxu0 %v1771
      %1813 = vmatprep.subr.bf16.mxu0 0
      %1814 = vmatpush1.bf16.msra.mxu0 %v1770
      %1815 = vmatprep.subr.bf16.mxu0 0
      %1816 = vmatpush1.bf16.msra.mxu0 %v1769
      %1817 = vmatprep.subr.bf16.mxu0 0
      %1818 = vmatpush2.bf16.msra.mxu0 %v1784
      %1819 = vmatprep.subr.bf16.mxu0 0
      %1820 = vmatpush2.bf16.msra.mxu0 %v1783
      %1821 = vmatprep.subr.bf16.mxu0 0
      %1822 = vmatpush2.bf16.msra.mxu0 %v1782
      %1823 = vmatprep.subr.bf16.mxu0 0
      %1824 = vmatpush2.bf16.msra.mxu0 %v1781
      %1825 = vmatprep.subr.bf16.mxu0 0
      %1826 = vmatpush2.bf16.msra.mxu0 %v1780
      %1827 = vmatprep.subr.bf16.mxu0 0
      %1828 = vmatpush2.bf16.msra.mxu0 %v1779
      %1829 = vmatprep.subr.bf16.mxu0 0
      %1830 = vmatpush2.bf16.msra.mxu0 %v1778
      %1831 = vmatprep.subr.bf16.mxu0 0
      %1832 = vmatpush2.bf16.msra.mxu0 %v1777
      %1833 = vmatprep.mubr.bf16.mxu0 %v1603
      %1834 = vmatmul.mubr.bf16.gmra.mxu0 %v1602
      %v1835 = vpop.f32.mrf.mxu0
      %v1836 = vadd.f32 %v1703, %v1835
      %v1837 = vpop.f32.mrf.mxu0
      %v1838 = vpop.f32.mrf.mxu0
      %v1839 = vadd.f32 %v1703, %v1838
      %v1840 = vpop.f32.mrf.mxu0
      %1841 = vmatprep.mubr.bf16.mxu0 %v1605
      %1842 = vmatmul.mubr.bf16.gmra.mxu0 %v1604
      %v1843 = vpop.f32.mrf.mxu0
      %v1844 = vadd.f32 %v1703, %v1843
      %v1845 = vpop.f32.mrf.mxu0
      %v1846 = vpop.f32.mrf.mxu0
      %v1847 = vadd.f32 %v1703, %v1846
      %v1848 = vpop.f32.mrf.mxu0
      %1849 = vmatprep.mubr.bf16.mxu0 %v1607
      %1850 = vmatmul.mubr.bf16.gmra.mxu0 %v1606
      %v1851 = vpop.f32.mrf.mxu0
      %v1852 = vadd.f32 %v1703, %v1851
      %v1853 = vpop.f32.mrf.mxu0
      %v1854 = vpop.f32.mrf.mxu0
      %v1855 = vadd.f32 %v1703, %v1854
      %v1856 = vpop.f32.mrf.mxu0
      %1857 = vmatprep.mubr.bf16.mxu0 %v1609
      %1858 = vmatmul.mubr.bf16.gmra.mxu0 %v1608
      %v1859 = vpop.f32.mrf.mxu0
      %v1860 = vadd.f32 %v1703, %v1859
      %v1861 = vpop.f32.mrf.mxu0
      %v1862 = vpop.f32.mrf.mxu0
      %v1863 = vadd.f32 %v1703, %v1862
      %v1864 = vpop.f32.mrf.mxu0
      %1865 = vmatprep.mubr.bf16.mxu0 %v1611
      %1866 = vmatmul.mubr.bf16.gmra.mxu0 %v1610
      %v1867 = vpop.f32.mrf.mxu0
      %v1868 = vadd.f32 %v1703, %v1867
      %v1869 = vpop.f32.mrf.mxu0
      %v1870 = vpop.f32.mrf.mxu0
      %v1871 = vadd.f32 %v1703, %v1870
      %v1872 = vpop.f32.mrf.mxu0
      %1873 = vmatprep.mubr.bf16.mxu0 %v1613
      %1874 = vmatmul.mubr.bf16.gmra.mxu0 %v1612
      %v1875 = vpop.f32.mrf.mxu0
      %v1876 = vadd.f32 %v1703, %v1875
      %v1877 = vpop.f32.mrf.mxu0
      %v1878 = vpop.f32.mrf.mxu0
      %v1879 = vadd.f32 %v1703, %v1878
      %v1880 = vpop.f32.mrf.mxu0
      %1881 = vmatprep.mubr.bf16.mxu0 %v1615
      %1882 = vmatmul.mubr.bf16.gmra.mxu0 %v1614
      %v1883 = vpop.f32.mrf.mxu0
      %v1884 = vadd.f32 %v1703, %v1883
      %v1885 = vpop.f32.mrf.mxu0
      %v1886 = vpop.f32.mrf.mxu0
      %v1887 = vadd.f32 %v1703, %v1886
      %v1888 = vpop.f32.mrf.mxu0
      %1889 = vmatprep.mubr.bf16.mxu0 %v1617
      %1890 = vmatmul.mubr.bf16.gmra.mxu0 %v1616
      %v1891 = vpop.f32.mrf.mxu0
      %v1892 = vadd.f32 %v1703, %v1891
      %v1893 = vpop.f32.mrf.mxu0
      %v1894 = vpop.f32.mrf.mxu0
      %v1895 = vadd.f32 %v1703, %v1894
      %v1896 = vpop.f32.mrf.mxu0
      %1897 = vmatprep.mubr.bf16.mxu0 %v1619
      %1898 = vmatmul.mubr.bf16.gmra.mxu0 %v1618
      %v1899 = vpop.f32.mrf.mxu0
      %v1900 = vadd.f32 %v1703, %v1899
      %v1901 = vpop.f32.mrf.mxu0
      %v1902 = vpop.f32.mrf.mxu0
      %v1903 = vadd.f32 %v1703, %v1902
      %v1904 = vpop.f32.mrf.mxu0
      %1905 = vmatprep.mubr.bf16.mxu0 %v1621
      %1906 = vmatmul.mubr.bf16.gmra.mxu0 %v1620
      %v1907 = vpop.f32.mrf.mxu0
      %v1908 = vadd.f32 %v1703, %v1907
      %v1909 = vpop.f32.mrf.mxu0
      %v1910 = vpop.f32.mrf.mxu0
      %v1911 = vadd.f32 %v1703, %v1910
      %v1912 = vpop.f32.mrf.mxu0
      %1913 = vmatprep.mubr.bf16.mxu0 %v1623
      %1914 = vmatmul.mubr.bf16.gmra.mxu0 %v1622
      %v1915 = vpop.f32.mrf.mxu0
      %v1916 = vadd.f32 %v1703, %v1915
      %v1917 = vpop.f32.mrf.mxu0
      %v1918 = vpop.f32.mrf.mxu0
      %v1919 = vadd.f32 %v1703, %v1918
      %v1920 = vpop.f32.mrf.mxu0
      %1921 = vmatprep.mubr.bf16.mxu0 %v1625
      %1922 = vmatmul.mubr.bf16.gmra.mxu0 %v1624
      %v1923 = vpop.f32.mrf.mxu0
      %v1924 = vadd.f32 %v1703, %v1923
      %v1925 = vpop.f32.mrf.mxu0
      %v1926 = vpop.f32.mrf.mxu0
      %v1927 = vadd.f32 %v1703, %v1926
      %v1928 = vpop.f32.mrf.mxu0
      %1929 = vmatprep.mubr.bf16.mxu0 %v1627
      %1930 = vmatmul.mubr.bf16.gmra.mxu0 %v1626
      %v1931 = vpop.f32.mrf.mxu0
      %v1932 = vadd.f32 %v1703, %v1931
      %v1933 = vpop.f32.mrf.mxu0
      %v1934 = vpop.f32.mrf.mxu0
      %v1935 = vadd.f32 %v1703, %v1934
      %v1936 = vpop.f32.mrf.mxu0
      %1937 = vmatprep.mubr.bf16.mxu0 %v1629
      %1938 = vmatmul.mubr.bf16.gmra.mxu0 %v1628
      %v1939 = vpop.f32.mrf.mxu0
      %v1940 = vadd.f32 %v1703, %v1939
      %v1941 = vpop.f32.mrf.mxu0
      %v1942 = vpop.f32.mrf.mxu0
      %v1943 = vadd.f32 %v1703, %v1942
      %v1944 = vpop.f32.mrf.mxu0
      %1945 = vmatprep.mubr.bf16.mxu0 %v1631
      %1946 = vmatmul.mubr.bf16.gmra.mxu0 %v1630
      %v1947 = vpop.f32.mrf.mxu0
      %v1948 = vadd.f32 %v1703, %v1947
      %v1949 = vpop.f32.mrf.mxu0
      %v1950 = vpop.f32.mrf.mxu0
      %v1951 = vadd.f32 %v1703, %v1950
      %v1952 = vpop.f32.mrf.mxu0
      %1953 = vmatprep.mubr.bf16.mxu0 %v1633
      %1954 = vmatmul.mubr.bf16.gmra.mxu0 %v1632
      %v1955 = vpop.f32.mrf.mxu0
      %v1956 = vadd.f32 %v1703, %v1955
      %v1957 = vpop.f32.mrf.mxu0
      %v1958 = vpop.f32.mrf.mxu0
      %v1959 = vadd.f32 %v1703, %v1958
      %v1960 = vpop.f32.mrf.mxu0
      %1961 = vmatprep.mubr.bf16.mxu0 %v1635
      %1962 = vmatmul.mubr.bf16.gmra.mxu0 %v1634
      %v1963 = vpop.f32.mrf.mxu0
      %v1964 = vadd.f32 %v1703, %v1963
      %v1965 = vpop.f32.mrf.mxu0
      %v1966 = vpop.f32.mrf.mxu0
      %v1967 = vadd.f32 %v1703, %v1966
      %v1968 = vpop.f32.mrf.mxu0
      %1969 = vmatprep.mubr.bf16.mxu0 %v1637
      %1970 = vmatmul.mubr.bf16.gmra.mxu0 %v1636
      %v1971 = vpop.f32.mrf.mxu0
      %v1972 = vadd.f32 %v1703, %v1971
      %v1973 = vpop.f32.mrf.mxu0
      %v1974 = vpop.f32.mrf.mxu0
      %v1975 = vadd.f32 %v1703, %v1974
      %v1976 = vpop.f32.mrf.mxu0
      %1977 = vmatprep.mubr.bf16.mxu0 %v1639
      %1978 = vmatmul.mubr.bf16.gmra.mxu0 %v1638
      %v1979 = vpop.f32.mrf.mxu0
      %v1980 = vadd.f32 %v1703, %v1979
      %v1981 = vpop.f32.mrf.mxu0
      %v1982 = vpop.f32.mrf.mxu0
      %v1983 = vadd.f32 %v1703, %v1982
      %v1984 = vpop.f32.mrf.mxu0
      %1985 = vmatprep.mubr.bf16.mxu0 %v1641
      %1986 = vmatmul.mubr.bf16.gmra.mxu0 %v1640
      %v1987 = vpop.f32.mrf.mxu0
      %v1988 = vadd.f32 %v1703, %v1987
      %v1989 = vpop.f32.mrf.mxu0
      %v1990 = vpop.f32.mrf.mxu0
      %v1991 = vadd.f32 %v1703, %v1990
      %v1992 = vpop.f32.mrf.mxu0
      %1993 = vmatprep.mubr.bf16.mxu0 %v1643
      %1994 = vmatmul.mubr.bf16.gmra.mxu0 %v1642
      %v1995 = vpop.f32.mrf.mxu0
      %v1996 = vadd.f32 %v1703, %v1995
      %v1997 = vpop.f32.mrf.mxu0
      %v1998 = vpop.f32.mrf.mxu0
      %v1999 = vadd.f32 %v1703, %v1998
      %v2000 = vpop.f32.mrf.mxu0
      %2001 = vmatprep.mubr.bf16.mxu0 %v1645
      %2002 = vmatmul.mubr.bf16.gmra.mxu0 %v1644
      %v2003 = vpop.f32.mrf.mxu0
      %v2004 = vadd.f32 %v1703, %v2003
      %v2005 = vpop.f32.mrf.mxu0
      %v2006 = vpop.f32.mrf.mxu0
      %v2007 = vadd.f32 %v1703, %v2006
      %v2008 = vpop.f32.mrf.mxu0
      %2009 = vmatprep.mubr.bf16.mxu0 %v1647
      %2010 = vmatmul.mubr.bf16.gmra.mxu0 %v1646
      %v2011 = vpop.f32.mrf.mxu0
      %v2012 = vadd.f32 %v1703, %v2011
      %v2013 = vpop.f32.mrf.mxu0
      %v2014 = vpop.f32.mrf.mxu0
      %v2015 = vadd.f32 %v1703, %v2014
      %v2016 = vpop.f32.mrf.mxu0
      %2017 = vmatprep.mubr.bf16.mxu0 %v1649
      %2018 = vmatmul.mubr.bf16.gmra.mxu0 %v1648
      %v2019 = vpop.f32.mrf.mxu0
      %v2020 = vadd.f32 %v1703, %v2019
      %v2021 = vpop.f32.mrf.mxu0
      %v2022 = vpop.f32.mrf.mxu0
      %v2023 = vadd.f32 %v1703, %v2022
      %v2024 = vpop.f32.mrf.mxu0
      %2025 = vmatprep.mubr.bf16.mxu0 %v1651
      %2026 = vmatmul.mubr.bf16.gmra.mxu0 %v1650
      %v2027 = vpop.f32.mrf.mxu0
      %v2028 = vadd.f32 %v1703, %v2027
      %v2029 = vpop.f32.mrf.mxu0
      %v2030 = vpop.f32.mrf.mxu0
      %v2031 = vadd.f32 %v1703, %v2030
      %v2032 = vpop.f32.mrf.mxu0
      %2033 = vmatprep.mubr.bf16.mxu0 %v1653
      %2034 = vmatmul.mubr.bf16.gmra.mxu0 %v1652
      %v2035 = vpop.f32.mrf.mxu0
      %v2036 = vadd.f32 %v1703, %v2035
      %v2037 = vpop.f32.mrf.mxu0
      %v2038 = vpop.f32.mrf.mxu0
      %v2039 = vadd.f32 %v1703, %v2038
      %v2040 = vpop.f32.mrf.mxu0
      %2041 = vmatprep.mubr.bf16.mxu0 %v1655
      %2042 = vmatmul.mubr.bf16.gmra.mxu0 %v1654
      %v2043 = vpop.f32.mrf.mxu0
      %v2044 = vadd.f32 %v1703, %v2043
      %v2045 = vpop.f32.mrf.mxu0
      %v2046 = vpop.f32.mrf.mxu0
      %v2047 = vadd.f32 %v1703, %v2046
      %v2048 = vpop.f32.mrf.mxu0
      %2049 = vmatprep.mubr.bf16.mxu0 %v1657
      %2050 = vmatmul.mubr.bf16.gmra.mxu0 %v1656
      %v2051 = vpop.f32.mrf.mxu0
      %v2052 = vadd.f32 %v1703, %v2051
      %v2053 = vpop.f32.mrf.mxu0
      %v2054 = vpop.f32.mrf.mxu0
      %v2055 = vadd.f32 %v1703, %v2054
      %v2056 = vpop.f32.mrf.mxu0
      %2057 = vmatprep.mubr.bf16.mxu0 %v1659
      %2058 = vmatmul.mubr.bf16.gmra.mxu0 %v1658
      %v2059 = vpop.f32.mrf.mxu0
      %v2060 = vadd.f32 %v1703, %v2059
      %v2061 = vpop.f32.mrf.mxu0
      %v2062 = vpop.f32.mrf.mxu0
      %v2063 = vadd.f32 %v1703, %v2062
      %v2064 = vpop.f32.mrf.mxu0
      %2065 = vmatprep.mubr.bf16.mxu0 %v1661
      %2066 = vmatmul.mubr.bf16.gmra.mxu0 %v1660
      %v2067 = vpop.f32.mrf.mxu0
      %v2068 = vadd.f32 %v1703, %v2067
      %v2069 = vpop.f32.mrf.mxu0
      %v2070 = vpop.f32.mrf.mxu0
      %v2071 = vadd.f32 %v1703, %v2070
      %v2072 = vpop.f32.mrf.mxu0
      %2073 = vmatprep.mubr.bf16.mxu0 %v1663
      %2074 = vmatmul.mubr.bf16.gmra.mxu0 %v1662
      %v2075 = vpop.f32.mrf.mxu0
      %v2076 = vadd.f32 %v1703, %v2075
      %v2077 = vpop.f32.mrf.mxu0
      %v2078 = vpop.f32.mrf.mxu0
      %v2079 = vadd.f32 %v1703, %v2078
      %v2080 = vpop.f32.mrf.mxu0
      %2081 = vmatprep.mubr.bf16.mxu0 %v1665
      %2082 = vmatmul.mubr.bf16.gmra.mxu0 %v1664
      %v2083 = vpop.f32.mrf.mxu0
      %v2084 = vadd.f32 %v1703, %v2083
      %v2085 = vpop.f32.mrf.mxu0
      %v2086 = vpop.f32.mrf.mxu0
      %v2087 = vadd.f32 %v1703, %v2086
      %v2088 = vpop.f32.mrf.mxu0
      %2089 = vdwg.mxu0
      %v2090 = vmax.f32 %v1836, 0.0
      %v2091 = vmax.f32 %v1839, 0.0
      %v2092 = vmax.f32 %v1844, 0.0
      %v2093 = vmax.f32 %v1847, 0.0
      %v2094 = vmax.f32 %v1852, 0.0
      %v2095 = vmax.f32 %v1855, 0.0
      %v2096 = vmax.f32 %v1860, 0.0
      %v2097 = vmax.f32 %v1863, 0.0
      %v2098 = vmax.f32 %v1868, 0.0
      %v2099 = vmax.f32 %v1871, 0.0
      %v2100 = vmax.f32 %v1876, 0.0
      %v2101 = vmax.f32 %v1879, 0.0
      %v2102 = vmax.f32 %v1884, 0.0
      %v2103 = vmax.f32 %v1887, 0.0
      %v2104 = vmax.f32 %v1892, 0.0
      %v2105 = vmax.f32 %v1895, 0.0
      %v2106 = vmax.f32 %v1900, 0.0
      %v2107 = vmax.f32 %v1903, 0.0
      %v2108 = vmax.f32 %v1908, 0.0
      %v2109 = vmax.f32 %v1911, 0.0
      %v2110 = vmax.f32 %v1916, 0.0
      %v2111 = vmax.f32 %v1919, 0.0
      %v2112 = vmax.f32 %v1924, 0.0
      %v2113 = vmax.f32 %v1927, 0.0
      %v2114 = vmax.f32 %v1932, 0.0
      %v2115 = vmax.f32 %v1935, 0.0
      %v2116 = vmax.f32 %v1940, 0.0
      %v2117 = vmax.f32 %v1943, 0.0
      %v2118 = vmax.f32 %v1948, 0.0
      %v2119 = vmax.f32 %v1951, 0.0
      %v2120 = vmax.f32 %v1956, 0.0
      %v2121 = vmax.f32 %v1959, 0.0
      %v2122 = vmax.f32 %v1964, 0.0
      %v2123 = vmax.f32 %v1967, 0.0
      %v2124 = vmax.f32 %v1972, 0.0
      %v2125 = vmax.f32 %v1975, 0.0
      %v2126 = vmax.f32 %v1980, 0.0
      %v2127 = vmax.f32 %v1983, 0.0
      %v2128 = vmax.f32 %v1988, 0.0
      %v2129 = vmax.f32 %v1991, 0.0
      %v2130 = vmax.f32 %v1996, 0.0
      %v2131 = vmax.f32 %v1999, 0.0
      %v2132 = vmax.f32 %v2004, 0.0
      %v2133 = vmax.f32 %v2007, 0.0
      %v2134 = vmax.f32 %v2012, 0.0
      %v2135 = vmax.f32 %v2015, 0.0
      %v2136 = vmax.f32 %v2020, 0.0
      %v2137 = vmax.f32 %v2023, 0.0
      %v2138 = vmax.f32 %v2028, 0.0
      %v2139 = vmax.f32 %v2031, 0.0
      %v2140 = vmax.f32 %v2036, 0.0
      %v2141 = vmax.f32 %v2039, 0.0
      %v2142 = vmax.f32 %v2044, 0.0
      %v2143 = vmax.f32 %v2047, 0.0
      %v2144 = vmax.f32 %v2052, 0.0
      %v2145 = vmax.f32 %v2055, 0.0
      %v2146 = vmax.f32 %v2060, 0.0
      %v2147 = vmax.f32 %v2063, 0.0
      %v2148 = vmax.f32 %v2068, 0.0
      %v2149 = vmax.f32 %v2071, 0.0
      %v2150 = vmax.f32 %v2076, 0.0
      %v2151 = vmax.f32 %v2079, 0.0
      %v2152 = vmax.f32 %v2084, 0.0
      %v2153 = vmax.f32 %v2087, 0.0
      %v2154 = vsel %vm222, %v2090, 0.0
      %v2155 = vsel %vm222, %v2091, 0.0
      %v2156 = vadd.f32 %v2154, %v2155
      %v2157 = vsel %vm222, %v2092, 0.0
      %v2158 = vadd.f32 %v2156, %v2157
      %v2159 = vsel %vm222, %v2093, 0.0
      %v2160 = vadd.f32 %v2158, %v2159
      %v2161 = vsel %vm222, %v2094, 0.0
      %v2162 = vadd.f32 %v2160, %v2161
      %v2163 = vsel %vm222, %v2095, 0.0
      %v2164 = vadd.f32 %v2162, %v2163
      %v2165 = vsel %vm222, %v2096, 0.0
      %v2166 = vadd.f32 %v2164, %v2165
      %v2167 = vsel %vm222, %v2097, 0.0
      %v2168 = vadd.f32 %v2166, %v2167
      %v2169 = vsel %vm222, %v2098, 0.0
      %v2170 = vadd.f32 %v2168, %v2169
      %v2171 = vsel %vm222, %v2099, 0.0
      %v2172 = vadd.f32 %v2170, %v2171
      %v2173 = vsel %vm222, %v2100, 0.0
      %v2174 = vadd.f32 %v2172, %v2173
      %v2175 = vsel %vm222, %v2101, 0.0
      %v2176 = vadd.f32 %v2174, %v2175
      %v2177 = vsel %vm222, %v2102, 0.0
      %v2178 = vadd.f32 %v2176, %v2177
      %v2179 = vsel %vm222, %v2103, 0.0
      %v2180 = vadd.f32 %v2178, %v2179
      %v2181 = vsel %vm222, %v2104, 0.0
      %v2182 = vadd.f32 %v2180, %v2181
      %v2183 = vsel %vm222, %v2105, 0.0
      %v2184 = vadd.f32 %v2182, %v2183
      %v2185 = vsel %vm222, %v2106, 0.0
      %v2186 = vadd.f32 %v2184, %v2185
      %v2187 = vsel %vm222, %v2107, 0.0
      %v2188 = vadd.f32 %v2186, %v2187
      %v2189 = vsel %vm222, %v2108, 0.0
      %v2190 = vadd.f32 %v2188, %v2189
      %v2191 = vsel %vm222, %v2109, 0.0
      %v2192 = vadd.f32 %v2190, %v2191
      %v2193 = vsel %vm222, %v2110, 0.0
      %v2194 = vadd.f32 %v2192, %v2193
      %v2195 = vsel %vm222, %v2111, 0.0
      %v2196 = vadd.f32 %v2194, %v2195
      %v2197 = vsel %vm222, %v2112, 0.0
      %v2198 = vadd.f32 %v2196, %v2197
      %v2199 = vsel %vm222, %v2113, 0.0
      %v2200 = vadd.f32 %v2198, %v2199
      %v2201 = vsel %vm222, %v2114, 0.0
      %v2202 = vadd.f32 %v2200, %v2201
      %v2203 = vsel %vm222, %v2115, 0.0
      %v2204 = vadd.f32 %v2202, %v2203
      %v2205 = vsel %vm222, %v2116, 0.0
      %v2206 = vadd.f32 %v2204, %v2205
      %v2207 = vsel %vm222, %v2117, 0.0
      %v2208 = vadd.f32 %v2206, %v2207
      %v2209 = vsel %vm222, %v2118, 0.0
      %v2210 = vadd.f32 %v2208, %v2209
      %v2211 = vsel %vm222, %v2119, 0.0
      %v2212 = vadd.f32 %v2210, %v2211
      %v2213 = vsel %vm222, %v2120, 0.0
      %v2214 = vadd.f32 %v2212, %v2213
      %v2215 = vsel %vm222, %v2121, 0.0
      %v2216 = vadd.f32 %v2214, %v2215
      %v2217 = vsel %vm222, %v2122, 0.0
      %v2218 = vadd.f32 %v2216, %v2217
      %v2219 = vsel %vm222, %v2123, 0.0
      %v2220 = vadd.f32 %v2218, %v2219
      %v2221 = vsel %vm222, %v2124, 0.0
      %v2222 = vadd.f32 %v2220, %v2221
      %v2223 = vsel %vm222, %v2125, 0.0
      %v2224 = vadd.f32 %v2222, %v2223
      %v2225 = vsel %vm222, %v2126, 0.0
      %v2226 = vadd.f32 %v2224, %v2225
      %v2227 = vsel %vm222, %v2127, 0.0
      %v2228 = vadd.f32 %v2226, %v2227
      %v2229 = vsel %vm222, %v2128, 0.0
      %v2230 = vadd.f32 %v2228, %v2229
      %v2231 = vsel %vm222, %v2129, 0.0
      %v2232 = vadd.f32 %v2230, %v2231
      %v2233 = vsel %vm222, %v2130, 0.0
      %v2234 = vadd.f32 %v2232, %v2233
      %v2235 = vsel %vm222, %v2131, 0.0
      %v2236 = vadd.f32 %v2234, %v2235
      %v2237 = vsel %vm222, %v2132, 0.0
      %v2238 = vadd.f32 %v2236, %v2237
      %v2239 = vsel %vm222, %v2133, 0.0
      %v2240 = vadd.f32 %v2238, %v2239
      %v2241 = vsel %vm222, %v2134, 0.0
      %v2242 = vadd.f32 %v2240, %v2241
      %v2243 = vsel %vm222, %v2135, 0.0
      %v2244 = vadd.f32 %v2242, %v2243
      %v2245 = vsel %vm222, %v2136, 0.0
      %v2246 = vadd.f32 %v2244, %v2245
      %v2247 = vsel %vm222, %v2137, 0.0
      %v2248 = vadd.f32 %v2246, %v2247
      %v2249 = vsel %vm222, %v2138, 0.0
      %v2250 = vadd.f32 %v2248, %v2249
      %v2251 = vsel %vm222, %v2139, 0.0
      %v2252 = vadd.f32 %v2250, %v2251
      %v2253 = vsel %vm222, %v2140, 0.0
      %v2254 = vadd.f32 %v2252, %v2253
      %v2255 = vsel %vm222, %v2141, 0.0
      %v2256 = vadd.f32 %v2254, %v2255
      %v2257 = vsel %vm222, %v2142, 0.0
      %v2258 = vadd.f32 %v2256, %v2257
      %v2259 = vsel %vm222, %v2143, 0.0
      %v2260 = vadd.f32 %v2258, %v2259
      %v2261 = vsel %vm222, %v2144, 0.0
      %v2262 = vadd.f32 %v2260, %v2261
      %v2263 = vsel %vm222, %v2145, 0.0
      %v2264 = vadd.f32 %v2262, %v2263
      %v2265 = vsel %vm222, %v2146, 0.0
      %v2266 = vadd.f32 %v2264, %v2265
      %v2267 = vsel %vm222, %v2147, 0.0
      %v2268 = vadd.f32 %v2266, %v2267
      %v2269 = vsel %vm222, %v2148, 0.0
      %v2270 = vadd.f32 %v2268, %v2269
      %v2271 = vsel %vm222, %v2149, 0.0
      %v2272 = vadd.f32 %v2270, %v2271
      %v2273 = vsel %vm222, %v2150, 0.0
      %v2274 = vadd.f32 %v2272, %v2273
      %v2275 = vsel %vm222, %v2151, 0.0
      %v2276 = vadd.f32 %v2274, %v2275
      %v2277 = vsel %vm222, %v2152, 0.0
      %v2278 = vadd.f32 %v2276, %v2277
      %v2279 = vsel %vm222, %v2153, 0.0
      %v2280 = vadd.f32 %v2278, %v2279
      %v2281 = vrot.slane %v2280, 4
      %v2282 = vadd.f32 %v2280, %v2281
      %v2283 = vrot.slane %v2282, 2
      %v2284 = vadd.f32 %v2282, %v2283
      %v2285 = vrot.slane %v2284, 1
      %v2286 = vadd.f32 %v2284, %v2285
      %v2287 = vrcp.pop 512.0
      %v2288 = vmul.f32 %v2286, %v2287
      %v2289 = vmax.f32 %v2288, 0.0
      %v2290 = vld [vmem:[%s3] sm:$0xff]
      %v2291 = vld [vmem:[%s3 + $0x8] sm:$0xff]
      %v2292 = vld [vmem:[%s3 + $0x10] sm:$0xff]
      %v2293 = vld [vmem:[%s3 + $0x18] sm:$0xff]
      %v2294 = vld [vmem:[#allocation2] sm:$0x1]
      %v2296 = vsel %vm222, %v2289, 0
      %2298 = vmatprep.subr.mxu0 0.0
      %2299 = vmatpush1.msra.mxu0 0.0
      %2300 = vmatprep.subr.mxu0 0.0
      %2301 = vmatpush1.msra.mxu0 0.0
      %2302 = vmatprep.subr.mxu0 0.0
      %2303 = vmatpush1.msra.mxu0 0.0
      %2304 = vmatprep.subr.mxu0 0.0
      %2305 = vmatpush1.msra.mxu0 0.0
      %2306 = vmatprep.subr.mxu0 0.0
      %2307 = vmatpush1.msra.mxu0 0.0
      %2308 = vmatprep.subr.mxu0 0.0
      %2309 = vmatpush1.msra.mxu0 0.0
      %2310 = vmatprep.subr.mxu0 0.0
      %2311 = vmatpush1.msra.mxu0 0.0
      %2312 = vmatprep.subr.mxu0 0.0
      %2313 = vmatpush1.msra.mxu0 0.0
      %2314 = vmatprep.subr.mxu0 0.0
      %2315 = vmatpush1.msra.mxu0 0.0
      %2316 = vmatprep.subr.mxu0 0.0
      %2317 = vmatpush1.msra.mxu0 0.0
      %2318 = vmatprep.subr.mxu0 0.0
      %2319 = vmatpush1.msra.mxu0 0.0
      %2320 = vmatprep.subr.mxu0 0.0
      %2321 = vmatpush1.msra.mxu0 0.0
      %2322 = vmatprep.subr.mxu0 0.0
      %2323 = vmatpush1.msra.mxu0 %v2293
      %2324 = vmatprep.subr.mxu0 0.0
      %2325 = vmatpush1.msra.mxu0 %v2292
      %2326 = vmatprep.subr.mxu0 0.0
      %2327 = vmatpush1.msra.mxu0 %v2291
      %2328 = vmatprep.subr.mxu0 0.0
      %2329 = vmatpush1.msra.mxu0 %v2290
      %2330 = vmatprep.subr.mxu0 0.0
      %2331 = vmatpush2.msra.mxu0 0.0
      %2332 = vmatprep.subr.mxu0 0.0
      %2333 = vmatpush2.msra.mxu0 0.0
      %2334 = vmatprep.subr.mxu0 0.0
      %2335 = vmatpush2.msra.mxu0 0.0
      %2336 = vmatprep.subr.mxu0 0.0
      %2337 = vmatpush2.msra.mxu0 0.0
      %2338 = vmatprep.subr.mxu0 0.0
      %2339 = vmatpush2.msra.mxu0 0.0
      %2340 = vmatprep.subr.mxu0 0.0
      %2341 = vmatpush2.msra.mxu0 0.0
      %2342 = vmatprep.subr.mxu0 0.0
      %2343 = vmatpush2.msra.mxu0 0.0
      %2344 = vmatprep.subr.mxu0 0.0
      %2345 = vmatpush2.msra.mxu0 0.0
      %2346 = vmatprep.subr.mxu0 0.0
      %2347 = vmatpush2.msra.mxu0 0.0
      %2348 = vmatprep.subr.mxu0 0.0
      %2349 = vmatpush2.msra.mxu0 0.0
      %2350 = vmatprep.subr.mxu0 0.0
      %2351 = vmatpush2.msra.mxu0 0.0
      %2352 = vmatprep.subr.mxu0 0.0
      %2353 = vmatpush2.msra.mxu0 0.0
      %2354 = vmatprep.subr.mxu0 0.0
      %2355 = vmatpush2.msra.mxu0 0.0
      %2356 = vmatprep.subr.mxu0 0.0
      %2357 = vmatpush2.msra.mxu0 0.0
      %2358 = vmatprep.subr.mxu0 0.0
      %2359 = vmatpush2.msra.mxu0 0.0
      %2360 = vmatprep.subr.mxu0 0.0
      %2361 = vmatpush2.msra.mxu0 0.0
      %2362 = vmatprep.mubr.f32.mxu0 0.0
      %2363 = vmatmul.mubr.f32.gmra.mxu0 %v2296
      %v2364 = vpop.f32.mrf.mxu0
      %v2365 = vadd.f32 %v2294, %v2364
      %v2366 = vpop.f32.mrf.mxu0
      %2367 = vdwg.mxu0
      %vm2368 = vcmask 0
      %2369 = vst.msk [vmem:[%s219] sm:$0x1] %vm2368, %v2365
      %p2370 = scmp.lt.s32.totalorder %s18, 1
      %s2371 = scalar_select %p2370, %s18, 1
      %s2372 = scalar_lea.vmem %s5, %s2371
      // Predicated region
      $region41: #{unique_eq3_net_mini.5} parent=39 // pred_check
        %p2373 = pneg %p146
      $region42: #{unique_eq3_net_mini.5} parent=39 // pred_check_branch
        %2375 = sbr.rel (%p2373) target = $region44
      $region43: #{unique_eq3_net_mini.5} parent=39 // pred_region
        _
      $region44: #{unique_eq3_net_mini.5} parent=39 // pred_fallthru
        _
    $region40: #{unique_eq3_net_mini.5} parent=5 // pred_fallthru
      _
    %p2376 = scmp.le.s32.totalorder 2, %s13
    // Predicated region
    $region45: #{unique_eq3_net_mini.5} parent=5 // pred_check
      %p2377 = pneg %p2376
    $region46: #{unique_eq3_net_mini.5} parent=5 // pred_check_branch
      %2379 = sbr.rel (%p2377) target = $region48
    $region47: #{unique_eq3_net_mini.5} parent=5 // pred_region
      %s2380 = ssub.s32 %s13, 2
      // Predicated region
      $region49: #{unique_eq3_net_mini.5} parent=47 // pred_check
        %p2381 = pneg %p152
      $region50: #{unique_eq3_net_mini.5} parent=47 // pred_check_branch
        %2383 = sbr.rel (%p2381) target = $region52
      $region51: #{unique_eq3_net_mini.5} parent=47 // pred_region
        %p2384 = scmp.lt.s32.totalorder %s19, 1
        %s2385 = scalar_select %p2384, %s19, 1
        %s2386 = scalar_lea.vmem %s5, %s2385
      $region52: #{unique_eq3_net_mini.5} parent=47 // pred_fallthru
        _
    $region48: #{unique_eq3_net_mini.5} parent=5 // pred_fallthru
      _
  $region6: #{unique_eq3_net_mini.5} parent=0 // loop_footer
    %s17 = sadd.s32 1, %s13
  $region7: #{unique_eq3_net_mini.5} parent=0 // loop_footer_branch
    %12 = sbr.rel target = $region3
  $region8: #{unique_eq3_net_mini.5} parent=0 // loop_exit
    _

// kernel: unique_eq3_net_mini.4
$region0: #{unique_eq3_net_mini.4}
  #allocation0 [shape = 'u32[]', space=smem, size = 0x4, offset = 0x4, fixed_abs, tag = 'smem constant byte address 0x4 - core index']
  #allocation1 [shape = 'u32[144,128]{1,0:T(1,128)}', space=vmem, size = 0x12000, scoped, tag = 'internal scratch']
  %s0 = inlined_call_operand.vmem [shape: bf16[4096,384], index: 0, kind: input, shape index: {}]
  %s1 = inlined_call_operand.vmem [shape: bf16[384,128], index: 1, kind: input, shape index: {}]
  %s2 = inlined_call_operand.vmem [shape: f32[1,128], index: 2, kind: input, shape index: {}]
  %s3 = inlined_call_operand.vmem [shape: f32[16,128], index: 3, kind: output, shape index: {}]
  %s4 = sld [smem:[#allocation0]]
  $region45: #{unique_eq3_net_mini.4} parent=0
    _
  %s6 = ssub.s32 1, %s4
  %s7 = scalar_select 0, %s6, %s4
  loop: start=0, step=1, limit=4
  $region2: #{unique_eq3_net_mini.4} parent=0 // loop_pre_header
    _
  $region3: #{unique_eq3_net_mini.4} parent=0 // loop_header
    %s9 = sphi 0, %s13
    %p10 = scmp.ge.s32.totalorder %s9, 4
    %s19 = sphi 0, %s21
    %s22 = sphi 0, %s19
    %s23 = sphi 0, %s22
    %s39 = sphi 0, %s23
    %s43 = sphi 0, %s43
    %s45 = sphi 0, %s43
    %s46 = sphi 0, %s45
    %s60 = sphi 0, %s46
    %s64 = sphi 0, %s64
    %s66 = sphi 0, %s64
    %s67 = sphi 0, %s66
    %s81 = sphi 0, %s67
    %s87 = sphi 0, %s89
    %s90 = sphi 0, %s87
    %s91 = sphi 0, %s90
    %s107 = sphi 0, %s91
  $region4: #{unique_eq3_net_mini.4} parent=0 // loop_header_branch
    %12 = sbr.rel (%p10) target = $region8
  $region5: #{unique_eq3_net_mini.4} parent=0 // loop_body
    %s14 = ssub.s32 %s9, 1
    %s15 = ssub.s32 %s9, 2
    %s16 = sadd.s32 %s9, 1
    %s17 = ssub.s32 %s9, %s16
    %p18 = scmp.eq.s32.totalorder %s17, 0
    %s20 = sadd.s32 %s19, 1
    %s21 = scalar_select %p18, %s19, %s20
    %p24 = pneg %p18
    %p25 = scmp.eq.s32.totalorder %s9, 1
    %p26 = por %p24, %p25
    %p27 = scmp.ne.s32.totalorder %s19, %s22
    %p28 = scmp.eq.s32.totalorder %s9, 0
    %p29 = por %p27, %p28
    %p30 = scmp.ne.s32.totalorder %s19, %s22
    %p31 = scmp.eq.s32.totalorder %s14, 1
    %p32 = por %p30, %p31
    %p33 = scmp.ne.s32.totalorder %s22, %s23
    %p34 = scmp.eq.s32.totalorder %s14, 0
    %p35 = por %p33, %p34
    %p36 = scmp.ne.s32.totalorder %s22, %s23
    %p37 = scmp.eq.s32.totalorder %s15, 1
    %p38 = por %p36, %p37
    %p40 = scmp.ne.s32.totalorder %s23, %s39
    %p41 = scmp.eq.s32.totalorder %s15, 0
    %p42 = por %p40, %p41
    %s44 = sadd.s32 %s43, 1
    %p47 = scmp.eq.s32.totalorder %s9, 1
    %p48 = scmp.ne.s32.totalorder %s43, %s45
    %p49 = scmp.eq.s32.totalorder %s9, 0
    %p50 = por %p48, %p49
    %p51 = scmp.ne.s32.totalorder %s43, %s45
    %p52 = scmp.eq.s32.totalorder %s14, 1
    %p53 = por %p51, %p52
    %p54 = scmp.ne.s32.totalorder %s45, %s46
    %p55 = scmp.eq.s32.totalorder %s14, 0
    %p56 = por %p54, %p55
    %p57 = scmp.ne.s32.totalorder %s45, %s46
    %p58 = scmp.eq.s32.totalorder %s15, 1
    %p59 = por %p57, %p58
    %p61 = scmp.ne.s32.totalorder %s46, %s60
    %p62 = scmp.eq.s32.totalorder %s15, 0
    %p63 = por %p61, %p62
    %s65 = sadd.s32 %s64, 1
    %p68 = scmp.eq.s32.totalorder %s9, 1
    %p69 = scmp.ne.s32.totalorder %s64, %s66
    %p70 = scmp.eq.s32.totalorder %s9, 0
    %p71 = por %p69, %p70
    %p72 = scmp.ne.s32.totalorder %s64, %s66
    %p73 = scmp.eq.s32.totalorder %s14, 1
    %p74 = por %p72, %p73
    %p75 = scmp.ne.s32.totalorder %s66, %s67
    %p76 = scmp.eq.s32.totalorder %s14, 0
    %p77 = por %p75, %p76
    %p78 = scmp.ne.s32.totalorder %s66, %s67
    %p79 = scmp.eq.s32.totalorder %s15, 1
    %p80 = por %p78, %p79
    %p82 = scmp.ne.s32.totalorder %s67, %s81
    %p83 = scmp.eq.s32.totalorder %s15, 0
    %p84 = por %p82, %p83
    %s85 = ssub.s32 %s9, %s16
    %p86 = scmp.eq.s32.totalorder %s85, 0
    %s88 = sadd.s32 %s87, 1
    %s89 = scalar_select %p86, %s87, %s88
    %p92 = pneg %p86
    %p93 = scmp.eq.s32.totalorder %s9, 1
    %p94 = por %p92, %p93
    %p95 = scmp.ne.s32.totalorder %s87, %s90
    %p96 = scmp.eq.s32.totalorder %s9, 0
    %p97 = por %p95, %p96
    %p98 = scmp.ne.s32.totalorder %s87, %s90
    %p99 = scmp.eq.s32.totalorder %s14, 1
    %p100 = por %p98, %p99
    %p101 = scmp.ne.s32.totalorder %s90, %s91
    %p102 = scmp.eq.s32.totalorder %s14, 0
    %p103 = por %p101, %p102
    %p104 = scmp.ne.s32.totalorder %s90, %s91
    %p105 = scmp.eq.s32.totalorder %s15, 1
    %p106 = por %p104, %p105
    %p108 = scmp.ne.s32.totalorder %s91, %s107
    %p109 = scmp.eq.s32.totalorder %s15, 0
    %p110 = por %p108, %p109
    %p111 = scmp.le.s32.totalorder 1, %s9
    %p112 = scmp.lt.s32.totalorder %s9, 3
    %p113 = pnand %p111, %p112
    %p114 = pneg %p113
    // Predicated region
    $region9: #{unique_eq3_net_mini.4} parent=5 // pred_check
      _
    $region10: #{unique_eq3_net_mini.4} parent=5 // pred_check_branch
      %116 = sbr.rel (%p113) target = $region12
    $region11: #{unique_eq3_net_mini.4} parent=5 // pred_region
      %s117 = ssub.s32 %s9, 1
      // Predicated region
      $region13: #{unique_eq3_net_mini.4} parent=11 // pred_check
        %p118 = pneg %p56
      $region14: #{unique_eq3_net_mini.4} parent=11 // pred_check_branch
        %120 = sbr.rel (%p118) target = $region16
      $region15: #{unique_eq3_net_mini.4} parent=11 // pred_region
        _
      $region16: #{unique_eq3_net_mini.4} parent=11 // pred_fallthru
        _
      // Predicated region
      $region17: #{unique_eq3_net_mini.4} parent=11 // pred_check
        %p121 = pneg %p77
      $region18: #{unique_eq3_net_mini.4} parent=11 // pred_check_branch
        %123 = sbr.rel (%p121) target = $region20
      $region19: #{unique_eq3_net_mini.4} parent=11 // pred_region
        _
      $region20: #{unique_eq3_net_mini.4} parent=11 // pred_fallthru
        _
    $region12: #{unique_eq3_net_mini.4} parent=5 // pred_fallthru
      _
    %p124 = scmp.lt.s32.totalorder %s9, 2
    // Predicated region
    $region21: #{unique_eq3_net_mini.4} parent=5 // pred_check
      %p125 = pneg %p124
    $region22: #{unique_eq3_net_mini.4} parent=5 // pred_check_branch
      %127 = sbr.rel (%p125) target = $region24
    $region23: #{unique_eq3_net_mini.4} parent=5 // pred_region
      // Predicated region
      $region25: #{unique_eq3_net_mini.4} parent=23 // pred_check
        %p128 = pneg %p29
      $region26: #{unique_eq3_net_mini.4} parent=23 // pred_check_branch
        %130 = sbr.rel (%p128) target = $region28
      $region27: #{unique_eq3_net_mini.4} parent=23 // pred_region
        %s131 = smul.u32 256, %s9
        %p132 = scmp.lt.s32.totalorder %s131, 511
        %s133 = scalar_select %p132, %s131, 511
        %s134 = smul.addr %s133, 3
        %s135 = smul.addr %s134, 4
        %s136 = scalar_lea.vmem %s0, %s135
        %s137 = smul.u32 256, %s9
      $region28: #{unique_eq3_net_mini.4} parent=23 // pred_fallthru
        _
    $region24: #{unique_eq3_net_mini.4} parent=5 // pred_fallthru
      _
    %p138 = scmp.le.s32.totalorder 1, %s9
    %p139 = scmp.lt.s32.totalorder %s9, 3
    %p140 = pnand %p138, %p139
    %p141 = pneg %p140
    // Predicated region
    $region29: #{unique_eq3_net_mini.4} parent=5 // pred_check
      _
    $region30: #{unique_eq3_net_mini.4} parent=5 // pred_check_branch
      %143 = sbr.rel (%p140) target = $region32
    $region31: #{unique_eq3_net_mini.4} parent=5 // pred_region
      %s144 = ssub.s32 %s9, 1
      %s145 = smul.u32 256, %s14
      %p146 = scmp.lt.s32.totalorder %s145, 511
      %s147 = scalar_select %p146, %s145, 511
      %s148 = smul.addr %s147, 3
      %s149 = smul.addr %s148, 4
      %s150 = scalar_lea.vmem %s0, %s149
      %p151 = pneg %p35
      %p152 = pneg %p32
      %p153 = pneg %p56
      %p154 = pneg %p53
      %p155 = pneg %p77
      %p156 = pneg %p74
      %p157 = pneg %p103
      %p158 = pneg %p100
      %p159 = scmp.lt.s32.totalorder %s14, 1
      %s160 = scalar_select %p159, %s14, 1
      %s161 = smul.addr %s160, 8
      %s162 = scalar_lea.vmem %s3, %s161
      %s163 = smul.u32 256, %s14
      %p164 = scmp.lt.s32.totalorder %s163, 511
      %s165 = scalar_select %p164, %s163, 511
      %s166 = smul.addr %s165, 3
      %s167 = smul.addr %s166, 4
      %s168 = scalar_lea.vmem %s0, %s167
      %s169 = smul.u32 256, %s14
      %p170 = scmp.lt.s32.totalorder %s14, 1
      %s171 = scalar_select %p170, %s14, 1
      %s172 = smul.addr %s171, 8
      %s173 = scalar_lea.vmem %s3, %s172
      %v175 = vld [vmem:[%s168] sm:$0xff]
      %v176 = vld [vmem:[%s168 + $0x8] sm:$0xf]
      %v177 = vld [vmem:[%s168 + $0xc] sm:$0xff]
      %v178 = vld [vmem:[%s168 + $0x14] sm:$0xf]
      %v179 = vld [vmem:[%s168 + $0x18] sm:$0xff]
      %v180 = vld [vmem:[%s168 + $0x20] sm:$0xf]
      %v181 = vld [vmem:[%s168 + $0x24] sm:$0xff]
      %v182 = vld [vmem:[%s168 + $0x2c] sm:$0xf]
      %v183 = vld [vmem:[%s168 + $0x30] sm:$0xff]
      %v184 = vld [vmem:[%s168 + $0x38] sm:$0xf]
      %v185 = vld [vmem:[%s168 + $0x3c] sm:$0xff]
      %v186 = vld [vmem:[%s168 + $0x44] sm:$0xf]
      %v187 = vld [vmem:[%s168 + $0x48] sm:$0xff]
      %v188 = vld [vmem:[%s168 + $0x50] sm:$0xf]
      %v189 = vld [vmem:[%s168 + $0x54] sm:$0xff]
      %v190 = vld [vmem:[%s168 + $0x5c] sm:$0xf]
      %v191 = vld [vmem:[%s168 + $0x60] sm:$0xff]
      %v192 = vld [vmem:[%s168 + $0x68] sm:$0xf]
      %v193 = vld [vmem:[%s168 + $0x6c] sm:$0xff]
      %v194 = vld [vmem:[%s168 + $0x74] sm:$0xf]
      %v195 = vld [vmem:[%s168 + $0x78] sm:$0xff]
      %v196 = vld [vmem:[%s168 + $0x80] sm:$0xf]
      %v197 = vld [vmem:[%s168 + $0x84] sm:$0xff]
      %v198 = vld [vmem:[%s168 + $0x8c] sm:$0xf]
      %v199 = vld [vmem:[%s168 + $0x90] sm:$0xff]
      %v200 = vld [vmem:[%s168 + $0x98] sm:$0xf]
      %v201 = vld [vmem:[%s168 + $0x9c] sm:$0xff]
      %v202 = vld [vmem:[%s168 + $0xa4] sm:$0xf]
      %v203 = vld [vmem:[%s168 + $0xa8] sm:$0xff]
      %v204 = vld [vmem:[%s168 + $0xb0] sm:$0xf]
      %v205 = vld [vmem:[%s168 + $0xb4] sm:$0xff]
      %v206 = vld [vmem:[%s168 + $0xbc] sm:$0xf]
      %v207 = vld [vmem:[%s168 + $0xc0] sm:$0xff]
      %v208 = vld [vmem:[%s168 + $0xc8] sm:$0xf]
      %v209 = vld [vmem:[%s168 + $0xcc] sm:$0xff]
      %v210 = vld [vmem:[%s168 + $0xd4] sm:$0xf]
      %v211 = vld [vmem:[%s168 + $0xd8] sm:$0xff]
      %v212 = vld [vmem:[%s168 + $0xe0] sm:$0xf]
      %v213 = vld [vmem:[%s168 + $0xe4] sm:$0xff]
      %v214 = vld [vmem:[%s168 + $0xec] sm:$0xf]
      %v215 = vld [vmem:[%s168 + $0xf0] sm:$0xff]
      %v216 = vld [vmem:[%s168 + $0xf8] sm:$0xf]
      %v217 = vld [vmem:[%s168 + $0xfc] sm:$0xff]
      %v218 = vld [vmem:[%s168 + $0x104] sm:$0xf]
      %v219 = vld [vmem:[%s168 + $0x108] sm:$0xff]
      %v220 = vld [vmem:[%s168 + $0x110] sm:$0xf]
      %v221 = vld [vmem:[%s168 + $0x114] sm:$0xff]
      %v222 = vld [vmem:[%s168 + $0x11c] sm:$0xf]
      %v223 = vld [vmem:[%s168 + $0x120] sm:$0xff]
      %v224 = vld [vmem:[%s168 + $0x128] sm:$0xf]
      %v225 = vld [vmem:[%s168 + $0x12c] sm:$0xff]
      %v226 = vld [vmem:[%s168 + $0x134] sm:$0xf]
      %v227 = vld [vmem:[%s168 + $0x138] sm:$0xff]
      %v228 = vld [vmem:[%s168 + $0x140] sm:$0xf]
      %v229 = vld [vmem:[%s168 + $0x144] sm:$0xff]
      %v230 = vld [vmem:[%s168 + $0x14c] sm:$0xf]
      %v231 = vld [vmem:[%s168 + $0x150] sm:$0xff]
      %v232 = vld [vmem:[%s168 + $0x158] sm:$0xf]
      %v233 = vld [vmem:[%s168 + $0x15c] sm:$0xff]
      %v234 = vld [vmem:[%s168 + $0x164] sm:$0xf]
      %v235 = vld [vmem:[%s168 + $0x168] sm:$0xff]
      %v236 = vld [vmem:[%s168 + $0x170] sm:$0xf]
      %v237 = vld [vmem:[%s168 + $0x174] sm:$0xff]
      %v238 = vld [vmem:[%s168 + $0x17c] sm:$0xf]
      %v239 = vld [vmem:[%s168 + $0x180] sm:$0xff]
      %v240 = vld [vmem:[%s168 + $0x188] sm:$0xf]
      %v241 = vld [vmem:[%s168 + $0x18c] sm:$0xff]
      %v242 = vld [vmem:[%s168 + $0x194] sm:$0xf]
      %v243 = vld [vmem:[%s168 + $0x198] sm:$0xff]
      %v244 = vld [vmem:[%s168 + $0x1a0] sm:$0xf]
      %v245 = vld [vmem:[%s168 + $0x1a4] sm:$0xff]
      %v246 = vld [vmem:[%s168 + $0x1ac] sm:$0xf]
      %v247 = vld [vmem:[%s168 + $0x1b0] sm:$0xff]
      %v248 = vld [vmem:[%s168 + $0x1b8] sm:$0xf]
      %v249 = vld [vmem:[%s168 + $0x1bc] sm:$0xff]
      %v250 = vld [vmem:[%s168 + $0x1c4] sm:$0xf]
      %v251 = vld [vmem:[%s168 + $0x1c8] sm:$0xff]
      %v252 = vld [vmem:[%s168 + $0x1d0] sm:$0xf]
      %v253 = vld [vmem:[%s168 + $0x1d4] sm:$0xff]
      %v254 = vld [vmem:[%s168 + $0x1dc] sm:$0xf]
      %v255 = vld [vmem:[%s168 + $0x1e0] sm:$0xff]
      %v256 = vld [vmem:[%s168 + $0x1e8] sm:$0xf]
      %v257 = vld [vmem:[%s168 + $0x1ec] sm:$0xff]
      %v258 = vld [vmem:[%s168 + $0x1f4] sm:$0xf]
      %v259 = vld [vmem:[%s168 + $0x1f8] sm:$0xff]
      %v260 = vld [vmem:[%s168 + $0x200] sm:$0xf]
      %v261 = vld [vmem:[%s168 + $0x204] sm:$0xff]
      %v262 = vld [vmem:[%s168 + $0x20c] sm:$0xf]
      %v263 = vld [vmem:[%s168 + $0x210] sm:$0xff]
      %v264 = vld [vmem:[%s168 + $0x218] sm:$0xf]
      %v265 = vld [vmem:[%s168 + $0x21c] sm:$0xff]
      %v266 = vld [vmem:[%s168 + $0x224] sm:$0xf]
      %v267 = vld [vmem:[%s168 + $0x228] sm:$0xff]
      %v268 = vld [vmem:[%s168 + $0x230] sm:$0xf]
      %v269 = vld [vmem:[%s168 + $0x234] sm:$0xff]
      %v270 = vld [vmem:[%s168 + $0x23c] sm:$0xf]
      %v271 = vld [vmem:[%s168 + $0x240] sm:$0xff]
      %v272 = vld [vmem:[%s168 + $0x248] sm:$0xf]
      %v273 = vld [vmem:[%s168 + $0x24c] sm:$0xff]
      %v274 = vld [vmem:[%s168 + $0x254] sm:$0xf]
      %v275 = vld [vmem:[%s168 + $0x258] sm:$0xff]
      %v276 = vld [vmem:[%s168 + $0x260] sm:$0xf]
      %v277 = vld [vmem:[%s168 + $0x264] sm:$0xff]
      %v278 = vld [vmem:[%s168 + $0x26c] sm:$0xf]
      %v279 = vld [vmem:[%s168 + $0x270] sm:$0xff]
      %v280 = vld [vmem:[%s168 + $0x278] sm:$0xf]
      %v281 = vld [vmem:[%s168 + $0x27c] sm:$0xff]
      %v282 = vld [vmem:[%s168 + $0x284] sm:$0xf]
      %v283 = vld [vmem:[%s168 + $0x288] sm:$0xff]
      %v284 = vld [vmem:[%s168 + $0x290] sm:$0xf]
      %v285 = vld [vmem:[%s168 + $0x294] sm:$0xff]
      %v286 = vld [vmem:[%s168 + $0x29c] sm:$0xf]
      %v287 = vld [vmem:[%s168 + $0x2a0] sm:$0xff]
      %v288 = vld [vmem:[%s168 + $0x2a8] sm:$0xf]
      %v289 = vld [vmem:[%s168 + $0x2ac] sm:$0xff]
      %v290 = vld [vmem:[%s168 + $0x2b4] sm:$0xf]
      %v291 = vld [vmem:[%s168 + $0x2b8] sm:$0xff]
      %v292 = vld [vmem:[%s168 + $0x2c0] sm:$0xf]
      %v293 = vld [vmem:[%s168 + $0x2c4] sm:$0xff]
      %v294 = vld [vmem:[%s168 + $0x2cc] sm:$0xf]
      %v295 = vld [vmem:[%s168 + $0x2d0] sm:$0xff]
      %v296 = vld [vmem:[%s168 + $0x2d8] sm:$0xf]
      %v297 = vld [vmem:[%s168 + $0x2dc] sm:$0xff]
      %v298 = vld [vmem:[%s168 + $0x2e4] sm:$0xf]
      %v299 = vld [vmem:[%s168 + $0x2e8] sm:$0xff]
      %v300 = vld [vmem:[%s168 + $0x2f0] sm:$0xf]
      %v301 = vld [vmem:[%s168 + $0x2f4] sm:$0xff]
      %v302 = vld [vmem:[%s168 + $0x2fc] sm:$0xf]
      %v303 = vld [vmem:[%s168 + $0x300] sm:$0xff]
      %v304 = vld [vmem:[%s168 + $0x308] sm:$0xf]
      %v305 = vld [vmem:[%s168 + $0x30c] sm:$0xff]
      %v306 = vld [vmem:[%s168 + $0x314] sm:$0xf]
      %v307 = vld [vmem:[%s168 + $0x318] sm:$0xff]
      %v308 = vld [vmem:[%s168 + $0x320] sm:$0xf]
      %v309 = vld [vmem:[%s168 + $0x324] sm:$0xff]
      %v310 = vld [vmem:[%s168 + $0x32c] sm:$0xf]
      %v311 = vld [vmem:[%s168 + $0x330] sm:$0xff]
      %v312 = vld [vmem:[%s168 + $0x338] sm:$0xf]
      %v313 = vld [vmem:[%s168 + $0x33c] sm:$0xff]
      %v314 = vld [vmem:[%s168 + $0x344] sm:$0xf]
      %v315 = vld [vmem:[%s168 + $0x348] sm:$0xff]
      %v316 = vld [vmem:[%s168 + $0x350] sm:$0xf]
      %v317 = vld [vmem:[%s168 + $0x354] sm:$0xff]
      %v318 = vld [vmem:[%s168 + $0x35c] sm:$0xf]
      %v319 = vld [vmem:[%s168 + $0x360] sm:$0xff]
      %v320 = vld [vmem:[%s168 + $0x368] sm:$0xf]
      %v321 = vld [vmem:[%s168 + $0x36c] sm:$0xff]
      %v322 = vld [vmem:[%s168 + $0x374] sm:$0xf]
      %v323 = vld [vmem:[%s168 + $0x378] sm:$0xff]
      %v324 = vld [vmem:[%s168 + $0x380] sm:$0xf]
      %v325 = vld [vmem:[%s168 + $0x384] sm:$0xff]
      %v326 = vld [vmem:[%s168 + $0x38c] sm:$0xf]
      %v327 = vld [vmem:[%s168 + $0x390] sm:$0xff]
      %v328 = vld [vmem:[%s168 + $0x398] sm:$0xf]
      %v329 = vld [vmem:[%s168 + $0x39c] sm:$0xff]
      %v330 = vld [vmem:[%s168 + $0x3a4] sm:$0xf]
      %v331 = vld [vmem:[%s168 + $0x3a8] sm:$0xff]
      %v332 = vld [vmem:[%s168 + $0x3b0] sm:$0xf]
      %v333 = vld [vmem:[%s168 + $0x3b4] sm:$0xff]
      %v334 = vld [vmem:[%s168 + $0x3bc] sm:$0xf]
      %v335 = vld [vmem:[%s168 + $0x3c0] sm:$0xff]
      %v336 = vld [vmem:[%s168 + $0x3c8] sm:$0xf]
      %v337 = vld [vmem:[%s168 + $0x3cc] sm:$0xff]
      %v338 = vld [vmem:[%s168 + $0x3d4] sm:$0xf]
      %v339 = vld [vmem:[%s168 + $0x3d8] sm:$0xff]
      %v340 = vld [vmem:[%s168 + $0x3e0] sm:$0xf]
      %v341 = vld [vmem:[%s168 + $0x3e4] sm:$0xff]
      %v342 = vld [vmem:[%s168 + $0x3ec] sm:$0xf]
      %v343 = vld [vmem:[%s168 + $0x3f0] sm:$0xff]
      %v344 = vld [vmem:[%s168 + $0x3f8] sm:$0xf]
      %v345 = vld [vmem:[%s168 + $0x3fc] sm:$0xff]
      %v346 = vld [vmem:[%s168 + $0x404] sm:$0xf]
      %v347 = vld [vmem:[%s168 + $0x408] sm:$0xff]
      %v348 = vld [vmem:[%s168 + $0x410] sm:$0xf]
      %v349 = vld [vmem:[%s168 + $0x414] sm:$0xff]
      %v350 = vld [vmem:[%s168 + $0x41c] sm:$0xf]
      %v351 = vld [vmem:[%s168 + $0x420] sm:$0xff]
      %v352 = vld [vmem:[%s168 + $0x428] sm:$0xf]
      %v353 = vld [vmem:[%s168 + $0x42c] sm:$0xff]
      %v354 = vld [vmem:[%s168 + $0x434] sm:$0xf]
      %v355 = vld [vmem:[%s168 + $0x438] sm:$0xff]
      %v356 = vld [vmem:[%s168 + $0x440] sm:$0xf]
      %v357 = vld [vmem:[%s168 + $0x444] sm:$0xff]
      %v358 = vld [vmem:[%s168 + $0x44c] sm:$0xf]
      %v359 = vld [vmem:[%s168 + $0x450] sm:$0xff]
      %v360 = vld [vmem:[%s168 + $0x458] sm:$0xf]
      %v361 = vld [vmem:[%s168 + $0x45c] sm:$0xff]
      %v362 = vld [vmem:[%s168 + $0x464] sm:$0xf]
      %v363 = vld [vmem:[%s168 + $0x468] sm:$0xff]
      %v364 = vld [vmem:[%s168 + $0x470] sm:$0xf]
      %v365 = vld [vmem:[%s168 + $0x474] sm:$0xff]
      %v366 = vld [vmem:[%s168 + $0x47c] sm:$0xf]
      %v367 = vld [vmem:[%s168 + $0x480] sm:$0xff]
      %v368 = vld [vmem:[%s168 + $0x488] sm:$0xf]
      %v369 = vld [vmem:[%s168 + $0x48c] sm:$0xff]
      %v370 = vld [vmem:[%s168 + $0x494] sm:$0xf]
      %v371 = vld [vmem:[%s168 + $0x498] sm:$0xff]
      %v372 = vld [vmem:[%s168 + $0x4a0] sm:$0xf]
      %v373 = vld [vmem:[%s168 + $0x4a4] sm:$0xff]
      %v374 = vld [vmem:[%s168 + $0x4ac] sm:$0xf]
      %v375 = vld [vmem:[%s168 + $0x4b0] sm:$0xff]
      %v376 = vld [vmem:[%s168 + $0x4b8] sm:$0xf]
      %v377 = vld [vmem:[%s168 + $0x4bc] sm:$0xff]
      %v378 = vld [vmem:[%s168 + $0x4c4] sm:$0xf]
      %v379 = vld [vmem:[%s168 + $0x4c8] sm:$0xff]
      %v380 = vld [vmem:[%s168 + $0x4d0] sm:$0xf]
      %v381 = vld [vmem:[%s168 + $0x4d4] sm:$0xff]
      %v382 = vld [vmem:[%s168 + $0x4dc] sm:$0xf]
      %v383 = vld [vmem:[%s168 + $0x4e0] sm:$0xff]
      %v384 = vld [vmem:[%s168 + $0x4e8] sm:$0xf]
      %v385 = vld [vmem:[%s168 + $0x4ec] sm:$0xff]
      %v386 = vld [vmem:[%s168 + $0x4f4] sm:$0xf]
      %v387 = vld [vmem:[%s168 + $0x4f8] sm:$0xff]
      %v388 = vld [vmem:[%s168 + $0x500] sm:$0xf]
      %v389 = vld [vmem:[%s168 + $0x504] sm:$0xff]
      %v390 = vld [vmem:[%s168 + $0x50c] sm:$0xf]
      %v391 = vld [vmem:[%s168 + $0x510] sm:$0xff]
      %v392 = vld [vmem:[%s168 + $0x518] sm:$0xf]
      %v393 = vld [vmem:[%s168 + $0x51c] sm:$0xff]
      %v394 = vld [vmem:[%s168 + $0x524] sm:$0xf]
      %v395 = vld [vmem:[%s168 + $0x528] sm:$0xff]
      %v396 = vld [vmem:[%s168 + $0x530] sm:$0xf]
      %v397 = vld [vmem:[%s168 + $0x534] sm:$0xff]
      %v398 = vld [vmem:[%s168 + $0x53c] sm:$0xf]
      %v399 = vld [vmem:[%s168 + $0x540] sm:$0xff]
      %v400 = vld [vmem:[%s168 + $0x548] sm:$0xf]
      %v401 = vld [vmem:[%s168 + $0x54c] sm:$0xff]
      %v402 = vld [vmem:[%s168 + $0x554] sm:$0xf]
      %v403 = vld [vmem:[%s168 + $0x558] sm:$0xff]
      %v404 = vld [vmem:[%s168 + $0x560] sm:$0xf]
      %v405 = vld [vmem:[%s168 + $0x564] sm:$0xff]
      %v406 = vld [vmem:[%s168 + $0x56c] sm:$0xf]
      %v407 = vld [vmem:[%s168 + $0x570] sm:$0xff]
      %v408 = vld [vmem:[%s168 + $0x578] sm:$0xf]
      %v409 = vld [vmem:[%s168 + $0x57c] sm:$0xff]
      %v410 = vld [vmem:[%s168 + $0x584] sm:$0xf]
      %v411 = vld [vmem:[%s168 + $0x588] sm:$0xff]
      %v412 = vld [vmem:[%s168 + $0x590] sm:$0xf]
      %v413 = vld [vmem:[%s168 + $0x594] sm:$0xff]
      %v414 = vld [vmem:[%s168 + $0x59c] sm:$0xf]
      %v415 = vld [vmem:[%s168 + $0x5a0] sm:$0xff]
      %v416 = vld [vmem:[%s168 + $0x5a8] sm:$0xf]
      %v417 = vld [vmem:[%s168 + $0x5ac] sm:$0xff]
      %v418 = vld [vmem:[%s168 + $0x5b4] sm:$0xf]
      %v419 = vld [vmem:[%s168 + $0x5b8] sm:$0xff]
      %v420 = vld [vmem:[%s168 + $0x5c0] sm:$0xf]
      %v421 = vld [vmem:[%s168 + $0x5c4] sm:$0xff]
      %v422 = vld [vmem:[%s168 + $0x5cc] sm:$0xf]
      %v423 = vld [vmem:[%s168 + $0x5d0] sm:$0xff]
      %v424 = vld [vmem:[%s168 + $0x5d8] sm:$0xf]
      %v425 = vld [vmem:[%s168 + $0x5dc] sm:$0xff]
      %v426 = vld [vmem:[%s168 + $0x5e4] sm:$0xf]
      %v427 = vld [vmem:[%s168 + $0x5e8] sm:$0xff]
      %v428 = vld [vmem:[%s168 + $0x5f0] sm:$0xf]
      %v429 = vld [vmem:[%s168 + $0x5f4] sm:$0xff]
      %v430 = vld [vmem:[%s168 + $0x5fc] sm:$0xf]
      %v431 = vld [vmem:[%s168 + $0x600] sm:$0xff]
      %v432 = vld [vmem:[%s168 + $0x608] sm:$0xf]
      %v433 = vld [vmem:[%s168 + $0x60c] sm:$0xff]
      %v434 = vld [vmem:[%s168 + $0x614] sm:$0xf]
      %v435 = vld [vmem:[%s168 + $0x618] sm:$0xff]
      %v436 = vld [vmem:[%s168 + $0x620] sm:$0xf]
      %v437 = vld [vmem:[%s168 + $0x624] sm:$0xff]
      %v438 = vld [vmem:[%s168 + $0x62c] sm:$0xf]
      %v439 = vld [vmem:[%s168 + $0x630] sm:$0xff]
      %v440 = vld [vmem:[%s168 + $0x638] sm:$0xf]
      %v441 = vld [vmem:[%s168 + $0x63c] sm:$0xff]
      %v442 = vld [vmem:[%s168 + $0x644] sm:$0xf]
      %v443 = vld [vmem:[%s168 + $0x648] sm:$0xff]
      %v444 = vld [vmem:[%s168 + $0x650] sm:$0xf]
      %v445 = vld [vmem:[%s168 + $0x654] sm:$0xff]
      %v446 = vld [vmem:[%s168 + $0x65c] sm:$0xf]
      %v447 = vld [vmem:[%s168 + $0x660] sm:$0xff]
      %v448 = vld [vmem:[%s168 + $0x668] sm:$0xf]
      %v449 = vld [vmem:[%s168 + $0x66c] sm:$0xff]
      %v450 = vld [vmem:[%s168 + $0x674] sm:$0xf]
      %v451 = vld [vmem:[%s168 + $0x678] sm:$0xff]
      %v452 = vld [vmem:[%s168 + $0x680] sm:$0xf]
      %v453 = vld [vmem:[%s168 + $0x684] sm:$0xff]
      %v454 = vld [vmem:[%s168 + $0x68c] sm:$0xf]
      %v455 = vld [vmem:[%s168 + $0x690] sm:$0xff]
      %v456 = vld [vmem:[%s168 + $0x698] sm:$0xf]
      %v457 = vld [vmem:[%s168 + $0x69c] sm:$0xff]
      %v458 = vld [vmem:[%s168 + $0x6a4] sm:$0xf]
      %v459 = vld [vmem:[%s168 + $0x6a8] sm:$0xff]
      %v460 = vld [vmem:[%s168 + $0x6b0] sm:$0xf]
      %v461 = vld [vmem:[%s168 + $0x6b4] sm:$0xff]
      %v462 = vld [vmem:[%s168 + $0x6bc] sm:$0xf]
      %v463 = vld [vmem:[%s168 + $0x6c0] sm:$0xff]
      %v464 = vld [vmem:[%s168 + $0x6c8] sm:$0xf]
      %v465 = vld [vmem:[%s168 + $0x6cc] sm:$0xff]
      %v466 = vld [vmem:[%s168 + $0x6d4] sm:$0xf]
      %v467 = vld [vmem:[%s168 + $0x6d8] sm:$0xff]
      %v468 = vld [vmem:[%s168 + $0x6e0] sm:$0xf]
      %v469 = vld [vmem:[%s168 + $0x6e4] sm:$0xff]
      %v470 = vld [vmem:[%s168 + $0x6ec] sm:$0xf]
      %v471 = vld [vmem:[%s168 + $0x6f0] sm:$0xff]
      %v472 = vld [vmem:[%s168 + $0x6f8] sm:$0xf]
      %v473 = vld [vmem:[%s168 + $0x6fc] sm:$0xff]
      %v474 = vld [vmem:[%s168 + $0x704] sm:$0xf]
      %v475 = vld [vmem:[%s168 + $0x708] sm:$0xff]
      %v476 = vld [vmem:[%s168 + $0x710] sm:$0xf]
      %v477 = vld [vmem:[%s168 + $0x714] sm:$0xff]
      %v478 = vld [vmem:[%s168 + $0x71c] sm:$0xf]
      %v479 = vld [vmem:[%s168 + $0x720] sm:$0xff]
      %v480 = vld [vmem:[%s168 + $0x728] sm:$0xf]
      %v481 = vld [vmem:[%s168 + $0x72c] sm:$0xff]
      %v482 = vld [vmem:[%s168 + $0x734] sm:$0xf]
      %v483 = vld [vmem:[%s168 + $0x738] sm:$0xff]
      %v484 = vld [vmem:[%s168 + $0x740] sm:$0xf]
      %v485 = vld [vmem:[%s168 + $0x744] sm:$0xff]
      %v486 = vld [vmem:[%s168 + $0x74c] sm:$0xf]
      %v487 = vld [vmem:[%s168 + $0x750] sm:$0xff]
      %v488 = vld [vmem:[%s168 + $0x758] sm:$0xf]
      %v489 = vld [vmem:[%s168 + $0x75c] sm:$0xff]
      %v490 = vld [vmem:[%s168 + $0x764] sm:$0xf]
      %v491 = vld [vmem:[%s168 + $0x768] sm:$0xff]
      %v492 = vld [vmem:[%s168 + $0x770] sm:$0xf]
      %v493 = vld [vmem:[%s168 + $0x774] sm:$0xff]
      %v494 = vld [vmem:[%s168 + $0x77c] sm:$0xf]
      %v495 = vld [vmem:[%s168 + $0x780] sm:$0xff]
      %v496 = vld [vmem:[%s168 + $0x788] sm:$0xf]
      %v497 = vld [vmem:[%s168 + $0x78c] sm:$0xff]
      %v498 = vld [vmem:[%s168 + $0x794] sm:$0xf]
      %v499 = vld [vmem:[%s168 + $0x798] sm:$0xff]
      %v500 = vld [vmem:[%s168 + $0x7a0] sm:$0xf]
      %v501 = vld [vmem:[%s168 + $0x7a4] sm:$0xff]
      %v502 = vld [vmem:[%s168 + $0x7ac] sm:$0xf]
      %v503 = vld [vmem:[%s168 + $0x7b0] sm:$0xff]
      %v504 = vld [vmem:[%s168 + $0x7b8] sm:$0xf]
      %v505 = vld [vmem:[%s168 + $0x7bc] sm:$0xff]
      %v506 = vld [vmem:[%s168 + $0x7c4] sm:$0xf]
      %v507 = vld [vmem:[%s168 + $0x7c8] sm:$0xff]
      %v508 = vld [vmem:[%s168 + $0x7d0] sm:$0xf]
      %v509 = vld [vmem:[%s168 + $0x7d4] sm:$0xff]
      %v510 = vld [vmem:[%s168 + $0x7dc] sm:$0xf]
      %v511 = vld [vmem:[%s168 + $0x7e0] sm:$0xff]
      %v512 = vld [vmem:[%s168 + $0x7e8] sm:$0xf]
      %v513 = vld [vmem:[%s168 + $0x7ec] sm:$0xff]
      %v514 = vld [vmem:[%s168 + $0x7f4] sm:$0xf]
      %v515 = vld [vmem:[%s168 + $0x7f8] sm:$0xff]
      %v516 = vld [vmem:[%s168 + $0x800] sm:$0xf]
      %v517 = vld [vmem:[%s168 + $0x804] sm:$0xff]
      %v518 = vld [vmem:[%s168 + $0x80c] sm:$0xf]
      %v519 = vld [vmem:[%s168 + $0x810] sm:$0xff]
      %v520 = vld [vmem:[%s168 + $0x818] sm:$0xf]
      %v521 = vld [vmem:[%s168 + $0x81c] sm:$0xff]
      %v522 = vld [vmem:[%s168 + $0x824] sm:$0xf]
      %v523 = vld [vmem:[%s168 + $0x828] sm:$0xff]
      %v524 = vld [vmem:[%s168 + $0x830] sm:$0xf]
      %v525 = vld [vmem:[%s168 + $0x834] sm:$0xff]
      %v526 = vld [vmem:[%s168 + $0x83c] sm:$0xf]
      %v527 = vld [vmem:[%s168 + $0x840] sm:$0xff]
      %v528 = vld [vmem:[%s168 + $0x848] sm:$0xf]
      %v529 = vld [vmem:[%s168 + $0x84c] sm:$0xff]
      %v530 = vld [vmem:[%s168 + $0x854] sm:$0xf]
      %v531 = vld [vmem:[%s168 + $0x858] sm:$0xff]
      %v532 = vld [vmem:[%s168 + $0x860] sm:$0xf]
      %v533 = vld [vmem:[%s168 + $0x864] sm:$0xff]
      %v534 = vld [vmem:[%s168 + $0x86c] sm:$0xf]
      %v535 = vld [vmem:[%s168 + $0x870] sm:$0xff]
      %v536 = vld [vmem:[%s168 + $0x878] sm:$0xf]
      %v537 = vld [vmem:[%s168 + $0x87c] sm:$0xff]
      %v538 = vld [vmem:[%s168 + $0x884] sm:$0xf]
      %v539 = vld [vmem:[%s168 + $0x888] sm:$0xff]
      %v540 = vld [vmem:[%s168 + $0x890] sm:$0xf]
      %v541 = vld [vmem:[%s168 + $0x894] sm:$0xff]
      %v542 = vld [vmem:[%s168 + $0x89c] sm:$0xf]
      %v543 = vld [vmem:[%s168 + $0x8a0] sm:$0xff]
      %v544 = vld [vmem:[%s168 + $0x8a8] sm:$0xf]
      %v545 = vld [vmem:[%s168 + $0x8ac] sm:$0xff]
      %v546 = vld [vmem:[%s168 + $0x8b4] sm:$0xf]
      %v547 = vld [vmem:[%s168 + $0x8b8] sm:$0xff]
      %v548 = vld [vmem:[%s168 + $0x8c0] sm:$0xf]
      %v549 = vld [vmem:[%s168 + $0x8c4] sm:$0xff]
      %v550 = vld [vmem:[%s168 + $0x8cc] sm:$0xf]
      %v551 = vld [vmem:[%s168 + $0x8d0] sm:$0xff]
      %v552 = vld [vmem:[%s168 + $0x8d8] sm:$0xf]
      %v553 = vld [vmem:[%s168 + $0x8dc] sm:$0xff]
      %v554 = vld [vmem:[%s168 + $0x8e4] sm:$0xf]
      %v555 = vld [vmem:[%s168 + $0x8e8] sm:$0xff]
      %v556 = vld [vmem:[%s168 + $0x8f0] sm:$0xf]
      %v557 = vld [vmem:[%s168 + $0x8f4] sm:$0xff]
      %v558 = vld [vmem:[%s168 + $0x8fc] sm:$0xf]
      %v559 = vld [vmem:[%s168 + $0x900] sm:$0xff]
      %v560 = vld [vmem:[%s168 + $0x908] sm:$0xf]
      %v561 = vld [vmem:[%s168 + $0x90c] sm:$0xff]
      %v562 = vld [vmem:[%s168 + $0x914] sm:$0xf]
      %v563 = vld [vmem:[%s168 + $0x918] sm:$0xff]
      %v564 = vld [vmem:[%s168 + $0x920] sm:$0xf]
      %v565 = vld [vmem:[%s168 + $0x924] sm:$0xff]
      %v566 = vld [vmem:[%s168 + $0x92c] sm:$0xf]
      %v567 = vld [vmem:[%s168 + $0x930] sm:$0xff]
      %v568 = vld [vmem:[%s168 + $0x938] sm:$0xf]
      %v569 = vld [vmem:[%s168 + $0x93c] sm:$0xff]
      %v570 = vld [vmem:[%s168 + $0x944] sm:$0xf]
      %v571 = vld [vmem:[%s168 + $0x948] sm:$0xff]
      %v572 = vld [vmem:[%s168 + $0x950] sm:$0xf]
      %v573 = vld [vmem:[%s168 + $0x954] sm:$0xff]
      %v574 = vld [vmem:[%s168 + $0x95c] sm:$0xf]
      %v575 = vld [vmem:[%s168 + $0x960] sm:$0xff]
      %v576 = vld [vmem:[%s168 + $0x968] sm:$0xf]
      %v577 = vld [vmem:[%s168 + $0x96c] sm:$0xff]
      %v578 = vld [vmem:[%s168 + $0x974] sm:$0xf]
      %v579 = vld [vmem:[%s168 + $0x978] sm:$0xff]
      %v580 = vld [vmem:[%s168 + $0x980] sm:$0xf]
      %v581 = vld [vmem:[%s168 + $0x984] sm:$0xff]
      %v582 = vld [vmem:[%s168 + $0x98c] sm:$0xf]
      %v583 = vld [vmem:[%s168 + $0x990] sm:$0xff]
      %v584 = vld [vmem:[%s168 + $0x998] sm:$0xf]
      %v585 = vld [vmem:[%s168 + $0x99c] sm:$0xff]
      %v586 = vld [vmem:[%s168 + $0x9a4] sm:$0xf]
      %v587 = vld [vmem:[%s168 + $0x9a8] sm:$0xff]
      %v588 = vld [vmem:[%s168 + $0x9b0] sm:$0xf]
      %v589 = vld [vmem:[%s168 + $0x9b4] sm:$0xff]
      %v590 = vld [vmem:[%s168 + $0x9bc] sm:$0xf]
      %v591 = vld [vmem:[%s168 + $0x9c0] sm:$0xff]
      %v592 = vld [vmem:[%s168 + $0x9c8] sm:$0xf]
      %v593 = vld [vmem:[%s168 + $0x9cc] sm:$0xff]
      %v594 = vld [vmem:[%s168 + $0x9d4] sm:$0xf]
      %v595 = vld [vmem:[%s168 + $0x9d8] sm:$0xff]
      %v596 = vld [vmem:[%s168 + $0x9e0] sm:$0xf]
      %v597 = vld [vmem:[%s168 + $0x9e4] sm:$0xff]
      %v598 = vld [vmem:[%s168 + $0x9ec] sm:$0xf]
      %v599 = vld [vmem:[%s168 + $0x9f0] sm:$0xff]
      %v600 = vld [vmem:[%s168 + $0x9f8] sm:$0xf]
      %v601 = vld [vmem:[%s168 + $0x9fc] sm:$0xff]
      %v602 = vld [vmem:[%s168 + $0xa04] sm:$0xf]
      %v603 = vld [vmem:[%s168 + $0xa08] sm:$0xff]
      %v604 = vld [vmem:[%s168 + $0xa10] sm:$0xf]
      %v605 = vld [vmem:[%s168 + $0xa14] sm:$0xff]
      %v606 = vld [vmem:[%s168 + $0xa1c] sm:$0xf]
      %v607 = vld [vmem:[%s168 + $0xa20] sm:$0xff]
      %v608 = vld [vmem:[%s168 + $0xa28] sm:$0xf]
      %v609 = vld [vmem:[%s168 + $0xa2c] sm:$0xff]
      %v610 = vld [vmem:[%s168 + $0xa34] sm:$0xf]
      %v611 = vld [vmem:[%s168 + $0xa38] sm:$0xff]
      %v612 = vld [vmem:[%s168 + $0xa40] sm:$0xf]
      %v613 = vld [vmem:[%s168 + $0xa44] sm:$0xff]
      %v614 = vld [vmem:[%s168 + $0xa4c] sm:$0xf]
      %v615 = vld [vmem:[%s168 + $0xa50] sm:$0xff]
      %v616 = vld [vmem:[%s168 + $0xa58] sm:$0xf]
      %v617 = vld [vmem:[%s168 + $0xa5c] sm:$0xff]
      %v618 = vld [vmem:[%s168 + $0xa64] sm:$0xf]
      %v619 = vld [vmem:[%s168 + $0xa68] sm:$0xff]
      %v620 = vld [vmem:[%s168 + $0xa70] sm:$0xf]
      %v621 = vld [vmem:[%s168 + $0xa74] sm:$0xff]
      %v622 = vld [vmem:[%s168 + $0xa7c] sm:$0xf]
      %v623 = vld [vmem:[%s168 + $0xa80] sm:$0xff]
      %v624 = vld [vmem:[%s168 + $0xa88] sm:$0xf]
      %v625 = vld [vmem:[%s168 + $0xa8c] sm:$0xff]
      %v626 = vld [vmem:[%s168 + $0xa94] sm:$0xf]
      %v627 = vld [vmem:[%s168 + $0xa98] sm:$0xff]
      %v628 = vld [vmem:[%s168 + $0xaa0] sm:$0xf]
      %v629 = vld [vmem:[%s168 + $0xaa4] sm:$0xff]
      %v630 = vld [vmem:[%s168 + $0xaac] sm:$0xf]
      %v631 = vld [vmem:[%s168 + $0xab0] sm:$0xff]
      %v632 = vld [vmem:[%s168 + $0xab8] sm:$0xf]
      %v633 = vld [vmem:[%s168 + $0xabc] sm:$0xff]
      %v634 = vld [vmem:[%s168 + $0xac4] sm:$0xf]
      %v635 = vld [vmem:[%s168 + $0xac8] sm:$0xff]
      %v636 = vld [vmem:[%s168 + $0xad0] sm:$0xf]
      %v637 = vld [vmem:[%s168 + $0xad4] sm:$0xff]
      %v638 = vld [vmem:[%s168 + $0xadc] sm:$0xf]
      %v639 = vld [vmem:[%s168 + $0xae0] sm:$0xff]
      %v640 = vld [vmem:[%s168 + $0xae8] sm:$0xf]
      %v641 = vld [vmem:[%s168 + $0xaec] sm:$0xff]
      %v642 = vld [vmem:[%s168 + $0xaf4] sm:$0xf]
      %v643 = vld [vmem:[%s168 + $0xaf8] sm:$0xff]
      %v644 = vld [vmem:[%s168 + $0xb00] sm:$0xf]
      %v645 = vld [vmem:[%s168 + $0xb04] sm:$0xff]
      %v646 = vld [vmem:[%s168 + $0xb0c] sm:$0xf]
      %v647 = vld [vmem:[%s168 + $0xb10] sm:$0xff]
      %v648 = vld [vmem:[%s168 + $0xb18] sm:$0xf]
      %v649 = vld [vmem:[%s168 + $0xb1c] sm:$0xff]
      %v650 = vld [vmem:[%s168 + $0xb24] sm:$0xf]
      %v651 = vld [vmem:[%s168 + $0xb28] sm:$0xff]
      %v652 = vld [vmem:[%s168 + $0xb30] sm:$0xf]
      %v653 = vld [vmem:[%s168 + $0xb34] sm:$0xff]
      %v654 = vld [vmem:[%s168 + $0xb3c] sm:$0xf]
      %v655 = vld [vmem:[%s168 + $0xb40] sm:$0xff]
      %v656 = vld [vmem:[%s168 + $0xb48] sm:$0xf]
      %v657 = vld [vmem:[%s168 + $0xb4c] sm:$0xff]
      %v658 = vld [vmem:[%s168 + $0xb54] sm:$0xf]
      %v659 = vld [vmem:[%s168 + $0xb58] sm:$0xff]
      %v660 = vld [vmem:[%s168 + $0xb60] sm:$0xf]
      %v661 = vld [vmem:[%s168 + $0xb64] sm:$0xff]
      %v662 = vld [vmem:[%s168 + $0xb6c] sm:$0xf]
      %v663 = vld [vmem:[%s168 + $0xb70] sm:$0xff]
      %v664 = vld [vmem:[%s168 + $0xb78] sm:$0xf]
      %v665 = vld [vmem:[%s168 + $0xb7c] sm:$0xff]
      %v666 = vld [vmem:[%s168 + $0xb84] sm:$0xf]
      %v667 = vld [vmem:[%s168 + $0xb88] sm:$0xff]
      %v668 = vld [vmem:[%s168 + $0xb90] sm:$0xf]
      %v669 = vld [vmem:[%s168 + $0xb94] sm:$0xff]
      %v670 = vld [vmem:[%s168 + $0xb9c] sm:$0xf]
      %v671 = vld [vmem:[%s168 + $0xba0] sm:$0xff]
      %v672 = vld [vmem:[%s168 + $0xba8] sm:$0xf]
      %v673 = vld [vmem:[%s168 + $0xbac] sm:$0xff]
      %v674 = vld [vmem:[%s168 + $0xbb4] sm:$0xf]
      %v675 = vld [vmem:[%s168 + $0xbb8] sm:$0xff]
      %v676 = vld [vmem:[%s168 + $0xbc0] sm:$0xf]
      %v677 = vld [vmem:[%s168 + $0xbc4] sm:$0xff]
      %v678 = vld [vmem:[%s168 + $0xbcc] sm:$0xf]
      %v679 = vld [vmem:[%s168 + $0xbd0] sm:$0xff]
      %v680 = vld [vmem:[%s168 + $0xbd8] sm:$0xf]
      %v681 = vld [vmem:[%s168 + $0xbdc] sm:$0xff]
      %v682 = vld [vmem:[%s168 + $0xbe4] sm:$0xf]
      %v683 = vld [vmem:[%s168 + $0xbe8] sm:$0xff]
      %v684 = vld [vmem:[%s168 + $0xbf0] sm:$0xf]
      %v685 = vld [vmem:[%s168 + $0xbf4] sm:$0xff]
      %v686 = vld [vmem:[%s168 + $0xbfc] sm:$0xf]
      %v687 = vld [vmem:[%s1] sm:$0xf]
      %v688 = vld [vmem:[%s1 + $0x4] sm:$0xf]
      %v689 = vld [vmem:[%s1 + $0x8] sm:$0xf]
      %v690 = vld [vmem:[%s1 + $0xc] sm:$0xf]
      %v691 = vld [vmem:[%s1 + $0x10] sm:$0xf]
      %v692 = vld [vmem:[%s1 + $0x14] sm:$0xf]
      %v693 = vld [vmem:[%s1 + $0x18] sm:$0xf]
      %v694 = vld [vmem:[%s1 + $0x1c] sm:$0xf]
      %v695 = vld [vmem:[%s1 + $0x20] sm:$0xf]
      %v696 = vld [vmem:[%s1 + $0x24] sm:$0xf]
      %v697 = vld [vmem:[%s1 + $0x28] sm:$0xf]
      %v698 = vld [vmem:[%s1 + $0x2c] sm:$0xf]
      %v699 = vld [vmem:[%s1 + $0x30] sm:$0xf]
      %v700 = vld [vmem:[%s1 + $0x34] sm:$0xf]
      %v701 = vld [vmem:[%s1 + $0x38] sm:$0xf]
      %v702 = vld [vmem:[%s1 + $0x3c] sm:$0xf]
      %v703 = vld [vmem:[%s1 + $0x40] sm:$0xf]
      %v704 = vld [vmem:[%s1 + $0x44] sm:$0xf]
      %v705 = vld [vmem:[%s1 + $0x48] sm:$0xf]
      %v706 = vld [vmem:[%s1 + $0x4c] sm:$0xf]
      %v707 = vld [vmem:[%s1 + $0x50] sm:$0xf]
      %v708 = vld [vmem:[%s1 + $0x54] sm:$0xf]
      %v709 = vld [vmem:[%s1 + $0x58] sm:$0xf]
      %v710 = vld [vmem:[%s1 + $0x5c] sm:$0xf]
      %v711 = vld [vmem:[%s1 + $0x60] sm:$0xf]
      %v712 = vld [vmem:[%s1 + $0x64] sm:$0xf]
      %v713 = vld [vmem:[%s1 + $0x68] sm:$0xf]
      %v714 = vld [vmem:[%s1 + $0x6c] sm:$0xf]
      %v715 = vld [vmem:[%s1 + $0x70] sm:$0xf]
      %v716 = vld [vmem:[%s1 + $0x74] sm:$0xf]
      %v717 = vld [vmem:[%s1 + $0x78] sm:$0xf]
      %v718 = vld [vmem:[%s1 + $0x7c] sm:$0xf]
      %v719 = vld [vmem:[%s1 + $0x80] sm:$0xf]
      %v720 = vld [vmem:[%s1 + $0x84] sm:$0xf]
      %v721 = vld [vmem:[%s1 + $0x88] sm:$0xf]
      %v722 = vld [vmem:[%s1 + $0x8c] sm:$0xf]
      %v723 = vld [vmem:[%s1 + $0x90] sm:$0xf]
      %v724 = vld [vmem:[%s1 + $0x94] sm:$0xf]
      %v725 = vld [vmem:[%s1 + $0x98] sm:$0xf]
      %v726 = vld [vmem:[%s1 + $0x9c] sm:$0xf]
      %v727 = vld [vmem:[%s1 + $0xa0] sm:$0xf]
      %v728 = vld [vmem:[%s1 + $0xa4] sm:$0xf]
      %v729 = vld [vmem:[%s1 + $0xa8] sm:$0xf]
      %v730 = vld [vmem:[%s1 + $0xac] sm:$0xf]
      %v731 = vld [vmem:[%s1 + $0xb0] sm:$0xf]
      %v732 = vld [vmem:[%s1 + $0xb4] sm:$0xf]
      %v733 = vld [vmem:[%s1 + $0xb8] sm:$0xf]
      %v734 = vld [vmem:[%s1 + $0xbc] sm:$0xf]
      %v735 = vld [vmem:[%s2] sm:$0x1]
      %v737 = vlaneseq
      %v738 = vshrl.u32 %v737, 7
      %v739 = vsub.s32 0, %v738
      %v740 = vrot.slane %v735, %v739
      %v1254 = vunpack.c.l.b16 %v175
      %v1255 = vunpack.c.h.b16 %v175
      %v1256 = vunpack.c.l.b16 %v176
      %v1257 = vunpack.c.l.b16 %v177
      %v1258 = vunpack.c.h.b16 %v177
      %v1259 = vunpack.c.l.b16 %v178
      %v1260 = vunpack.c.l.b16 %v179
      %v1261 = vunpack.c.h.b16 %v179
      %v1262 = vunpack.c.l.b16 %v180
      %v1263 = vunpack.c.l.b16 %v181
      %v1264 = vunpack.c.h.b16 %v181
      %v1265 = vunpack.c.l.b16 %v182
      %v1266 = vunpack.c.l.b16 %v183
      %v1267 = vunpack.c.h.b16 %v183
      %v1268 = vunpack.c.l.b16 %v184
      %v1269 = vunpack.c.l.b16 %v185
      %v1270 = vunpack.c.h.b16 %v185
      %v1271 = vunpack.c.l.b16 %v186
      %v1272 = vunpack.c.l.b16 %v187
      %v1273 = vunpack.c.h.b16 %v187
      %v1274 = vunpack.c.l.b16 %v188
      %v1275 = vunpack.c.l.b16 %v189
      %v1276 = vunpack.c.h.b16 %v189
      %v1277 = vunpack.c.l.b16 %v190
      %v1278 = vunpack.c.l.b16 %v191
      %v1279 = vunpack.c.h.b16 %v191
      %v1280 = vunpack.c.l.b16 %v192
      %v1281 = vunpack.c.l.b16 %v193
      %v1282 = vunpack.c.h.b16 %v193
      %v1283 = vunpack.c.l.b16 %v194
      %v1284 = vunpack.c.l.b16 %v195
      %v1285 = vunpack.c.h.b16 %v195
      %v1286 = vunpack.c.l.b16 %v196
      %v1287 = vunpack.c.l.b16 %v197
      %v1288 = vunpack.c.h.b16 %v197
      %v1289 = vunpack.c.l.b16 %v198
      %v1290 = vunpack.c.l.b16 %v199
      %v1291 = vunpack.c.h.b16 %v199
      %v1292 = vunpack.c.l.b16 %v200
      %v1293 = vunpack.c.l.b16 %v201
      %v1294 = vunpack.c.h.b16 %v201
      %v1295 = vunpack.c.l.b16 %v202
      %v1296 = vunpack.c.l.b16 %v203
      %v1297 = vunpack.c.h.b16 %v203
      %v1298 = vunpack.c.l.b16 %v204
      %v1299 = vunpack.c.l.b16 %v205
      %v1300 = vunpack.c.h.b16 %v205
      %v1301 = vunpack.c.l.b16 %v206
      %v1302 = vunpack.c.l.b16 %v207
      %v1303 = vunpack.c.h.b16 %v207
      %v1304 = vunpack.c.l.b16 %v208
      %v1305 = vunpack.c.l.b16 %v209
      %v1306 = vunpack.c.h.b16 %v209
      %v1307 = vunpack.c.l.b16 %v210
      %v1308 = vunpack.c.l.b16 %v211
      %v1309 = vunpack.c.h.b16 %v211
      %v1310 = vunpack.c.l.b16 %v212
      %v1311 = vunpack.c.l.b16 %v213
      %v1312 = vunpack.c.h.b16 %v213
      %v1313 = vunpack.c.l.b16 %v214
      %v1314 = vunpack.c.l.b16 %v215
      %v1315 = vunpack.c.h.b16 %v215
      %v1316 = vunpack.c.l.b16 %v216
      %v1317 = vunpack.c.l.b16 %v217
      %v1318 = vunpack.c.h.b16 %v217
      %v1319 = vunpack.c.l.b16 %v218
      %v1320 = vunpack.c.l.b16 %v219
      %v1321 = vunpack.c.h.b16 %v219
      %v1322 = vunpack.c.l.b16 %v220
      %v1323 = vunpack.c.l.b16 %v221
      %v1324 = vunpack.c.h.b16 %v221
      %v1325 = vunpack.c.l.b16 %v222
      %v1326 = vunpack.c.l.b16 %v223
      %v1327 = vunpack.c.h.b16 %v223
      %v1328 = vunpack.c.l.b16 %v224
      %v1329 = vunpack.c.l.b16 %v225
      %v1330 = vunpack.c.h.b16 %v225
      %v1331 = vunpack.c.l.b16 %v226
      %v1332 = vunpack.c.l.b16 %v227
      %v1333 = vunpack.c.h.b16 %v227
      %v1334 = vunpack.c.l.b16 %v228
      %v1335 = vunpack.c.l.b16 %v229
      %v1336 = vunpack.c.h.b16 %v229
      %v1337 = vunpack.c.l.b16 %v230
      %v1338 = vunpack.c.l.b16 %v231
      %v1339 = vunpack.c.h.b16 %v231
      %v1340 = vunpack.c.l.b16 %v232
      %v1341 = vunpack.c.l.b16 %v233
      %v1342 = vunpack.c.h.b16 %v233
      %v1343 = vunpack.c.l.b16 %v234
      %v1344 = vunpack.c.l.b16 %v235
      %v1345 = vunpack.c.h.b16 %v235
      %v1346 = vunpack.c.l.b16 %v236
      %v1347 = vunpack.c.l.b16 %v237
      %v1348 = vunpack.c.h.b16 %v237
      %v1349 = vunpack.c.l.b16 %v238
      %v1350 = vunpack.c.l.b16 %v239
      %v1351 = vunpack.c.h.b16 %v239
      %v1352 = vunpack.c.l.b16 %v240
      %v1353 = vunpack.c.l.b16 %v241
      %v1354 = vunpack.c.h.b16 %v241
      %v1355 = vunpack.c.l.b16 %v242
      %v1356 = vunpack.c.l.b16 %v243
      %v1357 = vunpack.c.h.b16 %v243
      %v1358 = vunpack.c.l.b16 %v244
      %v1359 = vunpack.c.l.b16 %v245
      %v1360 = vunpack.c.h.b16 %v245
      %v1361 = vunpack.c.l.b16 %v246
      %v1362 = vunpack.c.l.b16 %v247
      %v1363 = vunpack.c.h.b16 %v247
      %v1364 = vunpack.c.l.b16 %v248
      %v1365 = vunpack.c.l.b16 %v249
      %v1366 = vunpack.c.h.b16 %v249
      %v1367 = vunpack.c.l.b16 %v250
      %v1368 = vunpack.c.l.b16 %v251
      %v1369 = vunpack.c.h.b16 %v251
      %v1370 = vunpack.c.l.b16 %v252
      %v1371 = vunpack.c.l.b16 %v253
      %v1372 = vunpack.c.h.b16 %v253
      %v1373 = vunpack.c.l.b16 %v254
      %v1374 = vunpack.c.l.b16 %v255
      %v1375 = vunpack.c.h.b16 %v255
      %v1376 = vunpack.c.l.b16 %v256
      %v1377 = vunpack.c.l.b16 %v257
      %v1378 = vunpack.c.h.b16 %v257
      %v1379 = vunpack.c.l.b16 %v258
      %v1380 = vunpack.c.l.b16 %v259
      %v1381 = vunpack.c.h.b16 %v259
      %v1382 = vunpack.c.l.b16 %v260
      %v1383 = vunpack.c.l.b16 %v261
      %v1384 = vunpack.c.h.b16 %v261
      %v1385 = vunpack.c.l.b16 %v262
      %v1386 = vunpack.c.l.b16 %v263
      %v1387 = vunpack.c.h.b16 %v263
      %v1388 = vunpack.c.l.b16 %v264
      %v1389 = vunpack.c.l.b16 %v265
      %v1390 = vunpack.c.h.b16 %v265
      %v1391 = vunpack.c.l.b16 %v266
      %v1392 = vunpack.c.l.b16 %v267
      %v1393 = vunpack.c.h.b16 %v267
      %v1394 = vunpack.c.l.b16 %v268
      %v1395 = vunpack.c.l.b16 %v269
      %v1396 = vunpack.c.h.b16 %v269
      %v1397 = vunpack.c.l.b16 %v270
      %v1398 = vunpack.c.l.b16 %v271
      %v1399 = vunpack.c.h.b16 %v271
      %v1400 = vunpack.c.l.b16 %v272
      %v1401 = vunpack.c.l.b16 %v273
      %v1402 = vunpack.c.h.b16 %v273
      %v1403 = vunpack.c.l.b16 %v274
      %v1404 = vunpack.c.l.b16 %v275
      %v1405 = vunpack.c.h.b16 %v275
      %v1406 = vunpack.c.l.b16 %v276
      %v1407 = vunpack.c.l.b16 %v277
      %v1408 = vunpack.c.h.b16 %v277
      %v1409 = vunpack.c.l.b16 %v278
      %v1410 = vunpack.c.l.b16 %v279
      %v1411 = vunpack.c.h.b16 %v279
      %v1412 = vunpack.c.l.b16 %v280
      %v1413 = vunpack.c.l.b16 %v281
      %v1414 = vunpack.c.h.b16 %v281
      %v1415 = vunpack.c.l.b16 %v282
      %v1416 = vunpack.c.l.b16 %v283
      %v1417 = vunpack.c.h.b16 %v283
      %v1418 = vunpack.c.l.b16 %v284
      %v1419 = vunpack.c.l.b16 %v285
      %v1420 = vunpack.c.h.b16 %v285
      %v1421 = vunpack.c.l.b16 %v286
      %v1422 = vunpack.c.l.b16 %v287
      %v1423 = vunpack.c.h.b16 %v287
      %v1424 = vunpack.c.l.b16 %v288
      %v1425 = vunpack.c.l.b16 %v289
      %v1426 = vunpack.c.h.b16 %v289
      %v1427 = vunpack.c.l.b16 %v290
      %v1428 = vunpack.c.l.b16 %v291
      %v1429 = vunpack.c.h.b16 %v291
      %v1430 = vunpack.c.l.b16 %v292
      %v1431 = vunpack.c.l.b16 %v293
      %v1432 = vunpack.c.h.b16 %v293
      %v1433 = vunpack.c.l.b16 %v294
      %v1434 = vunpack.c.l.b16 %v295
      %v1435 = vunpack.c.h.b16 %v295
      %v1436 = vunpack.c.l.b16 %v296
      %v1437 = vunpack.c.l.b16 %v297
      %v1438 = vunpack.c.h.b16 %v297
      %v1439 = vunpack.c.l.b16 %v298
      %v1440 = vunpack.c.l.b16 %v299
      %v1441 = vunpack.c.h.b16 %v299
      %v1442 = vunpack.c.l.b16 %v300
      %v1443 = vunpack.c.l.b16 %v301
      %v1444 = vunpack.c.h.b16 %v301
      %v1445 = vunpack.c.l.b16 %v302
      %v1446 = vunpack.c.l.b16 %v303
      %v1447 = vunpack.c.h.b16 %v303
      %v1448 = vunpack.c.l.b16 %v304
      %v1449 = vunpack.c.l.b16 %v305
      %v1450 = vunpack.c.h.b16 %v305
      %v1451 = vunpack.c.l.b16 %v306
      %v1452 = vunpack.c.l.b16 %v307
      %v1453 = vunpack.c.h.b16 %v307
      %v1454 = vunpack.c.l.b16 %v308
      %v1455 = vunpack.c.l.b16 %v309
      %v1456 = vunpack.c.h.b16 %v309
      %v1457 = vunpack.c.l.b16 %v310
      %v1458 = vunpack.c.l.b16 %v311
      %v1459 = vunpack.c.h.b16 %v311
      %v1460 = vunpack.c.l.b16 %v312
      %v1461 = vunpack.c.l.b16 %v313
      %v1462 = vunpack.c.h.b16 %v313
      %v1463 = vunpack.c.l.b16 %v314
      %v1464 = vunpack.c.l.b16 %v315
      %v1465 = vunpack.c.h.b16 %v315
      %v1466 = vunpack.c.l.b16 %v316
      %v1467 = vunpack.c.l.b16 %v317
      %v1468 = vunpack.c.h.b16 %v317
      %v1469 = vunpack.c.l.b16 %v318
      %v1470 = vunpack.c.l.b16 %v319
      %v1471 = vunpack.c.h.b16 %v319
      %v1472 = vunpack.c.l.b16 %v320
      %v1473 = vunpack.c.l.b16 %v321
      %v1474 = vunpack.c.h.b16 %v321
      %v1475 = vunpack.c.l.b16 %v322
      %v1476 = vunpack.c.l.b16 %v323
      %v1477 = vunpack.c.h.b16 %v323
      %v1478 = vunpack.c.l.b16 %v324
      %v1479 = vunpack.c.l.b16 %v325
      %v1480 = vunpack.c.h.b16 %v325
      %v1481 = vunpack.c.l.b16 %v326
      %v1482 = vunpack.c.l.b16 %v327
      %v1483 = vunpack.c.h.b16 %v327
      %v1484 = vunpack.c.l.b16 %v328
      %v1485 = vunpack.c.l.b16 %v329
      %v1486 = vunpack.c.h.b16 %v329
      %v1487 = vunpack.c.l.b16 %v330
      %v1488 = vunpack.c.l.b16 %v331
      %v1489 = vunpack.c.h.b16 %v331
      %v1490 = vunpack.c.l.b16 %v332
      %v1491 = vunpack.c.l.b16 %v333
      %v1492 = vunpack.c.h.b16 %v333
      %v1493 = vunpack.c.l.b16 %v334
      %v1494 = vunpack.c.l.b16 %v335
      %v1495 = vunpack.c.h.b16 %v335
      %v1496 = vunpack.c.l.b16 %v336
      %v1497 = vunpack.c.l.b16 %v337
      %v1498 = vunpack.c.h.b16 %v337
      %v1499 = vunpack.c.l.b16 %v338
      %v1500 = vunpack.c.l.b16 %v339
      %v1501 = vunpack.c.h.b16 %v339
      %v1502 = vunpack.c.l.b16 %v340
      %v1503 = vunpack.c.l.b16 %v341
      %v1504 = vunpack.c.h.b16 %v341
      %v1505 = vunpack.c.l.b16 %v342
      %v1506 = vunpack.c.l.b16 %v343
      %v1507 = vunpack.c.h.b16 %v343
      %v1508 = vunpack.c.l.b16 %v344
      %v1509 = vunpack.c.l.b16 %v345
      %v1510 = vunpack.c.h.b16 %v345
      %v1511 = vunpack.c.l.b16 %v346
      %v1512 = vunpack.c.l.b16 %v347
      %v1513 = vunpack.c.h.b16 %v347
      %v1514 = vunpack.c.l.b16 %v348
      %v1515 = vunpack.c.l.b16 %v349
      %v1516 = vunpack.c.h.b16 %v349
      %v1517 = vunpack.c.l.b16 %v350
      %v1518 = vunpack.c.l.b16 %v351
      %v1519 = vunpack.c.h.b16 %v351
      %v1520 = vunpack.c.l.b16 %v352
      %v1521 = vunpack.c.l.b16 %v353
      %v1522 = vunpack.c.h.b16 %v353
      %v1523 = vunpack.c.l.b16 %v354
      %v1524 = vunpack.c.l.b16 %v355
      %v1525 = vunpack.c.h.b16 %v355
      %v1526 = vunpack.c.l.b16 %v356
      %v1527 = vunpack.c.l.b16 %v357
      %v1528 = vunpack.c.h.b16 %v357
      %v1529 = vunpack.c.l.b16 %v358
      %v1530 = vunpack.c.l.b16 %v359
      %v1531 = vunpack.c.h.b16 %v359
      %v1532 = vunpack.c.l.b16 %v360
      %v1533 = vunpack.c.l.b16 %v361
      %v1534 = vunpack.c.h.b16 %v361
      %v1535 = vunpack.c.l.b16 %v362
      %v1536 = vunpack.c.l.b16 %v363
      %v1537 = vunpack.c.h.b16 %v363
      %v1538 = vunpack.c.l.b16 %v364
      %v1539 = vunpack.c.l.b16 %v365
      %v1540 = vunpack.c.h.b16 %v365
      %v1541 = vunpack.c.l.b16 %v366
      %v1542 = vunpack.c.l.b16 %v367
      %v1543 = vunpack.c.h.b16 %v367
      %v1544 = vunpack.c.l.b16 %v368
      %v1545 = vunpack.c.l.b16 %v369
      %v1546 = vunpack.c.h.b16 %v369
      %v1547 = vunpack.c.l.b16 %v370
      %v1548 = vunpack.c.l.b16 %v371
      %v1549 = vunpack.c.h.b16 %v371
      %v1550 = vunpack.c.l.b16 %v372
      %v1551 = vunpack.c.l.b16 %v373
      %v1552 = vunpack.c.h.b16 %v373
      %v1553 = vunpack.c.l.b16 %v374
      %v1554 = vunpack.c.l.b16 %v375
      %v1555 = vunpack.c.h.b16 %v375
      %v1556 = vunpack.c.l.b16 %v376
      %v1557 = vunpack.c.l.b16 %v377
      %v1558 = vunpack.c.h.b16 %v377
      %v1559 = vunpack.c.l.b16 %v378
      %v1560 = vunpack.c.l.b16 %v379
      %v1561 = vunpack.c.h.b16 %v379
      %v1562 = vunpack.c.l.b16 %v380
      %v1563 = vunpack.c.l.b16 %v381
      %v1564 = vunpack.c.h.b16 %v381
      %v1565 = vunpack.c.l.b16 %v382
      %v1566 = vunpack.c.l.b16 %v383
      %v1567 = vunpack.c.h.b16 %v383
      %v1568 = vunpack.c.l.b16 %v384
      %v1569 = vunpack.c.l.b16 %v385
      %v1570 = vunpack.c.h.b16 %v385
      %v1571 = vunpack.c.l.b16 %v386
      %v1572 = vunpack.c.l.b16 %v387
      %v1573 = vunpack.c.h.b16 %v387
      %v1574 = vunpack.c.l.b16 %v388
      %v1575 = vunpack.c.l.b16 %v389
      %v1576 = vunpack.c.h.b16 %v389
      %v1577 = vunpack.c.l.b16 %v390
      %v1578 = vunpack.c.l.b16 %v391
      %v1579 = vunpack.c.h.b16 %v391
      %v1580 = vunpack.c.l.b16 %v392
      %v1581 = vunpack.c.l.b16 %v393
      %v1582 = vunpack.c.h.b16 %v393
      %v1583 = vunpack.c.l.b16 %v394
      %v1584 = vunpack.c.l.b16 %v395
      %v1585 = vunpack.c.h.b16 %v395
      %v1586 = vunpack.c.l.b16 %v396
      %v1587 = vunpack.c.l.b16 %v397
      %v1588 = vunpack.c.h.b16 %v397
      %v1589 = vunpack.c.l.b16 %v398
      %v1590 = vunpack.c.l.b16 %v399
      %v1591 = vunpack.c.h.b16 %v399
      %v1592 = vunpack.c.l.b16 %v400
      %v1593 = vunpack.c.l.b16 %v401
      %v1594 = vunpack.c.h.b16 %v401
      %v1595 = vunpack.c.l.b16 %v402
      %v1596 = vunpack.c.l.b16 %v403
      %v1597 = vunpack.c.h.b16 %v403
      %v1598 = vunpack.c.l.b16 %v404
      %v1599 = vunpack.c.l.b16 %v405
      %v1600 = vunpack.c.h.b16 %v405
      %v1601 = vunpack.c.l.b16 %v406
      %v1602 = vunpack.c.l.b16 %v407
      %v1603 = vunpack.c.h.b16 %v407
      %v1604 = vunpack.c.l.b16 %v408
      %v1605 = vunpack.c.l.b16 %v409
      %v1606 = vunpack.c.h.b16 %v409
      %v1607 = vunpack.c.l.b16 %v410
      %v1608 = vunpack.c.l.b16 %v411
      %v1609 = vunpack.c.h.b16 %v411
      %v1610 = vunpack.c.l.b16 %v412
      %v1611 = vunpack.c.l.b16 %v413
      %v1612 = vunpack.c.h.b16 %v413
      %v1613 = vunpack.c.l.b16 %v414
      %v1614 = vunpack.c.l.b16 %v415
      %v1615 = vunpack.c.h.b16 %v415
      %v1616 = vunpack.c.l.b16 %v416
      %v1617 = vunpack.c.l.b16 %v417
      %v1618 = vunpack.c.h.b16 %v417
      %v1619 = vunpack.c.l.b16 %v418
      %v1620 = vunpack.c.l.b16 %v419
      %v1621 = vunpack.c.h.b16 %v419
      %v1622 = vunpack.c.l.b16 %v420
      %v1623 = vunpack.c.l.b16 %v421
      %v1624 = vunpack.c.h.b16 %v421
      %v1625 = vunpack.c.l.b16 %v422
      %v1626 = vunpack.c.l.b16 %v423
      %v1627 = vunpack.c.h.b16 %v423
      %v1628 = vunpack.c.l.b16 %v424
      %v1629 = vunpack.c.l.b16 %v425
      %v1630 = vunpack.c.h.b16 %v425
      %v1631 = vunpack.c.l.b16 %v426
      %v1632 = vunpack.c.l.b16 %v427
      %v1633 = vunpack.c.h.b16 %v427
      %v1634 = vunpack.c.l.b16 %v428
      %v1635 = vunpack.c.l.b16 %v429
      %v1636 = vunpack.c.h.b16 %v429
      %v1637 = vunpack.c.l.b16 %v430
      %v1638 = vunpack.c.l.b16 %v431
      %v1639 = vunpack.c.h.b16 %v431
      %v1640 = vunpack.c.l.b16 %v432
      %v1641 = vunpack.c.l.b16 %v433
      %v1642 = vunpack.c.h.b16 %v433
      %v1643 = vunpack.c.l.b16 %v434
      %v1644 = vunpack.c.l.b16 %v435
      %v1645 = vunpack.c.h.b16 %v435
      %v1646 = vunpack.c.l.b16 %v436
      %v1647 = vunpack.c.l.b16 %v437
      %v1648 = vunpack.c.h.b16 %v437
      %v1649 = vunpack.c.l.b16 %v438
      %v1650 = vunpack.c.l.b16 %v439
      %v1651 = vunpack.c.h.b16 %v439
      %v1652 = vunpack.c.l.b16 %v440
      %v1653 = vunpack.c.l.b16 %v441
      %v1654 = vunpack.c.h.b16 %v441
      %v1655 = vunpack.c.l.b16 %v442
      %v1656 = vunpack.c.l.b16 %v443
      %v1657 = vunpack.c.h.b16 %v443
      %v1658 = vunpack.c.l.b16 %v444
      %v1659 = vunpack.c.l.b16 %v445
      %v1660 = vunpack.c.h.b16 %v445
      %v1661 = vunpack.c.l.b16 %v446
      %v1662 = vunpack.c.l.b16 %v447
      %v1663 = vunpack.c.h.b16 %v447
      %v1664 = vunpack.c.l.b16 %v448
      %v1665 = vunpack.c.l.b16 %v449
      %v1666 = vunpack.c.h.b16 %v449
      %v1667 = vunpack.c.l.b16 %v450
      %v1668 = vunpack.c.l.b16 %v451
      %v1669 = vunpack.c.h.b16 %v451
      %v1670 = vunpack.c.l.b16 %v452
      %v1671 = vunpack.c.l.b16 %v453
      %v1672 = vunpack.c.h.b16 %v453
      %v1673 = vunpack.c.l.b16 %v454
      %v1674 = vunpack.c.l.b16 %v455
      %v1675 = vunpack.c.h.b16 %v455
      %v1676 = vunpack.c.l.b16 %v456
      %v1677 = vunpack.c.l.b16 %v457
      %v1678 = vunpack.c.h.b16 %v457
      %v1679 = vunpack.c.l.b16 %v458
      %v1680 = vunpack.c.l.b16 %v459
      %v1681 = vunpack.c.h.b16 %v459
      %v1682 = vunpack.c.l.b16 %v460
      %v1683 = vunpack.c.l.b16 %v461
      %v1684 = vunpack.c.h.b16 %v461
      %v1685 = vunpack.c.l.b16 %v462
      %v1686 = vunpack.c.l.b16 %v463
      %v1687 = vunpack.c.h.b16 %v463
      %v1688 = vunpack.c.l.b16 %v464
      %v1689 = vunpack.c.l.b16 %v465
      %v1690 = vunpack.c.h.b16 %v465
      %v1691 = vunpack.c.l.b16 %v466
      %v1692 = vunpack.c.l.b16 %v467
      %v1693 = vunpack.c.h.b16 %v467
      %v1694 = vunpack.c.l.b16 %v468
      %v1695 = vunpack.c.l.b16 %v469
      %v1696 = vunpack.c.h.b16 %v469
      %v1697 = vunpack.c.l.b16 %v470
      %v1698 = vunpack.c.l.b16 %v471
      %v1699 = vunpack.c.h.b16 %v471
      %v1700 = vunpack.c.l.b16 %v472
      %v1701 = vunpack.c.l.b16 %v473
      %v1702 = vunpack.c.h.b16 %v473
      %v1703 = vunpack.c.l.b16 %v474
      %v1704 = vunpack.c.l.b16 %v475
      %v1705 = vunpack.c.h.b16 %v475
      %v1706 = vunpack.c.l.b16 %v476
      %v1707 = vunpack.c.l.b16 %v477
      %v1708 = vunpack.c.h.b16 %v477
      %v1709 = vunpack.c.l.b16 %v478
      %v1710 = vunpack.c.l.b16 %v479
      %v1711 = vunpack.c.h.b16 %v479
      %v1712 = vunpack.c.l.b16 %v480
      %v1713 = vunpack.c.l.b16 %v481
      %v1714 = vunpack.c.h.b16 %v481
      %v1715 = vunpack.c.l.b16 %v482
      %v1716 = vunpack.c.l.b16 %v483
      %v1717 = vunpack.c.h.b16 %v483
      %v1718 = vunpack.c.l.b16 %v484
      %v1719 = vunpack.c.l.b16 %v485
      %v1720 = vunpack.c.h.b16 %v485
      %v1721 = vunpack.c.l.b16 %v486
      %v1722 = vunpack.c.l.b16 %v487
      %v1723 = vunpack.c.h.b16 %v487
      %v1724 = vunpack.c.l.b16 %v488
      %v1725 = vunpack.c.l.b16 %v489
      %v1726 = vunpack.c.h.b16 %v489
      %v1727 = vunpack.c.l.b16 %v490
      %v1728 = vunpack.c.l.b16 %v491
      %v1729 = vunpack.c.h.b16 %v491
      %v1730 = vunpack.c.l.b16 %v492
      %v1731 = vunpack.c.l.b16 %v493
      %v1732 = vunpack.c.h.b16 %v493
      %v1733 = vunpack.c.l.b16 %v494
      %v1734 = vunpack.c.l.b16 %v495
      %v1735 = vunpack.c.h.b16 %v495
      %v1736 = vunpack.c.l.b16 %v496
      %v1737 = vunpack.c.l.b16 %v497
      %v1738 = vunpack.c.h.b16 %v497
      %v1739 = vunpack.c.l.b16 %v498
      %v1740 = vunpack.c.l.b16 %v499
      %v1741 = vunpack.c.h.b16 %v499
      %v1742 = vunpack.c.l.b16 %v500
      %v1743 = vunpack.c.l.b16 %v501
      %v1744 = vunpack.c.h.b16 %v501
      %v1745 = vunpack.c.l.b16 %v502
      %v1746 = vunpack.c.l.b16 %v503
      %v1747 = vunpack.c.h.b16 %v503
      %v1748 = vunpack.c.l.b16 %v504
      %v1749 = vunpack.c.l.b16 %v505
      %v1750 = vunpack.c.h.b16 %v505
      %v1751 = vunpack.c.l.b16 %v506
      %v1752 = vunpack.c.l.b16 %v507
      %v1753 = vunpack.c.h.b16 %v507
      %v1754 = vunpack.c.l.b16 %v508
      %v1755 = vunpack.c.l.b16 %v509
      %v1756 = vunpack.c.h.b16 %v509
      %v1757 = vunpack.c.l.b16 %v510
      %v1758 = vunpack.c.l.b16 %v511
      %v1759 = vunpack.c.h.b16 %v511
      %v1760 = vunpack.c.l.b16 %v512
      %v1761 = vunpack.c.l.b16 %v513
      %v1762 = vunpack.c.h.b16 %v513
      %v1763 = vunpack.c.l.b16 %v514
      %v1764 = vunpack.c.l.b16 %v515
      %v1765 = vunpack.c.h.b16 %v515
      %v1766 = vunpack.c.l.b16 %v516
      %v1767 = vunpack.c.l.b16 %v517
      %v1768 = vunpack.c.h.b16 %v517
      %v1769 = vunpack.c.l.b16 %v518
      %v1770 = vunpack.c.l.b16 %v519
      %v1771 = vunpack.c.h.b16 %v519
      %v1772 = vunpack.c.l.b16 %v520
      %v1773 = vunpack.c.l.b16 %v521
      %v1774 = vunpack.c.h.b16 %v521
      %v1775 = vunpack.c.l.b16 %v522
      %v1776 = vunpack.c.l.b16 %v523
      %v1777 = vunpack.c.h.b16 %v523
      %v1778 = vunpack.c.l.b16 %v524
      %v1779 = vunpack.c.l.b16 %v525
      %v1780 = vunpack.c.h.b16 %v525
      %v1781 = vunpack.c.l.b16 %v526
      %v1782 = vunpack.c.l.b16 %v527
      %v1783 = vunpack.c.h.b16 %v527
      %v1784 = vunpack.c.l.b16 %v528
      %v1785 = vunpack.c.l.b16 %v529
      %v1786 = vunpack.c.h.b16 %v529
      %v1787 = vunpack.c.l.b16 %v530
      %v1788 = vunpack.c.l.b16 %v531
      %v1789 = vunpack.c.h.b16 %v531
      %v1790 = vunpack.c.l.b16 %v532
      %v1791 = vunpack.c.l.b16 %v533
      %v1792 = vunpack.c.h.b16 %v533
      %v1793 = vunpack.c.l.b16 %v534
      %v1794 = vunpack.c.l.b16 %v535
      %v1795 = vunpack.c.h.b16 %v535
      %v1796 = vunpack.c.l.b16 %v536
      %v1797 = vunpack.c.l.b16 %v537
      %v1798 = vunpack.c.h.b16 %v537
      %v1799 = vunpack.c.l.b16 %v538
      %v1800 = vunpack.c.l.b16 %v539
      %v1801 = vunpack.c.h.b16 %v539
      %v1802 = vunpack.c.l.b16 %v540
      %v1803 = vunpack.c.l.b16 %v541
      %v1804 = vunpack.c.h.b16 %v541
      %v1805 = vunpack.c.l.b16 %v542
      %v1806 = vunpack.c.l.b16 %v543
      %v1807 = vunpack.c.h.b16 %v543
      %v1808 = vunpack.c.l.b16 %v544
      %v1809 = vunpack.c.l.b16 %v545
      %v1810 = vunpack.c.h.b16 %v545
      %v1811 = vunpack.c.l.b16 %v546
      %v1812 = vunpack.c.l.b16 %v547
      %v1813 = vunpack.c.h.b16 %v547
      %v1814 = vunpack.c.l.b16 %v548
      %v1815 = vunpack.c.l.b16 %v549
      %v1816 = vunpack.c.h.b16 %v549
      %v1817 = vunpack.c.l.b16 %v550
      %v1818 = vunpack.c.l.b16 %v551
      %v1819 = vunpack.c.h.b16 %v551
      %v1820 = vunpack.c.l.b16 %v552
      %v1821 = vunpack.c.l.b16 %v553
      %v1822 = vunpack.c.h.b16 %v553
      %v1823 = vunpack.c.l.b16 %v554
      %v1824 = vunpack.c.l.b16 %v555
      %v1825 = vunpack.c.h.b16 %v555
      %v1826 = vunpack.c.l.b16 %v556
      %v1827 = vunpack.c.l.b16 %v557
      %v1828 = vunpack.c.h.b16 %v557
      %v1829 = vunpack.c.l.b16 %v558
      %v1830 = vunpack.c.l.b16 %v559
      %v1831 = vunpack.c.h.b16 %v559
      %v1832 = vunpack.c.l.b16 %v560
      %v1833 = vunpack.c.l.b16 %v561
      %v1834 = vunpack.c.h.b16 %v561
      %v1835 = vunpack.c.l.b16 %v562
      %v1836 = vunpack.c.l.b16 %v563
      %v1837 = vunpack.c.h.b16 %v563
      %v1838 = vunpack.c.l.b16 %v564
      %v1839 = vunpack.c.l.b16 %v565
      %v1840 = vunpack.c.h.b16 %v565
      %v1841 = vunpack.c.l.b16 %v566
      %v1842 = vunpack.c.l.b16 %v567
      %v1843 = vunpack.c.h.b16 %v567
      %v1844 = vunpack.c.l.b16 %v568
      %v1845 = vunpack.c.l.b16 %v569
      %v1846 = vunpack.c.h.b16 %v569
      %v1847 = vunpack.c.l.b16 %v570
      %v1848 = vunpack.c.l.b16 %v571
      %v1849 = vunpack.c.h.b16 %v571
      %v1850 = vunpack.c.l.b16 %v572
      %v1851 = vunpack.c.l.b16 %v573
      %v1852 = vunpack.c.h.b16 %v573
      %v1853 = vunpack.c.l.b16 %v574
      %v1854 = vunpack.c.l.b16 %v575
      %v1855 = vunpack.c.h.b16 %v575
      %v1856 = vunpack.c.l.b16 %v576
      %v1857 = vunpack.c.l.b16 %v577
      %v1858 = vunpack.c.h.b16 %v577
      %v1859 = vunpack.c.l.b16 %v578
      %v1860 = vunpack.c.l.b16 %v579
      %v1861 = vunpack.c.h.b16 %v579
      %v1862 = vunpack.c.l.b16 %v580
      %v1863 = vunpack.c.l.b16 %v581
      %v1864 = vunpack.c.h.b16 %v581
      %v1865 = vunpack.c.l.b16 %v582
      %v1866 = vunpack.c.l.b16 %v583
      %v1867 = vunpack.c.h.b16 %v583
      %v1868 = vunpack.c.l.b16 %v584
      %v1869 = vunpack.c.l.b16 %v585
      %v1870 = vunpack.c.h.b16 %v585
      %v1871 = vunpack.c.l.b16 %v586
      %v1872 = vunpack.c.l.b16 %v587
      %v1873 = vunpack.c.h.b16 %v587
      %v1874 = vunpack.c.l.b16 %v588
      %v1875 = vunpack.c.l.b16 %v589
      %v1876 = vunpack.c.h.b16 %v589
      %v1877 = vunpack.c.l.b16 %v590
      %v1878 = vunpack.c.l.b16 %v591
      %v1879 = vunpack.c.h.b16 %v591
      %v1880 = vunpack.c.l.b16 %v592
      %v1881 = vunpack.c.l.b16 %v593
      %v1882 = vunpack.c.h.b16 %v593
      %v1883 = vunpack.c.l.b16 %v594
      %v1884 = vunpack.c.l.b16 %v595
      %v1885 = vunpack.c.h.b16 %v595
      %v1886 = vunpack.c.l.b16 %v596
      %v1887 = vunpack.c.l.b16 %v597
      %v1888 = vunpack.c.h.b16 %v597
      %v1889 = vunpack.c.l.b16 %v598
      %v1890 = vunpack.c.l.b16 %v599
      %v1891 = vunpack.c.h.b16 %v599
      %v1892 = vunpack.c.l.b16 %v600
      %v1893 = vunpack.c.l.b16 %v601
      %v1894 = vunpack.c.h.b16 %v601
      %v1895 = vunpack.c.l.b16 %v602
      %v1896 = vunpack.c.l.b16 %v603
      %v1897 = vunpack.c.h.b16 %v603
      %v1898 = vunpack.c.l.b16 %v604
      %v1899 = vunpack.c.l.b16 %v605
      %v1900 = vunpack.c.h.b16 %v605
      %v1901 = vunpack.c.l.b16 %v606
      %v1902 = vunpack.c.l.b16 %v607
      %v1903 = vunpack.c.h.b16 %v607
      %v1904 = vunpack.c.l.b16 %v608
      %v1905 = vunpack.c.l.b16 %v609
      %v1906 = vunpack.c.h.b16 %v609
      %v1907 = vunpack.c.l.b16 %v610
      %v1908 = vunpack.c.l.b16 %v611
      %v1909 = vunpack.c.h.b16 %v611
      %v1910 = vunpack.c.l.b16 %v612
      %v1911 = vunpack.c.l.b16 %v613
      %v1912 = vunpack.c.h.b16 %v613
      %v1913 = vunpack.c.l.b16 %v614
      %v1914 = vunpack.c.l.b16 %v615
      %v1915 = vunpack.c.h.b16 %v615
      %v1916 = vunpack.c.l.b16 %v616
      %v1917 = vunpack.c.l.b16 %v617
      %v1918 = vunpack.c.h.b16 %v617
      %v1919 = vunpack.c.l.b16 %v618
      %v1920 = vunpack.c.l.b16 %v619
      %v1921 = vunpack.c.h.b16 %v619
      %v1922 = vunpack.c.l.b16 %v620
      %v1923 = vunpack.c.l.b16 %v621
      %v1924 = vunpack.c.h.b16 %v621
      %v1925 = vunpack.c.l.b16 %v622
      %v1926 = vunpack.c.l.b16 %v623
      %v1927 = vunpack.c.h.b16 %v623
      %v1928 = vunpack.c.l.b16 %v624
      %v1929 = vunpack.c.l.b16 %v625
      %v1930 = vunpack.c.h.b16 %v625
      %v1931 = vunpack.c.l.b16 %v626
      %v1932 = vunpack.c.l.b16 %v627
      %v1933 = vunpack.c.h.b16 %v627
      %v1934 = vunpack.c.l.b16 %v628
      %v1935 = vunpack.c.l.b16 %v629
      %v1936 = vunpack.c.h.b16 %v629
      %v1937 = vunpack.c.l.b16 %v630
      %v1938 = vunpack.c.l.b16 %v631
      %v1939 = vunpack.c.h.b16 %v631
      %v1940 = vunpack.c.l.b16 %v632
      %v1941 = vunpack.c.l.b16 %v633
      %v1942 = vunpack.c.h.b16 %v633
      %v1943 = vunpack.c.l.b16 %v634
      %v1944 = vunpack.c.l.b16 %v635
      %v1945 = vunpack.c.h.b16 %v635
      %v1946 = vunpack.c.l.b16 %v636
      %v1947 = vunpack.c.l.b16 %v637
      %v1948 = vunpack.c.h.b16 %v637
      %v1949 = vunpack.c.l.b16 %v638
      %v1950 = vunpack.c.l.b16 %v639
      %v1951 = vunpack.c.h.b16 %v639
      %v1952 = vunpack.c.l.b16 %v640
      %v1953 = vunpack.c.l.b16 %v641
      %v1954 = vunpack.c.h.b16 %v641
      %v1955 = vunpack.c.l.b16 %v642
      %v1956 = vunpack.c.l.b16 %v643
      %v1957 = vunpack.c.h.b16 %v643
      %v1958 = vunpack.c.l.b16 %v644
      %v1959 = vunpack.c.l.b16 %v645
      %v1960 = vunpack.c.h.b16 %v645
      %v1961 = vunpack.c.l.b16 %v646
      %v1962 = vunpack.c.l.b16 %v647
      %v1963 = vunpack.c.h.b16 %v647
      %v1964 = vunpack.c.l.b16 %v648
      %v1965 = vunpack.c.l.b16 %v649
      %v1966 = vunpack.c.h.b16 %v649
      %v1967 = vunpack.c.l.b16 %v650
      %v1968 = vunpack.c.l.b16 %v651
      %v1969 = vunpack.c.h.b16 %v651
      %v1970 = vunpack.c.l.b16 %v652
      %v1971 = vunpack.c.l.b16 %v653
      %v1972 = vunpack.c.h.b16 %v653
      %v1973 = vunpack.c.l.b16 %v654
      %v1974 = vunpack.c.l.b16 %v655
      %v1975 = vunpack.c.h.b16 %v655
      %v1976 = vunpack.c.l.b16 %v656
      %v1977 = vunpack.c.l.b16 %v657
      %v1978 = vunpack.c.h.b16 %v657
      %v1979 = vunpack.c.l.b16 %v658
      %v1980 = vunpack.c.l.b16 %v659
      %v1981 = vunpack.c.h.b16 %v659
      %v1982 = vunpack.c.l.b16 %v660
      %v1983 = vunpack.c.l.b16 %v661
      %v1984 = vunpack.c.h.b16 %v661
      %v1985 = vunpack.c.l.b16 %v662
      %v1986 = vunpack.c.l.b16 %v663
      %v1987 = vunpack.c.h.b16 %v663
      %v1988 = vunpack.c.l.b16 %v664
      %v1989 = vunpack.c.l.b16 %v665
      %v1990 = vunpack.c.h.b16 %v665
      %v1991 = vunpack.c.l.b16 %v666
      %v1992 = vunpack.c.l.b16 %v667
      %v1993 = vunpack.c.h.b16 %v667
      %v1994 = vunpack.c.l.b16 %v668
      %v1995 = vunpack.c.l.b16 %v669
      %v1996 = vunpack.c.h.b16 %v669
      %v1997 = vunpack.c.l.b16 %v670
      %v1998 = vunpack.c.l.b16 %v671
      %v1999 = vunpack.c.h.b16 %v671
      %v2000 = vunpack.c.l.b16 %v672
      %v2001 = vunpack.c.l.b16 %v673
      %v2002 = vunpack.c.h.b16 %v673
      %v2003 = vunpack.c.l.b16 %v674
      %v2004 = vunpack.c.l.b16 %v675
      %v2005 = vunpack.c.h.b16 %v675
      %v2006 = vunpack.c.l.b16 %v676
      %v2007 = vunpack.c.l.b16 %v677
      %v2008 = vunpack.c.h.b16 %v677
      %v2009 = vunpack.c.l.b16 %v678
      %v2010 = vunpack.c.l.b16 %v679
      %v2011 = vunpack.c.h.b16 %v679
      %v2012 = vunpack.c.l.b16 %v680
      %v2013 = vunpack.c.l.b16 %v681
      %v2014 = vunpack.c.h.b16 %v681
      %v2015 = vunpack.c.l.b16 %v682
      %v2016 = vunpack.c.l.b16 %v683
      %v2017 = vunpack.c.h.b16 %v683
      %v2018 = vunpack.c.l.b16 %v684
      %v2019 = vunpack.c.l.b16 %v685
      %v2020 = vunpack.c.h.b16 %v685
      %v2021 = vunpack.c.l.b16 %v686
      %v2022 = vpack.c.b16 %v1257, %v1254
      %v2023 = vpack.c.b16 %v1258, %v1255
      %v2024 = vpack.c.b16 %v1259, %v1256
      %v2025 = vpack.c.b16 %v1263, %v1260
      %v2026 = vpack.c.b16 %v1264, %v1261
      %v2027 = vpack.c.b16 %v1265, %v1262
      %v2028 = vpack.c.b16 %v1269, %v1266
      %v2029 = vpack.c.b16 %v1270, %v1267
      %v2030 = vpack.c.b16 %v1271, %v1268
      %v2031 = vpack.c.b16 %v1275, %v1272
      %v2032 = vpack.c.b16 %v1276, %v1273
      %v2033 = vpack.c.b16 %v1277, %v1274
      %v2034 = vpack.c.b16 %v1281, %v1278
      %v2035 = vpack.c.b16 %v1282, %v1279
      %v2036 = vpack.c.b16 %v1283, %v1280
      %v2037 = vpack.c.b16 %v1287, %v1284
      %v2038 = vpack.c.b16 %v1288, %v1285
      %v2039 = vpack.c.b16 %v1289, %v1286
      %v2040 = vpack.c.b16 %v1293, %v1290
      %v2041 = vpack.c.b16 %v1294, %v1291
      %v2042 = vpack.c.b16 %v1295, %v1292
      %v2043 = vpack.c.b16 %v1299, %v1296
      %v2044 = vpack.c.b16 %v1300, %v1297
      %v2045 = vpack.c.b16 %v1301, %v1298
      %v2046 = vpack.c.b16 %v1305, %v1302
      %v2047 = vpack.c.b16 %v1306, %v1303
      %v2048 = vpack.c.b16 %v1307, %v1304
      %v2049 = vpack.c.b16 %v1311, %v1308
      %v2050 = vpack.c.b16 %v1312, %v1309
      %v2051 = vpack.c.b16 %v1313, %v1310
      %v2052 = vpack.c.b16 %v1317, %v1314
      %v2053 = vpack.c.b16 %v1318, %v1315
      %v2054 = vpack.c.b16 %v1319, %v1316
      %v2055 = vpack.c.b16 %v1323, %v1320
      %v2056 = vpack.c.b16 %v1324, %v1321
      %v2057 = vpack.c.b16 %v1325, %v1322
      %v2058 = vpack.c.b16 %v1329, %v1326
      %v2059 = vpack.c.b16 %v1330, %v1327
      %v2060 = vpack.c.b16 %v1331, %v1328
      %v2061 = vpack.c.b16 %v1335, %v1332
      %v2062 = vpack.c.b16 %v1336, %v1333
      %v2063 = vpack.c.b16 %v1337, %v1334
      %v2064 = vpack.c.b16 %v1341, %v1338
      %v2065 = vpack.c.b16 %v1342, %v1339
      %v2066 = vpack.c.b16 %v1343, %v1340
      %v2067 = vpack.c.b16 %v1347, %v1344
      %v2068 = vpack.c.b16 %v1348, %v1345
      %v2069 = vpack.c.b16 %v1349, %v1346
      %v2070 = vpack.c.b16 %v1353, %v1350
      %v2071 = vpack.c.b16 %v1354, %v1351
      %v2072 = vpack.c.b16 %v1355, %v1352
      %v2073 = vpack.c.b16 %v1359, %v1356
      %v2074 = vpack.c.b16 %v1360, %v1357
      %v2075 = vpack.c.b16 %v1361, %v1358
      %v2076 = vpack.c.b16 %v1365, %v1362
      %v2077 = vpack.c.b16 %v1366, %v1363
      %v2078 = vpack.c.b16 %v1367, %v1364
      %v2079 = vpack.c.b16 %v1371, %v1368
      %v2080 = vpack.c.b16 %v1372, %v1369
      %v2081 = vpack.c.b16 %v1373, %v1370
      %v2082 = vpack.c.b16 %v1377, %v1374
      %v2083 = vpack.c.b16 %v1378, %v1375
      %v2084 = vpack.c.b16 %v1379, %v1376
      %v2085 = vpack.c.b16 %v1383, %v1380
      %v2086 = vpack.c.b16 %v1384, %v1381
      %v2087 = vpack.c.b16 %v1385, %v1382
      %v2088 = vpack.c.b16 %v1389, %v1386
      %v2089 = vpack.c.b16 %v1390, %v1387
      %v2090 = vpack.c.b16 %v1391, %v1388
      %v2091 = vpack.c.b16 %v1395, %v1392
      %v2092 = vpack.c.b16 %v1396, %v1393
      %v2093 = vpack.c.b16 %v1397, %v1394
      %v2094 = vpack.c.b16 %v1401, %v1398
      %v2095 = vpack.c.b16 %v1402, %v1399
      %v2096 = vpack.c.b16 %v1403, %v1400
      %v2097 = vpack.c.b16 %v1407, %v1404
      %v2098 = vpack.c.b16 %v1408, %v1405
      %v2099 = vpack.c.b16 %v1409, %v1406
      %v2100 = vpack.c.b16 %v1413, %v1410
      %v2101 = vpack.c.b16 %v1414, %v1411
      %v2102 = vpack.c.b16 %v1415, %v1412
      %v2103 = vpack.c.b16 %v1419, %v1416
      %v2104 = vpack.c.b16 %v1420, %v1417
      %v2105 = vpack.c.b16 %v1421, %v1418
      %v2106 = vpack.c.b16 %v1425, %v1422
      %v2107 = vpack.c.b16 %v1426, %v1423
      %v2108 = vpack.c.b16 %v1427, %v1424
      %v2109 = vpack.c.b16 %v1431, %v1428
      %v2110 = vpack.c.b16 %v1432, %v1429
      %v2111 = vpack.c.b16 %v1433, %v1430
      %v2112 = vpack.c.b16 %v1437, %v1434
      %v2113 = vpack.c.b16 %v1438, %v1435
      %v2114 = vpack.c.b16 %v1439, %v1436
      %v2115 = vpack.c.b16 %v1443, %v1440
      %v2116 = vpack.c.b16 %v1444, %v1441
      %v2117 = vpack.c.b16 %v1445, %v1442
      %v2118 = vpack.c.b16 %v1449, %v1446
      %v2119 = vpack.c.b16 %v1450, %v1447
      %v2120 = vpack.c.b16 %v1451, %v1448
      %v2121 = vpack.c.b16 %v1455, %v1452
      %v2122 = vpack.c.b16 %v1456, %v1453
      %v2123 = vpack.c.b16 %v1457, %v1454
      %v2124 = vpack.c.b16 %v1461, %v1458
      %v2125 = vpack.c.b16 %v1462, %v1459
      %v2126 = vpack.c.b16 %v1463, %v1460
      %v2127 = vpack.c.b16 %v1467, %v1464
      %v2128 = vpack.c.b16 %v1468, %v1465
      %v2129 = vpack.c.b16 %v1469, %v1466
      %v2130 = vpack.c.b16 %v1473, %v1470
      %v2131 = vpack.c.b16 %v1474, %v1471
      %v2132 = vpack.c.b16 %v1475, %v1472
      %v2133 = vpack.c.b16 %v1479, %v1476
      %v2134 = vpack.c.b16 %v1480, %v1477
      %v2135 = vpack.c.b16 %v1481, %v1478
      %v2136 = vpack.c.b16 %v1485, %v1482
      %v2137 = vpack.c.b16 %v1486, %v1483
      %v2138 = vpack.c.b16 %v1487, %v1484
      %v2139 = vpack.c.b16 %v1491, %v1488
      %v2140 = vpack.c.b16 %v1492, %v1489
      %v2141 = vpack.c.b16 %v1493, %v1490
      %v2142 = vpack.c.b16 %v1497, %v1494
      %v2143 = vpack.c.b16 %v1498, %v1495
      %v2144 = vpack.c.b16 %v1499, %v1496
      %v2145 = vpack.c.b16 %v1503, %v1500
      %v2146 = vpack.c.b16 %v1504, %v1501
      %v2147 = vpack.c.b16 %v1505, %v1502
      %v2148 = vpack.c.b16 %v1509, %v1506
      %v2149 = vpack.c.b16 %v1510, %v1507
      %v2150 = vpack.c.b16 %v1511, %v1508
      %v2151 = vpack.c.b16 %v1515, %v1512
      %v2152 = vpack.c.b16 %v1516, %v1513
      %v2153 = vpack.c.b16 %v1517, %v1514
      %v2154 = vpack.c.b16 %v1521, %v1518
      %v2155 = vpack.c.b16 %v1522, %v1519
      %v2156 = vpack.c.b16 %v1523, %v1520
      %v2157 = vpack.c.b16 %v1527, %v1524
      %v2158 = vpack.c.b16 %v1528, %v1525
      %v2159 = vpack.c.b16 %v1529, %v1526
      %v2160 = vpack.c.b16 %v1533, %v1530
      %v2161 = vpack.c.b16 %v1534, %v1531
      %v2162 = vpack.c.b16 %v1535, %v1532
      %v2163 = vpack.c.b16 %v1539, %v1536
      %v2164 = vpack.c.b16 %v1540, %v1537
      %v2165 = vpack.c.b16 %v1541, %v1538
      %v2166 = vpack.c.b16 %v1545, %v1542
      %v2167 = vpack.c.b16 %v1546, %v1543
      %v2168 = vpack.c.b16 %v1547, %v1544
      %v2169 = vpack.c.b16 %v1551, %v1548
      %v2170 = vpack.c.b16 %v1552, %v1549
      %v2171 = vpack.c.b16 %v1553, %v1550
      %v2172 = vpack.c.b16 %v1557, %v1554
      %v2173 = vpack.c.b16 %v1558, %v1555
      %v2174 = vpack.c.b16 %v1559, %v1556
      %v2175 = vpack.c.b16 %v1563, %v1560
      %v2176 = vpack.c.b16 %v1564, %v1561
      %v2177 = vpack.c.b16 %v1565, %v1562
      %v2178 = vpack.c.b16 %v1569, %v1566
      %v2179 = vpack.c.b16 %v1570, %v1567
      %v2180 = vpack.c.b16 %v1571, %v1568
      %v2181 = vpack.c.b16 %v1575, %v1572
      %v2182 = vpack.c.b16 %v1576, %v1573
      %v2183 = vpack.c.b16 %v1577, %v1574
      %v2184 = vpack.c.b16 %v1581, %v1578
      %v2185 = vpack.c.b16 %v1582, %v1579
      %v2186 = vpack.c.b16 %v1583, %v1580
      %v2187 = vpack.c.b16 %v1587, %v1584
      %v2188 = vpack.c.b16 %v1588, %v1585
      %v2189 = vpack.c.b16 %v1589, %v1586
      %v2190 = vpack.c.b16 %v1593, %v1590
      %v2191 = vpack.c.b16 %v1594, %v1591
      %v2192 = vpack.c.b16 %v1595, %v1592
      %v2193 = vpack.c.b16 %v1599, %v1596
      %v2194 = vpack.c.b16 %v1600, %v1597
      %v2195 = vpack.c.b16 %v1601, %v1598
      %v2196 = vpack.c.b16 %v1605, %v1602
      %v2197 = vpack.c.b16 %v1606, %v1603
      %v2198 = vpack.c.b16 %v1607, %v1604
      %v2199 = vpack.c.b16 %v1611, %v1608
      %v2200 = vpack.c.b16 %v1612, %v1609
      %v2201 = vpack.c.b16 %v1613, %v1610
      %v2202 = vpack.c.b16 %v1617, %v1614
      %v2203 = vpack.c.b16 %v1618, %v1615
      %v2204 = vpack.c.b16 %v1619, %v1616
      %v2205 = vpack.c.b16 %v1623, %v1620
      %v2206 = vpack.c.b16 %v1624, %v1621
      %v2207 = vpack.c.b16 %v1625, %v1622
      %v2208 = vpack.c.b16 %v1629, %v1626
      %v2209 = vpack.c.b16 %v1630, %v1627
      %v2210 = vpack.c.b16 %v1631, %v1628
      %v2211 = vpack.c.b16 %v1635, %v1632
      %v2212 = vpack.c.b16 %v1636, %v1633
      %v2213 = vpack.c.b16 %v1637, %v1634
      %v2214 = vpack.c.b16 %v1641, %v1638
      %v2215 = vpack.c.b16 %v1642, %v1639
      %v2216 = vpack.c.b16 %v1643, %v1640
      %v2217 = vpack.c.b16 %v1647, %v1644
      %v2218 = vpack.c.b16 %v1648, %v1645
      %v2219 = vpack.c.b16 %v1649, %v1646
      %v2220 = vpack.c.b16 %v1653, %v1650
      %v2221 = vpack.c.b16 %v1654, %v1651
      %v2222 = vpack.c.b16 %v1655, %v1652
      %v2223 = vpack.c.b16 %v1659, %v1656
      %v2224 = vpack.c.b16 %v1660, %v1657
      %v2225 = vpack.c.b16 %v1661, %v1658
      %v2226 = vpack.c.b16 %v1665, %v1662
      %v2227 = vpack.c.b16 %v1666, %v1663
      %v2228 = vpack.c.b16 %v1667, %v1664
      %v2229 = vpack.c.b16 %v1671, %v1668
      %v2230 = vpack.c.b16 %v1672, %v1669
      %v2231 = vpack.c.b16 %v1673, %v1670
      %v2232 = vpack.c.b16 %v1677, %v1674
      %v2233 = vpack.c.b16 %v1678, %v1675
      %v2234 = vpack.c.b16 %v1679, %v1676
      %v2235 = vpack.c.b16 %v1683, %v1680
      %v2236 = vpack.c.b16 %v1684, %v1681
      %v2237 = vpack.c.b16 %v1685, %v1682
      %v2238 = vpack.c.b16 %v1689, %v1686
      %v2239 = vpack.c.b16 %v1690, %v1687
      %v2240 = vpack.c.b16 %v1691, %v1688
      %v2241 = vpack.c.b16 %v1695, %v1692
      %v2242 = vpack.c.b16 %v1696, %v1693
      %v2243 = vpack.c.b16 %v1697, %v1694
      %v2244 = vpack.c.b16 %v1701, %v1698
      %v2245 = vpack.c.b16 %v1702, %v1699
      %v2246 = vpack.c.b16 %v1703, %v1700
      %v2247 = vpack.c.b16 %v1707, %v1704
      %v2248 = vpack.c.b16 %v1708, %v1705
      %v2249 = vpack.c.b16 %v1709, %v1706
      %v2250 = vpack.c.b16 %v1713, %v1710
      %v2251 = vpack.c.b16 %v1714, %v1711
      %v2252 = vpack.c.b16 %v1715, %v1712
      %v2253 = vpack.c.b16 %v1719, %v1716
      %v2254 = vpack.c.b16 %v1720, %v1717
      %v2255 = vpack.c.b16 %v1721, %v1718
      %v2256 = vpack.c.b16 %v1725, %v1722
      %v2257 = vpack.c.b16 %v1726, %v1723
      %v2258 = vpack.c.b16 %v1727, %v1724
      %v2259 = vpack.c.b16 %v1731, %v1728
      %v2260 = vpack.c.b16 %v1732, %v1729
      %v2261 = vpack.c.b16 %v1733, %v1730
      %v2262 = vpack.c.b16 %v1737, %v1734
      %v2263 = vpack.c.b16 %v1738, %v1735
      %v2264 = vpack.c.b16 %v1739, %v1736
      %v2265 = vpack.c.b16 %v1743, %v1740
      %v2266 = vpack.c.b16 %v1744, %v1741
      %v2267 = vpack.c.b16 %v1745, %v1742
      %v2268 = vpack.c.b16 %v1749, %v1746
      %v2269 = vpack.c.b16 %v1750, %v1747
      %v2270 = vpack.c.b16 %v1751, %v1748
      %v2271 = vpack.c.b16 %v1755, %v1752
      %v2272 = vpack.c.b16 %v1756, %v1753
      %v2273 = vpack.c.b16 %v1757, %v1754
      %v2274 = vpack.c.b16 %v1761, %v1758
      %v2275 = vpack.c.b16 %v1762, %v1759
      %v2276 = vpack.c.b16 %v1763, %v1760
      %v2277 = vpack.c.b16 %v1767, %v1764
      %v2278 = vpack.c.b16 %v1768, %v1765
      %v2279 = vpack.c.b16 %v1769, %v1766
      %v2280 = vpack.c.b16 %v1773, %v1770
      %v2281 = vpack.c.b16 %v1774, %v1771
      %v2282 = vpack.c.b16 %v1775, %v1772
      %v2283 = vpack.c.b16 %v1779, %v1776
      %v2284 = vpack.c.b16 %v1780, %v1777
      %v2285 = vpack.c.b16 %v1781, %v1778
      %v2286 = vpack.c.b16 %v1785, %v1782
      %v2287 = vpack.c.b16 %v1786, %v1783
      %v2288 = vpack.c.b16 %v1787, %v1784
      %v2289 = vpack.c.b16 %v1791, %v1788
      %v2290 = vpack.c.b16 %v1792, %v1789
      %v2291 = vpack.c.b16 %v1793, %v1790
      %v2292 = vpack.c.b16 %v1797, %v1794
      %v2293 = vpack.c.b16 %v1798, %v1795
      %v2294 = vpack.c.b16 %v1799, %v1796
      %v2295 = vpack.c.b16 %v1803, %v1800
      %v2296 = vpack.c.b16 %v1804, %v1801
      %v2297 = vpack.c.b16 %v1805, %v1802
      %v2298 = vpack.c.b16 %v1809, %v1806
      %v2299 = vpack.c.b16 %v1810, %v1807
      %v2300 = vpack.c.b16 %v1811, %v1808
      %v2301 = vpack.c.b16 %v1815, %v1812
      %v2302 = vpack.c.b16 %v1816, %v1813
      %v2303 = vpack.c.b16 %v1817, %v1814
      %v2304 = vpack.c.b16 %v1821, %v1818
      %v2305 = vpack.c.b16 %v1822, %v1819
      %v2306 = vpack.c.b16 %v1823, %v1820
      %v2307 = vpack.c.b16 %v1827, %v1824
      %v2308 = vpack.c.b16 %v1828, %v1825
      %v2309 = vpack.c.b16 %v1829, %v1826
      %v2310 = vpack.c.b16 %v1833, %v1830
      %v2311 = vpack.c.b16 %v1834, %v1831
      %v2312 = vpack.c.b16 %v1835, %v1832
      %v2313 = vpack.c.b16 %v1839, %v1836
      %v2314 = vpack.c.b16 %v1840, %v1837
      %v2315 = vpack.c.b16 %v1841, %v1838
      %v2316 = vpack.c.b16 %v1845, %v1842
      %v2317 = vpack.c.b16 %v1846, %v1843
      %v2318 = vpack.c.b16 %v1847, %v1844
      %v2319 = vpack.c.b16 %v1851, %v1848
      %v2320 = vpack.c.b16 %v1852, %v1849
      %v2321 = vpack.c.b16 %v1853, %v1850
      %v2322 = vpack.c.b16 %v1857, %v1854
      %v2323 = vpack.c.b16 %v1858, %v1855
      %v2324 = vpack.c.b16 %v1859, %v1856
      %v2325 = vpack.c.b16 %v1863, %v1860
      %v2326 = vpack.c.b16 %v1864, %v1861
      %v2327 = vpack.c.b16 %v1865, %v1862
      %v2328 = vpack.c.b16 %v1869, %v1866
      %v2329 = vpack.c.b16 %v1870, %v1867
      %v2330 = vpack.c.b16 %v1871, %v1868
      %v2331 = vpack.c.b16 %v1875, %v1872
      %v2332 = vpack.c.b16 %v1876, %v1873
      %v2333 = vpack.c.b16 %v1877, %v1874
      %v2334 = vpack.c.b16 %v1881, %v1878
      %v2335 = vpack.c.b16 %v1882, %v1879
      %v2336 = vpack.c.b16 %v1883, %v1880
      %v2337 = vpack.c.b16 %v1887, %v1884
      %v2338 = vpack.c.b16 %v1888, %v1885
      %v2339 = vpack.c.b16 %v1889, %v1886
      %v2340 = vpack.c.b16 %v1893, %v1890
      %v2341 = vpack.c.b16 %v1894, %v1891
      %v2342 = vpack.c.b16 %v1895, %v1892
      %v2343 = vpack.c.b16 %v1899, %v1896
      %v2344 = vpack.c.b16 %v1900, %v1897
      %v2345 = vpack.c.b16 %v1901, %v1898
      %v2346 = vpack.c.b16 %v1905, %v1902
      %v2347 = vpack.c.b16 %v1906, %v1903
      %v2348 = vpack.c.b16 %v1907, %v1904
      %v2349 = vpack.c.b16 %v1911, %v1908
      %v2350 = vpack.c.b16 %v1912, %v1909
      %v2351 = vpack.c.b16 %v1913, %v1910
      %v2352 = vpack.c.b16 %v1917, %v1914
      %v2353 = vpack.c.b16 %v1918, %v1915
      %v2354 = vpack.c.b16 %v1919, %v1916
      %v2355 = vpack.c.b16 %v1923, %v1920
      %v2356 = vpack.c.b16 %v1924, %v1921
      %v2357 = vpack.c.b16 %v1925, %v1922
      %v2358 = vpack.c.b16 %v1929, %v1926
      %v2359 = vpack.c.b16 %v1930, %v1927
      %v2360 = vpack.c.b16 %v1931, %v1928
      %v2361 = vpack.c.b16 %v1935, %v1932
      %v2362 = vpack.c.b16 %v1936, %v1933
      %v2363 = vpack.c.b16 %v1937, %v1934
      %v2364 = vpack.c.b16 %v1941, %v1938
      %v2365 = vpack.c.b16 %v1942, %v1939
      %v2366 = vpack.c.b16 %v1943, %v1940
      %v2367 = vpack.c.b16 %v1947, %v1944
      %v2368 = vpack.c.b16 %v1948, %v1945
      %v2369 = vpack.c.b16 %v1949, %v1946
      %v2370 = vpack.c.b16 %v1953, %v1950
      %v2371 = vpack.c.b16 %v1954, %v1951
      %v2372 = vpack.c.b16 %v1955, %v1952
      %v2373 = vpack.c.b16 %v1959, %v1956
      %v2374 = vpack.c.b16 %v1960, %v1957
      %v2375 = vpack.c.b16 %v1961, %v1958
      %v2376 = vpack.c.b16 %v1965, %v1962
      %v2377 = vpack.c.b16 %v1966, %v1963
      %v2378 = vpack.c.b16 %v1967, %v1964
      %v2379 = vpack.c.b16 %v1971, %v1968
      %v2380 = vpack.c.b16 %v1972, %v1969
      %v2381 = vpack.c.b16 %v1973, %v1970
      %v2382 = vpack.c.b16 %v1977, %v1974
      %v2383 = vpack.c.b16 %v1978, %v1975
      %v2384 = vpack.c.b16 %v1979, %v1976
      %v2385 = vpack.c.b16 %v1983, %v1980
      %v2386 = vpack.c.b16 %v1984, %v1981
      %v2387 = vpack.c.b16 %v1985, %v1982
      %v2388 = vpack.c.b16 %v1989, %v1986
      %v2389 = vpack.c.b16 %v1990, %v1987
      %v2390 = vpack.c.b16 %v1991, %v1988
      %v2391 = vpack.c.b16 %v1995, %v1992
      %v2392 = vpack.c.b16 %v1996, %v1993
      %v2393 = vpack.c.b16 %v1997, %v1994
      %v2394 = vpack.c.b16 %v2001, %v1998
      %v2395 = vpack.c.b16 %v2002, %v1999
      %v2396 = vpack.c.b16 %v2003, %v2000
      %v2397 = vpack.c.b16 %v2007, %v2004
      %v2398 = vpack.c.b16 %v2008, %v2005
      %v2399 = vpack.c.b16 %v2009, %v2006
      %v2400 = vpack.c.b16 %v2013, %v2010
      %v2401 = vpack.c.b16 %v2014, %v2011
      %v2402 = vpack.c.b16 %v2015, %v2012
      %v2403 = vpack.c.b16 %v2019, %v2016
      %v2404 = vpack.c.b16 %v2020, %v2017
      %v2405 = vpack.c.b16 %v2021, %v2018
      %v2838 = vunpack.c.l.b16 %v687
      %v2839 = vunpack.c.l.b16 %v688
      %v2840 = vunpack.c.l.b16 %v689
      %v2841 = vunpack.c.l.b16 %v690
      %v2842 = vunpack.c.l.b16 %v691
      %v2843 = vunpack.c.l.b16 %v692
      %v2844 = vunpack.c.l.b16 %v693
      %v2845 = vunpack.c.l.b16 %v694
      %v2846 = vunpack.c.l.b16 %v695
      %v2847 = vunpack.c.l.b16 %v696
      %v2848 = vunpack.c.l.b16 %v697
      %v2849 = vunpack.c.l.b16 %v698
      %v2850 = vunpack.c.l.b16 %v699
      %v2851 = vunpack.c.l.b16 %v700
      %v2852 = vunpack.c.l.b16 %v701
      %v2853 = vunpack.c.l.b16 %v702
      %v2854 = vunpack.c.l.b16 %v703
      %v2855 = vunpack.c.l.b16 %v704
      %v2856 = vunpack.c.l.b16 %v705
      %v2857 = vunpack.c.l.b16 %v706
      %v2858 = vunpack.c.l.b16 %v707
      %v2859 = vunpack.c.l.b16 %v708
      %v2860 = vunpack.c.l.b16 %v709
      %v2861 = vunpack.c.l.b16 %v710
      %v2862 = vunpack.c.l.b16 %v711
      %v2863 = vunpack.c.l.b16 %v712
      %v2864 = vunpack.c.l.b16 %v713
      %v2865 = vunpack.c.l.b16 %v714
      %v2866 = vunpack.c.l.b16 %v715
      %v2867 = vunpack.c.l.b16 %v716
      %v2868 = vunpack.c.l.b16 %v717
      %v2869 = vunpack.c.l.b16 %v718
      %v2870 = vunpack.c.l.b16 %v719
      %v2871 = vunpack.c.l.b16 %v720
      %v2872 = vunpack.c.l.b16 %v721
      %v2873 = vunpack.c.l.b16 %v722
      %v2874 = vunpack.c.l.b16 %v723
      %v2875 = vunpack.c.l.b16 %v724
      %v2876 = vunpack.c.l.b16 %v725
      %v2877 = vunpack.c.l.b16 %v726
      %v2878 = vunpack.c.l.b16 %v727
      %v2879 = vunpack.c.l.b16 %v728
      %v2880 = vunpack.c.l.b16 %v729
      %v2881 = vunpack.c.l.b16 %v730
      %v2882 = vunpack.c.l.b16 %v731
      %v2883 = vunpack.c.l.b16 %v732
      %v2884 = vunpack.c.l.b16 %v733
      %v2885 = vunpack.c.l.b16 %v734
      %v2886 = vpack.c.b16 %v2839, %v2838
      %v2887 = vpack.c.b16 %v2841, %v2840
      %v2888 = vpack.c.b16 %v2843, %v2842
      %v2889 = vpack.c.b16 %v2845, %v2844
      %v2890 = vpack.c.b16 %v2847, %v2846
      %v2891 = vpack.c.b16 %v2849, %v2848
      %v2892 = vpack.c.b16 %v2851, %v2850
      %v2893 = vpack.c.b16 %v2853, %v2852
      %v2894 = vpack.c.b16 %v2855, %v2854
      %v2895 = vpack.c.b16 %v2857, %v2856
      %v2896 = vpack.c.b16 %v2859, %v2858
      %v2897 = vpack.c.b16 %v2861, %v2860
      %v2898 = vpack.c.b16 %v2863, %v2862
      %v2899 = vpack.c.b16 %v2865, %v2864
      %v2900 = vpack.c.b16 %v2867, %v2866
      %v2901 = vpack.c.b16 %v2869, %v2868
      %v2902 = vpack.c.b16 %v2871, %v2870
      %v2903 = vpack.c.b16 %v2873, %v2872
      %v2904 = vpack.c.b16 %v2875, %v2874
      %v2905 = vpack.c.b16 %v2877, %v2876
      %v2906 = vpack.c.b16 %v2879, %v2878
      %v2907 = vpack.c.b16 %v2881, %v2880
      %v2908 = vpack.c.b16 %v2883, %v2882
      %v2909 = vpack.c.b16 %v2885, %v2884
      %2934 = vmatprep.subr.bf16.mxu0 0
      %2935 = vmatpush1.bf16.msra.mxu0 %v2893
      %2936 = vmatprep.subr.bf16.mxu0 0
      %2937 = vmatpush1.bf16.msra.mxu0 %v2892
      %2938 = vmatprep.subr.bf16.mxu0 0
      %2939 = vmatpush1.bf16.msra.mxu0 %v2891
      %2940 = vmatprep.subr.bf16.mxu0 0
      %2941 = vmatpush1.bf16.msra.mxu0 %v2890
      %2942 = vmatprep.subr.bf16.mxu0 0
      %2943 = vmatpush1.bf16.msra.mxu0 %v2889
      %2944 = vmatprep.subr.bf16.mxu0 0
      %2945 = vmatpush1.bf16.msra.mxu0 %v2888
      %2946 = vmatprep.subr.bf16.mxu0 0
      %2947 = vmatpush1.bf16.msra.mxu0 %v2887
      %2948 = vmatprep.subr.bf16.mxu0 0
      %2949 = vmatpush1.bf16.msra.mxu0 %v2886
      %2950 = vmatprep.subr.bf16.mxu0 0
      %2951 = vmatpush2.bf16.msra.mxu0 %v2901
      %2952 = vmatprep.subr.bf16.mxu0 0
      %2953 = vmatpush2.bf16.msra.mxu0 %v2900
      %2954 = vmatprep.subr.bf16.mxu0 0
      %2955 = vmatpush2.bf16.msra.mxu0 %v2899
      %2956 = vmatprep.subr.bf16.mxu0 0
      %2957 = vmatpush2.bf16.msra.mxu0 %v2898
      %2958 = vmatprep.subr.bf16.mxu0 0
      %2959 = vmatpush2.bf16.msra.mxu0 %v2897
      %2960 = vmatprep.subr.bf16.mxu0 0
      %2961 = vmatpush2.bf16.msra.mxu0 %v2896
      %2962 = vmatprep.subr.bf16.mxu0 0
      %2963 = vmatpush2.bf16.msra.mxu0 %v2895
      %2964 = vmatprep.subr.bf16.mxu0 0
      %2965 = vmatpush2.bf16.msra.mxu0 %v2894
      %2966 = vmatprep.mubr.bf16.mxu0 %v2023
      %2967 = vmatmul.mubr.bf16.gmra.mxu0 %v2022
      %v2968 = vpop.f32.mrf.mxu0
      %v2969 = vadd.f32 %v740, %v2968
      %v2970 = vpop.f32.mrf.mxu0
      %v2971 = vpop.f32.mrf.mxu0
      %v2972 = vadd.f32 %v740, %v2971
      %v2973 = vpop.f32.mrf.mxu0
      %2974 = vmatprep.mubr.bf16.mxu0 %v2026
      %2975 = vmatmul.mubr.bf16.gmra.mxu0 %v2025
      %v2976 = vpop.f32.mrf.mxu0
      %v2977 = vadd.f32 %v740, %v2976
      %v2978 = vpop.f32.mrf.mxu0
      %v2979 = vpop.f32.mrf.mxu0
      %v2980 = vadd.f32 %v740, %v2979
      %v2981 = vpop.f32.mrf.mxu0
      %2982 = vmatprep.mubr.bf16.mxu0 %v2029
      %2983 = vmatmul.mubr.bf16.gmra.mxu0 %v2028
      %v2984 = vpop.f32.mrf.mxu0
      %v2985 = vadd.f32 %v740, %v2984
      %v2986 = vpop.f32.mrf.mxu0
      %v2987 = vpop.f32.mrf.mxu0
      %v2988 = vadd.f32 %v740, %v2987
      %v2989 = vpop.f32.mrf.mxu0
      %2990 = vmatprep.mubr.bf16.mxu0 %v2032
      %2991 = vmatmul.mubr.bf16.gmra.mxu0 %v2031
      %v2992 = vpop.f32.mrf.mxu0
      %v2993 = vadd.f32 %v740, %v2992
      %v2994 = vpop.f32.mrf.mxu0
      %v2995 = vpop.f32.mrf.mxu0
      %v2996 = vadd.f32 %v740, %v2995
      %v2997 = vpop.f32.mrf.mxu0
      %2998 = vmatprep.mubr.bf16.mxu0 %v2035
      %2999 = vmatmul.mubr.bf16.gmra.mxu0 %v2034
      %v3000 = vpop.f32.mrf.mxu0
      %v3001 = vadd.f32 %v740, %v3000
      %v3002 = vpop.f32.mrf.mxu0
      %v3003 = vpop.f32.mrf.mxu0
      %v3004 = vadd.f32 %v740, %v3003
      %v3005 = vpop.f32.mrf.mxu0
      %3006 = vmatprep.mubr.bf16.mxu0 %v2038
      %3007 = vmatmul.mubr.bf16.gmra.mxu0 %v2037
      %v3008 = vpop.f32.mrf.mxu0
      %v3009 = vadd.f32 %v740, %v3008
      %v3010 = vpop.f32.mrf.mxu0
      %v3011 = vpop.f32.mrf.mxu0
      %v3012 = vadd.f32 %v740, %v3011
      %v3013 = vpop.f32.mrf.mxu0
      %3014 = vmatprep.mubr.bf16.mxu0 %v2041
      %3015 = vmatmul.mubr.bf16.gmra.mxu0 %v2040
      %v3016 = vpop.f32.mrf.mxu0
      %v3017 = vadd.f32 %v740, %v3016
      %v3018 = vpop.f32.mrf.mxu0
      %v3019 = vpop.f32.mrf.mxu0
      %v3020 = vadd.f32 %v740, %v3019
      %v3021 = vpop.f32.mrf.mxu0
      %3022 = vmatprep.mubr.bf16.mxu0 %v2044
      %3023 = vmatmul.mubr.bf16.gmra.mxu0 %v2043
      %v3024 = vpop.f32.mrf.mxu0
      %v3025 = vadd.f32 %v740, %v3024
      %v3026 = vpop.f32.mrf.mxu0
      %v3027 = vpop.f32.mrf.mxu0
      %v3028 = vadd.f32 %v740, %v3027
      %v3029 = vpop.f32.mrf.mxu0
      %3030 = vmatprep.mubr.bf16.mxu0 %v2047
      %3031 = vmatmul.mubr.bf16.gmra.mxu0 %v2046
      %v3032 = vpop.f32.mrf.mxu0
      %v3033 = vadd.f32 %v740, %v3032
      %v3034 = vpop.f32.mrf.mxu0
      %v3035 = vpop.f32.mrf.mxu0
      %v3036 = vadd.f32 %v740, %v3035
      %v3037 = vpop.f32.mrf.mxu0
      %3038 = vmatprep.mubr.bf16.mxu0 %v2050
      %3039 = vmatmul.mubr.bf16.gmra.mxu0 %v2049
      %v3040 = vpop.f32.mrf.mxu0
      %v3041 = vadd.f32 %v740, %v3040
      %v3042 = vpop.f32.mrf.mxu0
      %v3043 = vpop.f32.mrf.mxu0
      %v3044 = vadd.f32 %v740, %v3043
      %v3045 = vpop.f32.mrf.mxu0
      %3046 = vmatprep.mubr.bf16.mxu0 %v2053
      %3047 = vmatmul.mubr.bf16.gmra.mxu0 %v2052
      %v3048 = vpop.f32.mrf.mxu0
      %v3049 = vadd.f32 %v740, %v3048
      %v3050 = vpop.f32.mrf.mxu0
      %v3051 = vpop.f32.mrf.mxu0
      %v3052 = vadd.f32 %v740, %v3051
      %v3053 = vpop.f32.mrf.mxu0
      %3054 = vmatprep.mubr.bf16.mxu0 %v2056
      %3055 = vmatmul.mubr.bf16.gmra.mxu0 %v2055
      %v3056 = vpop.f32.mrf.mxu0
      %v3057 = vadd.f32 %v740, %v3056
      %v3058 = vpop.f32.mrf.mxu0
      %v3059 = vpop.f32.mrf.mxu0
      %v3060 = vadd.f32 %v740, %v3059
      %v3061 = vpop.f32.mrf.mxu0
      %3062 = vmatprep.mubr.bf16.mxu0 %v2059
      %3063 = vmatmul.mubr.bf16.gmra.mxu0 %v2058
      %v3064 = vpop.f32.mrf.mxu0
      %v3065 = vadd.f32 %v740, %v3064
      %v3066 = vpop.f32.mrf.mxu0
      %v3067 = vpop.f32.mrf.mxu0
      %v3068 = vadd.f32 %v740, %v3067
      %v3069 = vpop.f32.mrf.mxu0
      %3070 = vmatprep.mubr.bf16.mxu0 %v2062
      %3071 = vmatmul.mubr.bf16.gmra.mxu0 %v2061
      %v3072 = vpop.f32.mrf.mxu0
      %v3073 = vadd.f32 %v740, %v3072
      %v3074 = vpop.f32.mrf.mxu0
      %v3075 = vpop.f32.mrf.mxu0
      %v3076 = vadd.f32 %v740, %v3075
      %v3077 = vpop.f32.mrf.mxu0
      %3078 = vmatprep.mubr.bf16.mxu0 %v2065
      %3079 = vmatmul.mubr.bf16.gmra.mxu0 %v2064
      %v3080 = vpop.f32.mrf.mxu0
      %v3081 = vadd.f32 %v740, %v3080
      %v3082 = vpop.f32.mrf.mxu0
      %v3083 = vpop.f32.mrf.mxu0
      %v3084 = vadd.f32 %v740, %v3083
      %v3085 = vpop.f32.mrf.mxu0
      %3086 = vmatprep.mubr.bf16.mxu0 %v2068
      %3087 = vmatmul.mubr.bf16.gmra.mxu0 %v2067
      %v3088 = vpop.f32.mrf.mxu0
      %v3089 = vadd.f32 %v740, %v3088
      %v3090 = vpop.f32.mrf.mxu0
      %v3091 = vpop.f32.mrf.mxu0
      %v3092 = vadd.f32 %v740, %v3091
      %v3093 = vpop.f32.mrf.mxu0
      %3094 = vmatprep.mubr.bf16.mxu0 %v2071
      %3095 = vmatmul.mubr.bf16.gmra.mxu0 %v2070
      %v3096 = vpop.f32.mrf.mxu0
      %v3097 = vadd.f32 %v740, %v3096
      %v3098 = vpop.f32.mrf.mxu0
      %v3099 = vpop.f32.mrf.mxu0
      %v3100 = vadd.f32 %v740, %v3099
      %v3101 = vpop.f32.mrf.mxu0
      %3102 = vmatprep.mubr.bf16.mxu0 %v2074
      %3103 = vmatmul.mubr.bf16.gmra.mxu0 %v2073
      %v3104 = vpop.f32.mrf.mxu0
      %v3105 = vadd.f32 %v740, %v3104
      %v3106 = vpop.f32.mrf.mxu0
      %v3107 = vpop.f32.mrf.mxu0
      %v3108 = vadd.f32 %v740, %v3107
      %v3109 = vpop.f32.mrf.mxu0
      %3110 = vmatprep.mubr.bf16.mxu0 %v2077
      %3111 = vmatmul.mubr.bf16.gmra.mxu0 %v2076
      %v3112 = vpop.f32.mrf.mxu0
      %v3113 = vadd.f32 %v740, %v3112
      %v3114 = vpop.f32.mrf.mxu0
      %v3115 = vpop.f32.mrf.mxu0
      %v3116 = vadd.f32 %v740, %v3115
      %v3117 = vpop.f32.mrf.mxu0
      %3118 = vmatprep.mubr.bf16.mxu0 %v2080
      %3119 = vmatmul.mubr.bf16.gmra.mxu0 %v2079
      %v3120 = vpop.f32.mrf.mxu0
      %v3121 = vadd.f32 %v740, %v3120
      %v3122 = vpop.f32.mrf.mxu0
      %v3123 = vpop.f32.mrf.mxu0
      %v3124 = vadd.f32 %v740, %v3123
      %v3125 = vpop.f32.mrf.mxu0
      %3126 = vmatprep.mubr.bf16.mxu0 %v2083
      %3127 = vmatmul.mubr.bf16.gmra.mxu0 %v2082
      %v3128 = vpop.f32.mrf.mxu0
      %v3129 = vadd.f32 %v740, %v3128
      %v3130 = vpop.f32.mrf.mxu0
      %v3131 = vpop.f32.mrf.mxu0
      %v3132 = vadd.f32 %v740, %v3131
      %v3133 = vpop.f32.mrf.mxu0
      %3134 = vmatprep.mubr.bf16.mxu0 %v2086
      %3135 = vmatmul.mubr.bf16.gmra.mxu0 %v2085
      %v3136 = vpop.f32.mrf.mxu0
      %v3137 = vadd.f32 %v740, %v3136
      %v3138 = vpop.f32.mrf.mxu0
      %v3139 = vpop.f32.mrf.mxu0
      %v3140 = vadd.f32 %v740, %v3139
      %v3141 = vpop.f32.mrf.mxu0
      %3142 = vmatprep.mubr.bf16.mxu0 %v2089
      %3143 = vmatmul.mubr.bf16.gmra.mxu0 %v2088
      %v3144 = vpop.f32.mrf.mxu0
      %v3145 = vadd.f32 %v740, %v3144
      %v3146 = vpop.f32.mrf.mxu0
      %v3147 = vpop.f32.mrf.mxu0
      %v3148 = vadd.f32 %v740, %v3147
      %v3149 = vpop.f32.mrf.mxu0
      %3150 = vmatprep.mubr.bf16.mxu0 %v2092
      %3151 = vmatmul.mubr.bf16.gmra.mxu0 %v2091
      %v3152 = vpop.f32.mrf.mxu0
      %v3153 = vadd.f32 %v740, %v3152
      %v3154 = vpop.f32.mrf.mxu0
      %v3155 = vpop.f32.mrf.mxu0
      %v3156 = vadd.f32 %v740, %v3155
      %v3157 = vpop.f32.mrf.mxu0
      %3158 = vmatprep.mubr.bf16.mxu0 %v2095
      %3159 = vmatmul.mubr.bf16.gmra.mxu0 %v2094
      %v3160 = vpop.f32.mrf.mxu0
      %v3161 = vadd.f32 %v740, %v3160
      %v3162 = vpop.f32.mrf.mxu0
      %v3163 = vpop.f32.mrf.mxu0
      %v3164 = vadd.f32 %v740, %v3163
      %v3165 = vpop.f32.mrf.mxu0
      %3166 = vmatprep.mubr.bf16.mxu0 %v2098
      %3167 = vmatmul.mubr.bf16.gmra.mxu0 %v2097
      %v3168 = vpop.f32.mrf.mxu0
      %v3169 = vadd.f32 %v740, %v3168
      %v3170 = vpop.f32.mrf.mxu0
      %v3171 = vpop.f32.mrf.mxu0
      %v3172 = vadd.f32 %v740, %v3171
      %v3173 = vpop.f32.mrf.mxu0
      %3174 = vmatprep.mubr.bf16.mxu0 %v2101
      %3175 = vmatmul.mubr.bf16.gmra.mxu0 %v2100
      %v3176 = vpop.f32.mrf.mxu0
      %v3177 = vadd.f32 %v740, %v3176
      %v3178 = vpop.f32.mrf.mxu0
      %v3179 = vpop.f32.mrf.mxu0
      %v3180 = vadd.f32 %v740, %v3179
      %v3181 = vpop.f32.mrf.mxu0
      %3182 = vmatprep.mubr.bf16.mxu0 %v2104
      %3183 = vmatmul.mubr.bf16.gmra.mxu0 %v2103
      %v3184 = vpop.f32.mrf.mxu0
      %v3185 = vadd.f32 %v740, %v3184
      %v3186 = vpop.f32.mrf.mxu0
      %v3187 = vpop.f32.mrf.mxu0
      %v3188 = vadd.f32 %v740, %v3187
      %v3189 = vpop.f32.mrf.mxu0
      %3190 = vmatprep.mubr.bf16.mxu0 %v2107
      %3191 = vmatmul.mubr.bf16.gmra.mxu0 %v2106
      %v3192 = vpop.f32.mrf.mxu0
      %v3193 = vadd.f32 %v740, %v3192
      %v3194 = vpop.f32.mrf.mxu0
      %v3195 = vpop.f32.mrf.mxu0
      %v3196 = vadd.f32 %v740, %v3195
      %v3197 = vpop.f32.mrf.mxu0
      %3198 = vmatprep.mubr.bf16.mxu0 %v2110
      %3199 = vmatmul.mubr.bf16.gmra.mxu0 %v2109
      %v3200 = vpop.f32.mrf.mxu0
      %v3201 = vadd.f32 %v740, %v3200
      %v3202 = vpop.f32.mrf.mxu0
      %v3203 = vpop.f32.mrf.mxu0
      %v3204 = vadd.f32 %v740, %v3203
      %v3205 = vpop.f32.mrf.mxu0
      %3206 = vmatprep.mubr.bf16.mxu0 %v2113
      %3207 = vmatmul.mubr.bf16.gmra.mxu0 %v2112
      %v3208 = vpop.f32.mrf.mxu0
      %v3209 = vadd.f32 %v740, %v3208
      %v3210 = vpop.f32.mrf.mxu0
      %v3211 = vpop.f32.mrf.mxu0
      %v3212 = vadd.f32 %v740, %v3211
      %v3213 = vpop.f32.mrf.mxu0
      %3214 = vmatprep.mubr.bf16.mxu0 %v2116
      %3215 = vmatmul.mubr.bf16.gmra.mxu0 %v2115
      %v3216 = vpop.f32.mrf.mxu0
      %v3217 = vadd.f32 %v740, %v3216
      %v3218 = vpop.f32.mrf.mxu0
      %v3219 = vpop.f32.mrf.mxu0
      %v3220 = vadd.f32 %v740, %v3219
      %v3221 = vpop.f32.mrf.mxu0
      %3222 = vmatprep.mubr.bf16.mxu0 %v2119
      %3223 = vmatmul.mubr.bf16.gmra.mxu0 %v2118
      %v3224 = vpop.f32.mrf.mxu0
      %v3225 = vadd.f32 %v740, %v3224
      %v3226 = vpop.f32.mrf.mxu0
      %v3227 = vpop.f32.mrf.mxu0
      %v3228 = vadd.f32 %v740, %v3227
      %v3229 = vpop.f32.mrf.mxu0
      %3230 = vmatprep.mubr.bf16.mxu0 %v2122
      %3231 = vmatmul.mubr.bf16.gmra.mxu0 %v2121
      %v3232 = vpop.f32.mrf.mxu0
      %v3233 = vadd.f32 %v740, %v3232
      %v3234 = vpop.f32.mrf.mxu0
      %v3235 = vpop.f32.mrf.mxu0
      %v3236 = vadd.f32 %v740, %v3235
      %v3237 = vpop.f32.mrf.mxu0
      %3238 = vmatprep.mubr.bf16.mxu0 %v2125
      %3239 = vmatmul.mubr.bf16.gmra.mxu0 %v2124
      %v3240 = vpop.f32.mrf.mxu0
      %v3241 = vadd.f32 %v740, %v3240
      %v3242 = vpop.f32.mrf.mxu0
      %v3243 = vpop.f32.mrf.mxu0
      %v3244 = vadd.f32 %v740, %v3243
      %v3245 = vpop.f32.mrf.mxu0
      %3246 = vmatprep.mubr.bf16.mxu0 %v2128
      %3247 = vmatmul.mubr.bf16.gmra.mxu0 %v2127
      %v3248 = vpop.f32.mrf.mxu0
      %v3249 = vadd.f32 %v740, %v3248
      %v3250 = vpop.f32.mrf.mxu0
      %v3251 = vpop.f32.mrf.mxu0
      %v3252 = vadd.f32 %v740, %v3251
      %v3253 = vpop.f32.mrf.mxu0
      %3254 = vmatprep.mubr.bf16.mxu0 %v2131
      %3255 = vmatmul.mubr.bf16.gmra.mxu0 %v2130
      %v3256 = vpop.f32.mrf.mxu0
      %v3257 = vadd.f32 %v740, %v3256
      %v3258 = vpop.f32.mrf.mxu0
      %v3259 = vpop.f32.mrf.mxu0
      %v3260 = vadd.f32 %v740, %v3259
      %v3261 = vpop.f32.mrf.mxu0
      %3262 = vmatprep.mubr.bf16.mxu0 %v2134
      %3263 = vmatmul.mubr.bf16.gmra.mxu0 %v2133
      %v3264 = vpop.f32.mrf.mxu0
      %v3265 = vadd.f32 %v740, %v3264
      %v3266 = vpop.f32.mrf.mxu0
      %v3267 = vpop.f32.mrf.mxu0
      %v3268 = vadd.f32 %v740, %v3267
      %v3269 = vpop.f32.mrf.mxu0
      %3270 = vmatprep.mubr.bf16.mxu0 %v2137
      %3271 = vmatmul.mubr.bf16.gmra.mxu0 %v2136
      %v3272 = vpop.f32.mrf.mxu0
      %v3273 = vadd.f32 %v740, %v3272
      %v3274 = vpop.f32.mrf.mxu0
      %v3275 = vpop.f32.mrf.mxu0
      %v3276 = vadd.f32 %v740, %v3275
      %v3277 = vpop.f32.mrf.mxu0
      %3278 = vmatprep.mubr.bf16.mxu0 %v2140
      %3279 = vmatmul.mubr.bf16.gmra.mxu0 %v2139
      %v3280 = vpop.f32.mrf.mxu0
      %v3281 = vadd.f32 %v740, %v3280
      %v3282 = vpop.f32.mrf.mxu0
      %v3283 = vpop.f32.mrf.mxu0
      %v3284 = vadd.f32 %v740, %v3283
      %v3285 = vpop.f32.mrf.mxu0
      %3286 = vmatprep.mubr.bf16.mxu0 %v2143
      %3287 = vmatmul.mubr.bf16.gmra.mxu0 %v2142
      %v3288 = vpop.f32.mrf.mxu0
      %v3289 = vadd.f32 %v740, %v3288
      %v3290 = vpop.f32.mrf.mxu0
      %v3291 = vpop.f32.mrf.mxu0
      %v3292 = vadd.f32 %v740, %v3291
      %v3293 = vpop.f32.mrf.mxu0
      %3294 = vmatprep.mubr.bf16.mxu0 %v2146
      %3295 = vmatmul.mubr.bf16.gmra.mxu0 %v2145
      %v3296 = vpop.f32.mrf.mxu0
      %v3297 = vadd.f32 %v740, %v3296
      %v3298 = vpop.f32.mrf.mxu0
      %v3299 = vpop.f32.mrf.mxu0
      %v3300 = vadd.f32 %v740, %v3299
      %v3301 = vpop.f32.mrf.mxu0
      %3302 = vmatprep.mubr.bf16.mxu0 %v2149
      %3303 = vmatmul.mubr.bf16.gmra.mxu0 %v2148
      %v3304 = vpop.f32.mrf.mxu0
      %v3305 = vadd.f32 %v740, %v3304
      %v3306 = vpop.f32.mrf.mxu0
      %v3307 = vpop.f32.mrf.mxu0
      %v3308 = vadd.f32 %v740, %v3307
      %v3309 = vpop.f32.mrf.mxu0
      %3310 = vmatprep.mubr.bf16.mxu0 %v2152
      %3311 = vmatmul.mubr.bf16.gmra.mxu0 %v2151
      %v3312 = vpop.f32.mrf.mxu0
      %v3313 = vadd.f32 %v740, %v3312
      %v3314 = vpop.f32.mrf.mxu0
      %v3315 = vpop.f32.mrf.mxu0
      %v3316 = vadd.f32 %v740, %v3315
      %v3317 = vpop.f32.mrf.mxu0
      %3318 = vmatprep.mubr.bf16.mxu0 %v2155
      %3319 = vmatmul.mubr.bf16.gmra.mxu0 %v2154
      %v3320 = vpop.f32.mrf.mxu0
      %v3321 = vadd.f32 %v740, %v3320
      %v3322 = vpop.f32.mrf.mxu0
      %v3323 = vpop.f32.mrf.mxu0
      %v3324 = vadd.f32 %v740, %v3323
      %v3325 = vpop.f32.mrf.mxu0
      %3326 = vmatprep.mubr.bf16.mxu0 %v2158
      %3327 = vmatmul.mubr.bf16.gmra.mxu0 %v2157
      %v3328 = vpop.f32.mrf.mxu0
      %v3329 = vadd.f32 %v740, %v3328
      %v3330 = vpop.f32.mrf.mxu0
      %v3331 = vpop.f32.mrf.mxu0
      %v3332 = vadd.f32 %v740, %v3331
      %v3333 = vpop.f32.mrf.mxu0
      %3334 = vmatprep.mubr.bf16.mxu0 %v2161
      %3335 = vmatmul.mubr.bf16.gmra.mxu0 %v2160
      %v3336 = vpop.f32.mrf.mxu0
      %v3337 = vadd.f32 %v740, %v3336
      %v3338 = vpop.f32.mrf.mxu0
      %v3339 = vpop.f32.mrf.mxu0
      %v3340 = vadd.f32 %v740, %v3339
      %v3341 = vpop.f32.mrf.mxu0
      %3342 = vmatprep.mubr.bf16.mxu0 %v2164
      %3343 = vmatmul.mubr.bf16.gmra.mxu0 %v2163
      %v3344 = vpop.f32.mrf.mxu0
      %v3345 = vadd.f32 %v740, %v3344
      %v3346 = vpop.f32.mrf.mxu0
      %v3347 = vpop.f32.mrf.mxu0
      %v3348 = vadd.f32 %v740, %v3347
      %v3349 = vpop.f32.mrf.mxu0
      %3350 = vmatprep.mubr.bf16.mxu0 %v2167
      %3351 = vmatmul.mubr.bf16.gmra.mxu0 %v2166
      %v3352 = vpop.f32.mrf.mxu0
      %v3353 = vadd.f32 %v740, %v3352
      %v3354 = vpop.f32.mrf.mxu0
      %v3355 = vpop.f32.mrf.mxu0
      %v3356 = vadd.f32 %v740, %v3355
      %v3357 = vpop.f32.mrf.mxu0
      %3358 = vmatprep.mubr.bf16.mxu0 %v2170
      %3359 = vmatmul.mubr.bf16.gmra.mxu0 %v2169
      %v3360 = vpop.f32.mrf.mxu0
      %v3361 = vadd.f32 %v740, %v3360
      %v3362 = vpop.f32.mrf.mxu0
      %v3363 = vpop.f32.mrf.mxu0
      %v3364 = vadd.f32 %v740, %v3363
      %v3365 = vpop.f32.mrf.mxu0
      %3366 = vmatprep.mubr.bf16.mxu0 %v2173
      %3367 = vmatmul.mubr.bf16.gmra.mxu0 %v2172
      %v3368 = vpop.f32.mrf.mxu0
      %v3369 = vadd.f32 %v740, %v3368
      %v3370 = vpop.f32.mrf.mxu0
      %v3371 = vpop.f32.mrf.mxu0
      %v3372 = vadd.f32 %v740, %v3371
      %v3373 = vpop.f32.mrf.mxu0
      %3374 = vmatprep.mubr.bf16.mxu0 %v2176
      %3375 = vmatmul.mubr.bf16.gmra.mxu0 %v2175
      %v3376 = vpop.f32.mrf.mxu0
      %v3377 = vadd.f32 %v740, %v3376
      %v3378 = vpop.f32.mrf.mxu0
      %v3379 = vpop.f32.mrf.mxu0
      %v3380 = vadd.f32 %v740, %v3379
      %v3381 = vpop.f32.mrf.mxu0
      %3382 = vmatprep.mubr.bf16.mxu0 %v2179
      %3383 = vmatmul.mubr.bf16.gmra.mxu0 %v2178
      %v3384 = vpop.f32.mrf.mxu0
      %v3385 = vadd.f32 %v740, %v3384
      %v3386 = vpop.f32.mrf.mxu0
      %v3387 = vpop.f32.mrf.mxu0
      %v3388 = vadd.f32 %v740, %v3387
      %v3389 = vpop.f32.mrf.mxu0
      %3390 = vmatprep.mubr.bf16.mxu0 %v2182
      %3391 = vmatmul.mubr.bf16.gmra.mxu0 %v2181
      %v3392 = vpop.f32.mrf.mxu0
      %v3393 = vadd.f32 %v740, %v3392
      %v3394 = vpop.f32.mrf.mxu0
      %v3395 = vpop.f32.mrf.mxu0
      %v3396 = vadd.f32 %v740, %v3395
      %v3397 = vpop.f32.mrf.mxu0
      %3398 = vmatprep.mubr.bf16.mxu0 %v2185
      %3399 = vmatmul.mubr.bf16.gmra.mxu0 %v2184
      %v3400 = vpop.f32.mrf.mxu0
      %v3401 = vadd.f32 %v740, %v3400
      %v3402 = vpop.f32.mrf.mxu0
      %v3403 = vpop.f32.mrf.mxu0
      %v3404 = vadd.f32 %v740, %v3403
      %v3405 = vpop.f32.mrf.mxu0
      %3406 = vmatprep.mubr.bf16.mxu0 %v2188
      %3407 = vmatmul.mubr.bf16.gmra.mxu0 %v2187
      %v3408 = vpop.f32.mrf.mxu0
      %v3409 = vadd.f32 %v740, %v3408
      %v3410 = vpop.f32.mrf.mxu0
      %v3411 = vpop.f32.mrf.mxu0
      %v3412 = vadd.f32 %v740, %v3411
      %v3413 = vpop.f32.mrf.mxu0
      %3414 = vmatprep.mubr.bf16.mxu0 %v2191
      %3415 = vmatmul.mubr.bf16.gmra.mxu0 %v2190
      %v3416 = vpop.f32.mrf.mxu0
      %v3417 = vadd.f32 %v740, %v3416
      %v3418 = vpop.f32.mrf.mxu0
      %v3419 = vpop.f32.mrf.mxu0
      %v3420 = vadd.f32 %v740, %v3419
      %v3421 = vpop.f32.mrf.mxu0
      %3422 = vmatprep.mubr.bf16.mxu0 %v2194
      %3423 = vmatmul.mubr.bf16.gmra.mxu0 %v2193
      %v3424 = vpop.f32.mrf.mxu0
      %v3425 = vadd.f32 %v740, %v3424
      %v3426 = vpop.f32.mrf.mxu0
      %v3427 = vpop.f32.mrf.mxu0
      %v3428 = vadd.f32 %v740, %v3427
      %v3429 = vpop.f32.mrf.mxu0
      %3430 = vmatprep.mubr.bf16.mxu0 %v2197
      %3431 = vmatmul.mubr.bf16.gmra.mxu0 %v2196
      %v3432 = vpop.f32.mrf.mxu0
      %v3433 = vadd.f32 %v740, %v3432
      %v3434 = vpop.f32.mrf.mxu0
      %v3435 = vpop.f32.mrf.mxu0
      %v3436 = vadd.f32 %v740, %v3435
      %v3437 = vpop.f32.mrf.mxu0
      %3438 = vmatprep.mubr.bf16.mxu0 %v2200
      %3439 = vmatmul.mubr.bf16.gmra.mxu0 %v2199
      %v3440 = vpop.f32.mrf.mxu0
      %v3441 = vadd.f32 %v740, %v3440
      %v3442 = vpop.f32.mrf.mxu0
      %v3443 = vpop.f32.mrf.mxu0
      %v3444 = vadd.f32 %v740, %v3443
      %v3445 = vpop.f32.mrf.mxu0
      %3446 = vmatprep.mubr.bf16.mxu0 %v2203
      %3447 = vmatmul.mubr.bf16.gmra.mxu0 %v2202
      %v3448 = vpop.f32.mrf.mxu0
      %v3449 = vadd.f32 %v740, %v3448
      %v3450 = vpop.f32.mrf.mxu0
      %v3451 = vpop.f32.mrf.mxu0
      %v3452 = vadd.f32 %v740, %v3451
      %v3453 = vpop.f32.mrf.mxu0
      %3454 = vmatprep.mubr.bf16.mxu0 %v2206
      %3455 = vmatmul.mubr.bf16.gmra.mxu0 %v2205
      %v3456 = vpop.f32.mrf.mxu0
      %v3457 = vadd.f32 %v740, %v3456
      %v3458 = vpop.f32.mrf.mxu0
      %v3459 = vpop.f32.mrf.mxu0
      %v3460 = vadd.f32 %v740, %v3459
      %v3461 = vpop.f32.mrf.mxu0
      %3462 = vmatprep.mubr.bf16.mxu0 %v2209
      %3463 = vmatmul.mubr.bf16.gmra.mxu0 %v2208
      %v3464 = vpop.f32.mrf.mxu0
      %v3465 = vadd.f32 %v740, %v3464
      %v3466 = vpop.f32.mrf.mxu0
      %v3467 = vpop.f32.mrf.mxu0
      %v3468 = vadd.f32 %v740, %v3467
      %v3469 = vpop.f32.mrf.mxu0
      %3470 = vmatprep.mubr.bf16.mxu0 %v2212
      %3471 = vmatmul.mubr.bf16.gmra.mxu0 %v2211
      %v3472 = vpop.f32.mrf.mxu0
      %v3473 = vadd.f32 %v740, %v3472
      %v3474 = vpop.f32.mrf.mxu0
      %v3475 = vpop.f32.mrf.mxu0
      %v3476 = vadd.f32 %v740, %v3475
      %v3477 = vpop.f32.mrf.mxu0
      %3478 = vmatprep.mubr.bf16.mxu0 %v2215
      %3479 = vmatmul.mubr.bf16.gmra.mxu0 %v2214
      %v3480 = vpop.f32.mrf.mxu0
      %v3481 = vadd.f32 %v740, %v3480
      %v3482 = vpop.f32.mrf.mxu0
      %v3483 = vpop.f32.mrf.mxu0
      %v3484 = vadd.f32 %v740, %v3483
      %v3485 = vpop.f32.mrf.mxu0
      %3486 = vmatprep.mubr.bf16.mxu0 %v2218
      %3487 = vmatmul.mubr.bf16.gmra.mxu0 %v2217
      %v3488 = vpop.f32.mrf.mxu0
      %v3489 = vadd.f32 %v740, %v3488
      %v3490 = vpop.f32.mrf.mxu0
      %v3491 = vpop.f32.mrf.mxu0
      %v3492 = vadd.f32 %v740, %v3491
      %v3493 = vpop.f32.mrf.mxu0
      %3494 = vmatprep.mubr.bf16.mxu0 %v2221
      %3495 = vmatmul.mubr.bf16.gmra.mxu0 %v2220
      %v3496 = vpop.f32.mrf.mxu0
      %v3497 = vadd.f32 %v740, %v3496
      %v3498 = vpop.f32.mrf.mxu0
      %v3499 = vpop.f32.mrf.mxu0
      %v3500 = vadd.f32 %v740, %v3499
      %v3501 = vpop.f32.mrf.mxu0
      %3502 = vmatprep.mubr.bf16.mxu0 %v2224
      %3503 = vmatmul.mubr.bf16.gmra.mxu0 %v2223
      %v3504 = vpop.f32.mrf.mxu0
      %v3505 = vadd.f32 %v740, %v3504
      %v3506 = vpop.f32.mrf.mxu0
      %v3507 = vpop.f32.mrf.mxu0
      %v3508 = vadd.f32 %v740, %v3507
      %v3509 = vpop.f32.mrf.mxu0
      %3510 = vmatprep.mubr.bf16.mxu0 %v2227
      %3511 = vmatmul.mubr.bf16.gmra.mxu0 %v2226
      %v3512 = vpop.f32.mrf.mxu0
      %v3513 = vadd.f32 %v740, %v3512
      %v3514 = vpop.f32.mrf.mxu0
      %v3515 = vpop.f32.mrf.mxu0
      %v3516 = vadd.f32 %v740, %v3515
      %v3517 = vpop.f32.mrf.mxu0
      %3518 = vmatprep.mubr.bf16.mxu0 %v2230
      %3519 = vmatmul.mubr.bf16.gmra.mxu0 %v2229
      %v3520 = vpop.f32.mrf.mxu0
      %v3521 = vadd.f32 %v740, %v3520
      %v3522 = vpop.f32.mrf.mxu0
      %v3523 = vpop.f32.mrf.mxu0
      %v3524 = vadd.f32 %v740, %v3523
      %v3525 = vpop.f32.mrf.mxu0
      %3526 = vmatprep.mubr.bf16.mxu0 %v2233
      %3527 = vmatmul.mubr.bf16.gmra.mxu0 %v2232
      %v3528 = vpop.f32.mrf.mxu0
      %v3529 = vadd.f32 %v740, %v3528
      %v3530 = vpop.f32.mrf.mxu0
      %v3531 = vpop.f32.mrf.mxu0
      %v3532 = vadd.f32 %v740, %v3531
      %v3533 = vpop.f32.mrf.mxu0
      %3534 = vmatprep.mubr.bf16.mxu0 %v2236
      %3535 = vmatmul.mubr.bf16.gmra.mxu0 %v2235
      %v3536 = vpop.f32.mrf.mxu0
      %v3537 = vadd.f32 %v740, %v3536
      %v3538 = vpop.f32.mrf.mxu0
      %v3539 = vpop.f32.mrf.mxu0
      %v3540 = vadd.f32 %v740, %v3539
      %v3541 = vpop.f32.mrf.mxu0
      %3542 = vmatprep.mubr.bf16.mxu0 %v2239
      %3543 = vmatmul.mubr.bf16.gmra.mxu0 %v2238
      %v3544 = vpop.f32.mrf.mxu0
      %v3545 = vadd.f32 %v740, %v3544
      %v3546 = vpop.f32.mrf.mxu0
      %v3547 = vpop.f32.mrf.mxu0
      %v3548 = vadd.f32 %v740, %v3547
      %v3549 = vpop.f32.mrf.mxu0
      %3550 = vmatprep.mubr.bf16.mxu0 %v2242
      %3551 = vmatmul.mubr.bf16.gmra.mxu0 %v2241
      %v3552 = vpop.f32.mrf.mxu0
      %v3553 = vadd.f32 %v740, %v3552
      %v3554 = vpop.f32.mrf.mxu0
      %v3555 = vpop.f32.mrf.mxu0
      %v3556 = vadd.f32 %v740, %v3555
      %v3557 = vpop.f32.mrf.mxu0
      %3558 = vmatprep.mubr.bf16.mxu0 %v2245
      %3559 = vmatmul.mubr.bf16.gmra.mxu0 %v2244
      %v3560 = vpop.f32.mrf.mxu0
      %v3561 = vadd.f32 %v740, %v3560
      %v3562 = vpop.f32.mrf.mxu0
      %v3563 = vpop.f32.mrf.mxu0
      %v3564 = vadd.f32 %v740, %v3563
      %v3565 = vpop.f32.mrf.mxu0
      %3566 = vmatprep.mubr.bf16.mxu0 %v2248
      %3567 = vmatmul.mubr.bf16.gmra.mxu0 %v2247
      %v3568 = vpop.f32.mrf.mxu0
      %v3569 = vadd.f32 %v740, %v3568
      %v3570 = vpop.f32.mrf.mxu0
      %v3571 = vpop.f32.mrf.mxu0
      %v3572 = vadd.f32 %v740, %v3571
      %v3573 = vpop.f32.mrf.mxu0
      %3574 = vmatprep.mubr.bf16.mxu0 %v2251
      %3575 = vmatmul.mubr.bf16.gmra.mxu0 %v2250
      %v3576 = vpop.f32.mrf.mxu0
      %v3577 = vadd.f32 %v740, %v3576
      %v3578 = vpop.f32.mrf.mxu0
      %v3579 = vpop.f32.mrf.mxu0
      %v3580 = vadd.f32 %v740, %v3579
      %v3581 = vpop.f32.mrf.mxu0
      %3582 = vmatprep.mubr.bf16.mxu0 %v2254
      %3583 = vmatmul.mubr.bf16.gmra.mxu0 %v2253
      %v3584 = vpop.f32.mrf.mxu0
      %v3585 = vadd.f32 %v740, %v3584
      %v3586 = vpop.f32.mrf.mxu0
      %v3587 = vpop.f32.mrf.mxu0
      %v3588 = vadd.f32 %v740, %v3587
      %v3589 = vpop.f32.mrf.mxu0
      %3590 = vmatprep.mubr.bf16.mxu0 %v2257
      %3591 = vmatmul.mubr.bf16.gmra.mxu0 %v2256
      %v3592 = vpop.f32.mrf.mxu0
      %v3593 = vadd.f32 %v740, %v3592
      %v3594 = vpop.f32.mrf.mxu0
      %v3595 = vpop.f32.mrf.mxu0
      %v3596 = vadd.f32 %v740, %v3595
      %v3597 = vpop.f32.mrf.mxu0
      %3598 = vmatprep.mubr.bf16.mxu0 %v2260
      %3599 = vmatmul.mubr.bf16.gmra.mxu0 %v2259
      %v3600 = vpop.f32.mrf.mxu0
      %v3601 = vadd.f32 %v740, %v3600
      %v3602 = vpop.f32.mrf.mxu0
      %v3603 = vpop.f32.mrf.mxu0
      %v3604 = vadd.f32 %v740, %v3603
      %v3605 = vpop.f32.mrf.mxu0
      %3606 = vmatprep.mubr.bf16.mxu0 %v2263
      %3607 = vmatmul.mubr.bf16.gmra.mxu0 %v2262
      %v3608 = vpop.f32.mrf.mxu0
      %v3609 = vadd.f32 %v740, %v3608
      %v3610 = vpop.f32.mrf.mxu0
      %v3611 = vpop.f32.mrf.mxu0
      %v3612 = vadd.f32 %v740, %v3611
      %v3613 = vpop.f32.mrf.mxu0
      %3614 = vmatprep.mubr.bf16.mxu0 %v2266
      %3615 = vmatmul.mubr.bf16.gmra.mxu0 %v2265
      %v3616 = vpop.f32.mrf.mxu0
      %v3617 = vadd.f32 %v740, %v3616
      %v3618 = vpop.f32.mrf.mxu0
      %v3619 = vpop.f32.mrf.mxu0
      %v3620 = vadd.f32 %v740, %v3619
      %v3621 = vpop.f32.mrf.mxu0
      %3622 = vmatprep.mubr.bf16.mxu0 %v2269
      %3623 = vmatmul.mubr.bf16.gmra.mxu0 %v2268
      %v3624 = vpop.f32.mrf.mxu0
      %v3625 = vadd.f32 %v740, %v3624
      %v3626 = vpop.f32.mrf.mxu0
      %v3627 = vpop.f32.mrf.mxu0
      %v3628 = vadd.f32 %v740, %v3627
      %v3629 = vpop.f32.mrf.mxu0
      %3630 = vmatprep.mubr.bf16.mxu0 %v2272
      %3631 = vmatmul.mubr.bf16.gmra.mxu0 %v2271
      %v3632 = vpop.f32.mrf.mxu0
      %v3633 = vadd.f32 %v740, %v3632
      %v3634 = vpop.f32.mrf.mxu0
      %v3635 = vpop.f32.mrf.mxu0
      %v3636 = vadd.f32 %v740, %v3635
      %v3637 = vpop.f32.mrf.mxu0
      %3638 = vmatprep.mubr.bf16.mxu0 %v2275
      %3639 = vmatmul.mubr.bf16.gmra.mxu0 %v2274
      %v3640 = vpop.f32.mrf.mxu0
      %v3641 = vadd.f32 %v740, %v3640
      %v3642 = vpop.f32.mrf.mxu0
      %v3643 = vpop.f32.mrf.mxu0
      %v3644 = vadd.f32 %v740, %v3643
      %v3645 = vpop.f32.mrf.mxu0
      %3646 = vmatprep.mubr.bf16.mxu0 %v2278
      %3647 = vmatmul.mubr.bf16.gmra.mxu0 %v2277
      %v3648 = vpop.f32.mrf.mxu0
      %v3649 = vadd.f32 %v740, %v3648
      %v3650 = vpop.f32.mrf.mxu0
      %v3651 = vpop.f32.mrf.mxu0
      %v3652 = vadd.f32 %v740, %v3651
      %v3653 = vpop.f32.mrf.mxu0
      %3654 = vmatprep.mubr.bf16.mxu0 %v2281
      %3655 = vmatmul.mubr.bf16.gmra.mxu0 %v2280
      %v3656 = vpop.f32.mrf.mxu0
      %v3657 = vadd.f32 %v740, %v3656
      %v3658 = vpop.f32.mrf.mxu0
      %v3659 = vpop.f32.mrf.mxu0
      %v3660 = vadd.f32 %v740, %v3659
      %v3661 = vpop.f32.mrf.mxu0
      %3662 = vmatprep.mubr.bf16.mxu0 %v2284
      %3663 = vmatmul.mubr.bf16.gmra.mxu0 %v2283
      %v3664 = vpop.f32.mrf.mxu0
      %v3665 = vadd.f32 %v740, %v3664
      %v3666 = vpop.f32.mrf.mxu0
      %v3667 = vpop.f32.mrf.mxu0
      %v3668 = vadd.f32 %v740, %v3667
      %v3669 = vpop.f32.mrf.mxu0
      %3670 = vmatprep.mubr.bf16.mxu0 %v2287
      %3671 = vmatmul.mubr.bf16.gmra.mxu0 %v2286
      %v3672 = vpop.f32.mrf.mxu0
      %v3673 = vadd.f32 %v740, %v3672
      %v3674 = vpop.f32.mrf.mxu0
      %v3675 = vpop.f32.mrf.mxu0
      %v3676 = vadd.f32 %v740, %v3675
      %v3677 = vpop.f32.mrf.mxu0
      %3678 = vmatprep.mubr.bf16.mxu0 %v2290
      %3679 = vmatmul.mubr.bf16.gmra.mxu0 %v2289
      %v3680 = vpop.f32.mrf.mxu0
      %v3681 = vadd.f32 %v740, %v3680
      %v3682 = vpop.f32.mrf.mxu0
      %v3683 = vpop.f32.mrf.mxu0
      %v3684 = vadd.f32 %v740, %v3683
      %v3685 = vpop.f32.mrf.mxu0
      %3686 = vmatprep.mubr.bf16.mxu0 %v2293
      %3687 = vmatmul.mubr.bf16.gmra.mxu0 %v2292
      %v3688 = vpop.f32.mrf.mxu0
      %v3689 = vadd.f32 %v740, %v3688
      %v3690 = vpop.f32.mrf.mxu0
      %v3691 = vpop.f32.mrf.mxu0
      %v3692 = vadd.f32 %v740, %v3691
      %v3693 = vpop.f32.mrf.mxu0
      %3694 = vmatprep.mubr.bf16.mxu0 %v2296
      %3695 = vmatmul.mubr.bf16.gmra.mxu0 %v2295
      %v3696 = vpop.f32.mrf.mxu0
      %v3697 = vadd.f32 %v740, %v3696
      %v3698 = vpop.f32.mrf.mxu0
      %v3699 = vpop.f32.mrf.mxu0
      %v3700 = vadd.f32 %v740, %v3699
      %v3701 = vpop.f32.mrf.mxu0
      %3702 = vmatprep.mubr.bf16.mxu0 %v2299
      %3703 = vmatmul.mubr.bf16.gmra.mxu0 %v2298
      %v3704 = vpop.f32.mrf.mxu0
      %v3705 = vadd.f32 %v740, %v3704
      %v3706 = vpop.f32.mrf.mxu0
      %v3707 = vpop.f32.mrf.mxu0
      %v3708 = vadd.f32 %v740, %v3707
      %v3709 = vpop.f32.mrf.mxu0
      %3710 = vmatprep.mubr.bf16.mxu0 %v2302
      %3711 = vmatmul.mubr.bf16.gmra.mxu0 %v2301
      %v3712 = vpop.f32.mrf.mxu0
      %v3713 = vadd.f32 %v740, %v3712
      %v3714 = vpop.f32.mrf.mxu0
      %v3715 = vpop.f32.mrf.mxu0
      %v3716 = vadd.f32 %v740, %v3715
      %v3717 = vpop.f32.mrf.mxu0
      %3718 = vmatprep.mubr.bf16.mxu0 %v2305
      %3719 = vmatmul.mubr.bf16.gmra.mxu0 %v2304
      %v3720 = vpop.f32.mrf.mxu0
      %v3721 = vadd.f32 %v740, %v3720
      %v3722 = vpop.f32.mrf.mxu0
      %v3723 = vpop.f32.mrf.mxu0
      %v3724 = vadd.f32 %v740, %v3723
      %v3725 = vpop.f32.mrf.mxu0
      %3726 = vmatprep.mubr.bf16.mxu0 %v2308
      %3727 = vmatmul.mubr.bf16.gmra.mxu0 %v2307
      %v3728 = vpop.f32.mrf.mxu0
      %v3729 = vadd.f32 %v740, %v3728
      %v3730 = vpop.f32.mrf.mxu0
      %v3731 = vpop.f32.mrf.mxu0
      %v3732 = vadd.f32 %v740, %v3731
      %v3733 = vpop.f32.mrf.mxu0
      %3734 = vmatprep.mubr.bf16.mxu0 %v2311
      %3735 = vmatmul.mubr.bf16.gmra.mxu0 %v2310
      %v3736 = vpop.f32.mrf.mxu0
      %v3737 = vadd.f32 %v740, %v3736
      %v3738 = vpop.f32.mrf.mxu0
      %v3739 = vpop.f32.mrf.mxu0
      %v3740 = vadd.f32 %v740, %v3739
      %v3741 = vpop.f32.mrf.mxu0
      %3742 = vmatprep.mubr.bf16.mxu0 %v2314
      %3743 = vmatmul.mubr.bf16.gmra.mxu0 %v2313
      %v3744 = vpop.f32.mrf.mxu0
      %v3745 = vadd.f32 %v740, %v3744
      %v3746 = vpop.f32.mrf.mxu0
      %v3747 = vpop.f32.mrf.mxu0
      %v3748 = vadd.f32 %v740, %v3747
      %v3749 = vpop.f32.mrf.mxu0
      %3750 = vmatprep.mubr.bf16.mxu0 %v2317
      %3751 = vmatmul.mubr.bf16.gmra.mxu0 %v2316
      %v3752 = vpop.f32.mrf.mxu0
      %v3753 = vadd.f32 %v740, %v3752
      %v3754 = vpop.f32.mrf.mxu0
      %v3755 = vpop.f32.mrf.mxu0
      %v3756 = vadd.f32 %v740, %v3755
      %v3757 = vpop.f32.mrf.mxu0
      %3758 = vmatprep.mubr.bf16.mxu0 %v2320
      %3759 = vmatmul.mubr.bf16.gmra.mxu0 %v2319
      %v3760 = vpop.f32.mrf.mxu0
      %v3761 = vadd.f32 %v740, %v3760
      %v3762 = vpop.f32.mrf.mxu0
      %v3763 = vpop.f32.mrf.mxu0
      %v3764 = vadd.f32 %v740, %v3763
      %v3765 = vpop.f32.mrf.mxu0
      %3766 = vmatprep.mubr.bf16.mxu0 %v2323
      %3767 = vmatmul.mubr.bf16.gmra.mxu0 %v2322
      %v3768 = vpop.f32.mrf.mxu0
      %v3769 = vadd.f32 %v740, %v3768
      %v3770 = vpop.f32.mrf.mxu0
      %v3771 = vpop.f32.mrf.mxu0
      %v3772 = vadd.f32 %v740, %v3771
      %v3773 = vpop.f32.mrf.mxu0
      %3774 = vmatprep.mubr.bf16.mxu0 %v2326
      %3775 = vmatmul.mubr.bf16.gmra.mxu0 %v2325
      %v3776 = vpop.f32.mrf.mxu0
      %v3777 = vadd.f32 %v740, %v3776
      %v3778 = vpop.f32.mrf.mxu0
      %v3779 = vpop.f32.mrf.mxu0
      %v3780 = vadd.f32 %v740, %v3779
      %v3781 = vpop.f32.mrf.mxu0
      %3782 = vmatprep.mubr.bf16.mxu0 %v2329
      %3783 = vmatmul.mubr.bf16.gmra.mxu0 %v2328
      %v3784 = vpop.f32.mrf.mxu0
      %v3785 = vadd.f32 %v740, %v3784
      %v3786 = vpop.f32.mrf.mxu0
      %v3787 = vpop.f32.mrf.mxu0
      %v3788 = vadd.f32 %v740, %v3787
      %v3789 = vpop.f32.mrf.mxu0
      %3790 = vmatprep.mubr.bf16.mxu0 %v2332
      %3791 = vmatmul.mubr.bf16.gmra.mxu0 %v2331
      %v3792 = vpop.f32.mrf.mxu0
      %v3793 = vadd.f32 %v740, %v3792
      %v3794 = vpop.f32.mrf.mxu0
      %v3795 = vpop.f32.mrf.mxu0
      %v3796 = vadd.f32 %v740, %v3795
      %v3797 = vpop.f32.mrf.mxu0
      %3798 = vmatprep.mubr.bf16.mxu0 %v2335
      %3799 = vmatmul.mubr.bf16.gmra.mxu0 %v2334
      %v3800 = vpop.f32.mrf.mxu0
      %v3801 = vadd.f32 %v740, %v3800
      %v3802 = vpop.f32.mrf.mxu0
      %v3803 = vpop.f32.mrf.mxu0
      %v3804 = vadd.f32 %v740, %v3803
      %v3805 = vpop.f32.mrf.mxu0
      %3806 = vmatprep.mubr.bf16.mxu0 %v2338
      %3807 = vmatmul.mubr.bf16.gmra.mxu0 %v2337
      %v3808 = vpop.f32.mrf.mxu0
      %v3809 = vadd.f32 %v740, %v3808
      %v3810 = vpop.f32.mrf.mxu0
      %v3811 = vpop.f32.mrf.mxu0
      %v3812 = vadd.f32 %v740, %v3811
      %v3813 = vpop.f32.mrf.mxu0
      %3814 = vmatprep.mubr.bf16.mxu0 %v2341
      %3815 = vmatmul.mubr.bf16.gmra.mxu0 %v2340
      %v3816 = vpop.f32.mrf.mxu0
      %v3817 = vadd.f32 %v740, %v3816
      %v3818 = vpop.f32.mrf.mxu0
      %v3819 = vpop.f32.mrf.mxu0
      %v3820 = vadd.f32 %v740, %v3819
      %v3821 = vpop.f32.mrf.mxu0
      %3822 = vmatprep.mubr.bf16.mxu0 %v2344
      %3823 = vmatmul.mubr.bf16.gmra.mxu0 %v2343
      %v3824 = vpop.f32.mrf.mxu0
      %v3825 = vadd.f32 %v740, %v3824
      %v3826 = vpop.f32.mrf.mxu0
      %v3827 = vpop.f32.mrf.mxu0
      %v3828 = vadd.f32 %v740, %v3827
      %v3829 = vpop.f32.mrf.mxu0
      %3830 = vmatprep.mubr.bf16.mxu0 %v2347
      %3831 = vmatmul.mubr.bf16.gmra.mxu0 %v2346
      %v3832 = vpop.f32.mrf.mxu0
      %v3833 = vadd.f32 %v740, %v3832
      %v3834 = vpop.f32.mrf.mxu0
      %v3835 = vpop.f32.mrf.mxu0
      %v3836 = vadd.f32 %v740, %v3835
      %v3837 = vpop.f32.mrf.mxu0
      %3838 = vmatprep.mubr.bf16.mxu0 %v2350
      %3839 = vmatmul.mubr.bf16.gmra.mxu0 %v2349
      %v3840 = vpop.f32.mrf.mxu0
      %v3841 = vadd.f32 %v740, %v3840
      %v3842 = vpop.f32.mrf.mxu0
      %v3843 = vpop.f32.mrf.mxu0
      %v3844 = vadd.f32 %v740, %v3843
      %v3845 = vpop.f32.mrf.mxu0
      %3846 = vmatprep.mubr.bf16.mxu0 %v2353
      %3847 = vmatmul.mubr.bf16.gmra.mxu0 %v2352
      %v3848 = vpop.f32.mrf.mxu0
      %v3849 = vadd.f32 %v740, %v3848
      %v3850 = vpop.f32.mrf.mxu0
      %v3851 = vpop.f32.mrf.mxu0
      %v3852 = vadd.f32 %v740, %v3851
      %v3853 = vpop.f32.mrf.mxu0
      %3854 = vmatprep.mubr.bf16.mxu0 %v2356
      %3855 = vmatmul.mubr.bf16.gmra.mxu0 %v2355
      %v3856 = vpop.f32.mrf.mxu0
      %v3857 = vadd.f32 %v740, %v3856
      %v3858 = vpop.f32.mrf.mxu0
      %v3859 = vpop.f32.mrf.mxu0
      %v3860 = vadd.f32 %v740, %v3859
      %v3861 = vpop.f32.mrf.mxu0
      %3862 = vmatprep.mubr.bf16.mxu0 %v2359
      %3863 = vmatmul.mubr.bf16.gmra.mxu0 %v2358
      %v3864 = vpop.f32.mrf.mxu0
      %v3865 = vadd.f32 %v740, %v3864
      %v3866 = vpop.f32.mrf.mxu0
      %v3867 = vpop.f32.mrf.mxu0
      %v3868 = vadd.f32 %v740, %v3867
      %v3869 = vpop.f32.mrf.mxu0
      %3870 = vmatprep.mubr.bf16.mxu0 %v2362
      %3871 = vmatmul.mubr.bf16.gmra.mxu0 %v2361
      %v3872 = vpop.f32.mrf.mxu0
      %v3873 = vadd.f32 %v740, %v3872
      %v3874 = vpop.f32.mrf.mxu0
      %v3875 = vpop.f32.mrf.mxu0
      %v3876 = vadd.f32 %v740, %v3875
      %v3877 = vpop.f32.mrf.mxu0
      %3878 = vmatprep.mubr.bf16.mxu0 %v2365
      %3879 = vmatmul.mubr.bf16.gmra.mxu0 %v2364
      %v3880 = vpop.f32.mrf.mxu0
      %v3881 = vadd.f32 %v740, %v3880
      %v3882 = vpop.f32.mrf.mxu0
      %v3883 = vpop.f32.mrf.mxu0
      %v3884 = vadd.f32 %v740, %v3883
      %v3885 = vpop.f32.mrf.mxu0
      %3886 = vmatprep.mubr.bf16.mxu0 %v2368
      %3887 = vmatmul.mubr.bf16.gmra.mxu0 %v2367
      %v3888 = vpop.f32.mrf.mxu0
      %v3889 = vadd.f32 %v740, %v3888
      %v3890 = vpop.f32.mrf.mxu0
      %v3891 = vpop.f32.mrf.mxu0
      %v3892 = vadd.f32 %v740, %v3891
      %v3893 = vpop.f32.mrf.mxu0
      %3894 = vmatprep.mubr.bf16.mxu0 %v2371
      %3895 = vmatmul.mubr.bf16.gmra.mxu0 %v2370
      %v3896 = vpop.f32.mrf.mxu0
      %v3897 = vadd.f32 %v740, %v3896
      %v3898 = vpop.f32.mrf.mxu0
      %v3899 = vpop.f32.mrf.mxu0
      %v3900 = vadd.f32 %v740, %v3899
      %v3901 = vpop.f32.mrf.mxu0
      %3902 = vmatprep.mubr.bf16.mxu0 %v2374
      %3903 = vmatmul.mubr.bf16.gmra.mxu0 %v2373
      %v3904 = vpop.f32.mrf.mxu0
      %v3905 = vadd.f32 %v740, %v3904
      %v3906 = vpop.f32.mrf.mxu0
      %v3907 = vpop.f32.mrf.mxu0
      %v3908 = vadd.f32 %v740, %v3907
      %v3909 = vpop.f32.mrf.mxu0
      %3910 = vmatprep.mubr.bf16.mxu0 %v2377
      %3911 = vmatmul.mubr.bf16.gmra.mxu0 %v2376
      %v3912 = vpop.f32.mrf.mxu0
      %v3913 = vadd.f32 %v740, %v3912
      %v3914 = vpop.f32.mrf.mxu0
      %v3915 = vpop.f32.mrf.mxu0
      %v3916 = vadd.f32 %v740, %v3915
      %v3917 = vpop.f32.mrf.mxu0
      %3918 = vmatprep.mubr.bf16.mxu0 %v2380
      %3919 = vmatmul.mubr.bf16.gmra.mxu0 %v2379
      %v3920 = vpop.f32.mrf.mxu0
      %v3921 = vadd.f32 %v740, %v3920
      %v3922 = vpop.f32.mrf.mxu0
      %v3923 = vpop.f32.mrf.mxu0
      %v3924 = vadd.f32 %v740, %v3923
      %v3925 = vpop.f32.mrf.mxu0
      %3926 = vmatprep.mubr.bf16.mxu0 %v2383
      %3927 = vmatmul.mubr.bf16.gmra.mxu0 %v2382
      %v3928 = vpop.f32.mrf.mxu0
      %v3929 = vadd.f32 %v740, %v3928
      %v3930 = vpop.f32.mrf.mxu0
      %v3931 = vpop.f32.mrf.mxu0
      %v3932 = vadd.f32 %v740, %v3931
      %v3933 = vpop.f32.mrf.mxu0
      %3934 = vmatprep.mubr.bf16.mxu0 %v2386
      %3935 = vmatmul.mubr.bf16.gmra.mxu0 %v2385
      %v3936 = vpop.f32.mrf.mxu0
      %v3937 = vadd.f32 %v740, %v3936
      %v3938 = vpop.f32.mrf.mxu0
      %v3939 = vpop.f32.mrf.mxu0
      %v3940 = vadd.f32 %v740, %v3939
      %v3941 = vpop.f32.mrf.mxu0
      %3942 = vmatprep.mubr.bf16.mxu0 %v2389
      %3943 = vmatmul.mubr.bf16.gmra.mxu0 %v2388
      %v3944 = vpop.f32.mrf.mxu0
      %v3945 = vadd.f32 %v740, %v3944
      %v3946 = vpop.f32.mrf.mxu0
      %v3947 = vpop.f32.mrf.mxu0
      %v3948 = vadd.f32 %v740, %v3947
      %v3949 = vpop.f32.mrf.mxu0
      %3950 = vmatprep.mubr.bf16.mxu0 %v2392
      %3951 = vmatmul.mubr.bf16.gmra.mxu0 %v2391
      %v3952 = vpop.f32.mrf.mxu0
      %v3953 = vadd.f32 %v740, %v3952
      %v3954 = vpop.f32.mrf.mxu0
      %v3955 = vpop.f32.mrf.mxu0
      %v3956 = vadd.f32 %v740, %v3955
      %v3957 = vpop.f32.mrf.mxu0
      %3958 = vmatprep.mubr.bf16.mxu0 %v2395
      %3959 = vmatmul.mubr.bf16.gmra.mxu0 %v2394
      %v3960 = vpop.f32.mrf.mxu0
      %v3961 = vadd.f32 %v740, %v3960
      %v3962 = vpop.f32.mrf.mxu0
      %v3963 = vpop.f32.mrf.mxu0
      %v3964 = vadd.f32 %v740, %v3963
      %v3965 = vpop.f32.mrf.mxu0
      %3966 = vmatprep.mubr.bf16.mxu0 %v2398
      %3967 = vmatmul.mubr.bf16.gmra.mxu0 %v2397
      %v3968 = vpop.f32.mrf.mxu0
      %v3969 = vadd.f32 %v740, %v3968
      %v3970 = vpop.f32.mrf.mxu0
      %v3971 = vpop.f32.mrf.mxu0
      %v3972 = vadd.f32 %v740, %v3971
      %v3973 = vpop.f32.mrf.mxu0
      %3974 = vmatprep.mubr.bf16.mxu0 %v2401
      %3975 = vmatmul.mubr.bf16.gmra.mxu0 %v2400
      %v3976 = vpop.f32.mrf.mxu0
      %v3977 = vadd.f32 %v740, %v3976
      %v3978 = vpop.f32.mrf.mxu0
      %v3979 = vpop.f32.mrf.mxu0
      %v3980 = vadd.f32 %v740, %v3979
      %v3981 = vpop.f32.mrf.mxu0
      %3982 = vmatprep.mubr.bf16.mxu0 %v2404
      %3983 = vmatmul.mubr.bf16.gmra.mxu0 %v2403
      %v3984 = vpop.f32.mrf.mxu0
      %v3985 = vadd.f32 %v740, %v3984
      %v3986 = vpop.f32.mrf.mxu0
      %v3987 = vpop.f32.mrf.mxu0
      %v3988 = vadd.f32 %v740, %v3987
      %v3989 = vpop.f32.mrf.mxu0
      %3990 = vdwg.mxu0
      %3991 = vmatprep.subr.bf16.mxu0 0
      %3992 = vmatpush1.bf16.msra.mxu0 %v2909
      %3993 = vmatprep.subr.bf16.mxu0 0
      %3994 = vmatpush1.bf16.msra.mxu0 %v2908
      %3995 = vmatprep.subr.bf16.mxu0 0
      %3996 = vmatpush1.bf16.msra.mxu0 %v2907
      %3997 = vmatprep.subr.bf16.mxu0 0
      %3998 = vmatpush1.bf16.msra.mxu0 %v2906
      %3999 = vmatprep.subr.bf16.mxu0 0
      %4000 = vmatpush1.bf16.msra.mxu0 %v2905
      %4001 = vmatprep.subr.bf16.mxu0 0
      %4002 = vmatpush1.bf16.msra.mxu0 %v2904
      %4003 = vmatprep.subr.bf16.mxu0 0
      %4004 = vmatpush1.bf16.msra.mxu0 %v2903
      %4005 = vmatprep.subr.bf16.mxu0 0
      %4006 = vmatpush1.bf16.msra.mxu0 %v2902
      %4007 = vmatprep.subr.bf16.mxu0 0
      %4008 = vmatpush2.bf16.msra.mxu0 0
      %4009 = vmatprep.subr.bf16.mxu0 0
      %4010 = vmatpush2.bf16.msra.mxu0 0
      %4011 = vmatprep.subr.bf16.mxu0 0
      %4012 = vmatpush2.bf16.msra.mxu0 0
      %4013 = vmatprep.subr.bf16.mxu0 0
      %4014 = vmatpush2.bf16.msra.mxu0 0
      %4015 = vmatprep.subr.bf16.mxu0 0
      %4016 = vmatpush2.bf16.msra.mxu0 0
      %4017 = vmatprep.subr.bf16.mxu0 0
      %4018 = vmatpush2.bf16.msra.mxu0 0
      %4019 = vmatprep.subr.bf16.mxu0 0
      %4020 = vmatpush2.bf16.msra.mxu0 0
      %4021 = vmatprep.subr.bf16.mxu0 0
      %4022 = vmatpush2.bf16.msra.mxu0 0
      %4023 = vmatprep.mubr.bf16.mxu0 0
      %4024 = vmatmul.mubr.bf16.gmra.mxu0 %v2024
      %v4025 = vpop.f32.mrf.mxu0
      %v4026 = vadd.f32 %v2969, %v4025
      %v4027 = vpop.f32.mrf.mxu0
      %v4028 = vpop.f32.mrf.mxu0
      %v4029 = vadd.f32 %v2972, %v4028
      %v4030 = vpop.f32.mrf.mxu0
      %4031 = vmatprep.mubr.bf16.mxu0 0
      %4032 = vmatmul.mubr.bf16.gmra.mxu0 %v2027
      %v4033 = vpop.f32.mrf.mxu0
      %v4034 = vadd.f32 %v2977, %v4033
      %v4035 = vpop.f32.mrf.mxu0
      %v4036 = vpop.f32.mrf.mxu0
      %v4037 = vadd.f32 %v2980, %v4036
      %v4038 = vpop.f32.mrf.mxu0
      %4039 = vmatprep.mubr.bf16.mxu0 0
      %4040 = vmatmul.mubr.bf16.gmra.mxu0 %v2030
      %v4041 = vpop.f32.mrf.mxu0
      %v4042 = vadd.f32 %v2985, %v4041
      %v4043 = vpop.f32.mrf.mxu0
      %v4044 = vpop.f32.mrf.mxu0
      %v4045 = vadd.f32 %v2988, %v4044
      %v4046 = vpop.f32.mrf.mxu0
      %4047 = vmatprep.mubr.bf16.mxu0 0
      %4048 = vmatmul.mubr.bf16.gmra.mxu0 %v2033
      %v4049 = vpop.f32.mrf.mxu0
      %v4050 = vadd.f32 %v2993, %v4049
      %v4051 = vpop.f32.mrf.mxu0
      %v4052 = vpop.f32.mrf.mxu0
      %v4053 = vadd.f32 %v2996, %v4052
      %v4054 = vpop.f32.mrf.mxu0
      %4055 = vmatprep.mubr.bf16.mxu0 0
      %4056 = vmatmul.mubr.bf16.gmra.mxu0 %v2036
      %v4057 = vpop.f32.mrf.mxu0
      %v4058 = vadd.f32 %v3001, %v4057
      %v4059 = vpop.f32.mrf.mxu0
      %v4060 = vpop.f32.mrf.mxu0
      %v4061 = vadd.f32 %v3004, %v4060
      %v4062 = vpop.f32.mrf.mxu0
      %4063 = vmatprep.mubr.bf16.mxu0 0
      %4064 = vmatmul.mubr.bf16.gmra.mxu0 %v2039
      %v4065 = vpop.f32.mrf.mxu0
      %v4066 = vadd.f32 %v3009, %v4065
      %v4067 = vpop.f32.mrf.mxu0
      %v4068 = vpop.f32.mrf.mxu0
      %v4069 = vadd.f32 %v3012, %v4068
      %v4070 = vpop.f32.mrf.mxu0
      %4071 = vmatprep.mubr.bf16.mxu0 0
      %4072 = vmatmul.mubr.bf16.gmra.mxu0 %v2042
      %v4073 = vpop.f32.mrf.mxu0
      %v4074 = vadd.f32 %v3017, %v4073
      %v4075 = vpop.f32.mrf.mxu0
      %v4076 = vpop.f32.mrf.mxu0
      %v4077 = vadd.f32 %v3020, %v4076
      %v4078 = vpop.f32.mrf.mxu0
      %4079 = vmatprep.mubr.bf16.mxu0 0
      %4080 = vmatmul.mubr.bf16.gmra.mxu0 %v2045
      %v4081 = vpop.f32.mrf.mxu0
      %v4082 = vadd.f32 %v3025, %v4081
      %v4083 = vpop.f32.mrf.mxu0
      %v4084 = vpop.f32.mrf.mxu0
      %v4085 = vadd.f32 %v3028, %v4084
      %v4086 = vpop.f32.mrf.mxu0
      %4087 = vmatprep.mubr.bf16.mxu0 0
      %4088 = vmatmul.mubr.bf16.gmra.mxu0 %v2048
      %v4089 = vpop.f32.mrf.mxu0
      %v4090 = vadd.f32 %v3033, %v4089
      %v4091 = vpop.f32.mrf.mxu0
      %v4092 = vpop.f32.mrf.mxu0
      %v4093 = vadd.f32 %v3036, %v4092
      %v4094 = vpop.f32.mrf.mxu0
      %4095 = vmatprep.mubr.bf16.mxu0 0
      %4096 = vmatmul.mubr.bf16.gmra.mxu0 %v2051
      %v4097 = vpop.f32.mrf.mxu0
      %v4098 = vadd.f32 %v3041, %v4097
      %v4099 = vpop.f32.mrf.mxu0
      %v4100 = vpop.f32.mrf.mxu0
      %v4101 = vadd.f32 %v3044, %v4100
      %v4102 = vpop.f32.mrf.mxu0
      %4103 = vmatprep.mubr.bf16.mxu0 0
      %4104 = vmatmul.mubr.bf16.gmra.mxu0 %v2054
      %v4105 = vpop.f32.mrf.mxu0
      %v4106 = vadd.f32 %v3049, %v4105
      %v4107 = vpop.f32.mrf.mxu0
      %v4108 = vpop.f32.mrf.mxu0
      %v4109 = vadd.f32 %v3052, %v4108
      %v4110 = vpop.f32.mrf.mxu0
      %4111 = vmatprep.mubr.bf16.mxu0 0
      %4112 = vmatmul.mubr.bf16.gmra.mxu0 %v2057
      %v4113 = vpop.f32.mrf.mxu0
      %v4114 = vadd.f32 %v3057, %v4113
      %v4115 = vpop.f32.mrf.mxu0
      %v4116 = vpop.f32.mrf.mxu0
      %v4117 = vadd.f32 %v3060, %v4116
      %v4118 = vpop.f32.mrf.mxu0
      %4119 = vmatprep.mubr.bf16.mxu0 0
      %4120 = vmatmul.mubr.bf16.gmra.mxu0 %v2060
      %v4121 = vpop.f32.mrf.mxu0
      %v4122 = vadd.f32 %v3065, %v4121
      %v4123 = vpop.f32.mrf.mxu0
      %v4124 = vpop.f32.mrf.mxu0
      %v4125 = vadd.f32 %v3068, %v4124
      %v4126 = vpop.f32.mrf.mxu0
      %4127 = vmatprep.mubr.bf16.mxu0 0
      %4128 = vmatmul.mubr.bf16.gmra.mxu0 %v2063
      %v4129 = vpop.f32.mrf.mxu0
      %v4130 = vadd.f32 %v3073, %v4129
      %v4131 = vpop.f32.mrf.mxu0
      %v4132 = vpop.f32.mrf.mxu0
      %v4133 = vadd.f32 %v3076, %v4132
      %v4134 = vpop.f32.mrf.mxu0
      %4135 = vmatprep.mubr.bf16.mxu0 0
      %4136 = vmatmul.mubr.bf16.gmra.mxu0 %v2066
      %v4137 = vpop.f32.mrf.mxu0
      %v4138 = vadd.f32 %v3081, %v4137
      %v4139 = vpop.f32.mrf.mxu0
      %v4140 = vpop.f32.mrf.mxu0
      %v4141 = vadd.f32 %v3084, %v4140
      %v4142 = vpop.f32.mrf.mxu0
      %4143 = vmatprep.mubr.bf16.mxu0 0
      %4144 = vmatmul.mubr.bf16.gmra.mxu0 %v2069
      %v4145 = vpop.f32.mrf.mxu0
      %v4146 = vadd.f32 %v3089, %v4145
      %v4147 = vpop.f32.mrf.mxu0
      %v4148 = vpop.f32.mrf.mxu0
      %v4149 = vadd.f32 %v3092, %v4148
      %v4150 = vpop.f32.mrf.mxu0
      %4151 = vmatprep.mubr.bf16.mxu0 0
      %4152 = vmatmul.mubr.bf16.gmra.mxu0 %v2072
      %v4153 = vpop.f32.mrf.mxu0
      %v4154 = vadd.f32 %v3097, %v4153
      %v4155 = vpop.f32.mrf.mxu0
      %v4156 = vpop.f32.mrf.mxu0
      %v4157 = vadd.f32 %v3100, %v4156
      %v4158 = vpop.f32.mrf.mxu0
      %4159 = vmatprep.mubr.bf16.mxu0 0
      %4160 = vmatmul.mubr.bf16.gmra.mxu0 %v2075
      %v4161 = vpop.f32.mrf.mxu0
      %v4162 = vadd.f32 %v3105, %v4161
      %v4163 = vpop.f32.mrf.mxu0
      %v4164 = vpop.f32.mrf.mxu0
      %v4165 = vadd.f32 %v3108, %v4164
      %v4166 = vpop.f32.mrf.mxu0
      %4167 = vmatprep.mubr.bf16.mxu0 0
      %4168 = vmatmul.mubr.bf16.gmra.mxu0 %v2078
      %v4169 = vpop.f32.mrf.mxu0
      %v4170 = vadd.f32 %v3113, %v4169
      %v4171 = vpop.f32.mrf.mxu0
      %v4172 = vpop.f32.mrf.mxu0
      %v4173 = vadd.f32 %v3116, %v4172
      %v4174 = vpop.f32.mrf.mxu0
      %4175 = vmatprep.mubr.bf16.mxu0 0
      %4176 = vmatmul.mubr.bf16.gmra.mxu0 %v2081
      %v4177 = vpop.f32.mrf.mxu0
      %v4178 = vadd.f32 %v3121, %v4177
      %v4179 = vpop.f32.mrf.mxu0
      %v4180 = vpop.f32.mrf.mxu0
      %v4181 = vadd.f32 %v3124, %v4180
      %v4182 = vpop.f32.mrf.mxu0
      %4183 = vmatprep.mubr.bf16.mxu0 0
      %4184 = vmatmul.mubr.bf16.gmra.mxu0 %v2084
      %v4185 = vpop.f32.mrf.mxu0
      %v4186 = vadd.f32 %v3129, %v4185
      %v4187 = vpop.f32.mrf.mxu0
      %v4188 = vpop.f32.mrf.mxu0
      %v4189 = vadd.f32 %v3132, %v4188
      %v4190 = vpop.f32.mrf.mxu0
      %4191 = vmatprep.mubr.bf16.mxu0 0
      %4192 = vmatmul.mubr.bf16.gmra.mxu0 %v2087
      %v4193 = vpop.f32.mrf.mxu0
      %v4194 = vadd.f32 %v3137, %v4193
      %v4195 = vpop.f32.mrf.mxu0
      %v4196 = vpop.f32.mrf.mxu0
      %v4197 = vadd.f32 %v3140, %v4196
      %v4198 = vpop.f32.mrf.mxu0
      %4199 = vmatprep.mubr.bf16.mxu0 0
      %4200 = vmatmul.mubr.bf16.gmra.mxu0 %v2090
      %v4201 = vpop.f32.mrf.mxu0
      %v4202 = vadd.f32 %v3145, %v4201
      %v4203 = vpop.f32.mrf.mxu0
      %v4204 = vpop.f32.mrf.mxu0
      %v4205 = vadd.f32 %v3148, %v4204
      %v4206 = vpop.f32.mrf.mxu0
      %4207 = vmatprep.mubr.bf16.mxu0 0
      %4208 = vmatmul.mubr.bf16.gmra.mxu0 %v2093
      %v4209 = vpop.f32.mrf.mxu0
      %v4210 = vadd.f32 %v3153, %v4209
      %v4211 = vpop.f32.mrf.mxu0
      %v4212 = vpop.f32.mrf.mxu0
      %v4213 = vadd.f32 %v3156, %v4212
      %v4214 = vpop.f32.mrf.mxu0
      %4215 = vmatprep.mubr.bf16.mxu0 0
      %4216 = vmatmul.mubr.bf16.gmra.mxu0 %v2096
      %v4217 = vpop.f32.mrf.mxu0
      %v4218 = vadd.f32 %v3161, %v4217
      %v4219 = vpop.f32.mrf.mxu0
      %v4220 = vpop.f32.mrf.mxu0
      %v4221 = vadd.f32 %v3164, %v4220
      %v4222 = vpop.f32.mrf.mxu0
      %4223 = vmatprep.mubr.bf16.mxu0 0
      %4224 = vmatmul.mubr.bf16.gmra.mxu0 %v2099
      %v4225 = vpop.f32.mrf.mxu0
      %v4226 = vadd.f32 %v3169, %v4225
      %v4227 = vpop.f32.mrf.mxu0
      %v4228 = vpop.f32.mrf.mxu0
      %v4229 = vadd.f32 %v3172, %v4228
      %v4230 = vpop.f32.mrf.mxu0
      %4231 = vmatprep.mubr.bf16.mxu0 0
      %4232 = vmatmul.mubr.bf16.gmra.mxu0 %v2102
      %v4233 = vpop.f32.mrf.mxu0
      %v4234 = vadd.f32 %v3177, %v4233
      %v4235 = vpop.f32.mrf.mxu0
      %v4236 = vpop.f32.mrf.mxu0
      %v4237 = vadd.f32 %v3180, %v4236
      %v4238 = vpop.f32.mrf.mxu0
      %4239 = vmatprep.mubr.bf16.mxu0 0
      %4240 = vmatmul.mubr.bf16.gmra.mxu0 %v2105
      %v4241 = vpop.f32.mrf.mxu0
      %v4242 = vadd.f32 %v3185, %v4241
      %v4243 = vpop.f32.mrf.mxu0
      %v4244 = vpop.f32.mrf.mxu0
      %v4245 = vadd.f32 %v3188, %v4244
      %v4246 = vpop.f32.mrf.mxu0
      %4247 = vmatprep.mubr.bf16.mxu0 0
      %4248 = vmatmul.mubr.bf16.gmra.mxu0 %v2108
      %v4249 = vpop.f32.mrf.mxu0
      %v4250 = vadd.f32 %v3193, %v4249
      %v4251 = vpop.f32.mrf.mxu0
      %v4252 = vpop.f32.mrf.mxu0
      %v4253 = vadd.f32 %v3196, %v4252
      %v4254 = vpop.f32.mrf.mxu0
      %4255 = vmatprep.mubr.bf16.mxu0 0
      %4256 = vmatmul.mubr.bf16.gmra.mxu0 %v2111
      %v4257 = vpop.f32.mrf.mxu0
      %v4258 = vadd.f32 %v3201, %v4257
      %v4259 = vpop.f32.mrf.mxu0
      %v4260 = vpop.f32.mrf.mxu0
      %v4261 = vadd.f32 %v3204, %v4260
      %v4262 = vpop.f32.mrf.mxu0
      %4263 = vmatprep.mubr.bf16.mxu0 0
      %4264 = vmatmul.mubr.bf16.gmra.mxu0 %v2114
      %v4265 = vpop.f32.mrf.mxu0
      %v4266 = vadd.f32 %v3209, %v4265
      %v4267 = vpop.f32.mrf.mxu0
      %v4268 = vpop.f32.mrf.mxu0
      %v4269 = vadd.f32 %v3212, %v4268
      %v4270 = vpop.f32.mrf.mxu0
      %4271 = vmatprep.mubr.bf16.mxu0 0
      %4272 = vmatmul.mubr.bf16.gmra.mxu0 %v2117
      %v4273 = vpop.f32.mrf.mxu0
      %v4274 = vadd.f32 %v3217, %v4273
      %v4275 = vpop.f32.mrf.mxu0
      %v4276 = vpop.f32.mrf.mxu0
      %v4277 = vadd.f32 %v3220, %v4276
      %v4278 = vpop.f32.mrf.mxu0
      %4279 = vmatprep.mubr.bf16.mxu0 0
      %4280 = vmatmul.mubr.bf16.gmra.mxu0 %v2120
      %v4281 = vpop.f32.mrf.mxu0
      %v4282 = vadd.f32 %v3225, %v4281
      %v4283 = vpop.f32.mrf.mxu0
      %v4284 = vpop.f32.mrf.mxu0
      %v4285 = vadd.f32 %v3228, %v4284
      %v4286 = vpop.f32.mrf.mxu0
      %4287 = vmatprep.mubr.bf16.mxu0 0
      %4288 = vmatmul.mubr.bf16.gmra.mxu0 %v2123
      %v4289 = vpop.f32.mrf.mxu0
      %v4290 = vadd.f32 %v3233, %v4289
      %v4291 = vpop.f32.mrf.mxu0
      %v4292 = vpop.f32.mrf.mxu0
      %v4293 = vadd.f32 %v3236, %v4292
      %v4294 = vpop.f32.mrf.mxu0
      %4295 = vmatprep.mubr.bf16.mxu0 0
      %4296 = vmatmul.mubr.bf16.gmra.mxu0 %v2126
      %v4297 = vpop.f32.mrf.mxu0
      %v4298 = vadd.f32 %v3241, %v4297
      %v4299 = vpop.f32.mrf.mxu0
      %v4300 = vpop.f32.mrf.mxu0
      %v4301 = vadd.f32 %v3244, %v4300
      %v4302 = vpop.f32.mrf.mxu0
      %4303 = vmatprep.mubr.bf16.mxu0 0
      %4304 = vmatmul.mubr.bf16.gmra.mxu0 %v2129
      %v4305 = vpop.f32.mrf.mxu0
      %v4306 = vadd.f32 %v3249, %v4305
      %v4307 = vpop.f32.mrf.mxu0
      %v4308 = vpop.f32.mrf.mxu0
      %v4309 = vadd.f32 %v3252, %v4308
      %v4310 = vpop.f32.mrf.mxu0
      %4311 = vmatprep.mubr.bf16.mxu0 0
      %4312 = vmatmul.mubr.bf16.gmra.mxu0 %v2132
      %v4313 = vpop.f32.mrf.mxu0
      %v4314 = vadd.f32 %v3257, %v4313
      %v4315 = vpop.f32.mrf.mxu0
      %v4316 = vpop.f32.mrf.mxu0
      %v4317 = vadd.f32 %v3260, %v4316
      %v4318 = vpop.f32.mrf.mxu0
      %4319 = vmatprep.mubr.bf16.mxu0 0
      %4320 = vmatmul.mubr.bf16.gmra.mxu0 %v2135
      %v4321 = vpop.f32.mrf.mxu0
      %v4322 = vadd.f32 %v3265, %v4321
      %v4323 = vpop.f32.mrf.mxu0
      %v4324 = vpop.f32.mrf.mxu0
      %v4325 = vadd.f32 %v3268, %v4324
      %v4326 = vpop.f32.mrf.mxu0
      %4327 = vmatprep.mubr.bf16.mxu0 0
      %4328 = vmatmul.mubr.bf16.gmra.mxu0 %v2138
      %v4329 = vpop.f32.mrf.mxu0
      %v4330 = vadd.f32 %v3273, %v4329
      %v4331 = vpop.f32.mrf.mxu0
      %v4332 = vpop.f32.mrf.mxu0
      %v4333 = vadd.f32 %v3276, %v4332
      %v4334 = vpop.f32.mrf.mxu0
      %4335 = vmatprep.mubr.bf16.mxu0 0
      %4336 = vmatmul.mubr.bf16.gmra.mxu0 %v2141
      %v4337 = vpop.f32.mrf.mxu0
      %v4338 = vadd.f32 %v3281, %v4337
      %v4339 = vpop.f32.mrf.mxu0
      %v4340 = vpop.f32.mrf.mxu0
      %v4341 = vadd.f32 %v3284, %v4340
      %v4342 = vpop.f32.mrf.mxu0
      %4343 = vmatprep.mubr.bf16.mxu0 0
      %4344 = vmatmul.mubr.bf16.gmra.mxu0 %v2144
      %v4345 = vpop.f32.mrf.mxu0
      %v4346 = vadd.f32 %v3289, %v4345
      %v4347 = vpop.f32.mrf.mxu0
      %v4348 = vpop.f32.mrf.mxu0
      %v4349 = vadd.f32 %v3292, %v4348
      %v4350 = vpop.f32.mrf.mxu0
      %4351 = vmatprep.mubr.bf16.mxu0 0
      %4352 = vmatmul.mubr.bf16.gmra.mxu0 %v2147
      %v4353 = vpop.f32.mrf.mxu0
      %v4354 = vadd.f32 %v3297, %v4353
      %v4355 = vpop.f32.mrf.mxu0
      %v4356 = vpop.f32.mrf.mxu0
      %v4357 = vadd.f32 %v3300, %v4356
      %v4358 = vpop.f32.mrf.mxu0
      %4359 = vmatprep.mubr.bf16.mxu0 0
      %4360 = vmatmul.mubr.bf16.gmra.mxu0 %v2150
      %v4361 = vpop.f32.mrf.mxu0
      %v4362 = vadd.f32 %v3305, %v4361
      %v4363 = vpop.f32.mrf.mxu0
      %v4364 = vpop.f32.mrf.mxu0
      %v4365 = vadd.f32 %v3308, %v4364
      %v4366 = vpop.f32.mrf.mxu0
      %4367 = vmatprep.mubr.bf16.mxu0 0
      %4368 = vmatmul.mubr.bf16.gmra.mxu0 %v2153
      %v4369 = vpop.f32.mrf.mxu0
      %v4370 = vadd.f32 %v3313, %v4369
      %v4371 = vpop.f32.mrf.mxu0
      %v4372 = vpop.f32.mrf.mxu0
      %v4373 = vadd.f32 %v3316, %v4372
      %v4374 = vpop.f32.mrf.mxu0
      %4375 = vmatprep.mubr.bf16.mxu0 0
      %4376 = vmatmul.mubr.bf16.gmra.mxu0 %v2156
      %v4377 = vpop.f32.mrf.mxu0
      %v4378 = vadd.f32 %v3321, %v4377
      %v4379 = vpop.f32.mrf.mxu0
      %v4380 = vpop.f32.mrf.mxu0
      %v4381 = vadd.f32 %v3324, %v4380
      %v4382 = vpop.f32.mrf.mxu0
      %4383 = vmatprep.mubr.bf16.mxu0 0
      %4384 = vmatmul.mubr.bf16.gmra.mxu0 %v2159
      %v4385 = vpop.f32.mrf.mxu0
      %v4386 = vadd.f32 %v3329, %v4385
      %v4387 = vpop.f32.mrf.mxu0
      %v4388 = vpop.f32.mrf.mxu0
      %v4389 = vadd.f32 %v3332, %v4388
      %v4390 = vpop.f32.mrf.mxu0
      %4391 = vmatprep.mubr.bf16.mxu0 0
      %4392 = vmatmul.mubr.bf16.gmra.mxu0 %v2162
      %v4393 = vpop.f32.mrf.mxu0
      %v4394 = vadd.f32 %v3337, %v4393
      %v4395 = vpop.f32.mrf.mxu0
      %v4396 = vpop.f32.mrf.mxu0
      %v4397 = vadd.f32 %v3340, %v4396
      %v4398 = vpop.f32.mrf.mxu0
      %4399 = vmatprep.mubr.bf16.mxu0 0
      %4400 = vmatmul.mubr.bf16.gmra.mxu0 %v2165
      %v4401 = vpop.f32.mrf.mxu0
      %v4402 = vadd.f32 %v3345, %v4401
      %v4403 = vpop.f32.mrf.mxu0
      %v4404 = vpop.f32.mrf.mxu0
      %v4405 = vadd.f32 %v3348, %v4404
      %v4406 = vpop.f32.mrf.mxu0
      %4407 = vmatprep.mubr.bf16.mxu0 0
      %4408 = vmatmul.mubr.bf16.gmra.mxu0 %v2168
      %v4409 = vpop.f32.mrf.mxu0
      %v4410 = vadd.f32 %v3353, %v4409
      %v4411 = vpop.f32.mrf.mxu0
      %v4412 = vpop.f32.mrf.mxu0
      %v4413 = vadd.f32 %v3356, %v4412
      %v4414 = vpop.f32.mrf.mxu0
      %4415 = vmatprep.mubr.bf16.mxu0 0
      %4416 = vmatmul.mubr.bf16.gmra.mxu0 %v2171
      %v4417 = vpop.f32.mrf.mxu0
      %v4418 = vadd.f32 %v3361, %v4417
      %v4419 = vpop.f32.mrf.mxu0
      %v4420 = vpop.f32.mrf.mxu0
      %v4421 = vadd.f32 %v3364, %v4420
      %v4422 = vpop.f32.mrf.mxu0
      %4423 = vmatprep.mubr.bf16.mxu0 0
      %4424 = vmatmul.mubr.bf16.gmra.mxu0 %v2174
      %v4425 = vpop.f32.mrf.mxu0
      %v4426 = vadd.f32 %v3369, %v4425
      %v4427 = vpop.f32.mrf.mxu0
      %v4428 = vpop.f32.mrf.mxu0
      %v4429 = vadd.f32 %v3372, %v4428
      %v4430 = vpop.f32.mrf.mxu0
      %4431 = vmatprep.mubr.bf16.mxu0 0
      %4432 = vmatmul.mubr.bf16.gmra.mxu0 %v2177
      %v4433 = vpop.f32.mrf.mxu0
      %v4434 = vadd.f32 %v3377, %v4433
      %v4435 = vpop.f32.mrf.mxu0
      %v4436 = vpop.f32.mrf.mxu0
      %v4437 = vadd.f32 %v3380, %v4436
      %v4438 = vpop.f32.mrf.mxu0
      %4439 = vmatprep.mubr.bf16.mxu0 0
      %4440 = vmatmul.mubr.bf16.gmra.mxu0 %v2180
      %v4441 = vpop.f32.mrf.mxu0
      %v4442 = vadd.f32 %v3385, %v4441
      %v4443 = vpop.f32.mrf.mxu0
      %v4444 = vpop.f32.mrf.mxu0
      %v4445 = vadd.f32 %v3388, %v4444
      %v4446 = vpop.f32.mrf.mxu0
      %4447 = vmatprep.mubr.bf16.mxu0 0
      %4448 = vmatmul.mubr.bf16.gmra.mxu0 %v2183
      %v4449 = vpop.f32.mrf.mxu0
      %v4450 = vadd.f32 %v3393, %v4449
      %v4451 = vpop.f32.mrf.mxu0
      %v4452 = vpop.f32.mrf.mxu0
      %v4453 = vadd.f32 %v3396, %v4452
      %v4454 = vpop.f32.mrf.mxu0
      %4455 = vmatprep.mubr.bf16.mxu0 0
      %4456 = vmatmul.mubr.bf16.gmra.mxu0 %v2186
      %v4457 = vpop.f32.mrf.mxu0
      %v4458 = vadd.f32 %v3401, %v4457
      %v4459 = vpop.f32.mrf.mxu0
      %v4460 = vpop.f32.mrf.mxu0
      %v4461 = vadd.f32 %v3404, %v4460
      %v4462 = vpop.f32.mrf.mxu0
      %4463 = vmatprep.mubr.bf16.mxu0 0
      %4464 = vmatmul.mubr.bf16.gmra.mxu0 %v2189
      %v4465 = vpop.f32.mrf.mxu0
      %v4466 = vadd.f32 %v3409, %v4465
      %v4467 = vpop.f32.mrf.mxu0
      %v4468 = vpop.f32.mrf.mxu0
      %v4469 = vadd.f32 %v3412, %v4468
      %v4470 = vpop.f32.mrf.mxu0
      %4471 = vmatprep.mubr.bf16.mxu0 0
      %4472 = vmatmul.mubr.bf16.gmra.mxu0 %v2192
      %v4473 = vpop.f32.mrf.mxu0
      %v4474 = vadd.f32 %v3417, %v4473
      %v4475 = vpop.f32.mrf.mxu0
      %v4476 = vpop.f32.mrf.mxu0
      %v4477 = vadd.f32 %v3420, %v4476
      %v4478 = vpop.f32.mrf.mxu0
      %4479 = vmatprep.mubr.bf16.mxu0 0
      %4480 = vmatmul.mubr.bf16.gmra.mxu0 %v2195
      %v4481 = vpop.f32.mrf.mxu0
      %v4482 = vadd.f32 %v3425, %v4481
      %v4483 = vpop.f32.mrf.mxu0
      %v4484 = vpop.f32.mrf.mxu0
      %v4485 = vadd.f32 %v3428, %v4484
      %v4486 = vpop.f32.mrf.mxu0
      %4487 = vmatprep.mubr.bf16.mxu0 0
      %4488 = vmatmul.mubr.bf16.gmra.mxu0 %v2198
      %v4489 = vpop.f32.mrf.mxu0
      %v4490 = vadd.f32 %v3433, %v4489
      %v4491 = vpop.f32.mrf.mxu0
      %v4492 = vpop.f32.mrf.mxu0
      %v4493 = vadd.f32 %v3436, %v4492
      %v4494 = vpop.f32.mrf.mxu0
      %4495 = vmatprep.mubr.bf16.mxu0 0
      %4496 = vmatmul.mubr.bf16.gmra.mxu0 %v2201
      %v4497 = vpop.f32.mrf.mxu0
      %v4498 = vadd.f32 %v3441, %v4497
      %v4499 = vpop.f32.mrf.mxu0
      %v4500 = vpop.f32.mrf.mxu0
      %v4501 = vadd.f32 %v3444, %v4500
      %v4502 = vpop.f32.mrf.mxu0
      %4503 = vmatprep.mubr.bf16.mxu0 0
      %4504 = vmatmul.mubr.bf16.gmra.mxu0 %v2204
      %v4505 = vpop.f32.mrf.mxu0
      %v4506 = vadd.f32 %v3449, %v4505
      %v4507 = vpop.f32.mrf.mxu0
      %v4508 = vpop.f32.mrf.mxu0
      %v4509 = vadd.f32 %v3452, %v4508
      %v4510 = vpop.f32.mrf.mxu0
      %4511 = vmatprep.mubr.bf16.mxu0 0
      %4512 = vmatmul.mubr.bf16.gmra.mxu0 %v2207
      %v4513 = vpop.f32.mrf.mxu0
      %v4514 = vadd.f32 %v3457, %v4513
      %v4515 = vpop.f32.mrf.mxu0
      %v4516 = vpop.f32.mrf.mxu0
      %v4517 = vadd.f32 %v3460, %v4516
      %v4518 = vpop.f32.mrf.mxu0
      %4519 = vmatprep.mubr.bf16.mxu0 0
      %4520 = vmatmul.mubr.bf16.gmra.mxu0 %v2210
      %v4521 = vpop.f32.mrf.mxu0
      %v4522 = vadd.f32 %v3465, %v4521
      %v4523 = vpop.f32.mrf.mxu0
      %v4524 = vpop.f32.mrf.mxu0
      %v4525 = vadd.f32 %v3468, %v4524
      %v4526 = vpop.f32.mrf.mxu0
      %4527 = vmatprep.mubr.bf16.mxu0 0
      %4528 = vmatmul.mubr.bf16.gmra.mxu0 %v2213
      %v4529 = vpop.f32.mrf.mxu0
      %v4530 = vadd.f32 %v3473, %v4529
      %v4531 = vpop.f32.mrf.mxu0
      %v4532 = vpop.f32.mrf.mxu0
      %v4533 = vadd.f32 %v3476, %v4532
      %v4534 = vpop.f32.mrf.mxu0
      %4535 = vmatprep.mubr.bf16.mxu0 0
      %4536 = vmatmul.mubr.bf16.gmra.mxu0 %v2216
      %v4537 = vpop.f32.mrf.mxu0
      %v4538 = vadd.f32 %v3481, %v4537
      %v4539 = vpop.f32.mrf.mxu0
      %v4540 = vpop.f32.mrf.mxu0
      %v4541 = vadd.f32 %v3484, %v4540
      %v4542 = vpop.f32.mrf.mxu0
      %4543 = vmatprep.mubr.bf16.mxu0 0
      %4544 = vmatmul.mubr.bf16.gmra.mxu0 %v2219
      %v4545 = vpop.f32.mrf.mxu0
      %v4546 = vadd.f32 %v3489, %v4545
      %v4547 = vpop.f32.mrf.mxu0
      %v4548 = vpop.f32.mrf.mxu0
      %v4549 = vadd.f32 %v3492, %v4548
      %v4550 = vpop.f32.mrf.mxu0
      %4551 = vmatprep.mubr.bf16.mxu0 0
      %4552 = vmatmul.mubr.bf16.gmra.mxu0 %v2222
      %v4553 = vpop.f32.mrf.mxu0
      %v4554 = vadd.f32 %v3497, %v4553
      %v4555 = vpop.f32.mrf.mxu0
      %v4556 = vpop.f32.mrf.mxu0
      %v4557 = vadd.f32 %v3500, %v4556
      %v4558 = vpop.f32.mrf.mxu0
      %4559 = vmatprep.mubr.bf16.mxu0 0
      %4560 = vmatmul.mubr.bf16.gmra.mxu0 %v2225
      %v4561 = vpop.f32.mrf.mxu0
      %v4562 = vadd.f32 %v3505, %v4561
      %v4563 = vpop.f32.mrf.mxu0
      %v4564 = vpop.f32.mrf.mxu0
      %v4565 = vadd.f32 %v3508, %v4564
      %v4566 = vpop.f32.mrf.mxu0
      %4567 = vmatprep.mubr.bf16.mxu0 0
      %4568 = vmatmul.mubr.bf16.gmra.mxu0 %v2228
      %v4569 = vpop.f32.mrf.mxu0
      %v4570 = vadd.f32 %v3513, %v4569
      %v4571 = vpop.f32.mrf.mxu0
      %v4572 = vpop.f32.mrf.mxu0
      %v4573 = vadd.f32 %v3516, %v4572
      %v4574 = vpop.f32.mrf.mxu0
      %4575 = vmatprep.mubr.bf16.mxu0 0
      %4576 = vmatmul.mubr.bf16.gmra.mxu0 %v2231
      %v4577 = vpop.f32.mrf.mxu0
      %v4578 = vadd.f32 %v3521, %v4577
      %v4579 = vpop.f32.mrf.mxu0
      %v4580 = vpop.f32.mrf.mxu0
      %v4581 = vadd.f32 %v3524, %v4580
      %v4582 = vpop.f32.mrf.mxu0
      %4583 = vmatprep.mubr.bf16.mxu0 0
      %4584 = vmatmul.mubr.bf16.gmra.mxu0 %v2234
      %v4585 = vpop.f32.mrf.mxu0
      %v4586 = vadd.f32 %v3529, %v4585
      %v4587 = vpop.f32.mrf.mxu0
      %v4588 = vpop.f32.mrf.mxu0
      %v4589 = vadd.f32 %v3532, %v4588
      %v4590 = vpop.f32.mrf.mxu0
      %4591 = vmatprep.mubr.bf16.mxu0 0
      %4592 = vmatmul.mubr.bf16.gmra.mxu0 %v2237
      %v4593 = vpop.f32.mrf.mxu0
      %v4594 = vadd.f32 %v3537, %v4593
      %v4595 = vpop.f32.mrf.mxu0
      %v4596 = vpop.f32.mrf.mxu0
      %v4597 = vadd.f32 %v3540, %v4596
      %v4598 = vpop.f32.mrf.mxu0
      %4599 = vmatprep.mubr.bf16.mxu0 0
      %4600 = vmatmul.mubr.bf16.gmra.mxu0 %v2240
      %v4601 = vpop.f32.mrf.mxu0
      %v4602 = vadd.f32 %v3545, %v4601
      %v4603 = vpop.f32.mrf.mxu0
      %v4604 = vpop.f32.mrf.mxu0
      %v4605 = vadd.f32 %v3548, %v4604
      %v4606 = vpop.f32.mrf.mxu0
      %4607 = vmatprep.mubr.bf16.mxu0 0
      %4608 = vmatmul.mubr.bf16.gmra.mxu0 %v2243
      %v4609 = vpop.f32.mrf.mxu0
      %v4610 = vadd.f32 %v3553, %v4609
      %v4611 = vpop.f32.mrf.mxu0
      %v4612 = vpop.f32.mrf.mxu0
      %v4613 = vadd.f32 %v3556, %v4612
      %v4614 = vpop.f32.mrf.mxu0
      %4615 = vmatprep.mubr.bf16.mxu0 0
      %4616 = vmatmul.mubr.bf16.gmra.mxu0 %v2246
      %v4617 = vpop.f32.mrf.mxu0
      %v4618 = vadd.f32 %v3561, %v4617
      %v4619 = vpop.f32.mrf.mxu0
      %v4620 = vpop.f32.mrf.mxu0
      %v4621 = vadd.f32 %v3564, %v4620
      %v4622 = vpop.f32.mrf.mxu0
      %4623 = vmatprep.mubr.bf16.mxu0 0
      %4624 = vmatmul.mubr.bf16.gmra.mxu0 %v2249
      %v4625 = vpop.f32.mrf.mxu0
      %v4626 = vadd.f32 %v3569, %v4625
      %v4627 = vpop.f32.mrf.mxu0
      %v4628 = vpop.f32.mrf.mxu0
      %v4629 = vadd.f32 %v3572, %v4628
      %v4630 = vpop.f32.mrf.mxu0
      %4631 = vmatprep.mubr.bf16.mxu0 0
      %4632 = vmatmul.mubr.bf16.gmra.mxu0 %v2252
      %v4633 = vpop.f32.mrf.mxu0
      %v4634 = vadd.f32 %v3577, %v4633
      %v4635 = vpop.f32.mrf.mxu0
      %v4636 = vpop.f32.mrf.mxu0
      %v4637 = vadd.f32 %v3580, %v4636
      %v4638 = vpop.f32.mrf.mxu0
      %4639 = vmatprep.mubr.bf16.mxu0 0
      %4640 = vmatmul.mubr.bf16.gmra.mxu0 %v2255
      %v4641 = vpop.f32.mrf.mxu0
      %v4642 = vadd.f32 %v3585, %v4641
      %v4643 = vpop.f32.mrf.mxu0
      %v4644 = vpop.f32.mrf.mxu0
      %v4645 = vadd.f32 %v3588, %v4644
      %v4646 = vpop.f32.mrf.mxu0
      %4647 = vmatprep.mubr.bf16.mxu0 0
      %4648 = vmatmul.mubr.bf16.gmra.mxu0 %v2258
      %v4649 = vpop.f32.mrf.mxu0
      %v4650 = vadd.f32 %v3593, %v4649
      %v4651 = vpop.f32.mrf.mxu0
      %v4652 = vpop.f32.mrf.mxu0
      %v4653 = vadd.f32 %v3596, %v4652
      %v4654 = vpop.f32.mrf.mxu0
      %4655 = vmatprep.mubr.bf16.mxu0 0
      %4656 = vmatmul.mubr.bf16.gmra.mxu0 %v2261
      %v4657 = vpop.f32.mrf.mxu0
      %v4658 = vadd.f32 %v3601, %v4657
      %v4659 = vpop.f32.mrf.mxu0
      %v4660 = vpop.f32.mrf.mxu0
      %v4661 = vadd.f32 %v3604, %v4660
      %v4662 = vpop.f32.mrf.mxu0
      %4663 = vmatprep.mubr.bf16.mxu0 0
      %4664 = vmatmul.mubr.bf16.gmra.mxu0 %v2264
      %v4665 = vpop.f32.mrf.mxu0
      %v4666 = vadd.f32 %v3609, %v4665
      %v4667 = vpop.f32.mrf.mxu0
      %v4668 = vpop.f32.mrf.mxu0
      %v4669 = vadd.f32 %v3612, %v4668
      %v4670 = vpop.f32.mrf.mxu0
      %4671 = vmatprep.mubr.bf16.mxu0 0
      %4672 = vmatmul.mubr.bf16.gmra.mxu0 %v2267
      %v4673 = vpop.f32.mrf.mxu0
      %v4674 = vadd.f32 %v3617, %v4673
      %v4675 = vpop.f32.mrf.mxu0
      %v4676 = vpop.f32.mrf.mxu0
      %v4677 = vadd.f32 %v3620, %v4676
      %v4678 = vpop.f32.mrf.mxu0
      %4679 = vmatprep.mubr.bf16.mxu0 0
      %4680 = vmatmul.mubr.bf16.gmra.mxu0 %v2270
      %v4681 = vpop.f32.mrf.mxu0
      %v4682 = vadd.f32 %v3625, %v4681
      %v4683 = vpop.f32.mrf.mxu0
      %v4684 = vpop.f32.mrf.mxu0
      %v4685 = vadd.f32 %v3628, %v4684
      %v4686 = vpop.f32.mrf.mxu0
      %4687 = vmatprep.mubr.bf16.mxu0 0
      %4688 = vmatmul.mubr.bf16.gmra.mxu0 %v2273
      %v4689 = vpop.f32.mrf.mxu0
      %v4690 = vadd.f32 %v3633, %v4689
      %v4691 = vpop.f32.mrf.mxu0
      %v4692 = vpop.f32.mrf.mxu0
      %v4693 = vadd.f32 %v3636, %v4692
      %v4694 = vpop.f32.mrf.mxu0
      %4695 = vmatprep.mubr.bf16.mxu0 0
      %4696 = vmatmul.mubr.bf16.gmra.mxu0 %v2276
      %v4697 = vpop.f32.mrf.mxu0
      %v4698 = vadd.f32 %v3641, %v4697
      %v4699 = vpop.f32.mrf.mxu0
      %v4700 = vpop.f32.mrf.mxu0
      %v4701 = vadd.f32 %v3644, %v4700
      %v4702 = vpop.f32.mrf.mxu0
      %4703 = vmatprep.mubr.bf16.mxu0 0
      %4704 = vmatmul.mubr.bf16.gmra.mxu0 %v2279
      %v4705 = vpop.f32.mrf.mxu0
      %v4706 = vadd.f32 %v3649, %v4705
      %v4707 = vpop.f32.mrf.mxu0
      %v4708 = vpop.f32.mrf.mxu0
      %v4709 = vadd.f32 %v3652, %v4708
      %v4710 = vpop.f32.mrf.mxu0
      %4711 = vmatprep.mubr.bf16.mxu0 0
      %4712 = vmatmul.mubr.bf16.gmra.mxu0 %v2282
      %v4713 = vpop.f32.mrf.mxu0
      %v4714 = vadd.f32 %v3657, %v4713
      %v4715 = vpop.f32.mrf.mxu0
      %v4716 = vpop.f32.mrf.mxu0
      %v4717 = vadd.f32 %v3660, %v4716
      %v4718 = vpop.f32.mrf.mxu0
      %4719 = vmatprep.mubr.bf16.mxu0 0
      %4720 = vmatmul.mubr.bf16.gmra.mxu0 %v2285
      %v4721 = vpop.f32.mrf.mxu0
      %v4722 = vadd.f32 %v3665, %v4721
      %v4723 = vpop.f32.mrf.mxu0
      %v4724 = vpop.f32.mrf.mxu0
      %v4725 = vadd.f32 %v3668, %v4724
      %v4726 = vpop.f32.mrf.mxu0
      %4727 = vmatprep.mubr.bf16.mxu0 0
      %4728 = vmatmul.mubr.bf16.gmra.mxu0 %v2288
      %v4729 = vpop.f32.mrf.mxu0
      %v4730 = vadd.f32 %v3673, %v4729
      %v4731 = vpop.f32.mrf.mxu0
      %v4732 = vpop.f32.mrf.mxu0
      %v4733 = vadd.f32 %v3676, %v4732
      %v4734 = vpop.f32.mrf.mxu0
      %4735 = vmatprep.mubr.bf16.mxu0 0
      %4736 = vmatmul.mubr.bf16.gmra.mxu0 %v2291
      %v4737 = vpop.f32.mrf.mxu0
      %v4738 = vadd.f32 %v3681, %v4737
      %v4739 = vpop.f32.mrf.mxu0
      %v4740 = vpop.f32.mrf.mxu0
      %v4741 = vadd.f32 %v3684, %v4740
      %v4742 = vpop.f32.mrf.mxu0
      %4743 = vmatprep.mubr.bf16.mxu0 0
      %4744 = vmatmul.mubr.bf16.gmra.mxu0 %v2294
      %v4745 = vpop.f32.mrf.mxu0
      %v4746 = vadd.f32 %v3689, %v4745
      %v4747 = vpop.f32.mrf.mxu0
      %v4748 = vpop.f32.mrf.mxu0
      %v4749 = vadd.f32 %v3692, %v4748
      %v4750 = vpop.f32.mrf.mxu0
      %4751 = vmatprep.mubr.bf16.mxu0 0
      %4752 = vmatmul.mubr.bf16.gmra.mxu0 %v2297
      %v4753 = vpop.f32.mrf.mxu0
      %v4754 = vadd.f32 %v3697, %v4753
      %v4755 = vpop.f32.mrf.mxu0
      %v4756 = vpop.f32.mrf.mxu0
      %v4757 = vadd.f32 %v3700, %v4756
      %v4758 = vpop.f32.mrf.mxu0
      %4759 = vmatprep.mubr.bf16.mxu0 0
      %4760 = vmatmul.mubr.bf16.gmra.mxu0 %v2300
      %v4761 = vpop.f32.mrf.mxu0
      %v4762 = vadd.f32 %v3705, %v4761
      %v4763 = vpop.f32.mrf.mxu0
      %v4764 = vpop.f32.mrf.mxu0
      %v4765 = vadd.f32 %v3708, %v4764
      %v4766 = vpop.f32.mrf.mxu0
      %4767 = vmatprep.mubr.bf16.mxu0 0
      %4768 = vmatmul.mubr.bf16.gmra.mxu0 %v2303
      %v4769 = vpop.f32.mrf.mxu0
      %v4770 = vadd.f32 %v3713, %v4769
      %v4771 = vpop.f32.mrf.mxu0
      %v4772 = vpop.f32.mrf.mxu0
      %v4773 = vadd.f32 %v3716, %v4772
      %v4774 = vpop.f32.mrf.mxu0
      %4775 = vmatprep.mubr.bf16.mxu0 0
      %4776 = vmatmul.mubr.bf16.gmra.mxu0 %v2306
      %v4777 = vpop.f32.mrf.mxu0
      %v4778 = vadd.f32 %v3721, %v4777
      %v4779 = vpop.f32.mrf.mxu0
      %v4780 = vpop.f32.mrf.mxu0
      %v4781 = vadd.f32 %v3724, %v4780
      %v4782 = vpop.f32.mrf.mxu0
      %4783 = vmatprep.mubr.bf16.mxu0 0
      %4784 = vmatmul.mubr.bf16.gmra.mxu0 %v2309
      %v4785 = vpop.f32.mrf.mxu0
      %v4786 = vadd.f32 %v3729, %v4785
      %v4787 = vpop.f32.mrf.mxu0
      %v4788 = vpop.f32.mrf.mxu0
      %v4789 = vadd.f32 %v3732, %v4788
      %v4790 = vpop.f32.mrf.mxu0
      %4791 = vmatprep.mubr.bf16.mxu0 0
      %4792 = vmatmul.mubr.bf16.gmra.mxu0 %v2312
      %v4793 = vpop.f32.mrf.mxu0
      %v4794 = vadd.f32 %v3737, %v4793
      %v4795 = vpop.f32.mrf.mxu0
      %v4796 = vpop.f32.mrf.mxu0
      %v4797 = vadd.f32 %v3740, %v4796
      %v4798 = vpop.f32.mrf.mxu0
      %4799 = vmatprep.mubr.bf16.mxu0 0
      %4800 = vmatmul.mubr.bf16.gmra.mxu0 %v2315
      %v4801 = vpop.f32.mrf.mxu0
      %v4802 = vadd.f32 %v3745, %v4801
      %v4803 = vpop.f32.mrf.mxu0
      %v4804 = vpop.f32.mrf.mxu0
      %v4805 = vadd.f32 %v3748, %v4804
      %v4806 = vpop.f32.mrf.mxu0
      %4807 = vmatprep.mubr.bf16.mxu0 0
      %4808 = vmatmul.mubr.bf16.gmra.mxu0 %v2318
      %v4809 = vpop.f32.mrf.mxu0
      %v4810 = vadd.f32 %v3753, %v4809
      %v4811 = vpop.f32.mrf.mxu0
      %v4812 = vpop.f32.mrf.mxu0
      %v4813 = vadd.f32 %v3756, %v4812
      %v4814 = vpop.f32.mrf.mxu0
      %4815 = vmatprep.mubr.bf16.mxu0 0
      %4816 = vmatmul.mubr.bf16.gmra.mxu0 %v2321
      %v4817 = vpop.f32.mrf.mxu0
      %v4818 = vadd.f32 %v3761, %v4817
      %v4819 = vpop.f32.mrf.mxu0
      %v4820 = vpop.f32.mrf.mxu0
      %v4821 = vadd.f32 %v3764, %v4820
      %v4822 = vpop.f32.mrf.mxu0
      %4823 = vmatprep.mubr.bf16.mxu0 0
      %4824 = vmatmul.mubr.bf16.gmra.mxu0 %v2324
      %v4825 = vpop.f32.mrf.mxu0
      %v4826 = vadd.f32 %v3769, %v4825
      %v4827 = vpop.f32.mrf.mxu0
      %v4828 = vpop.f32.mrf.mxu0
      %v4829 = vadd.f32 %v3772, %v4828
      %v4830 = vpop.f32.mrf.mxu0
      %4831 = vmatprep.mubr.bf16.mxu0 0
      %4832 = vmatmul.mubr.bf16.gmra.mxu0 %v2327
      %v4833 = vpop.f32.mrf.mxu0
      %v4834 = vadd.f32 %v3777, %v4833
      %v4835 = vpop.f32.mrf.mxu0
      %v4836 = vpop.f32.mrf.mxu0
      %v4837 = vadd.f32 %v3780, %v4836
      %v4838 = vpop.f32.mrf.mxu0
      %4839 = vmatprep.mubr.bf16.mxu0 0
      %4840 = vmatmul.mubr.bf16.gmra.mxu0 %v2330
      %v4841 = vpop.f32.mrf.mxu0
      %v4842 = vadd.f32 %v3785, %v4841
      %v4843 = vpop.f32.mrf.mxu0
      %v4844 = vpop.f32.mrf.mxu0
      %v4845 = vadd.f32 %v3788, %v4844
      %v4846 = vpop.f32.mrf.mxu0
      %4847 = vmatprep.mubr.bf16.mxu0 0
      %4848 = vmatmul.mubr.bf16.gmra.mxu0 %v2333
      %v4849 = vpop.f32.mrf.mxu0
      %v4850 = vadd.f32 %v3793, %v4849
      %v4851 = vpop.f32.mrf.mxu0
      %v4852 = vpop.f32.mrf.mxu0
      %v4853 = vadd.f32 %v3796, %v4852
      %v4854 = vpop.f32.mrf.mxu0
      %4855 = vmatprep.mubr.bf16.mxu0 0
      %4856 = vmatmul.mubr.bf16.gmra.mxu0 %v2336
      %v4857 = vpop.f32.mrf.mxu0
      %v4858 = vadd.f32 %v3801, %v4857
      %v4859 = vpop.f32.mrf.mxu0
      %v4860 = vpop.f32.mrf.mxu0
      %v4861 = vadd.f32 %v3804, %v4860
      %v4862 = vpop.f32.mrf.mxu0
      %4863 = vmatprep.mubr.bf16.mxu0 0
      %4864 = vmatmul.mubr.bf16.gmra.mxu0 %v2339
      %v4865 = vpop.f32.mrf.mxu0
      %v4866 = vadd.f32 %v3809, %v4865
      %v4867 = vpop.f32.mrf.mxu0
      %v4868 = vpop.f32.mrf.mxu0
      %v4869 = vadd.f32 %v3812, %v4868
      %v4870 = vpop.f32.mrf.mxu0
      %4871 = vmatprep.mubr.bf16.mxu0 0
      %4872 = vmatmul.mubr.bf16.gmra.mxu0 %v2342
      %v4873 = vpop.f32.mrf.mxu0
      %v4874 = vadd.f32 %v3817, %v4873
      %v4875 = vpop.f32.mrf.mxu0
      %v4876 = vpop.f32.mrf.mxu0
      %v4877 = vadd.f32 %v3820, %v4876
      %v4878 = vpop.f32.mrf.mxu0
      %4879 = vmatprep.mubr.bf16.mxu0 0
      %4880 = vmatmul.mubr.bf16.gmra.mxu0 %v2345
      %v4881 = vpop.f32.mrf.mxu0
      %v4882 = vadd.f32 %v3825, %v4881
      %v4883 = vpop.f32.mrf.mxu0
      %v4884 = vpop.f32.mrf.mxu0
      %v4885 = vadd.f32 %v3828, %v4884
      %v4886 = vpop.f32.mrf.mxu0
      %4887 = vmatprep.mubr.bf16.mxu0 0
      %4888 = vmatmul.mubr.bf16.gmra.mxu0 %v2348
      %v4889 = vpop.f32.mrf.mxu0
      %v4890 = vadd.f32 %v3833, %v4889
      %v4891 = vpop.f32.mrf.mxu0
      %v4892 = vpop.f32.mrf.mxu0
      %v4893 = vadd.f32 %v3836, %v4892
      %v4894 = vpop.f32.mrf.mxu0
      %4895 = vmatprep.mubr.bf16.mxu0 0
      %4896 = vmatmul.mubr.bf16.gmra.mxu0 %v2351
      %v4897 = vpop.f32.mrf.mxu0
      %v4898 = vadd.f32 %v3841, %v4897
      %v4899 = vpop.f32.mrf.mxu0
      %v4900 = vpop.f32.mrf.mxu0
      %v4901 = vadd.f32 %v3844, %v4900
      %v4902 = vpop.f32.mrf.mxu0
      %4903 = vmatprep.mubr.bf16.mxu0 0
      %4904 = vmatmul.mubr.bf16.gmra.mxu0 %v2354
      %v4905 = vpop.f32.mrf.mxu0
      %v4906 = vadd.f32 %v3849, %v4905
      %v4907 = vpop.f32.mrf.mxu0
      %v4908 = vpop.f32.mrf.mxu0
      %v4909 = vadd.f32 %v3852, %v4908
      %v4910 = vpop.f32.mrf.mxu0
      %4911 = vmatprep.mubr.bf16.mxu0 0
      %4912 = vmatmul.mubr.bf16.gmra.mxu0 %v2357
      %v4913 = vpop.f32.mrf.mxu0
      %v4914 = vadd.f32 %v3857, %v4913
      %v4915 = vpop.f32.mrf.mxu0
      %v4916 = vpop.f32.mrf.mxu0
      %v4917 = vadd.f32 %v3860, %v4916
      %v4918 = vpop.f32.mrf.mxu0
      %4919 = vmatprep.mubr.bf16.mxu0 0
      %4920 = vmatmul.mubr.bf16.gmra.mxu0 %v2360
      %v4921 = vpop.f32.mrf.mxu0
      %v4922 = vadd.f32 %v3865, %v4921
      %v4923 = vpop.f32.mrf.mxu0
      %v4924 = vpop.f32.mrf.mxu0
      %v4925 = vadd.f32 %v3868, %v4924
      %v4926 = vpop.f32.mrf.mxu0
      %4927 = vmatprep.mubr.bf16.mxu0 0
      %4928 = vmatmul.mubr.bf16.gmra.mxu0 %v2363
      %v4929 = vpop.f32.mrf.mxu0
      %v4930 = vadd.f32 %v3873, %v4929
      %v4931 = vpop.f32.mrf.mxu0
      %v4932 = vpop.f32.mrf.mxu0
      %v4933 = vadd.f32 %v3876, %v4932
      %v4934 = vpop.f32.mrf.mxu0
      %4935 = vmatprep.mubr.bf16.mxu0 0
      %4936 = vmatmul.mubr.bf16.gmra.mxu0 %v2366
      %v4937 = vpop.f32.mrf.mxu0
      %v4938 = vadd.f32 %v3881, %v4937
      %v4939 = vpop.f32.mrf.mxu0
      %v4940 = vpop.f32.mrf.mxu0
      %v4941 = vadd.f32 %v3884, %v4940
      %v4942 = vpop.f32.mrf.mxu0
      %4943 = vmatprep.mubr.bf16.mxu0 0
      %4944 = vmatmul.mubr.bf16.gmra.mxu0 %v2369
      %v4945 = vpop.f32.mrf.mxu0
      %v4946 = vadd.f32 %v3889, %v4945
      %v4947 = vpop.f32.mrf.mxu0
      %v4948 = vpop.f32.mrf.mxu0
      %v4949 = vadd.f32 %v3892, %v4948
      %v4950 = vpop.f32.mrf.mxu0
      %4951 = vmatprep.mubr.bf16.mxu0 0
      %4952 = vmatmul.mubr.bf16.gmra.mxu0 %v2372
      %v4953 = vpop.f32.mrf.mxu0
      %v4954 = vadd.f32 %v3897, %v4953
      %v4955 = vpop.f32.mrf.mxu0
      %v4956 = vpop.f32.mrf.mxu0
      %v4957 = vadd.f32 %v3900, %v4956
      %v4958 = vpop.f32.mrf.mxu0
      %4959 = vmatprep.mubr.bf16.mxu0 0
      %4960 = vmatmul.mubr.bf16.gmra.mxu0 %v2375
      %v4961 = vpop.f32.mrf.mxu0
      %v4962 = vadd.f32 %v3905, %v4961
      %v4963 = vpop.f32.mrf.mxu0
      %v4964 = vpop.f32.mrf.mxu0
      %v4965 = vadd.f32 %v3908, %v4964
      %v4966 = vpop.f32.mrf.mxu0
      %4967 = vmatprep.mubr.bf16.mxu0 0
      %4968 = vmatmul.mubr.bf16.gmra.mxu0 %v2378
      %v4969 = vpop.f32.mrf.mxu0
      %v4970 = vadd.f32 %v3913, %v4969
      %v4971 = vpop.f32.mrf.mxu0
      %v4972 = vpop.f32.mrf.mxu0
      %v4973 = vadd.f32 %v3916, %v4972
      %v4974 = vpop.f32.mrf.mxu0
      %4975 = vmatprep.mubr.bf16.mxu0 0
      %4976 = vmatmul.mubr.bf16.gmra.mxu0 %v2381
      %v4977 = vpop.f32.mrf.mxu0
      %v4978 = vadd.f32 %v3921, %v4977
      %v4979 = vpop.f32.mrf.mxu0
      %v4980 = vpop.f32.mrf.mxu0
      %v4981 = vadd.f32 %v3924, %v4980
      %v4982 = vpop.f32.mrf.mxu0
      %4983 = vmatprep.mubr.bf16.mxu0 0
      %4984 = vmatmul.mubr.bf16.gmra.mxu0 %v2384
      %v4985 = vpop.f32.mrf.mxu0
      %v4986 = vadd.f32 %v3929, %v4985
      %v4987 = vpop.f32.mrf.mxu0
      %v4988 = vpop.f32.mrf.mxu0
      %v4989 = vadd.f32 %v3932, %v4988
      %v4990 = vpop.f32.mrf.mxu0
      %4991 = vmatprep.mubr.bf16.mxu0 0
      %4992 = vmatmul.mubr.bf16.gmra.mxu0 %v2387
      %v4993 = vpop.f32.mrf.mxu0
      %v4994 = vadd.f32 %v3937, %v4993
      %v4995 = vpop.f32.mrf.mxu0
      %v4996 = vpop.f32.mrf.mxu0
      %v4997 = vadd.f32 %v3940, %v4996
      %v4998 = vpop.f32.mrf.mxu0
      %4999 = vmatprep.mubr.bf16.mxu0 0
      %5000 = vmatmul.mubr.bf16.gmra.mxu0 %v2390
      %v5001 = vpop.f32.mrf.mxu0
      %v5002 = vadd.f32 %v3945, %v5001
      %v5003 = vpop.f32.mrf.mxu0
      %v5004 = vpop.f32.mrf.mxu0
      %v5005 = vadd.f32 %v3948, %v5004
      %v5006 = vpop.f32.mrf.mxu0
      %5007 = vmatprep.mubr.bf16.mxu0 0
      %5008 = vmatmul.mubr.bf16.gmra.mxu0 %v2393
      %v5009 = vpop.f32.mrf.mxu0
      %v5010 = vadd.f32 %v3953, %v5009
      %v5011 = vpop.f32.mrf.mxu0
      %v5012 = vpop.f32.mrf.mxu0
      %v5013 = vadd.f32 %v3956, %v5012
      %v5014 = vpop.f32.mrf.mxu0
      %5015 = vmatprep.mubr.bf16.mxu0 0
      %5016 = vmatmul.mubr.bf16.gmra.mxu0 %v2396
      %v5017 = vpop.f32.mrf.mxu0
      %v5018 = vadd.f32 %v3961, %v5017
      %v5019 = vpop.f32.mrf.mxu0
      %v5020 = vpop.f32.mrf.mxu0
      %v5021 = vadd.f32 %v3964, %v5020
      %v5022 = vpop.f32.mrf.mxu0
      %5023 = vmatprep.mubr.bf16.mxu0 0
      %5024 = vmatmul.mubr.bf16.gmra.mxu0 %v2399
      %v5025 = vpop.f32.mrf.mxu0
      %v5026 = vadd.f32 %v3969, %v5025
      %v5027 = vpop.f32.mrf.mxu0
      %v5028 = vpop.f32.mrf.mxu0
      %v5029 = vadd.f32 %v3972, %v5028
      %v5030 = vpop.f32.mrf.mxu0
      %5031 = vmatprep.mubr.bf16.mxu0 0
      %5032 = vmatmul.mubr.bf16.gmra.mxu0 %v2402
      %v5033 = vpop.f32.mrf.mxu0
      %v5034 = vadd.f32 %v3977, %v5033
      %v5035 = vpop.f32.mrf.mxu0
      %v5036 = vpop.f32.mrf.mxu0
      %v5037 = vadd.f32 %v3980, %v5036
      %v5038 = vpop.f32.mrf.mxu0
      %5039 = vmatprep.mubr.bf16.mxu0 0
      %5040 = vmatmul.mubr.bf16.gmra.mxu0 %v2405
      %v5041 = vpop.f32.mrf.mxu0
      %v5042 = vadd.f32 %v3985, %v5041
      %v5043 = vpop.f32.mrf.mxu0
      %v5044 = vpop.f32.mrf.mxu0
      %v5045 = vadd.f32 %v3988, %v5044
      %v5046 = vpop.f32.mrf.mxu0
      %5047 = vdwg.mxu0
      %v5048 = vmax.f32 %v4026, 0.0
      %v5049 = vmax.f32 %v4029, 0.0
      %v5050 = vmax.f32 %v4034, 0.0
      %v5051 = vmax.f32 %v4037, 0.0
      %v5052 = vmax.f32 %v4042, 0.0
      %v5053 = vmax.f32 %v4045, 0.0
      %v5054 = vmax.f32 %v4050, 0.0
      %v5055 = vmax.f32 %v4053, 0.0
      %v5056 = vmax.f32 %v4058, 0.0
      %v5057 = vmax.f32 %v4061, 0.0
      %v5058 = vmax.f32 %v4066, 0.0
      %v5059 = vmax.f32 %v4069, 0.0
      %v5060 = vmax.f32 %v4074, 0.0
      %v5061 = vmax.f32 %v4077, 0.0
      %v5062 = vmax.f32 %v4082, 0.0
      %v5063 = vmax.f32 %v4085, 0.0
      %v5064 = vmax.f32 %v4090, 0.0
      %v5065 = vmax.f32 %v4093, 0.0
      %v5066 = vmax.f32 %v4098, 0.0
      %v5067 = vmax.f32 %v4101, 0.0
      %v5068 = vmax.f32 %v4106, 0.0
      %v5069 = vmax.f32 %v4109, 0.0
      %v5070 = vmax.f32 %v4114, 0.0
      %v5071 = vmax.f32 %v4117, 0.0
      %v5072 = vmax.f32 %v4122, 0.0
      %v5073 = vmax.f32 %v4125, 0.0
      %v5074 = vmax.f32 %v4130, 0.0
      %v5075 = vmax.f32 %v4133, 0.0
      %v5076 = vmax.f32 %v4138, 0.0
      %v5077 = vmax.f32 %v4141, 0.0
      %v5078 = vmax.f32 %v4146, 0.0
      %v5079 = vmax.f32 %v4149, 0.0
      %v5080 = vmax.f32 %v4154, 0.0
      %v5081 = vmax.f32 %v4157, 0.0
      %v5082 = vmax.f32 %v4162, 0.0
      %v5083 = vmax.f32 %v4165, 0.0
      %v5084 = vmax.f32 %v4170, 0.0
      %v5085 = vmax.f32 %v4173, 0.0
      %v5086 = vmax.f32 %v4178, 0.0
      %v5087 = vmax.f32 %v4181, 0.0
      %v5088 = vmax.f32 %v4186, 0.0
      %v5089 = vmax.f32 %v4189, 0.0
      %v5090 = vmax.f32 %v4194, 0.0
      %v5091 = vmax.f32 %v4197, 0.0
      %v5092 = vmax.f32 %v4202, 0.0
      %v5093 = vmax.f32 %v4205, 0.0
      %v5094 = vmax.f32 %v4210, 0.0
      %v5095 = vmax.f32 %v4213, 0.0
      %v5096 = vmax.f32 %v4218, 0.0
      %v5097 = vmax.f32 %v4221, 0.0
      %v5098 = vmax.f32 %v4226, 0.0
      %v5099 = vmax.f32 %v4229, 0.0
      %v5100 = vmax.f32 %v4234, 0.0
      %v5101 = vmax.f32 %v4237, 0.0
      %v5102 = vmax.f32 %v4242, 0.0
      %v5103 = vmax.f32 %v4245, 0.0
      %v5104 = vmax.f32 %v4250, 0.0
      %v5105 = vmax.f32 %v4253, 0.0
      %v5106 = vmax.f32 %v4258, 0.0
      %v5107 = vmax.f32 %v4261, 0.0
      %v5108 = vmax.f32 %v4266, 0.0
      %v5109 = vmax.f32 %v4269, 0.0
      %v5110 = vmax.f32 %v4274, 0.0
      %v5111 = vmax.f32 %v4277, 0.0
      %v5112 = vmax.f32 %v4282, 0.0
      %v5113 = vmax.f32 %v4285, 0.0
      %v5114 = vmax.f32 %v4290, 0.0
      %v5115 = vmax.f32 %v4293, 0.0
      %v5116 = vmax.f32 %v4298, 0.0
      %v5117 = vmax.f32 %v4301, 0.0
      %v5118 = vmax.f32 %v4306, 0.0
      %v5119 = vmax.f32 %v4309, 0.0
      %v5120 = vmax.f32 %v4314, 0.0
      %v5121 = vmax.f32 %v4317, 0.0
      %v5122 = vmax.f32 %v4322, 0.0
      %v5123 = vmax.f32 %v4325, 0.0
      %v5124 = vmax.f32 %v4330, 0.0
      %v5125 = vmax.f32 %v4333, 0.0
      %v5126 = vmax.f32 %v4338, 0.0
      %v5127 = vmax.f32 %v4341, 0.0
      %v5128 = vmax.f32 %v4346, 0.0
      %v5129 = vmax.f32 %v4349, 0.0
      %v5130 = vmax.f32 %v4354, 0.0
      %v5131 = vmax.f32 %v4357, 0.0
      %v5132 = vmax.f32 %v4362, 0.0
      %v5133 = vmax.f32 %v4365, 0.0
      %v5134 = vmax.f32 %v4370, 0.0
      %v5135 = vmax.f32 %v4373, 0.0
      %v5136 = vmax.f32 %v4378, 0.0
      %v5137 = vmax.f32 %v4381, 0.0
      %v5138 = vmax.f32 %v4386, 0.0
      %v5139 = vmax.f32 %v4389, 0.0
      %v5140 = vmax.f32 %v4394, 0.0
      %v5141 = vmax.f32 %v4397, 0.0
      %v5142 = vmax.f32 %v4402, 0.0
      %v5143 = vmax.f32 %v4405, 0.0
      %v5144 = vmax.f32 %v4410, 0.0
      %v5145 = vmax.f32 %v4413, 0.0
      %v5146 = vmax.f32 %v4418, 0.0
      %v5147 = vmax.f32 %v4421, 0.0
      %v5148 = vmax.f32 %v4426, 0.0
      %v5149 = vmax.f32 %v4429, 0.0
      %v5150 = vmax.f32 %v4434, 0.0
      %v5151 = vmax.f32 %v4437, 0.0
      %v5152 = vmax.f32 %v4442, 0.0
      %v5153 = vmax.f32 %v4445, 0.0
      %v5154 = vmax.f32 %v4450, 0.0
      %v5155 = vmax.f32 %v4453, 0.0
      %v5156 = vmax.f32 %v4458, 0.0
      %v5157 = vmax.f32 %v4461, 0.0
      %v5158 = vmax.f32 %v4466, 0.0
      %v5159 = vmax.f32 %v4469, 0.0
      %v5160 = vmax.f32 %v4474, 0.0
      %v5161 = vmax.f32 %v4477, 0.0
      %v5162 = vmax.f32 %v4482, 0.0
      %v5163 = vmax.f32 %v4485, 0.0
      %v5164 = vmax.f32 %v4490, 0.0
      %v5165 = vmax.f32 %v4493, 0.0
      %v5166 = vmax.f32 %v4498, 0.0
      %v5167 = vmax.f32 %v4501, 0.0
      %v5168 = vmax.f32 %v4506, 0.0
      %v5169 = vmax.f32 %v4509, 0.0
      %v5170 = vmax.f32 %v4514, 0.0
      %v5171 = vmax.f32 %v4517, 0.0
      %v5172 = vmax.f32 %v4522, 0.0
      %v5173 = vmax.f32 %v4525, 0.0
      %v5174 = vmax.f32 %v4530, 0.0
      %v5175 = vmax.f32 %v4533, 0.0
      %v5176 = vmax.f32 %v4538, 0.0
      %v5177 = vmax.f32 %v4541, 0.0
      %v5178 = vmax.f32 %v4546, 0.0
      %v5179 = vmax.f32 %v4549, 0.0
      %v5180 = vmax.f32 %v4554, 0.0
      %v5181 = vmax.f32 %v4557, 0.0
      %v5182 = vmax.f32 %v4562, 0.0
      %v5183 = vmax.f32 %v4565, 0.0
      %v5184 = vmax.f32 %v4570, 0.0
      %v5185 = vmax.f32 %v4573, 0.0
      %v5186 = vmax.f32 %v4578, 0.0
      %v5187 = vmax.f32 %v4581, 0.0
      %v5188 = vmax.f32 %v4586, 0.0
      %v5189 = vmax.f32 %v4589, 0.0
      %v5190 = vmax.f32 %v4594, 0.0
      %v5191 = vmax.f32 %v4597, 0.0
      %v5192 = vmax.f32 %v4602, 0.0
      %v5193 = vmax.f32 %v4605, 0.0
      %v5194 = vmax.f32 %v4610, 0.0
      %v5195 = vmax.f32 %v4613, 0.0
      %v5196 = vmax.f32 %v4618, 0.0
      %v5197 = vmax.f32 %v4621, 0.0
      %v5198 = vmax.f32 %v4626, 0.0
      %v5199 = vmax.f32 %v4629, 0.0
      %v5200 = vmax.f32 %v4634, 0.0
      %v5201 = vmax.f32 %v4637, 0.0
      %v5202 = vmax.f32 %v4642, 0.0
      %v5203 = vmax.f32 %v4645, 0.0
      %v5204 = vmax.f32 %v4650, 0.0
      %v5205 = vmax.f32 %v4653, 0.0
      %v5206 = vmax.f32 %v4658, 0.0
      %v5207 = vmax.f32 %v4661, 0.0
      %v5208 = vmax.f32 %v4666, 0.0
      %v5209 = vmax.f32 %v4669, 0.0
      %v5210 = vmax.f32 %v4674, 0.0
      %v5211 = vmax.f32 %v4677, 0.0
      %v5212 = vmax.f32 %v4682, 0.0
      %v5213 = vmax.f32 %v4685, 0.0
      %v5214 = vmax.f32 %v4690, 0.0
      %v5215 = vmax.f32 %v4693, 0.0
      %v5216 = vmax.f32 %v4698, 0.0
      %v5217 = vmax.f32 %v4701, 0.0
      %v5218 = vmax.f32 %v4706, 0.0
      %v5219 = vmax.f32 %v4709, 0.0
      %v5220 = vmax.f32 %v4714, 0.0
      %v5221 = vmax.f32 %v4717, 0.0
      %v5222 = vmax.f32 %v4722, 0.0
      %v5223 = vmax.f32 %v4725, 0.0
      %v5224 = vmax.f32 %v4730, 0.0
      %v5225 = vmax.f32 %v4733, 0.0
      %v5226 = vmax.f32 %v4738, 0.0
      %v5227 = vmax.f32 %v4741, 0.0
      %v5228 = vmax.f32 %v4746, 0.0
      %v5229 = vmax.f32 %v4749, 0.0
      %v5230 = vmax.f32 %v4754, 0.0
      %v5231 = vmax.f32 %v4757, 0.0
      %v5232 = vmax.f32 %v4762, 0.0
      %v5233 = vmax.f32 %v4765, 0.0
      %v5234 = vmax.f32 %v4770, 0.0
      %v5235 = vmax.f32 %v4773, 0.0
      %v5236 = vmax.f32 %v4778, 0.0
      %v5237 = vmax.f32 %v4781, 0.0
      %v5238 = vmax.f32 %v4786, 0.0
      %v5239 = vmax.f32 %v4789, 0.0
      %v5240 = vmax.f32 %v4794, 0.0
      %v5241 = vmax.f32 %v4797, 0.0
      %v5242 = vmax.f32 %v4802, 0.0
      %v5243 = vmax.f32 %v4805, 0.0
      %v5244 = vmax.f32 %v4810, 0.0
      %v5245 = vmax.f32 %v4813, 0.0
      %v5246 = vmax.f32 %v4818, 0.0
      %v5247 = vmax.f32 %v4821, 0.0
      %v5248 = vmax.f32 %v4826, 0.0
      %v5249 = vmax.f32 %v4829, 0.0
      %v5250 = vmax.f32 %v4834, 0.0
      %v5251 = vmax.f32 %v4837, 0.0
      %v5252 = vmax.f32 %v4842, 0.0
      %v5253 = vmax.f32 %v4845, 0.0
      %v5254 = vmax.f32 %v4850, 0.0
      %v5255 = vmax.f32 %v4853, 0.0
      %v5256 = vmax.f32 %v4858, 0.0
      %v5257 = vmax.f32 %v4861, 0.0
      %v5258 = vmax.f32 %v4866, 0.0
      %v5259 = vmax.f32 %v4869, 0.0
      %v5260 = vmax.f32 %v4874, 0.0
      %v5261 = vmax.f32 %v4877, 0.0
      %v5262 = vmax.f32 %v4882, 0.0
      %v5263 = vmax.f32 %v4885, 0.0
      %v5264 = vmax.f32 %v4890, 0.0
      %v5265 = vmax.f32 %v4893, 0.0
      %v5266 = vmax.f32 %v4898, 0.0
      %v5267 = vmax.f32 %v4901, 0.0
      %v5268 = vmax.f32 %v4906, 0.0
      %v5269 = vmax.f32 %v4909, 0.0
      %v5270 = vmax.f32 %v4914, 0.0
      %v5271 = vmax.f32 %v4917, 0.0
      %v5272 = vmax.f32 %v4922, 0.0
      %v5273 = vmax.f32 %v4925, 0.0
      %v5274 = vmax.f32 %v4930, 0.0
      %v5275 = vmax.f32 %v4933, 0.0
      %v5276 = vmax.f32 %v4938, 0.0
      %v5277 = vmax.f32 %v4941, 0.0
      %v5278 = vmax.f32 %v4946, 0.0
      %v5279 = vmax.f32 %v4949, 0.0
      %v5280 = vmax.f32 %v4954, 0.0
      %v5281 = vmax.f32 %v4957, 0.0
      %v5282 = vmax.f32 %v4962, 0.0
      %v5283 = vmax.f32 %v4965, 0.0
      %v5284 = vmax.f32 %v4970, 0.0
      %v5285 = vmax.f32 %v4973, 0.0
      %v5286 = vmax.f32 %v4978, 0.0
      %v5287 = vmax.f32 %v4981, 0.0
      %v5288 = vmax.f32 %v4986, 0.0
      %v5289 = vmax.f32 %v4989, 0.0
      %v5290 = vmax.f32 %v4994, 0.0
      %v5291 = vmax.f32 %v4997, 0.0
      %v5292 = vmax.f32 %v5002, 0.0
      %v5293 = vmax.f32 %v5005, 0.0
      %v5294 = vmax.f32 %v5010, 0.0
      %v5295 = vmax.f32 %v5013, 0.0
      %v5296 = vmax.f32 %v5018, 0.0
      %v5297 = vmax.f32 %v5021, 0.0
      %v5298 = vmax.f32 %v5026, 0.0
      %v5299 = vmax.f32 %v5029, 0.0
      %v5300 = vmax.f32 %v5034, 0.0
      %v5301 = vmax.f32 %v5037, 0.0
      %v5302 = vmax.f32 %v5042, 0.0
      %v5303 = vmax.f32 %v5045, 0.0
      %v5304 = vadd.f32 %v5048, %v5049
      %v5305 = vadd.f32 %v5304, %v5050
      %v5306 = vadd.f32 %v5305, %v5051
      %v5307 = vadd.f32 %v5306, %v5052
      %v5308 = vadd.f32 %v5307, %v5053
      %v5309 = vadd.f32 %v5308, %v5054
      %v5310 = vadd.f32 %v5309, %v5055
      %v5311 = vadd.f32 %v5310, %v5056
      %v5312 = vadd.f32 %v5311, %v5057
      %v5313 = vadd.f32 %v5312, %v5058
      %v5314 = vadd.f32 %v5313, %v5059
      %v5315 = vadd.f32 %v5314, %v5060
      %v5316 = vadd.f32 %v5315, %v5061
      %v5317 = vadd.f32 %v5316, %v5062
      %v5318 = vadd.f32 %v5317, %v5063
      %v5319 = vadd.f32 %v5318, %v5064
      %v5320 = vadd.f32 %v5319, %v5065
      %v5321 = vadd.f32 %v5320, %v5066
      %v5322 = vadd.f32 %v5321, %v5067
      %v5323 = vadd.f32 %v5322, %v5068
      %v5324 = vadd.f32 %v5323, %v5069
      %v5325 = vadd.f32 %v5324, %v5070
      %v5326 = vadd.f32 %v5325, %v5071
      %v5327 = vadd.f32 %v5326, %v5072
      %v5328 = vadd.f32 %v5327, %v5073
      %v5329 = vadd.f32 %v5328, %v5074
      %v5330 = vadd.f32 %v5329, %v5075
      %v5331 = vadd.f32 %v5330, %v5076
      %v5332 = vadd.f32 %v5331, %v5077
      %v5333 = vadd.f32 %v5332, %v5078
      %v5334 = vadd.f32 %v5333, %v5079
      %v5335 = vrot.slane %v5334, 4
      %v5336 = vadd.f32 %v5334, %v5335
      %v5337 = vrot.slane %v5336, 2
      %v5338 = vadd.f32 %v5336, %v5337
      %v5339 = vrot.slane %v5338, 1
      %v5340 = vadd.f32 %v5338, %v5339
      %v5341 = vadd.f32 %v5080, %v5081
      %v5342 = vadd.f32 %v5341, %v5082
      %v5343 = vadd.f32 %v5342, %v5083
      %v5344 = vadd.f32 %v5343, %v5084
      %v5345 = vadd.f32 %v5344, %v5085
      %v5346 = vadd.f32 %v5345, %v5086
      %v5347 = vadd.f32 %v5346, %v5087
      %v5348 = vadd.f32 %v5347, %v5088
      %v5349 = vadd.f32 %v5348, %v5089
      %v5350 = vadd.f32 %v5349, %v5090
      %v5351 = vadd.f32 %v5350, %v5091
      %v5352 = vadd.f32 %v5351, %v5092
      %v5353 = vadd.f32 %v5352, %v5093
      %v5354 = vadd.f32 %v5353, %v5094
      %v5355 = vadd.f32 %v5354, %v5095
      %v5356 = vadd.f32 %v5355, %v5096
      %v5357 = vadd.f32 %v5356, %v5097
      %v5358 = vadd.f32 %v5357, %v5098
      %v5359 = vadd.f32 %v5358, %v5099
      %v5360 = vadd.f32 %v5359, %v5100
      %v5361 = vadd.f32 %v5360, %v5101
      %v5362 = vadd.f32 %v5361, %v5102
      %v5363 = vadd.f32 %v5362, %v5103
      %v5364 = vadd.f32 %v5363, %v5104
      %v5365 = vadd.f32 %v5364, %v5105
      %v5366 = vadd.f32 %v5365, %v5106
      %v5367 = vadd.f32 %v5366, %v5107
      %v5368 = vadd.f32 %v5367, %v5108
      %v5369 = vadd.f32 %v5368, %v5109
      %v5370 = vadd.f32 %v5369, %v5110
      %v5371 = vadd.f32 %v5370, %v5111
      %v5372 = vrot.slane %v5371, 4
      %v5373 = vadd.f32 %v5371, %v5372
      %v5374 = vrot.slane %v5373, 2
      %v5375 = vadd.f32 %v5373, %v5374
      %v5376 = vrot.slane %v5375, 1
      %v5377 = vadd.f32 %v5375, %v5376
      %v5378 = vadd.f32 %v5112, %v5113
      %v5379 = vadd.f32 %v5378, %v5114
      %v5380 = vadd.f32 %v5379, %v5115
      %v5381 = vadd.f32 %v5380, %v5116
      %v5382 = vadd.f32 %v5381, %v5117
      %v5383 = vadd.f32 %v5382, %v5118
      %v5384 = vadd.f32 %v5383, %v5119
      %v5385 = vadd.f32 %v5384, %v5120
      %v5386 = vadd.f32 %v5385, %v5121
      %v5387 = vadd.f32 %v5386, %v5122
      %v5388 = vadd.f32 %v5387, %v5123
      %v5389 = vadd.f32 %v5388, %v5124
      %v5390 = vadd.f32 %v5389, %v5125
      %v5391 = vadd.f32 %v5390, %v5126
      %v5392 = vadd.f32 %v5391, %v5127
      %v5393 = vadd.f32 %v5392, %v5128
      %v5394 = vadd.f32 %v5393, %v5129
      %v5395 = vadd.f32 %v5394, %v5130
      %v5396 = vadd.f32 %v5395, %v5131
      %v5397 = vadd.f32 %v5396, %v5132
      %v5398 = vadd.f32 %v5397, %v5133
      %v5399 = vadd.f32 %v5398, %v5134
      %v5400 = vadd.f32 %v5399, %v5135
      %v5401 = vadd.f32 %v5400, %v5136
      %v5402 = vadd.f32 %v5401, %v5137
      %v5403 = vadd.f32 %v5402, %v5138
      %v5404 = vadd.f32 %v5403, %v5139
      %v5405 = vadd.f32 %v5404, %v5140
      %v5406 = vadd.f32 %v5405, %v5141
      %v5407 = vadd.f32 %v5406, %v5142
      %v5408 = vadd.f32 %v5407, %v5143
      %v5409 = vrot.slane %v5408, 4
      %v5410 = vadd.f32 %v5408, %v5409
      %v5411 = vrot.slane %v5410, 2
      %v5412 = vadd.f32 %v5410, %v5411
      %v5413 = vrot.slane %v5412, 1
      %v5414 = vadd.f32 %v5412, %v5413
      %v5415 = vadd.f32 %v5144, %v5145
      %v5416 = vadd.f32 %v5415, %v5146
      %v5417 = vadd.f32 %v5416, %v5147
      %v5418 = vadd.f32 %v5417, %v5148
      %v5419 = vadd.f32 %v5418, %v5149
      %v5420 = vadd.f32 %v5419, %v5150
      %v5421 = vadd.f32 %v5420, %v5151
      %v5422 = vadd.f32 %v5421, %v5152
      %v5423 = vadd.f32 %v5422, %v5153
      %v5424 = vadd.f32 %v5423, %v5154
      %v5425 = vadd.f32 %v5424, %v5155
      %v5426 = vadd.f32 %v5425, %v5156
      %v5427 = vadd.f32 %v5426, %v5157
      %v5428 = vadd.f32 %v5427, %v5158
      %v5429 = vadd.f32 %v5428, %v5159
      %v5430 = vadd.f32 %v5429, %v5160
      %v5431 = vadd.f32 %v5430, %v5161
      %v5432 = vadd.f32 %v5431, %v5162
      %v5433 = vadd.f32 %v5432, %v5163
      %v5434 = vadd.f32 %v5433, %v5164
      %v5435 = vadd.f32 %v5434, %v5165
      %v5436 = vadd.f32 %v5435, %v5166
      %v5437 = vadd.f32 %v5436, %v5167
      %v5438 = vadd.f32 %v5437, %v5168
      %v5439 = vadd.f32 %v5438, %v5169
      %v5440 = vadd.f32 %v5439, %v5170
      %v5441 = vadd.f32 %v5440, %v5171
      %v5442 = vadd.f32 %v5441, %v5172
      %v5443 = vadd.f32 %v5442, %v5173
      %v5444 = vadd.f32 %v5443, %v5174
      %v5445 = vadd.f32 %v5444, %v5175
      %v5446 = vrot.slane %v5445, 4
      %v5447 = vadd.f32 %v5445, %v5446
      %v5448 = vrot.slane %v5447, 2
      %v5449 = vadd.f32 %v5447, %v5448
      %v5450 = vrot.slane %v5449, 1
      %v5451 = vadd.f32 %v5449, %v5450
      %v5452 = vadd.f32 %v5176, %v5177
      %v5453 = vadd.f32 %v5452, %v5178
      %v5454 = vadd.f32 %v5453, %v5179
      %v5455 = vadd.f32 %v5454, %v5180
      %v5456 = vadd.f32 %v5455, %v5181
      %v5457 = vadd.f32 %v5456, %v5182
      %v5458 = vadd.f32 %v5457, %v5183
      %v5459 = vadd.f32 %v5458, %v5184
      %v5460 = vadd.f32 %v5459, %v5185
      %v5461 = vadd.f32 %v5460, %v5186
      %v5462 = vadd.f32 %v5461, %v5187
      %v5463 = vadd.f32 %v5462, %v5188
      %v5464 = vadd.f32 %v5463, %v5189
      %v5465 = vadd.f32 %v5464, %v5190
      %v5466 = vadd.f32 %v5465, %v5191
      %v5467 = vadd.f32 %v5466, %v5192
      %v5468 = vadd.f32 %v5467, %v5193
      %v5469 = vadd.f32 %v5468, %v5194
      %v5470 = vadd.f32 %v5469, %v5195
      %v5471 = vadd.f32 %v5470, %v5196
      %v5472 = vadd.f32 %v5471, %v5197
      %v5473 = vadd.f32 %v5472, %v5198
      %v5474 = vadd.f32 %v5473, %v5199
      %v5475 = vadd.f32 %v5474, %v5200
      %v5476 = vadd.f32 %v5475, %v5201
      %v5477 = vadd.f32 %v5476, %v5202
      %v5478 = vadd.f32 %v5477, %v5203
      %v5479 = vadd.f32 %v5478, %v5204
      %v5480 = vadd.f32 %v5479, %v5205
      %v5481 = vadd.f32 %v5480, %v5206
      %v5482 = vadd.f32 %v5481, %v5207
      %v5483 = vrot.slane %v5482, 4
      %v5484 = vadd.f32 %v5482, %v5483
      %v5485 = vrot.slane %v5484, 2
      %v5486 = vadd.f32 %v5484, %v5485
      %v5487 = vrot.slane %v5486, 1
      %v5488 = vadd.f32 %v5486, %v5487
      %v5489 = vadd.f32 %v5208, %v5209
      %v5490 = vadd.f32 %v5489, %v5210
      %v5491 = vadd.f32 %v5490, %v5211
      %v5492 = vadd.f32 %v5491, %v5212
      %v5493 = vadd.f32 %v5492, %v5213
      %v5494 = vadd.f32 %v5493, %v5214
      %v5495 = vadd.f32 %v5494, %v5215
      %v5496 = vadd.f32 %v5495, %v5216
      %v5497 = vadd.f32 %v5496, %v5217
      %v5498 = vadd.f32 %v5497, %v5218
      %v5499 = vadd.f32 %v5498, %v5219
      %v5500 = vadd.f32 %v5499, %v5220
      %v5501 = vadd.f32 %v5500, %v5221
      %v5502 = vadd.f32 %v5501, %v5222
      %v5503 = vadd.f32 %v5502, %v5223
      %v5504 = vadd.f32 %v5503, %v5224
      %v5505 = vadd.f32 %v5504, %v5225
      %v5506 = vadd.f32 %v5505, %v5226
      %v5507 = vadd.f32 %v5506, %v5227
      %v5508 = vadd.f32 %v5507, %v5228
      %v5509 = vadd.f32 %v5508, %v5229
      %v5510 = vadd.f32 %v5509, %v5230
      %v5511 = vadd.f32 %v5510, %v5231
      %v5512 = vadd.f32 %v5511, %v5232
      %v5513 = vadd.f32 %v5512, %v5233
      %v5514 = vadd.f32 %v5513, %v5234
      %v5515 = vadd.f32 %v5514, %v5235
      %v5516 = vadd.f32 %v5515, %v5236
      %v5517 = vadd.f32 %v5516, %v5237
      %v5518 = vadd.f32 %v5517, %v5238
      %v5519 = vadd.f32 %v5518, %v5239
      %v5520 = vrot.slane %v5519, 4
      %v5521 = vadd.f32 %v5519, %v5520
      %v5522 = vrot.slane %v5521, 2
      %v5523 = vadd.f32 %v5521, %v5522
      %v5524 = vrot.slane %v5523, 1
      %v5525 = vadd.f32 %v5523, %v5524
      %v5526 = vadd.f32 %v5240, %v5241
      %v5527 = vadd.f32 %v5526, %v5242
      %v5528 = vadd.f32 %v5527, %v5243
      %v5529 = vadd.f32 %v5528, %v5244
      %v5530 = vadd.f32 %v5529, %v5245
      %v5531 = vadd.f32 %v5530, %v5246
      %v5532 = vadd.f32 %v5531, %v5247
      %v5533 = vadd.f32 %v5532, %v5248
      %v5534 = vadd.f32 %v5533, %v5249
      %v5535 = vadd.f32 %v5534, %v5250
      %v5536 = vadd.f32 %v5535, %v5251
      %v5537 = vadd.f32 %v5536, %v5252
      %v5538 = vadd.f32 %v5537, %v5253
      %v5539 = vadd.f32 %v5538, %v5254
      %v5540 = vadd.f32 %v5539, %v5255
      %v5541 = vadd.f32 %v5540, %v5256
      %v5542 = vadd.f32 %v5541, %v5257
      %v5543 = vadd.f32 %v5542, %v5258
      %v5544 = vadd.f32 %v5543, %v5259
      %v5545 = vadd.f32 %v5544, %v5260
      %v5546 = vadd.f32 %v5545, %v5261
      %v5547 = vadd.f32 %v5546, %v5262
      %v5548 = vadd.f32 %v5547, %v5263
      %v5549 = vadd.f32 %v5548, %v5264
      %v5550 = vadd.f32 %v5549, %v5265
      %v5551 = vadd.f32 %v5550, %v5266
      %v5552 = vadd.f32 %v5551, %v5267
      %v5553 = vadd.f32 %v5552, %v5268
      %v5554 = vadd.f32 %v5553, %v5269
      %v5555 = vadd.f32 %v5554, %v5270
      %v5556 = vadd.f32 %v5555, %v5271
      %v5557 = vrot.slane %v5556, 4
      %v5558 = vadd.f32 %v5556, %v5557
      %v5559 = vrot.slane %v5558, 2
      %v5560 = vadd.f32 %v5558, %v5559
      %v5561 = vrot.slane %v5560, 1
      %v5562 = vadd.f32 %v5560, %v5561
      %v5563 = vadd.f32 %v5272, %v5273
      %v5564 = vadd.f32 %v5563, %v5274
      %v5565 = vadd.f32 %v5564, %v5275
      %v5566 = vadd.f32 %v5565, %v5276
      %v5567 = vadd.f32 %v5566, %v5277
      %v5568 = vadd.f32 %v5567, %v5278
      %v5569 = vadd.f32 %v5568, %v5279
      %v5570 = vadd.f32 %v5569, %v5280
      %v5571 = vadd.f32 %v5570, %v5281
      %v5572 = vadd.f32 %v5571, %v5282
      %v5573 = vadd.f32 %v5572, %v5283
      %v5574 = vadd.f32 %v5573, %v5284
      %v5575 = vadd.f32 %v5574, %v5285
      %v5576 = vadd.f32 %v5575, %v5286
      %v5577 = vadd.f32 %v5576, %v5287
      %v5578 = vadd.f32 %v5577, %v5288
      %v5579 = vadd.f32 %v5578, %v5289
      %v5580 = vadd.f32 %v5579, %v5290
      %v5581 = vadd.f32 %v5580, %v5291
      %v5582 = vadd.f32 %v5581, %v5292
      %v5583 = vadd.f32 %v5582, %v5293
      %v5584 = vadd.f32 %v5583, %v5294
      %v5585 = vadd.f32 %v5584, %v5295
      %v5586 = vadd.f32 %v5585, %v5296
      %v5587 = vadd.f32 %v5586, %v5297
      %v5588 = vadd.f32 %v5587, %v5298
      %v5589 = vadd.f32 %v5588, %v5299
      %v5590 = vadd.f32 %v5589, %v5300
      %v5591 = vadd.f32 %v5590, %v5301
      %v5592 = vadd.f32 %v5591, %v5302
      %v5593 = vadd.f32 %v5592, %v5303
      %v5594 = vrot.slane %v5593, 4
      %v5595 = vadd.f32 %v5593, %v5594
      %v5596 = vrot.slane %v5595, 2
      %v5597 = vadd.f32 %v5595, %v5596
      %v5598 = vrot.slane %v5597, 1
      %v5599 = vadd.f32 %v5597, %v5598
      %v5600 = vrcp.pop 256.0
      %v5601 = vmul.f32 %v5340, %v5600
      %v5602 = vmul.f32 %v5377, %v5600
      %v5603 = vmul.f32 %v5414, %v5600
      %v5604 = vmul.f32 %v5451, %v5600
      %v5605 = vmul.f32 %v5488, %v5600
      %v5606 = vmul.f32 %v5525, %v5600
      %v5607 = vmul.f32 %v5562, %v5600
      %v5608 = vmul.f32 %v5599, %v5600
      %vm5617 = vcmask 1041409
      %v5618 = vsel %vm5617, %v5602, %v5601
      %vm5619 = vcmask 1042434
      %v5620 = vsel %vm5619, %v5603, %v5618
      %vm5621 = vcmask 1043459
      %v5622 = vsel %vm5621, %v5604, %v5620
      %vm5623 = vcmask 1044484
      %v5624 = vsel %vm5623, %v5605, %v5622
      %vm5625 = vcmask 1045509
      %v5626 = vsel %vm5625, %v5606, %v5624
      %vm5627 = vcmask 1046534
      %v5628 = vsel %vm5627, %v5607, %v5626
      %vm5629 = vcmask 1047559
      %v5630 = vsel %vm5629, %v5608, %v5628
      %5632 = vst [vmem:[%s173] sm:$0xff] %v5630
      %p5633 = scmp.lt.s32.totalorder %s14, 1
      %s5634 = scalar_select %p5633, %s14, 1
      %s5635 = smul.addr %s5634, 8
      %s5636 = scalar_lea.vmem %s3, %s5635
      // Predicated region
      $region33: #{unique_eq3_net_mini.4} parent=31 // pred_check
        %p5637 = pneg %p100
      $region34: #{unique_eq3_net_mini.4} parent=31 // pred_check_branch
        %5639 = sbr.rel (%p5637) target = $region36
      $region35: #{unique_eq3_net_mini.4} parent=31 // pred_region
        _
      $region36: #{unique_eq3_net_mini.4} parent=31 // pred_fallthru
        _
    $region32: #{unique_eq3_net_mini.4} parent=5 // pred_fallthru
      _
    %p5640 = scmp.le.s32.totalorder 2, %s9
    // Predicated region
    $region37: #{unique_eq3_net_mini.4} parent=5 // pred_check
      %p5641 = pneg %p5640
    $region38: #{unique_eq3_net_mini.4} parent=5 // pred_check_branch
      %5643 = sbr.rel (%p5641) target = $region40
    $region39: #{unique_eq3_net_mini.4} parent=5 // pred_region
      %s5644 = ssub.s32 %s9, 2
      // Predicated region
      $region41: #{unique_eq3_net_mini.4} parent=39 // pred_check
        %p5645 = pneg %p106
      $region42: #{unique_eq3_net_mini.4} parent=39 // pred_check_branch
        %5647 = sbr.rel (%p5645) target = $region44
      $region43: #{unique_eq3_net_mini.4} parent=39 // pred_region
        %p5648 = scmp.lt.s32.totalorder %s15, 1
        %s5649 = scalar_select %p5648, %s15, 1
        %s5650 = smul.addr %s5649, 8
        %s5651 = scalar_lea.vmem %s3, %s5650
      $region44: #{unique_eq3_net_mini.4} parent=39 // pred_fallthru
        _
    $region40: #{unique_eq3_net_mini.4} parent=5 // pred_fallthru
      _
  $region6: #{unique_eq3_net_mini.4} parent=0 // loop_footer
    %s13 = sadd.s32 1, %s9
  $region7: #{unique_eq3_net_mini.4} parent=0 // loop_footer_branch
    %8 = sbr.rel target = $region3
  $region8: #{unique_eq3_net_mini.4} parent=0 // loop_exit
    _

</llo_original>
